<compile_context>
chip_gen: v6e
topology: v6e:2x2x1
jax: 0.10.0
libtpu: 0.0.40
codegen_flags: <defaults>
</compile_context>

<pallas_src>
import functools

import jax
import jax.numpy as jnp
from jax import lax
from jax.experimental import pallas as pl
from jax.experimental.pallas import tpu as pltpu

KSIZE = 16   # Conv1d kernel_size (fixed in makeconv)
STRIDE = 2   # Conv1d stride      (fixed in makeconv)


def _f(o):
    # torch.jit.script f: o if o >= -1e-11 else o * -1e10
    return jnp.where(o < -1e-11, o * -1e10, o)


# ------------------------------ fused MMM forward kernel ------------------------------
def mmm_kernel(*refs, num_convs, num_iter):
    x_ref = refs[0]
    a_refs = refs[1:1 + num_convs]                       # banded conv matrices (L_in, L_out)
    p_ref = refs[1 + num_convs]                          # SMEM: [bias, gamma, beta] per conv
    h0_ref, c0_ref, wih_ref, whh_ref, b_ref = refs[2 + num_convs:7 + num_convs]
    r_ref, hn_ref, cn_ref = refs[7 + num_convs:10 + num_convs]
    seq_ref = refs[10 + num_convs]                       # VMEM scratch (T, H)

    # ---- hHead: num_convs x (Conv1d -> BatchNorm1d -> tanh -> f) ----
    x = x_ref[...]                                       # (N, L0)
    for ci in range(num_convs):
        a = a_refs[ci][...]                              # (L_in, L_out)
        # Stride-2 Conv1d as a banded matmul: out[:, j] = sum_k w[k] * x[:, 2j + k].
        acc = jnp.dot(x, a, preferred_element_type=jnp.float32) + p_ref[3 * ci + 0]
        # BatchNorm1d(1), training-mode batch statistics, single pass (E[x^2] - mean^2).
        # TODO(synk): running-stat updates of BatchNorm are not tracked (forward-only).
        n = float(acc.shape[0] * acc.shape[1])
        s1 = jnp.sum(acc)
        s2 = jnp.sum(acc * acc)
        mean = s1 / n
        var = s2 / n - mean * mean
        xhat = (acc - mean) * lax.rsqrt(var + 1e-5)
        y = p_ref[3 * ci + 1] * xhat + p_ref[3 * ci + 2]   # gamma * xhat + beta
        x = _f(jnp.tanh(y))

    # ---- BasicLSTM ----
    X = x                                                # (T, H): T = conv batch, H = sz
    T, H = X.shape
    NL = h0_ref.shape[0]                                 # num_layers
    NM = wih_ref.shape[0]                                # num_lstms

    s = X
    hn = h0_ref[...]                                     # (NL, H)
    cn = c0_ref[...]
    r = jnp.zeros((T, H), jnp.float32)

    def lstm_apply(m, inp, h, c):
        # Multi-layer LSTM over the full sequence. PyTorch gate order: i, f, g, o.
        # TODO(synk): nn.LSTM dropout=0.2 between layers (train-mode only) not modeled.
        layer_in = inp                                   # (T, H) f32
        h_list, c_list = [], []
        for l in range(NL):
            wih = wih_ref[m, l, :, :]                    # (H, 4H) bf16 (= W_ih^T)
            whh = whh_ref[m, l, :, :]                    # (H, 4H) bf16 (= W_hh^T)
            b = b_ref[m, l, :, :]                        # (1, 4H) f32  (= b_ih + b_hh)
            # Bias hoisted out of the serial time loop; bf16 operands, f32 accumulate.
            xw = jnp.dot(layer_in.astype(jnp.bfloat16), wih,
                         preferred_element_type=jnp.float32) + b        # (T, 4H)
            h_t = h[l:l + 1]                             # (1, H) f32
            c_t = c[l:l + 1]
            # NOTE: the identical whh could be pinned in MXU weight registers across the
            # recurrence (pltpu.matmul_push_rhs); left to the Mosaic scheduler here.
            for t in range(T):
                gates = xw[t:t + 1] + jnp.dot(h_t.astype(jnp.bfloat16), whh,
                                              preferred_element_type=jnp.float32)
                sig = jax.nn.sigmoid(gates)              # one EUP pass over all 4H lanes
                tg = jnp.tanh(gates)
                i_g = sig[:, 0 * H:1 * H]
                f_g = sig[:, 1 * H:2 * H]
                g_g = tg[:, 2 * H:3 * H]
                o_g = sig[:, 3 * H:4 * H]
                c_t = f_g * c_t + i_g * g_g              # state math stays f32
                h_t = o_g * jnp.tanh(c_t)
                seq_ref[pl.ds(t, 1), :] = h_t            # per-step row into VMEM scratch
            layer_in = seq_ref[...]                      # (T, H) output of layer l
            h_list.append(h_t)
            c_list.append(c_t)
        return layer_in, jnp.concatenate(h_list, 0), jnp.concatenate(c_list, 0)

    for _ in range(num_iter):
        o, a_, b_ = lstm_apply(0, jnp.tanh((X + s) * 0.5), hn, cn)
        s = _f(s + o)
        hn, cn = a_, b_
        for m in range(1, NM):
            o, a_, b_ = lstm_apply(m, jnp.tanh((s + X) * 0.5), hn, cn)
            relu_o = jnp.maximum(o, 0.0)
            if (m - 1) % 2 == 0:
                r = r - relu_o                           # mul = -1 when (m-1) even
            else:
                r = r + relu_o
            s = _f(s + o)
            hn, cn = b_, a_      # hn <- c_n, cn <- h_n (exactly as in the PyTorch loop)

    r_ref[...] = r
    hn_ref[...] = hn
    cn_ref[...] = cn


# ------------------------------------ host wrappers ------------------------------------
def _conv_matrix(w, l_in, l_out):
    # Banded matrix A with A[i, j] = w[i - STRIDE*j] for 0 <= i - STRIDE*j < KSIZE.
    ii = jnp.arange(l_in, dtype=jnp.int32)[:, None]
    jj = jnp.arange(l_out, dtype=jnp.int32)[None, :]
    d = ii - STRIDE * jj
    valid = (d >= 0) & (d < KSIZE)
    return jnp.where(valid, w[jnp.clip(d, 0, KSIZE - 1)], 0.0).astype(jnp.float32)


def fused_mmm(x, a_list, conv_p, h0, c0, wih, whh, bias, num_iter):
    T = x.shape[0]
    H = a_list[-1].shape[1]
    NL = h0.shape[0]
    num_convs = len(a_list)
    kern = functools.partial(mmm_kernel, num_convs=num_convs, num_iter=num_iter)
    vmem = pl.BlockSpec(memory_space=pltpu.MemorySpace.VMEM)
    smem = pl.BlockSpec(memory_space=pltpu.MemorySpace.SMEM)
    return pl.pallas_call(
        kern,
        out_shape=(jax.ShapeDtypeStruct((T, H), jnp.float32),
                   jax.ShapeDtypeStruct((NL, H), jnp.float32),
                   jax.ShapeDtypeStruct((NL, H), jnp.float32)),
        in_specs=[vmem] + [vmem] * num_convs + [smem] + [vmem] * 5,
        out_specs=(vmem, vmem, vmem),
        scratch_shapes=[pltpu.VMEM((T, H), jnp.float32)],
    )(x, *a_list, conv_p, h0, c0, wih, whh, bias)


@functools.partial(jax.jit, static_argnames=("num_iter",))
def mmm_forward(params, X, h0, c0, num_iter):
    # X: (N, 1, L); h0, c0: (num_layers, 1, sz)
    last = X.reshape(-1)[-1]
    X1 = (X - last) / last
    # lp = log1p(max(|X1|)) is computed in the original but never used by BasicLSTM.forward.
    x = X1[:, 0, :].astype(jnp.float32)                  # (N, L) — channel dim (==1) squeezed
    num_convs = params["conv_w"].shape[0]

    # Cheap per-call XLA prep (functions of the parameters only):
    # banded conv matrices + [bias, gamma, beta] scalar triples for every conv stage.
    a_list = []
    l_in = x.shape[1]
    for ci in range(num_convs):
        l_out = (l_in - KSIZE) // STRIDE + 1
        a_list.append(_conv_matrix(params["conv_w"][ci], l_in, l_out))
        l_in = l_out
    gamma = jnp.ones((num_convs,), jnp.float32)          # fresh BatchNorm1d: gamma=1, beta=0
    beta = jnp.zeros((num_convs,), jnp.float32)
    conv_p = jnp.stack([params["conv_b"], gamma, beta], axis=1).reshape(-1)

    r, hn, cn = fused_mmm(
        x, a_list, conv_p, h0[:, 0, :], c0[:, 0, :],
        params["wih"].astype(jnp.bfloat16),              # MXU-native matmul operands
        params["whh"].astype(jnp.bfloat16),
        params["bias"], num_iter)
    return r[:, None, :], (hn[:, None, :], cn[:, None, :])


def init_params(key, num_convs, sz, num_layers, num_lstms):
    k0, k1, k2, k3, k4 = jax.random.split(key, 5)
    kw = 1.0 / jnp.sqrt(16.0)
    conv_w = jax.random.uniform(k0, (num_convs, KSIZE), jnp.float32, -kw, kw)
    conv_b = jax.random.uniform(k1, (num_convs,), jnp.float32, -kw, kw)
    kl = 1.0 / jnp.sqrt(float(sz))
    wih = jax.random.uniform(k2, (num_lstms, num_layers, sz, 4 * sz), jnp.float32, -kl, kl)
    whh = jax.random.uniform(k3, (num_lstms, num_layers, sz, 4 * sz), jnp.float32, -kl, kl)
    bias = jax.random.uniform(k4, (num_lstms, num_layers, 1, 4 * sz), jnp.float32,
                              -2 * kl, 2 * kl)   # b_ih + b_hh, kept 2D for VMEM
    return {"conv_w": conv_w, "conv_b": conv_b, "wih": wih, "whh": whh, "bias": bias}


if __name__ == "__main__":
    # Small config consistent with the module structure:
    num_convs, sz, num_layers, num_lstms, num_iter = 3, 32, 2, 3, 2
    # Input length so that 3 convs (k=16, s=2) reduce L -> sz:  354 -> 170 -> 78 -> 32
    L = sz
    for _ in range(num_convs):
        L = (L - 1) * STRIDE + KSIZE
    N = 4   # conv batch dim == LSTM sequence length

    key = jax.random.PRNGKey(0)
    kx, kh, kc, kp = jax.random.split(key, 4)
    X = jax.random.normal(kx, (N, 1, L), jnp.float32) + 2.0   # keep X.view(-1)[-1] away from 0
    h0 = 0.1 * jax.random.normal(kh, (num_layers, 1, sz), jnp.float32)
    c0 = 0.1 * jax.random.normal(kc, (num_layers, 1, sz), jnp.float32)
    params = init_params(kp, num_convs, sz, num_layers, num_lstms)

    r, (hn, cn) = mmm_forward(params, X, h0, c0, num_iter)
    jax.block_until_ready((r, hn, cn))
    assert r.shape == (N, 1, sz)
    assert hn.shape == (num_layers, 1, sz) and cn.shape == (num_layers, 1, sz)
    print("KERNEL_OK")
</pallas_src>

<mosaic_0001>
module attributes {stable_mosaic.version = 11 : i64} {
  func.func @mmm_kernel(%arg0: memref<4x354xf32, #tpu.memory_space<vmem>>, %arg1: memref<354x170xf32, #tpu.memory_space<vmem>>, %arg2: memref<170x78xf32, #tpu.memory_space<vmem>>, %arg3: memref<78x32xf32, #tpu.memory_space<vmem>>, %arg4: memref<9xf32, #tpu.memory_space<smem>>, %arg5: memref<2x32xf32, #tpu.memory_space<vmem>>, %arg6: memref<2x32xf32, #tpu.memory_space<vmem>>, %arg7: memref<3x2x32x128xbf16, #tpu.memory_space<vmem>>, %arg8: memref<3x2x32x128xbf16, #tpu.memory_space<vmem>>, %arg9: memref<3x2x1x128xf32, #tpu.memory_space<vmem>>, %arg10: memref<4x32xf32, #tpu.memory_space<vmem>>, %arg11: memref<2x32xf32, #tpu.memory_space<vmem>>, %arg12: memref<2x32xf32, #tpu.memory_space<vmem>>, %arg13: memref<4x32xf32, #tpu.memory_space<vmem>>) attributes {dimension_semantics = [], scalar_prefetch = 0 : i64, scratch_operands = 1 : i64, tpu.core_type = #tpu.core_type<tc>} {
    %c0 = arith.constant 0 : index
    %c0_0 = arith.constant 0 : index
    %0 = vector.load %arg0[%c0, %c0_0] : memref<4x354xf32, #tpu.memory_space<vmem>>, vector<4x354xf32>
    %c0_1 = arith.constant 0 : index
    %c0_2 = arith.constant 0 : index
    %1 = vector.load %arg1[%c0_1, %c0_2] : memref<354x170xf32, #tpu.memory_space<vmem>>, vector<354x170xf32>
    %cst = arith.constant dense<0.000000e+00> : vector<4x170xf32>
    %2 = tpu.matmul %0, %1, %cst {dimension_numbers = #tpu.dot_dimension_numbers<[1], [0], [0], [1], [0, 0, 1, 1], [], []>} : vector<4x354xf32>, vector<354x170xf32>, vector<4x170xf32> -> vector<4x170xf32>
    %c0_3 = arith.constant 0 : index
    %3 = memref.load %arg4[%c0_3] : memref<9xf32, #tpu.memory_space<smem>>
    %4 = vector.broadcast %3 : f32 to vector<4x170xf32>
    %5 = arith.addf %2, %4 : vector<4x170xf32>
    %6 = vector.shape_cast %5 : vector<4x170xf32> to vector<1x4x170xf32>
    %cst_4 = arith.constant dense<0.000000e+00> : vector<1xf32>
    %7 = vector.multi_reduction <add>, %6, %cst_4 [1, 2] : vector<1x4x170xf32> to vector<1xf32>
    %8 = vector.shape_cast %7 : vector<1xf32> to vector<1x1x1xf32>
    %9 = vector.extract %8[0, 0, 0] : f32 from vector<1x1x1xf32>
    %10 = arith.mulf %5, %5 : vector<4x170xf32>
    %11 = vector.shape_cast %10 : vector<4x170xf32> to vector<1x4x170xf32>
    %cst_5 = arith.constant dense<0.000000e+00> : vector<1xf32>
    %12 = vector.multi_reduction <add>, %11, %cst_5 [1, 2] : vector<1x4x170xf32> to vector<1xf32>
    %13 = vector.shape_cast %12 : vector<1xf32> to vector<1x1x1xf32>
    %14 = vector.extract %13[0, 0, 0] : f32 from vector<1x1x1xf32>
    %cst_6 = arith.constant 6.800000e+02 : f32
    %15 = arith.divf %9, %cst_6 : f32
    %cst_7 = arith.constant 6.800000e+02 : f32
    %16 = arith.divf %14, %cst_7 : f32
    %17 = arith.mulf %15, %15 : f32
    %18 = arith.subf %16, %17 : f32
    %19 = vector.broadcast %15 : f32 to vector<4x170xf32>
    %20 = arith.subf %5, %19 : vector<4x170xf32>
    %cst_8 = arith.constant 9.99999974E-6 : f32
    %21 = arith.addf %18, %cst_8 : f32
    %22 = math.rsqrt %21 : f32
    %23 = vector.broadcast %22 : f32 to vector<4x170xf32>
    %24 = arith.mulf %20, %23 : vector<4x170xf32>
    %c1 = arith.constant 1 : index
    %25 = memref.load %arg4[%c1] : memref<9xf32, #tpu.memory_space<smem>>
    %26 = vector.broadcast %25 : f32 to vector<4x170xf32>
    %27 = arith.mulf %26, %24 : vector<4x170xf32>
    %c2 = arith.constant 2 : index
    %28 = memref.load %arg4[%c2] : memref<9xf32, #tpu.memory_space<smem>>
    %29 = vector.broadcast %28 : f32 to vector<4x170xf32>
    %30 = arith.addf %27, %29 : vector<4x170xf32>
    %31 = math.tanh %30 : vector<4x170xf32>
    %cst_9 = arith.constant -9.99999996E-12 : f32
    %32 = vector.broadcast %cst_9 : f32 to vector<4x170xf32>
    %33 = arith.cmpf olt, %31, %32 : vector<4x170xf32>
    %cst_10 = arith.constant -1.000000e+10 : f32
    %34 = vector.broadcast %cst_10 : f32 to vector<4x170xf32>
    %35 = arith.mulf %31, %34 : vector<4x170xf32>
    %36 = arith.select %33, %35, %31 : vector<4x170xi1>, vector<4x170xf32>
    %c0_11 = arith.constant 0 : index
    %c0_12 = arith.constant 0 : index
    %37 = vector.load %arg2[%c0_11, %c0_12] : memref<170x78xf32, #tpu.memory_space<vmem>>, vector<170x78xf32>
    %cst_13 = arith.constant dense<0.000000e+00> : vector<4x78xf32>
    %38 = tpu.matmul %36, %37, %cst_13 {dimension_numbers = #tpu.dot_dimension_numbers<[1], [0], [0], [1], [0, 0, 1, 1], [], []>} : vector<4x170xf32>, vector<170x78xf32>, vector<4x78xf32> -> vector<4x78xf32>
    %c3 = arith.constant 3 : index
    %39 = memref.load %arg4[%c3] : memref<9xf32, #tpu.memory_space<smem>>
    %40 = vector.broadcast %39 : f32 to vector<4x78xf32>
    %41 = arith.addf %38, %40 : vector<4x78xf32>
    %42 = vector.shape_cast %41 : vector<4x78xf32> to vector<1x4x78xf32>
    %cst_14 = arith.constant dense<0.000000e+00> : vector<1xf32>
    %43 = vector.multi_reduction <add>, %42, %cst_14 [1, 2] : vector<1x4x78xf32> to vector<1xf32>
    %44 = vector.shape_cast %43 : vector<1xf32> to vector<1x1x1xf32>
    %45 = vector.extract %44[0, 0, 0] : f32 from vector<1x1x1xf32>
    %46 = arith.mulf %41, %41 : vector<4x78xf32>
    %47 = vector.shape_cast %46 : vector<4x78xf32> to vector<1x4x78xf32>
    %cst_15 = arith.constant dense<0.000000e+00> : vector<1xf32>
    %48 = vector.multi_reduction <add>, %47, %cst_15 [1, 2] : vector<1x4x78xf32> to vector<1xf32>
    %49 = vector.shape_cast %48 : vector<1xf32> to vector<1x1x1xf32>
    %50 = vector.extract %49[0, 0, 0] : f32 from vector<1x1x1xf32>
    %cst_16 = arith.constant 3.120000e+02 : f32
    %51 = arith.divf %45, %cst_16 : f32
    %cst_17 = arith.constant 3.120000e+02 : f32
    %52 = arith.divf %50, %cst_17 : f32
    %53 = arith.mulf %51, %51 : f32
    %54 = arith.subf %52, %53 : f32
    %55 = vector.broadcast %51 : f32 to vector<4x78xf32>
    %56 = arith.subf %41, %55 : vector<4x78xf32>
    %cst_18 = arith.constant 9.99999974E-6 : f32
    %57 = arith.addf %54, %cst_18 : f32
    %58 = math.rsqrt %57 : f32
    %59 = vector.broadcast %58 : f32 to vector<4x78xf32>
    %60 = arith.mulf %56, %59 : vector<4x78xf32>
    %c4 = arith.constant 4 : index
    %61 = memref.load %arg4[%c4] : memref<9xf32, #tpu.memory_space<smem>>
    %62 = vector.broadcast %61 : f32 to vector<4x78xf32>
    %63 = arith.mulf %62, %60 : vector<4x78xf32>
    %c5 = arith.constant 5 : index
    %64 = memref.load %arg4[%c5] : memref<9xf32, #tpu.memory_space<smem>>
    %65 = vector.broadcast %64 : f32 to vector<4x78xf32>
    %66 = arith.addf %63, %65 : vector<4x78xf32>
    %67 = math.tanh %66 : vector<4x78xf32>
    %cst_19 = arith.constant -9.99999996E-12 : f32
    %68 = vector.broadcast %cst_19 : f32 to vector<4x78xf32>
    %69 = arith.cmpf olt, %67, %68 : vector<4x78xf32>
    %cst_20 = arith.constant -1.000000e+10 : f32
    %70 = vector.broadcast %cst_20 : f32 to vector<4x78xf32>
    %71 = arith.mulf %67, %70 : vector<4x78xf32>
    %72 = arith.select %69, %71, %67 : vector<4x78xi1>, vector<4x78xf32>
    %c0_21 = arith.constant 0 : index
    %c0_22 = arith.constant 0 : index
    %73 = vector.load %arg3[%c0_21, %c0_22] : memref<78x32xf32, #tpu.memory_space<vmem>>, vector<78x32xf32>
    %cst_23 = arith.constant dense<0.000000e+00> : vector<4x32xf32>
    %74 = tpu.matmul %72, %73, %cst_23 {dimension_numbers = #tpu.dot_dimension_numbers<[1], [0], [0], [1], [0, 0, 1, 1], [], []>} : vector<4x78xf32>, vector<78x32xf32>, vector<4x32xf32> -> vector<4x32xf32>
    %c6 = arith.constant 6 : index
    %75 = memref.load %arg4[%c6] : memref<9xf32, #tpu.memory_space<smem>>
    %76 = vector.broadcast %75 : f32 to vector<4x32xf32>
    %77 = arith.addf %74, %76 : vector<4x32xf32>
    %78 = vector.shape_cast %77 : vector<4x32xf32> to vector<1x4x32xf32>
    %cst_24 = arith.constant dense<0.000000e+00> : vector<1xf32>
    %79 = vector.multi_reduction <add>, %78, %cst_24 [1, 2] : vector<1x4x32xf32> to vector<1xf32>
    %80 = vector.shape_cast %79 : vector<1xf32> to vector<1x1x1xf32>
    %81 = vector.extract %80[0, 0, 0] : f32 from vector<1x1x1xf32>
    %82 = arith.mulf %77, %77 : vector<4x32xf32>
    %83 = vector.shape_cast %82 : vector<4x32xf32> to vector<1x4x32xf32>
    %cst_25 = arith.constant dense<0.000000e+00> : vector<1xf32>
    %84 = vector.multi_reduction <add>, %83, %cst_25 [1, 2] : vector<1x4x32xf32> to vector<1xf32>
    %85 = vector.shape_cast %84 : vector<1xf32> to vector<1x1x1xf32>
    %86 = vector.extract %85[0, 0, 0] : f32 from vector<1x1x1xf32>
    %cst_26 = arith.constant 1.280000e+02 : f32
    %87 = arith.divf %81, %cst_26 : f32
    %cst_27 = arith.constant 1.280000e+02 : f32
    %88 = arith.divf %86, %cst_27 : f32
    %89 = arith.mulf %87, %87 : f32
    %90 = arith.subf %88, %89 : f32
    %91 = vector.broadcast %87 : f32 to vector<4x32xf32>
    %92 = arith.subf %77, %91 : vector<4x32xf32>
    %cst_28 = arith.constant 9.99999974E-6 : f32
    %93 = arith.addf %90, %cst_28 : f32
    %94 = math.rsqrt %93 : f32
    %95 = vector.broadcast %94 : f32 to vector<4x32xf32>
    %96 = arith.mulf %92, %95 : vector<4x32xf32>
    %c7 = arith.constant 7 : index
    %97 = memref.load %arg4[%c7] : memref<9xf32, #tpu.memory_space<smem>>
    %98 = vector.broadcast %97 : f32 to vector<4x32xf32>
    %99 = arith.mulf %98, %96 : vector<4x32xf32>
    %c8 = arith.constant 8 : index
    %100 = memref.load %arg4[%c8] : memref<9xf32, #tpu.memory_space<smem>>
    %101 = vector.broadcast %100 : f32 to vector<4x32xf32>
    %102 = arith.addf %99, %101 : vector<4x32xf32>
    %103 = math.tanh %102 : vector<4x32xf32>
    %cst_29 = arith.constant -9.99999996E-12 : f32
    %104 = vector.broadcast %cst_29 : f32 to vector<4x32xf32>
    %105 = arith.cmpf olt, %103, %104 : vector<4x32xf32>
    %cst_30 = arith.constant -1.000000e+10 : f32
    %106 = vector.broadcast %cst_30 : f32 to vector<4x32xf32>
    %107 = arith.mulf %103, %106 : vector<4x32xf32>
    %108 = arith.select %105, %107, %103 : vector<4x32xi1>, vector<4x32xf32>
    %c0_31 = arith.constant 0 : index
    %c0_32 = arith.constant 0 : index
    %109 = vector.load %arg5[%c0_31, %c0_32] : memref<2x32xf32, #tpu.memory_space<vmem>>, vector<2x32xf32>
    %c0_33 = arith.constant 0 : index
    %c0_34 = arith.constant 0 : index
    %110 = vector.load %arg6[%c0_33, %c0_34] : memref<2x32xf32, #tpu.memory_space<vmem>>, vector<2x32xf32>
    %cst_35 = arith.constant 0.000000e+00 : f32
    %111 = vector.broadcast %cst_35 : f32 to vector<4x32xf32>
    %112 = arith.addf %108, %108 : vector<4x32xf32>
    %cst_36 = arith.constant 5.000000e-01 : f32
    %113 = vector.broadcast %cst_36 : f32 to vector<4x32xf32>
    %114 = arith.mulf %112, %113 : vector<4x32xf32>
    %115 = math.tanh %114 : vector<4x32xf32>
    %c0_37 = arith.constant 0 : index
    %c0_38 = arith.constant 0 : index
    %c0_39 = arith.constant 0 : index
    %c0_40 = arith.constant 0 : index
    %116 = vector.load %arg7[%c0_37, %c0_38, %c0_39, %c0_40] : memref<3x2x32x128xbf16, #tpu.memory_space<vmem>>, vector<1x1x32x128xbf16>
    %117 = vector.shape_cast %116 : vector<1x1x32x128xbf16> to vector<32x128xbf16>
    %c0_41 = arith.constant 0 : index
    %c0_42 = arith.constant 0 : index
    %c0_43 = arith.constant 0 : index
    %c0_44 = arith.constant 0 : index
    %118 = vector.load %arg8[%c0_41, %c0_42, %c0_43, %c0_44] : memref<3x2x32x128xbf16, #tpu.memory_space<vmem>>, vector<1x1x32x128xbf16>
    %119 = vector.shape_cast %118 : vector<1x1x32x128xbf16> to vector<32x128xbf16>
    %c0_45 = arith.constant 0 : index
    %c0_46 = arith.constant 0 : index
    %c0_47 = arith.constant 0 : index
    %c0_48 = arith.constant 0 : index
    %120 = vector.load %arg9[%c0_45, %c0_46, %c0_47, %c0_48] : memref<3x2x1x128xf32, #tpu.memory_space<vmem>>, vector<1x1x1x128xf32>
    %121 = vector.shape_cast %120 : vector<1x1x1x128xf32> to vector<1x128xf32>
    %122 = arith.truncf %115 : vector<4x32xf32> to vector<4x32xbf16>
    %cst_49 = arith.constant dense<0.000000e+00> : vector<4x128xf32>
    %123 = tpu.matmul %122, %117, %cst_49 {dimension_numbers = #tpu.dot_dimension_numbers<[1], [0], [0], [1], [0, 0, 1, 1], [], []>} : vector<4x32xbf16>, vector<32x128xbf16>, vector<4x128xf32> -> vector<4x128xf32>
    %124 = vector.broadcast %121 : vector<1x128xf32> to vector<4x128xf32>
    %125 = arith.addf %123, %124 : vector<4x128xf32>
    %126 = vector.extract_strided_slice %109 {offsets = [0, 0], sizes = [1, 32], strides = [1, 1]} : vector<2x32xf32> to vector<1x32xf32>
    %127 = vector.extract_strided_slice %110 {offsets = [0, 0], sizes = [1, 32], strides = [1, 1]} : vector<2x32xf32> to vector<1x32xf32>
    %128 = vector.extract_strided_slice %125 {offsets = [0, 0], sizes = [1, 128], strides = [1, 1]} : vector<4x128xf32> to vector<1x128xf32>
    %129 = arith.truncf %126 : vector<1x32xf32> to vector<1x32xbf16>
    %cst_50 = arith.constant dense<0.000000e+00> : vector<1x128xf32>
    %130 = tpu.matmul %129, %119, %cst_50 {dimension_numbers = #tpu.dot_dimension_numbers<[1], [0], [0], [1], [0, 0, 1, 1], [], []>} : vector<1x32xbf16>, vector<32x128xbf16>, vector<1x128xf32> -> vector<1x128xf32>
    %131 = arith.addf %128, %130 : vector<1x128xf32>
    %132 = arith.negf %131 : vector<1x128xf32>
    %133 = math.exp %132 : vector<1x128xf32>
    %cst_51 = arith.constant 1.000000e+00 : f32
    %134 = vector.broadcast %cst_51 : f32 to vector<1x128xf32>
    %135 = arith.addf %134, %133 : vector<1x128xf32>
    %136 = arith.divf %134, %135 : vector<1x128xf32>
    %137 = math.tanh %131 : vector<1x128xf32>
    %138 = vector.extract_strided_slice %136 {offsets = [0, 0], sizes = [1, 32], strides = [1, 1]} : vector<1x128xf32> to vector<1x32xf32>
    %139 = vector.extract_strided_slice %136 {offsets = [0, 32], sizes = [1, 32], strides = [1, 1]} : vector<1x128xf32> to vector<1x32xf32>
    %140 = vector.extract_strided_slice %137 {offsets = [0, 64], sizes = [1, 32], strides = [1, 1]} : vector<1x128xf32> to vector<1x32xf32>
    %141 = vector.extract_strided_slice %136 {offsets = [0, 96], sizes = [1, 32], strides = [1, 1]} : vector<1x128xf32> to vector<1x32xf32>
    %142 = arith.mulf %139, %127 : vector<1x32xf32>
    %143 = arith.mulf %138, %140 : vector<1x32xf32>
    %144 = arith.addf %142, %143 : vector<1x32xf32>
    %145 = math.tanh %144 : vector<1x32xf32>
    %146 = arith.mulf %141, %145 : vector<1x32xf32>
    %c0_52 = arith.constant 0 : index
    %c0_53 = arith.constant 0 : index
    %147 = vector.load %arg13[%c0_52, %c0_53] : memref<4x32xf32, #tpu.memory_space<vmem>>, vector<1x32xf32>
    tpu.vector_store %arg13[%c0_52, %c0_53], %146 {strides = array<i32>} : memref<4x32xf32, #tpu.memory_space<vmem>>, vector<1x32xf32>,
    %148 = vector.extract_strided_slice %125 {offsets = [1, 0], sizes = [1, 128], strides = [1, 1]} : vector<4x128xf32> to vector<1x128xf32>
    %149 = arith.truncf %146 : vector<1x32xf32> to vector<1x32xbf16>
    %cst_54 = arith.constant dense<0.000000e+00> : vector<1x128xf32>
    %150 = tpu.matmul %149, %119, %cst_54 {dimension_numbers = #tpu.dot_dimension_numbers<[1], [0], [0], [1], [0, 0, 1, 1], [], []>} : vector<1x32xbf16>, vector<32x128xbf16>, vector<1x128xf32> -> vector<1x128xf32>
    %151 = arith.addf %148, %150 : vector<1x128xf32>
    %152 = arith.negf %151 : vector<1x128xf32>
    %153 = math.exp %152 : vector<1x128xf32>
    %cst_55 = arith.constant 1.000000e+00 : f32
    %154 = vector.broadcast %cst_55 : f32 to vector<1x128xf32>
    %155 = arith.addf %154, %153 : vector<1x128xf32>
    %156 = arith.divf %154, %155 : vector<1x128xf32>
    %157 = math.tanh %151 : vector<1x128xf32>
    %158 = vector.extract_strided_slice %156 {offsets = [0, 0], sizes = [1, 32], strides = [1, 1]} : vector<1x128xf32> to vector<1x32xf32>
    %159 = vector.extract_strided_slice %156 {offsets = [0, 32], sizes = [1, 32], strides = [1, 1]} : vector<1x128xf32> to vector<1x32xf32>
    %160 = vector.extract_strided_slice %157 {offsets = [0, 64], sizes = [1, 32], strides = [1, 1]} : vector<1x128xf32> to vector<1x32xf32>
    %161 = vector.extract_strided_slice %156 {offsets = [0, 96], sizes = [1, 32], strides = [1, 1]} : vector<1x128xf32> to vector<1x32xf32>
    %162 = arith.mulf %159, %144 : vector<1x32xf32>
    %163 = arith.mulf %158, %160 : vector<1x32xf32>
    %164 = arith.addf %162, %163 : vector<1x32xf32>
    %165 = math.tanh %164 : vector<1x32xf32>
    %166 = arith.mulf %161, %165 : vector<1x32xf32>
    %c1_56 = arith.constant 1 : index
    %c0_57 = arith.constant 0 : index
    %167 = vector.load %arg13[%c1_56, %c0_57] : memref<4x32xf32, #tpu.memory_space<vmem>>, vector<1x32xf32>
    tpu.vector_store %arg13[%c1_56, %c0_57], %166 {strides = array<i32>} : memref<4x32xf32, #tpu.memory_space<vmem>>, vector<1x32xf32>,
    %168 = vector.extract_strided_slice %125 {offsets = [2, 0], sizes = [1, 128], strides = [1, 1]} : vector<4x128xf32> to vector<1x128xf32>
    %169 = arith.truncf %166 : vector<1x32xf32> to vector<1x32xbf16>
    %cst_58 = arith.constant dense<0.000000e+00> : vector<1x128xf32>
    %170 = tpu.matmul %169, %119, %cst_58 {dimension_numbers = #tpu.dot_dimension_numbers<[1], [0], [0], [1], [0, 0, 1, 1], [], []>} : vector<1x32xbf16>, vector<32x128xbf16>, vector<1x128xf32> -> vector<1x128xf32>
    %171 = arith.addf %168, %170 : vector<1x128xf32>
    %172 = arith.negf %171 : vector<1x128xf32>
    %173 = math.exp %172 : vector<1x128xf32>
    %cst_59 = arith.constant 1.000000e+00 : f32
    %174 = vector.broadcast %cst_59 : f32 to vector<1x128xf32>
    %175 = arith.addf %174, %173 : vector<1x128xf32>
    %176 = arith.divf %174, %175 : vector<1x128xf32>
    %177 = math.tanh %171 : vector<1x128xf32>
    %178 = vector.extract_strided_slice %176 {offsets = [0, 0], sizes = [1, 32], strides = [1, 1]} : vector<1x128xf32> to vector<1x32xf32>
    %179 = vector.extract_strided_slice %176 {offsets = [0, 32], sizes = [1, 32], strides = [1, 1]} : vector<1x128xf32> to vector<1x32xf32>
    %180 = vector.extract_strided_slice %177 {offsets = [0, 64], sizes = [1, 32], strides = [1, 1]} : vector<1x128xf32> to vector<1x32xf32>
    %181 = vector.extract_strided_slice %176 {offsets = [0, 96], sizes = [1, 32], strides = [1, 1]} : vector<1x128xf32> to vector<1x32xf32>
    %182 = arith.mulf %179, %164 : vector<1x32xf32>
    %183 = arith.mulf %178, %180 : vector<1x32xf32>
    %184 = arith.addf %182, %183 : vector<1x32xf32>
    %185 = math.tanh %184 : vector<1x32xf32>
    %186 = arith.mulf %181, %185 : vector<1x32xf32>
    %c2_60 = arith.constant 2 : index
    %c0_61 = arith.constant 0 : index
    %187 = vector.load %arg13[%c2_60, %c0_61] : memref<4x32xf32, #tpu.memory_space<vmem>>, vector<1x32xf32>
    tpu.vector_store %arg13[%c2_60, %c0_61], %186 {strides = array<i32>} : memref<4x32xf32, #tpu.memory_space<vmem>>, vector<1x32xf32>,
    %188 = vector.extract_strided_slice %125 {offsets = [3, 0], sizes = [1, 128], strides = [1, 1]} : vector<4x128xf32> to vector<1x128xf32>
    %189 = arith.truncf %186 : vector<1x32xf32> to vector<1x32xbf16>
    %cst_62 = arith.constant dense<0.000000e+00> : vector<1x128xf32>
    %190 = tpu.matmul %189, %119, %cst_62 {dimension_numbers = #tpu.dot_dimension_numbers<[1], [0], [0], [1], [0, 0, 1, 1], [], []>} : vector<1x32xbf16>, vector<32x128xbf16>, vector<1x128xf32> -> vector<1x128xf32>
    %191 = arith.addf %188, %190 : vector<1x128xf32>
    %192 = arith.negf %191 : vector<1x128xf32>
    %193 = math.exp %192 : vector<1x128xf32>
    %cst_63 = arith.constant 1.000000e+00 : f32
    %194 = vector.broadcast %cst_63 : f32 to vector<1x128xf32>
    %195 = arith.addf %194, %193 : vector<1x128xf32>
    %196 = arith.divf %194, %195 : vector<1x128xf32>
    %197 = math.tanh %191 : vector<1x128xf32>
    %198 = vector.extract_strided_slice %196 {offsets = [0, 0], sizes = [1, 32], strides = [1, 1]} : vector<1x128xf32> to vector<1x32xf32>
    %199 = vector.extract_strided_slice %196 {offsets = [0, 32], sizes = [1, 32], strides = [1, 1]} : vector<1x128xf32> to vector<1x32xf32>
    %200 = vector.extract_strided_slice %197 {offsets = [0, 64], sizes = [1, 32], strides = [1, 1]} : vector<1x128xf32> to vector<1x32xf32>
    %201 = vector.extract_strided_slice %196 {offsets = [0, 96], sizes = [1, 32], strides = [1, 1]} : vector<1x128xf32> to vector<1x32xf32>
    %202 = arith.mulf %199, %184 : vector<1x32xf32>
    %203 = arith.mulf %198, %200 : vector<1x32xf32>
    %204 = arith.addf %202, %203 : vector<1x32xf32>
    %205 = math.tanh %204 : vector<1x32xf32>
    %206 = arith.mulf %201, %205 : vector<1x32xf32>
    %c3_64 = arith.constant 3 : index
    %c0_65 = arith.constant 0 : index
    %207 = vector.load %arg13[%c3_64, %c0_65] : memref<4x32xf32, #tpu.memory_space<vmem>>, vector<1x32xf32>
    tpu.vector_store %arg13[%c3_64, %c0_65], %206 {strides = array<i32>} : memref<4x32xf32, #tpu.memory_space<vmem>>, vector<1x32xf32>,
    %c0_66 = arith.constant 0 : index
    %c0_67 = arith.constant 0 : index
    %208 = vector.load %arg13[%c0_66, %c0_67] : memref<4x32xf32, #tpu.memory_space<vmem>>, vector<4x32xf32>
    %c0_68 = arith.constant 0 : index
    %c1_69 = arith.constant 1 : index
    %c0_70 = arith.constant 0 : index
    %c0_71 = arith.constant 0 : index
    %209 = vector.load %arg7[%c0_68, %c1_69, %c0_70, %c0_71] : memref<3x2x32x128xbf16, #tpu.memory_space<vmem>>, vector<1x1x32x128xbf16>
    %210 = vector.shape_cast %209 : vector<1x1x32x128xbf16> to vector<32x128xbf16>
    %c0_72 = arith.constant 0 : index
    %c1_73 = arith.constant 1 : index
    %c0_74 = arith.constant 0 : index
    %c0_75 = arith.constant 0 : index
    %211 = vector.load %arg8[%c0_72, %c1_73, %c0_74, %c0_75] : memref<3x2x32x128xbf16, #tpu.memory_space<vmem>>, vector<1x1x32x128xbf16>
    %212 = vector.shape_cast %211 : vector<1x1x32x128xbf16> to vector<32x128xbf16>
    %c0_76 = arith.constant 0 : index
    %c1_77 = arith.constant 1 : index
    %c0_78 = arith.constant 0 : index
    %c0_79 = arith.constant 0 : index
    %213 = vector.load %arg9[%c0_76, %c1_77, %c0_78, %c0_79] : memref<3x2x1x128xf32, #tpu.memory_space<vmem>>, vector<1x1x1x128xf32>
    %214 = vector.shape_cast %213 : vector<1x1x1x128xf32> to vector<1x128xf32>
    %215 = arith.truncf %208 : vector<4x32xf32> to vector<4x32xbf16>
    %cst_80 = arith.constant dense<0.000000e+00> : vector<4x128xf32>
    %216 = tpu.matmul %215, %210, %cst_80 {dimension_numbers = #tpu.dot_dimension_numbers<[1], [0], [0], [1], [0, 0, 1, 1], [], []>} : vector<4x32xbf16>, vector<32x128xbf16>, vector<4x128xf32> -> vector<4x128xf32>
    %217 = vector.broadcast %214 : vector<1x128xf32> to vector<4x128xf32>
    %218 = arith.addf %216, %217 : vector<4x128xf32>
    %219 = vector.extract_strided_slice %109 {offsets = [1, 0], sizes = [1, 32], strides = [1, 1]} : vector<2x32xf32> to vector<1x32xf32>
    %220 = vector.extract_strided_slice %110 {offsets = [1, 0], sizes = [1, 32], strides = [1, 1]} : vector<2x32xf32> to vector<1x32xf32>
    %221 = vector.extract_strided_slice %218 {offsets = [0, 0], sizes = [1, 128], strides = [1, 1]} : vector<4x128xf32> to vector<1x128xf32>
    %222 = arith.truncf %219 : vector<1x32xf32> to vector<1x32xbf16>
    %cst_81 = arith.constant dense<0.000000e+00> : vector<1x128xf32>
    %223 = tpu.matmul %222, %212, %cst_81 {dimension_numbers = #tpu.dot_dimension_numbers<[1], [0], [0], [1], [0, 0, 1, 1], [], []>} : vector<1x32xbf16>, vector<32x128xbf16>, vector<1x128xf32> -> vector<1x128xf32>
    %224 = arith.addf %221, %223 : vector<1x128xf32>
    %225 = arith.negf %224 : vector<1x128xf32>
    %226 = math.exp %225 : vector<1x128xf32>
    %cst_82 = arith.constant 1.000000e+00 : f32
    %227 = vector.broadcast %cst_82 : f32 to vector<1x128xf32>
    %228 = arith.addf %227, %226 : vector<1x128xf32>
    %229 = arith.divf %227, %228 : vector<1x128xf32>
    %230 = math.tanh %224 : vector<1x128xf32>
    %231 = vector.extract_strided_slice %229 {offsets = [0, 0], sizes = [1, 32], strides = [1, 1]} : vector<1x128xf32> to vector<1x32xf32>
    %232 = vector.extract_strided_slice %229 {offsets = [0, 32], sizes = [1, 32], strides = [1, 1]} : vector<1x128xf32> to vector<1x32xf32>
    %233 = vector.extract_strided_slice %230 {offsets = [0, 64], sizes = [1, 32], strides = [1, 1]} : vector<1x128xf32> to vector<1x32xf32>
    %234 = vector.extract_strided_slice %229 {offsets = [0, 96], sizes = [1, 32], strides = [1, 1]} : vector<1x128xf32> to vector<1x32xf32>
    %235 = arith.mulf %232, %220 : vector<1x32xf32>
    %236 = arith.mulf %231, %233 : vector<1x32xf32>
    %237 = arith.addf %235, %236 : vector<1x32xf32>
    %238 = math.tanh %237 : vector<1x32xf32>
    %239 = arith.mulf %234, %238 : vector<1x32xf32>
    %c0_83 = arith.constant 0 : index
    %c0_84 = arith.constant 0 : index
    %240 = vector.load %arg13[%c0_83, %c0_84] : memref<4x32xf32, #tpu.memory_space<vmem>>, vector<1x32xf32>
    tpu.vector_store %arg13[%c0_83, %c0_84], %239 {strides = array<i32>} : memref<4x32xf32, #tpu.memory_space<vmem>>, vector<1x32xf32>,
    %241 = vector.extract_strided_slice %218 {offsets = [1, 0], sizes = [1, 128], strides = [1, 1]} : vector<4x128xf32> to vector<1x128xf32>
    %242 = arith.truncf %239 : vector<1x32xf32> to vector<1x32xbf16>
    %cst_85 = arith.constant dense<0.000000e+00> : vector<1x128xf32>
    %243 = tpu.matmul %242, %212, %cst_85 {dimension_numbers = #tpu.dot_dimension_numbers<[1], [0], [0], [1], [0, 0, 1, 1], [], []>} : vector<1x32xbf16>, vector<32x128xbf16>, vector<1x128xf32> -> vector<1x128xf32>
    %244 = arith.addf %241, %243 : vector<1x128xf32>
    %245 = arith.negf %244 : vector<1x128xf32>
    %246 = math.exp %245 : vector<1x128xf32>
    %cst_86 = arith.constant 1.000000e+00 : f32
    %247 = vector.broadcast %cst_86 : f32 to vector<1x128xf32>
    %248 = arith.addf %247, %246 : vector<1x128xf32>
    %249 = arith.divf %247, %248 : vector<1x128xf32>
    %250 = math.tanh %244 : vector<1x128xf32>
    %251 = vector.extract_strided_slice %249 {offsets = [0, 0], sizes = [1, 32], strides = [1, 1]} : vector<1x128xf32> to vector<1x32xf32>
    %252 = vector.extract_strided_slice %249 {offsets = [0, 32], sizes = [1, 32], strides = [1, 1]} : vector<1x128xf32> to vector<1x32xf32>
    %253 = vector.extract_strided_slice %250 {offsets = [0, 64], sizes = [1, 32], strides = [1, 1]} : vector<1x128xf32> to vector<1x32xf32>
    %254 = vector.extract_strided_slice %249 {offsets = [0, 96], sizes = [1, 32], strides = [1, 1]} : vector<1x128xf32> to vector<1x32xf32>
    %255 = arith.mulf %252, %237 : vector<1x32xf32>
    %256 = arith.mulf %251, %253 : vector<1x32xf32>
    %257 = arith.addf %255, %256 : vector<1x32xf32>
    %258 = math.tanh %257 : vector<1x32xf32>
    %259 = arith.mulf %254, %258 : vector<1x32xf32>
    %c1_87 = arith.constant 1 : index
    %c0_88 = arith.constant 0 : index
    %260 = vector.load %arg13[%c1_87, %c0_88] : memref<4x32xf32, #tpu.memory_space<vmem>>, vector<1x32xf32>
    tpu.vector_store %arg13[%c1_87, %c0_88], %259 {strides = array<i32>} : memref<4x32xf32, #tpu.memory_space<vmem>>, vector<1x32xf32>,
    %261 = vector.extract_strided_slice %218 {offsets = [2, 0], sizes = [1, 128], strides = [1, 1]} : vector<4x128xf32> to vector<1x128xf32>
    %262 = arith.truncf %259 : vector<1x32xf32> to vector<1x32xbf16>
    %cst_89 = arith.constant dense<0.000000e+00> : vector<1x128xf32>
    %263 = tpu.matmul %262, %212, %cst_89 {dimension_numbers = #tpu.dot_dimension_numbers<[1], [0], [0], [1], [0, 0, 1, 1], [], []>} : vector<1x32xbf16>, vector<32x128xbf16>, vector<1x128xf32> -> vector<1x128xf32>
    %264 = arith.addf %261, %263 : vector<1x128xf32>
    %265 = arith.negf %264 : vector<1x128xf32>
    %266 = math.exp %265 : vector<1x128xf32>
    %cst_90 = arith.constant 1.000000e+00 : f32
    %267 = vector.broadcast %cst_90 : f32 to vector<1x128xf32>
    %268 = arith.addf %267, %266 : vector<1x128xf32>
    %269 = arith.divf %267, %268 : vector<1x128xf32>
    %270 = math.tanh %264 : vector<1x128xf32>
    %271 = vector.extract_strided_slice %269 {offsets = [0, 0], sizes = [1, 32], strides = [1, 1]} : vector<1x128xf32> to vector<1x32xf32>
    %272 = vector.extract_strided_slice %269 {offsets = [0, 32], sizes = [1, 32], strides = [1, 1]} : vector<1x128xf32> to vector<1x32xf32>
    %273 = vector.extract_strided_slice %270 {offsets = [0, 64], sizes = [1, 32], strides = [1, 1]} : vector<1x128xf32> to vector<1x32xf32>
    %274 = vector.extract_strided_slice %269 {offsets = [0, 96], sizes = [1, 32], strides = [1, 1]} : vector<1x128xf32> to vector<1x32xf32>
    %275 = arith.mulf %272, %257 : vector<1x32xf32>
    %276 = arith.mulf %271, %273 : vector<1x32xf32>
    %277 = arith.addf %275, %276 : vector<1x32xf32>
    %278 = math.tanh %277 : vector<1x32xf32>
    %279 = arith.mulf %274, %278 : vector<1x32xf32>
    %c2_91 = arith.constant 2 : index
    %c0_92 = arith.constant 0 : index
    %280 = vector.load %arg13[%c2_91, %c0_92] : memref<4x32xf32, #tpu.memory_space<vmem>>, vector<1x32xf32>
    tpu.vector_store %arg13[%c2_91, %c0_92], %279 {strides = array<i32>} : memref<4x32xf32, #tpu.memory_space<vmem>>, vector<1x32xf32>,
    %281 = vector.extract_strided_slice %218 {offsets = [3, 0], sizes = [1, 128], strides = [1, 1]} : vector<4x128xf32> to vector<1x128xf32>
    %282 = arith.truncf %279 : vector<1x32xf32> to vector<1x32xbf16>
    %cst_93 = arith.constant dense<0.000000e+00> : vector<1x128xf32>
    %283 = tpu.matmul %282, %212, %cst_93 {dimension_numbers = #tpu.dot_dimension_numbers<[1], [0], [0], [1], [0, 0, 1, 1], [], []>} : vector<1x32xbf16>, vector<32x128xbf16>, vector<1x128xf32> -> vector<1x128xf32>
    %284 = arith.addf %281, %283 : vector<1x128xf32>
    %285 = arith.negf %284 : vector<1x128xf32>
    %286 = math.exp %285 : vector<1x128xf32>
    %cst_94 = arith.constant 1.000000e+00 : f32
    %287 = vector.broadcast %cst_94 : f32 to vector<1x128xf32>
    %288 = arith.addf %287, %286 : vector<1x128xf32>
    %289 = arith.divf %287, %288 : vector<1x128xf32>
    %290 = math.tanh %284 : vector<1x128xf32>
    %291 = vector.extract_strided_slice %289 {offsets = [0, 0], sizes = [1, 32], strides = [1, 1]} : vector<1x128xf32> to vector<1x32xf32>
    %292 = vector.extract_strided_slice %289 {offsets = [0, 32], sizes = [1, 32], strides = [1, 1]} : vector<1x128xf32> to vector<1x32xf32>
    %293 = vector.extract_strided_slice %290 {offsets = [0, 64], sizes = [1, 32], strides = [1, 1]} : vector<1x128xf32> to vector<1x32xf32>
    %294 = vector.extract_strided_slice %289 {offsets = [0, 96], sizes = [1, 32], strides = [1, 1]} : vector<1x128xf32> to vector<1x32xf32>
    %295 = arith.mulf %292, %277 : vector<1x32xf32>
    %296 = arith.mulf %291, %293 : vector<1x32xf32>
    %297 = arith.addf %295, %296 : vector<1x32xf32>
    %298 = math.tanh %297 : vector<1x32xf32>
    %299 = arith.mulf %294, %298 : vector<1x32xf32>
    %c3_95 = arith.constant 3 : index
    %c0_96 = arith.constant 0 : index
    %300 = vector.load %arg13[%c3_95, %c0_96] : memref<4x32xf32, #tpu.memory_space<vmem>>, vector<1x32xf32>
    tpu.vector_store %arg13[%c3_95, %c0_96], %299 {strides = array<i32>} : memref<4x32xf32, #tpu.memory_space<vmem>>, vector<1x32xf32>,
    %c0_97 = arith.constant 0 : index
    %c0_98 = arith.constant 0 : index
    %301 = vector.load %arg13[%c0_97, %c0_98] : memref<4x32xf32, #tpu.memory_space<vmem>>, vector<4x32xf32>
    %302 = tpu.concatenate %206, %299 in 0 : vector<1x32xf32>, vector<1x32xf32> -> vector<2x32xf32>
    %303 = tpu.concatenate %204, %297 in 0 : vector<1x32xf32>, vector<1x32xf32> -> vector<2x32xf32>
    %304 = arith.addf %108, %301 : vector<4x32xf32>
    %cst_99 = arith.constant -9.99999996E-12 : f32
    %305 = vector.broadcast %cst_99 : f32 to vector<4x32xf32>
    %306 = arith.cmpf olt, %304, %305 : vector<4x32xf32>
    %cst_100 = arith.constant -1.000000e+10 : f32
    %307 = vector.broadcast %cst_100 : f32 to vector<4x32xf32>
    %308 = arith.mulf %304, %307 : vector<4x32xf32>
    %309 = arith.select %306, %308, %304 : vector<4x32xi1>, vector<4x32xf32>
    %310 = arith.addf %309, %108 : vector<4x32xf32>
    %cst_101 = arith.constant 5.000000e-01 : f32
    %311 = vector.broadcast %cst_101 : f32 to vector<4x32xf32>
    %312 = arith.mulf %310, %311 : vector<4x32xf32>
    %313 = math.tanh %312 : vector<4x32xf32>
    %c1_102 = arith.constant 1 : index
    %c0_103 = arith.constant 0 : index
    %c0_104 = arith.constant 0 : index
    %c0_105 = arith.constant 0 : index
    %314 = vector.load %arg7[%c1_102, %c0_103, %c0_104, %c0_105] : memref<3x2x32x128xbf16, #tpu.memory_space<vmem>>, vector<1x1x32x128xbf16>
    %315 = vector.shape_cast %314 : vector<1x1x32x128xbf16> to vector<32x128xbf16>
    %c1_106 = arith.constant 1 : index
    %c0_107 = arith.constant 0 : index
    %c0_108 = arith.constant 0 : index
    %c0_109 = arith.constant 0 : index
    %316 = vector.load %arg8[%c1_106, %c0_107, %c0_108, %c0_109] : memref<3x2x32x128xbf16, #tpu.memory_space<vmem>>, vector<1x1x32x128xbf16>
    %317 = vector.shape_cast %316 : vector<1x1x32x128xbf16> to vector<32x128xbf16>
    %c1_110 = arith.constant 1 : index
    %c0_111 = arith.constant 0 : index
    %c0_112 = arith.constant 0 : index
    %c0_113 = arith.constant 0 : index
    %318 = vector.load %arg9[%c1_110, %c0_111, %c0_112, %c0_113] : memref<3x2x1x128xf32, #tpu.memory_space<vmem>>, vector<1x1x1x128xf32>
    %319 = vector.shape_cast %318 : vector<1x1x1x128xf32> to vector<1x128xf32>
    %320 = arith.truncf %313 : vector<4x32xf32> to vector<4x32xbf16>
    %cst_114 = arith.constant dense<0.000000e+00> : vector<4x128xf32>
    %321 = tpu.matmul %320, %315, %cst_114 {dimension_numbers = #tpu.dot_dimension_numbers<[1], [0], [0], [1], [0, 0, 1, 1], [], []>} : vector<4x32xbf16>, vector<32x128xbf16>, vector<4x128xf32> -> vector<4x128xf32>
    %322 = vector.broadcast %319 : vector<1x128xf32> to vector<4x128xf32>
    %323 = arith.addf %321, %322 : vector<4x128xf32>
    %324 = vector.extract_strided_slice %302 {offsets = [0, 0], sizes = [1, 32], strides = [1, 1]} : vector<2x32xf32> to vector<1x32xf32>
    %325 = vector.extract_strided_slice %303 {offsets = [0, 0], sizes = [1, 32], strides = [1, 1]} : vector<2x32xf32> to vector<1x32xf32>
    %326 = vector.extract_strided_slice %323 {offsets = [0, 0], sizes = [1, 128], strides = [1, 1]} : vector<4x128xf32> to vector<1x128xf32>
    %327 = arith.truncf %324 : vector<1x32xf32> to vector<1x32xbf16>
    %cst_115 = arith.constant dense<0.000000e+00> : vector<1x128xf32>
    %328 = tpu.matmul %327, %317, %cst_115 {dimension_numbers = #tpu.dot_dimension_numbers<[1], [0], [0], [1], [0, 0, 1, 1], [], []>} : vector<1x32xbf16>, vector<32x128xbf16>, vector<1x128xf32> -> vector<1x128xf32>
    %329 = arith.addf %326, %328 : vector<1x128xf32>
    %330 = arith.negf %329 : vector<1x128xf32>
    %331 = math.exp %330 : vector<1x128xf32>
    %cst_116 = arith.constant 1.000000e+00 : f32
    %332 = vector.broadcast %cst_116 : f32 to vector<1x128xf32>
    %333 = arith.addf %332, %331 : vector<1x128xf32>
    %334 = arith.divf %332, %333 : vector<1x128xf32>
    %335 = math.tanh %329 : vector<1x128xf32>
    %336 = vector.extract_strided_slice %334 {offsets = [0, 0], sizes = [1, 32], strides = [1, 1]} : vector<1x128xf32> to vector<1x32xf32>
    %337 = vector.extract_strided_slice %334 {offsets = [0, 32], sizes = [1, 32], strides = [1, 1]} : vector<1x128xf32> to vector<1x32xf32>
    %338 = vector.extract_strided_slice %335 {offsets = [0, 64], sizes = [1, 32], strides = [1, 1]} : vector<1x128xf32> to vector<1x32xf32>
    %339 = vector.extract_strided_slice %334 {offsets = [0, 96], sizes = [1, 32], strides = [1, 1]} : vector<1x128xf32> to vector<1x32xf32>
    %340 = arith.mulf %337, %325 : vector<1x32xf32>
    %341 = arith.mulf %336, %338 : vector<1x32xf32>
    %342 = arith.addf %340, %341 : vector<1x32xf32>
    %343 = math.tanh %342 : vector<1x32xf32>
    %344 = arith.mulf %339, %343 : vector<1x32xf32>
    %c0_117 = arith.constant 0 : index
    %c0_118 = arith.constant 0 : index
    %345 = vector.load %arg13[%c0_117, %c0_118] : memref<4x32xf32, #tpu.memory_space<vmem>>, vector<1x32xf32>
    tpu.vector_store %arg13[%c0_117, %c0_118], %344 {strides = array<i32>} : memref<4x32xf32, #tpu.memory_space<vmem>>, vector<1x32xf32>,
    %346 = vector.extract_strided_slice %323 {offsets = [1, 0], sizes = [1, 128], strides = [1, 1]} : vector<4x128xf32> to vector<1x128xf32>
    %347 = arith.truncf %344 : vector<1x32xf32> to vector<1x32xbf16>
    %cst_119 = arith.constant dense<0.000000e+00> : vector<1x128xf32>
    %348 = tpu.matmul %347, %317, %cst_119 {dimension_numbers = #tpu.dot_dimension_numbers<[1], [0], [0], [1], [0, 0, 1, 1], [], []>} : vector<1x32xbf16>, vector<32x128xbf16>, vector<1x128xf32> -> vector<1x128xf32>
    %349 = arith.addf %346, %348 : vector<1x128xf32>
    %350 = arith.negf %349 : vector<1x128xf32>
    %351 = math.exp %350 : vector<1x128xf32>
    %cst_120 = arith.constant 1.000000e+00 : f32
    %352 = vector.broadcast %cst_120 : f32 to vector<1x128xf32>
    %353 = arith.addf %352, %351 : vector<1x128xf32>
    %354 = arith.divf %352, %353 : vector<1x128xf32>
    %355 = math.tanh %349 : vector<1x128xf32>
    %356 = vector.extract_strided_slice %354 {offsets = [0, 0], sizes = [1, 32], strides = [1, 1]} : vector<1x128xf32> to vector<1x32xf32>
    %357 = vector.extract_strided_slice %354 {offsets = [0, 32], sizes = [1, 32], strides = [1, 1]} : vector<1x128xf32> to vector<1x32xf32>
    %358 = vector.extract_strided_slice %355 {offsets = [0, 64], sizes = [1, 32], strides = [1, 1]} : vector<1x128xf32> to vector<1x32xf32>
    %359 = vector.extract_strided_slice %354 {offsets = [0, 96], sizes = [1, 32], strides = [1, 1]} : vector<1x128xf32> to vector<1x32xf32>
    %360 = arith.mulf %357, %342 : vector<1x32xf32>
    %361 = arith.mulf %356, %358 : vector<1x32xf32>
    %362 = arith.addf %360, %361 : vector<1x32xf32>
    %363 = math.tanh %362 : vector<1x32xf32>
    %364 = arith.mulf %359, %363 : vector<1x32xf32>
    %c1_121 = arith.constant 1 : index
    %c0_122 = arith.constant 0 : index
    %365 = vector.load %arg13[%c1_121, %c0_122] : memref<4x32xf32, #tpu.memory_space<vmem>>, vector<1x32xf32>
    tpu.vector_store %arg13[%c1_121, %c0_122], %364 {strides = array<i32>} : memref<4x32xf32, #tpu.memory_space<vmem>>, vector<1x32xf32>,
    %366 = vector.extract_strided_slice %323 {offsets = [2, 0], sizes = [1, 128], strides = [1, 1]} : vector<4x128xf32> to vector<1x128xf32>
    %367 = arith.truncf %364 : vector<1x32xf32> to vector<1x32xbf16>
    %cst_123 = arith.constant dense<0.000000e+00> : vector<1x128xf32>
    %368 = tpu.matmul %367, %317, %cst_123 {dimension_numbers = #tpu.dot_dimension_numbers<[1], [0], [0], [1], [0, 0, 1, 1], [], []>} : vector<1x32xbf16>, vector<32x128xbf16>, vector<1x128xf32> -> vector<1x128xf32>
    %369 = arith.addf %366, %368 : vector<1x128xf32>
    %370 = arith.negf %369 : vector<1x128xf32>
    %371 = math.exp %370 : vector<1x128xf32>
    %cst_124 = arith.constant 1.000000e+00 : f32
    %372 = vector.broadcast %cst_124 : f32 to vector<1x128xf32>
    %373 = arith.addf %372, %371 : vector<1x128xf32>
    %374 = arith.divf %372, %373 : vector<1x128xf32>
    %375 = math.tanh %369 : vector<1x128xf32>
    %376 = vector.extract_strided_slice %374 {offsets = [0, 0], sizes = [1, 32], strides = [1, 1]} : vector<1x128xf32> to vector<1x32xf32>
    %377 = vector.extract_strided_slice %374 {offsets = [0, 32], sizes = [1, 32], strides = [1, 1]} : vector<1x128xf32> to vector<1x32xf32>
    %378 = vector.extract_strided_slice %375 {offsets = [0, 64], sizes = [1, 32], strides = [1, 1]} : vector<1x128xf32> to vector<1x32xf32>
    %379 = vector.extract_strided_slice %374 {offsets = [0, 96], sizes = [1, 32], strides = [1, 1]} : vector<1x128xf32> to vector<1x32xf32>
    %380 = arith.mulf %377, %362 : vector<1x32xf32>
    %381 = arith.mulf %376, %378 : vector<1x32xf32>
    %382 = arith.addf %380, %381 : vector<1x32xf32>
    %383 = math.tanh %382 : vector<1x32xf32>
    %384 = arith.mulf %379, %383 : vector<1x32xf32>
    %c2_125 = arith.constant 2 : index
    %c0_126 = arith.constant 0 : index
    %385 = vector.load %arg13[%c2_125, %c0_126] : memref<4x32xf32, #tpu.memory_space<vmem>>, vector<1x32xf32>
    tpu.vector_store %arg13[%c2_125, %c0_126], %384 {strides = array<i32>} : memref<4x32xf32, #tpu.memory_space<vmem>>, vector<1x32xf32>,
    %386 = vector.extract_strided_slice %323 {offsets = [3, 0], sizes = [1, 128], strides = [1, 1]} : vector<4x128xf32> to vector<1x128xf32>
    %387 = arith.truncf %384 : vector<1x32xf32> to vector<1x32xbf16>
    %cst_127 = arith.constant dense<0.000000e+00> : vector<1x128xf32>
    %388 = tpu.matmul %387, %317, %cst_127 {dimension_numbers = #tpu.dot_dimension_numbers<[1], [0], [0], [1], [0, 0, 1, 1], [], []>} : vector<1x32xbf16>, vector<32x128xbf16>, vector<1x128xf32> -> vector<1x128xf32>
    %389 = arith.addf %386, %388 : vector<1x128xf32>
    %390 = arith.negf %389 : vector<1x128xf32>
    %391 = math.exp %390 : vector<1x128xf32>
    %cst_128 = arith.constant 1.000000e+00 : f32
    %392 = vector.broadcast %cst_128 : f32 to vector<1x128xf32>
    %393 = arith.addf %392, %391 : vector<1x128xf32>
    %394 = arith.divf %392, %393 : vector<1x128xf32>
    %395 = math.tanh %389 : vector<1x128xf32>
    %396 = vector.extract_strided_slice %394 {offsets = [0, 0], sizes = [1, 32], strides = [1, 1]} : vector<1x128xf32> to vector<1x32xf32>
    %397 = vector.extract_strided_slice %394 {offsets = [0, 32], sizes = [1, 32], strides = [1, 1]} : vector<1x128xf32> to vector<1x32xf32>
    %398 = vector.extract_strided_slice %395 {offsets = [0, 64], sizes = [1, 32], strides = [1, 1]} : vector<1x128xf32> to vector<1x32xf32>
    %399 = vector.extract_strided_slice %394 {offsets = [0, 96], sizes = [1, 32], strides = [1, 1]} : vector<1x128xf32> to vector<1x32xf32>
    %400 = arith.mulf %397, %382 : vector<1x32xf32>
    %401 = arith.mulf %396, %398 : vector<1x32xf32>
    %402 = arith.addf %400, %401 : vector<1x32xf32>
    %403 = math.tanh %402 : vector<1x32xf32>
    %404 = arith.mulf %399, %403 : vector<1x32xf32>
    %c3_129 = arith.constant 3 : index
    %c0_130 = arith.constant 0 : index
    %405 = vector.load %arg13[%c3_129, %c0_130] : memref<4x32xf32, #tpu.memory_space<vmem>>, vector<1x32xf32>
    tpu.vector_store %arg13[%c3_129, %c0_130], %404 {strides = array<i32>} : memref<4x32xf32, #tpu.memory_space<vmem>>, vector<1x32xf32>,
    %c0_131 = arith.constant 0 : index
    %c0_132 = arith.constant 0 : index
    %406 = vector.load %arg13[%c0_131, %c0_132] : memref<4x32xf32, #tpu.memory_space<vmem>>, vector<4x32xf32>
    %c1_133 = arith.constant 1 : index
    %c1_134 = arith.constant 1 : index
    %c0_135 = arith.constant 0 : index
    %c0_136 = arith.constant 0 : index
    %407 = vector.load %arg7[%c1_133, %c1_134, %c0_135, %c0_136] : memref<3x2x32x128xbf16, #tpu.memory_space<vmem>>, vector<1x1x32x128xbf16>
    %408 = vector.shape_cast %407 : vector<1x1x32x128xbf16> to vector<32x128xbf16>
    %c1_137 = arith.constant 1 : index
    %c1_138 = arith.constant 1 : index
    %c0_139 = arith.constant 0 : index
    %c0_140 = arith.constant 0 : index
    %409 = vector.load %arg8[%c1_137, %c1_138, %c0_139, %c0_140] : memref<3x2x32x128xbf16, #tpu.memory_space<vmem>>, vector<1x1x32x128xbf16>
    %410 = vector.shape_cast %409 : vector<1x1x32x128xbf16> to vector<32x128xbf16>
    %c1_141 = arith.constant 1 : index
    %c1_142 = arith.constant 1 : index
    %c0_143 = arith.constant 0 : index
    %c0_144 = arith.constant 0 : index
    %411 = vector.load %arg9[%c1_141, %c1_142, %c0_143, %c0_144] : memref<3x2x1x128xf32, #tpu.memory_space<vmem>>, vector<1x1x1x128xf32>
    %412 = vector.shape_cast %411 : vector<1x1x1x128xf32> to vector<1x128xf32>
    %413 = arith.truncf %406 : vector<4x32xf32> to vector<4x32xbf16>
    %cst_145 = arith.constant dense<0.000000e+00> : vector<4x128xf32>
    %414 = tpu.matmul %413, %408, %cst_145 {dimension_numbers = #tpu.dot_dimension_numbers<[1], [0], [0], [1], [0, 0, 1, 1], [], []>} : vector<4x32xbf16>, vector<32x128xbf16>, vector<4x128xf32> -> vector<4x128xf32>
    %415 = vector.broadcast %412 : vector<1x128xf32> to vector<4x128xf32>
    %416 = arith.addf %414, %415 : vector<4x128xf32>
    %417 = vector.extract_strided_slice %302 {offsets = [1, 0], sizes = [1, 32], strides = [1, 1]} : vector<2x32xf32> to vector<1x32xf32>
    %418 = vector.extract_strided_slice %303 {offsets = [1, 0], sizes = [1, 32], strides = [1, 1]} : vector<2x32xf32> to vector<1x32xf32>
    %419 = vector.extract_strided_slice %416 {offsets = [0, 0], sizes = [1, 128], strides = [1, 1]} : vector<4x128xf32> to vector<1x128xf32>
    %420 = arith.truncf %417 : vector<1x32xf32> to vector<1x32xbf16>
    %cst_146 = arith.constant dense<0.000000e+00> : vector<1x128xf32>
    %421 = tpu.matmul %420, %410, %cst_146 {dimension_numbers = #tpu.dot_dimension_numbers<[1], [0], [0], [1], [0, 0, 1, 1], [], []>} : vector<1x32xbf16>, vector<32x128xbf16>, vector<1x128xf32> -> vector<1x128xf32>
    %422 = arith.addf %419, %421 : vector<1x128xf32>
    %423 = arith.negf %422 : vector<1x128xf32>
    %424 = math.exp %423 : vector<1x128xf32>
    %cst_147 = arith.constant 1.000000e+00 : f32
    %425 = vector.broadcast %cst_147 : f32 to vector<1x128xf32>
    %426 = arith.addf %425, %424 : vector<1x128xf32>
    %427 = arith.divf %425, %426 : vector<1x128xf32>
    %428 = math.tanh %422 : vector<1x128xf32>
    %429 = vector.extract_strided_slice %427 {offsets = [0, 0], sizes = [1, 32], strides = [1, 1]} : vector<1x128xf32> to vector<1x32xf32>
    %430 = vector.extract_strided_slice %427 {offsets = [0, 32], sizes = [1, 32], strides = [1, 1]} : vector<1x128xf32> to vector<1x32xf32>
    %431 = vector.extract_strided_slice %428 {offsets = [0, 64], sizes = [1, 32], strides = [1, 1]} : vector<1x128xf32> to vector<1x32xf32>
    %432 = vector.extract_strided_slice %427 {offsets = [0, 96], sizes = [1, 32], strides = [1, 1]} : vector<1x128xf32> to vector<1x32xf32>
    %433 = arith.mulf %430, %418 : vector<1x32xf32>
    %434 = arith.mulf %429, %431 : vector<1x32xf32>
    %435 = arith.addf %433, %434 : vector<1x32xf32>
    %436 = math.tanh %435 : vector<1x32xf32>
    %437 = arith.mulf %432, %436 : vector<1x32xf32>
    %c0_148 = arith.constant 0 : index
    %c0_149 = arith.constant 0 : index
    %438 = vector.load %arg13[%c0_148, %c0_149] : memref<4x32xf32, #tpu.memory_space<vmem>>, vector<1x32xf32>
    tpu.vector_store %arg13[%c0_148, %c0_149], %437 {strides = array<i32>} : memref<4x32xf32, #tpu.memory_space<vmem>>, vector<1x32xf32>,
    %439 = vector.extract_strided_slice %416 {offsets = [1, 0], sizes = [1, 128], strides = [1, 1]} : vector<4x128xf32> to vector<1x128xf32>
    %440 = arith.truncf %437 : vector<1x32xf32> to vector<1x32xbf16>
    %cst_150 = arith.constant dense<0.000000e+00> : vector<1x128xf32>
    %441 = tpu.matmul %440, %410, %cst_150 {dimension_numbers = #tpu.dot_dimension_numbers<[1], [0], [0], [1], [0, 0, 1, 1], [], []>} : vector<1x32xbf16>, vector<32x128xbf16>, vector<1x128xf32> -> vector<1x128xf32>
    %442 = arith.addf %439, %441 : vector<1x128xf32>
    %443 = arith.negf %442 : vector<1x128xf32>
    %444 = math.exp %443 : vector<1x128xf32>
    %cst_151 = arith.constant 1.000000e+00 : f32
    %445 = vector.broadcast %cst_151 : f32 to vector<1x128xf32>
    %446 = arith.addf %445, %444 : vector<1x128xf32>
    %447 = arith.divf %445, %446 : vector<1x128xf32>
    %448 = math.tanh %442 : vector<1x128xf32>
    %449 = vector.extract_strided_slice %447 {offsets = [0, 0], sizes = [1, 32], strides = [1, 1]} : vector<1x128xf32> to vector<1x32xf32>
    %450 = vector.extract_strided_slice %447 {offsets = [0, 32], sizes = [1, 32], strides = [1, 1]} : vector<1x128xf32> to vector<1x32xf32>
    %451 = vector.extract_strided_slice %448 {offsets = [0, 64], sizes = [1, 32], strides = [1, 1]} : vector<1x128xf32> to vector<1x32xf32>
    %452 = vector.extract_strided_slice %447 {offsets = [0, 96], sizes = [1, 32], strides = [1, 1]} : vector<1x128xf32> to vector<1x32xf32>
    %453 = arith.mulf %450, %435 : vector<1x32xf32>
    %454 = arith.mulf %449, %451 : vector<1x32xf32>
    %455 = arith.addf %453, %454 : vector<1x32xf32>
    %456 = math.tanh %455 : vector<1x32xf32>
    %457 = arith.mulf %452, %456 : vector<1x32xf32>
    %c1_152 = arith.constant 1 : index
    %c0_153 = arith.constant 0 : index
    %458 = vector.load %arg13[%c1_152, %c0_153] : memref<4x32xf32, #tpu.memory_space<vmem>>, vector<1x32xf32>
    tpu.vector_store %arg13[%c1_152, %c0_153], %457 {strides = array<i32>} : memref<4x32xf32, #tpu.memory_space<vmem>>, vector<1x32xf32>,
    %459 = vector.extract_strided_slice %416 {offsets = [2, 0], sizes = [1, 128], strides = [1, 1]} : vector<4x128xf32> to vector<1x128xf32>
    %460 = arith.truncf %457 : vector<1x32xf32> to vector<1x32xbf16>
    %cst_154 = arith.constant dense<0.000000e+00> : vector<1x128xf32>
    %461 = tpu.matmul %460, %410, %cst_154 {dimension_numbers = #tpu.dot_dimension_numbers<[1], [0], [0], [1], [0, 0, 1, 1], [], []>} : vector<1x32xbf16>, vector<32x128xbf16>, vector<1x128xf32> -> vector<1x128xf32>
    %462 = arith.addf %459, %461 : vector<1x128xf32>
    %463 = arith.negf %462 : vector<1x128xf32>
    %464 = math.exp %463 : vector<1x128xf32>
    %cst_155 = arith.constant 1.000000e+00 : f32
    %465 = vector.broadcast %cst_155 : f32 to vector<1x128xf32>
    %466 = arith.addf %465, %464 : vector<1x128xf32>
    %467 = arith.divf %465, %466 : vector<1x128xf32>
    %468 = math.tanh %462 : vector<1x128xf32>
    %469 = vector.extract_strided_slice %467 {offsets = [0, 0], sizes = [1, 32], strides = [1, 1]} : vector<1x128xf32> to vector<1x32xf32>
    %470 = vector.extract_strided_slice %467 {offsets = [0, 32], sizes = [1, 32], strides = [1, 1]} : vector<1x128xf32> to vector<1x32xf32>
    %471 = vector.extract_strided_slice %468 {offsets = [0, 64], sizes = [1, 32], strides = [1, 1]} : vector<1x128xf32> to vector<1x32xf32>
    %472 = vector.extract_strided_slice %467 {offsets = [0, 96], sizes = [1, 32], strides = [1, 1]} : vector<1x128xf32> to vector<1x32xf32>
    %473 = arith.mulf %470, %455 : vector<1x32xf32>
    %474 = arith.mulf %469, %471 : vector<1x32xf32>
    %475 = arith.addf %473, %474 : vector<1x32xf32>
    %476 = math.tanh %475 : vector<1x32xf32>
    %477 = arith.mulf %472, %476 : vector<1x32xf32>
    %c2_156 = arith.constant 2 : index
    %c0_157 = arith.constant 0 : index
    %478 = vector.load %arg13[%c2_156, %c0_157] : memref<4x32xf32, #tpu.memory_space<vmem>>, vector<1x32xf32>
    tpu.vector_store %arg13[%c2_156, %c0_157], %477 {strides = array<i32>} : memref<4x32xf32, #tpu.memory_space<vmem>>, vector<1x32xf32>,
    %479 = vector.extract_strided_slice %416 {offsets = [3, 0], sizes = [1, 128], strides = [1, 1]} : vector<4x128xf32> to vector<1x128xf32>
    %480 = arith.truncf %477 : vector<1x32xf32> to vector<1x32xbf16>
    %cst_158 = arith.constant dense<0.000000e+00> : vector<1x128xf32>
    %481 = tpu.matmul %480, %410, %cst_158 {dimension_numbers = #tpu.dot_dimension_numbers<[1], [0], [0], [1], [0, 0, 1, 1], [], []>} : vector<1x32xbf16>, vector<32x128xbf16>, vector<1x128xf32> -> vector<1x128xf32>
    %482 = arith.addf %479, %481 : vector<1x128xf32>
    %483 = arith.negf %482 : vector<1x128xf32>
    %484 = math.exp %483 : vector<1x128xf32>
    %cst_159 = arith.constant 1.000000e+00 : f32
    %485 = vector.broadcast %cst_159 : f32 to vector<1x128xf32>
    %486 = arith.addf %485, %484 : vector<1x128xf32>
    %487 = arith.divf %485, %486 : vector<1x128xf32>
    %488 = math.tanh %482 : vector<1x128xf32>
    %489 = vector.extract_strided_slice %487 {offsets = [0, 0], sizes = [1, 32], strides = [1, 1]} : vector<1x128xf32> to vector<1x32xf32>
    %490 = vector.extract_strided_slice %487 {offsets = [0, 32], sizes = [1, 32], strides = [1, 1]} : vector<1x128xf32> to vector<1x32xf32>
    %491 = vector.extract_strided_slice %488 {offsets = [0, 64], sizes = [1, 32], strides = [1, 1]} : vector<1x128xf32> to vector<1x32xf32>
    %492 = vector.extract_strided_slice %487 {offsets = [0, 96], sizes = [1, 32], strides = [1, 1]} : vector<1x128xf32> to vector<1x32xf32>
    %493 = arith.mulf %490, %475 : vector<1x32xf32>
    %494 = arith.mulf %489, %491 : vector<1x32xf32>
    %495 = arith.addf %493, %494 : vector<1x32xf32>
    %496 = math.tanh %495 : vector<1x32xf32>
    %497 = arith.mulf %492, %496 : vector<1x32xf32>
    %c3_160 = arith.constant 3 : index
    %c0_161 = arith.constant 0 : index
    %498 = vector.load %arg13[%c3_160, %c0_161] : memref<4x32xf32, #tpu.memory_space<vmem>>, vector<1x32xf32>
    tpu.vector_store %arg13[%c3_160, %c0_161], %497 {strides = array<i32>} : memref<4x32xf32, #tpu.memory_space<vmem>>, vector<1x32xf32>,
    %c0_162 = arith.constant 0 : index
    %c0_163 = arith.constant 0 : index
    %499 = vector.load %arg13[%c0_162, %c0_163] : memref<4x32xf32, #tpu.memory_space<vmem>>, vector<4x32xf32>
    %500 = tpu.concatenate %404, %497 in 0 : vector<1x32xf32>, vector<1x32xf32> -> vector<2x32xf32>
    %501 = tpu.concatenate %402, %495 in 0 : vector<1x32xf32>, vector<1x32xf32> -> vector<2x32xf32>
    %cst_164 = arith.constant 0.000000e+00 : f32
    %502 = vector.broadcast %cst_164 : f32 to vector<4x32xf32>
    %503 = arith.maximumf %499, %502 : vector<4x32xf32>
    %504 = arith.subf %111, %503 : vector<4x32xf32>
    %505 = arith.addf %309, %499 : vector<4x32xf32>
    %cst_165 = arith.constant -9.99999996E-12 : f32
    %506 = vector.broadcast %cst_165 : f32 to vector<4x32xf32>
    %507 = arith.cmpf olt, %505, %506 : vector<4x32xf32>
    %cst_166 = arith.constant -1.000000e+10 : f32
    %508 = vector.broadcast %cst_166 : f32 to vector<4x32xf32>
    %509 = arith.mulf %505, %508 : vector<4x32xf32>
    %510 = arith.select %507, %509, %505 : vector<4x32xi1>, vector<4x32xf32>
    %511 = arith.addf %510, %108 : vector<4x32xf32>
    %cst_167 = arith.constant 5.000000e-01 : f32
    %512 = vector.broadcast %cst_167 : f32 to vector<4x32xf32>
    %513 = arith.mulf %511, %512 : vector<4x32xf32>
    %514 = math.tanh %513 : vector<4x32xf32>
    %c2_168 = arith.constant 2 : index
    %c0_169 = arith.constant 0 : index
    %c0_170 = arith.constant 0 : index
    %c0_171 = arith.constant 0 : index
    %515 = vector.load %arg7[%c2_168, %c0_169, %c0_170, %c0_171] : memref<3x2x32x128xbf16, #tpu.memory_space<vmem>>, vector<1x1x32x128xbf16>
    %516 = vector.shape_cast %515 : vector<1x1x32x128xbf16> to vector<32x128xbf16>
    %c2_172 = arith.constant 2 : index
    %c0_173 = arith.constant 0 : index
    %c0_174 = arith.constant 0 : index
    %c0_175 = arith.constant 0 : index
    %517 = vector.load %arg8[%c2_172, %c0_173, %c0_174, %c0_175] : memref<3x2x32x128xbf16, #tpu.memory_space<vmem>>, vector<1x1x32x128xbf16>
    %518 = vector.shape_cast %517 : vector<1x1x32x128xbf16> to vector<32x128xbf16>
    %c2_176 = arith.constant 2 : index
    %c0_177 = arith.constant 0 : index
    %c0_178 = arith.constant 0 : index
    %c0_179 = arith.constant 0 : index
    %519 = vector.load %arg9[%c2_176, %c0_177, %c0_178, %c0_179] : memref<3x2x1x128xf32, #tpu.memory_space<vmem>>, vector<1x1x1x128xf32>
    %520 = vector.shape_cast %519 : vector<1x1x1x128xf32> to vector<1x128xf32>
    %521 = arith.truncf %514 : vector<4x32xf32> to vector<4x32xbf16>
    %cst_180 = arith.constant dense<0.000000e+00> : vector<4x128xf32>
    %522 = tpu.matmul %521, %516, %cst_180 {dimension_numbers = #tpu.dot_dimension_numbers<[1], [0], [0], [1], [0, 0, 1, 1], [], []>} : vector<4x32xbf16>, vector<32x128xbf16>, vector<4x128xf32> -> vector<4x128xf32>
    %523 = vector.broadcast %520 : vector<1x128xf32> to vector<4x128xf32>
    %524 = arith.addf %522, %523 : vector<4x128xf32>
    %525 = vector.extract_strided_slice %501 {offsets = [0, 0], sizes = [1, 32], strides = [1, 1]} : vector<2x32xf32> to vector<1x32xf32>
    %526 = vector.extract_strided_slice %500 {offsets = [0, 0], sizes = [1, 32], strides = [1, 1]} : vector<2x32xf32> to vector<1x32xf32>
    %527 = vector.extract_strided_slice %524 {offsets = [0, 0], sizes = [1, 128], strides = [1, 1]} : vector<4x128xf32> to vector<1x128xf32>
    %528 = arith.truncf %525 : vector<1x32xf32> to vector<1x32xbf16>
    %cst_181 = arith.constant dense<0.000000e+00> : vector<1x128xf32>
    %529 = tpu.matmul %528, %518, %cst_181 {dimension_numbers = #tpu.dot_dimension_numbers<[1], [0], [0], [1], [0, 0, 1, 1], [], []>} : vector<1x32xbf16>, vector<32x128xbf16>, vector<1x128xf32> -> vector<1x128xf32>
    %530 = arith.addf %527, %529 : vector<1x128xf32>
    %531 = arith.negf %530 : vector<1x128xf32>
    %532 = math.exp %531 : vector<1x128xf32>
    %cst_182 = arith.constant 1.000000e+00 : f32
    %533 = vector.broadcast %cst_182 : f32 to vector<1x128xf32>
    %534 = arith.addf %533, %532 : vector<1x128xf32>
    %535 = arith.divf %533, %534 : vector<1x128xf32>
    %536 = math.tanh %530 : vector<1x128xf32>
    %537 = vector.extract_strided_slice %535 {offsets = [0, 0], sizes = [1, 32], strides = [1, 1]} : vector<1x128xf32> to vector<1x32xf32>
    %538 = vector.extract_strided_slice %535 {offsets = [0, 32], sizes = [1, 32], strides = [1, 1]} : vector<1x128xf32> to vector<1x32xf32>
    %539 = vector.extract_strided_slice %536 {offsets = [0, 64], sizes = [1, 32], strides = [1, 1]} : vector<1x128xf32> to vector<1x32xf32>
    %540 = vector.extract_strided_slice %535 {offsets = [0, 96], sizes = [1, 32], strides = [1, 1]} : vector<1x128xf32> to vector<1x32xf32>
    %541 = arith.mulf %538, %526 : vector<1x32xf32>
    %542 = arith.mulf %537, %539 : vector<1x32xf32>
    %543 = arith.addf %541, %542 : vector<1x32xf32>
    %544 = math.tanh %543 : vector<1x32xf32>
    %545 = arith.mulf %540, %544 : vector<1x32xf32>
    %c0_183 = arith.constant 0 : index
    %c0_184 = arith.constant 0 : index
    %546 = vector.load %arg13[%c0_183, %c0_184] : memref<4x32xf32, #tpu.memory_space<vmem>>, vector<1x32xf32>
    tpu.vector_store %arg13[%c0_183, %c0_184], %545 {strides = array<i32>} : memref<4x32xf32, #tpu.memory_space<vmem>>, vector<1x32xf32>,
    %547 = vector.extract_strided_slice %524 {offsets = [1, 0], sizes = [1, 128], strides = [1, 1]} : vector<4x128xf32> to vector<1x128xf32>
    %548 = arith.truncf %545 : vector<1x32xf32> to vector<1x32xbf16>
    %cst_185 = arith.constant dense<0.000000e+00> : vector<1x128xf32>
    %549 = tpu.matmul %548, %518, %cst_185 {dimension_numbers = #tpu.dot_dimension_numbers<[1], [0], [0], [1], [0, 0, 1, 1], [], []>} : vector<1x32xbf16>, vector<32x128xbf16>, vector<1x128xf32> -> vector<1x128xf32>
    %550 = arith.addf %547, %549 : vector<1x128xf32>
    %551 = arith.negf %550 : vector<1x128xf32>
    %552 = math.exp %551 : vector<1x128xf32>
    %cst_186 = arith.constant 1.000000e+00 : f32
    %553 = vector.broadcast %cst_186 : f32 to vector<1x128xf32>
    %554 = arith.addf %553, %552 : vector<1x128xf32>
    %555 = arith.divf %553, %554 : vector<1x128xf32>
    %556 = math.tanh %550 : vector<1x128xf32>
    %557 = vector.extract_strided_slice %555 {offsets = [0, 0], sizes = [1, 32], strides = [1, 1]} : vector<1x128xf32> to vector<1x32xf32>
    %558 = vector.extract_strided_slice %555 {offsets = [0, 32], sizes = [1, 32], strides = [1, 1]} : vector<1x128xf32> to vector<1x32xf32>
    %559 = vector.extract_strided_slice %556 {offsets = [0, 64], sizes = [1, 32], strides = [1, 1]} : vector<1x128xf32> to vector<1x32xf32>
    %560 = vector.extract_strided_slice %555 {offsets = [0, 96], sizes = [1, 32], strides = [1, 1]} : vector<1x128xf32> to vector<1x32xf32>
    %561 = arith.mulf %558, %543 : vector<1x32xf32>
    %562 = arith.mulf %557, %559 : vector<1x32xf32>
    %563 = arith.addf %561, %562 : vector<1x32xf32>
    %564 = math.tanh %563 : vector<1x32xf32>
    %565 = arith.mulf %560, %564 : vector<1x32xf32>
    %c1_187 = arith.constant 1 : index
    %c0_188 = arith.constant 0 : index
    %566 = vector.load %arg13[%c1_187, %c0_188] : memref<4x32xf32, #tpu.memory_space<vmem>>, vector<1x32xf32>
    tpu.vector_store %arg13[%c1_187, %c0_188], %565 {strides = array<i32>} : memref<4x32xf32, #tpu.memory_space<vmem>>, vector<1x32xf32>,
    %567 = vector.extract_strided_slice %524 {offsets = [2, 0], sizes = [1, 128], strides = [1, 1]} : vector<4x128xf32> to vector<1x128xf32>
    %568 = arith.truncf %565 : vector<1x32xf32> to vector<1x32xbf16>
    %cst_189 = arith.constant dense<0.000000e+00> : vector<1x128xf32>
    %569 = tpu.matmul %568, %518, %cst_189 {dimension_numbers = #tpu.dot_dimension_numbers<[1], [0], [0], [1], [0, 0, 1, 1], [], []>} : vector<1x32xbf16>, vector<32x128xbf16>, vector<1x128xf32> -> vector<1x128xf32>
    %570 = arith.addf %567, %569 : vector<1x128xf32>
    %571 = arith.negf %570 : vector<1x128xf32>
    %572 = math.exp %571 : vector<1x128xf32>
    %cst_190 = arith.constant 1.000000e+00 : f32
    %573 = vector.broadcast %cst_190 : f32 to vector<1x128xf32>
    %574 = arith.addf %573, %572 : vector<1x128xf32>
    %575 = arith.divf %573, %574 : vector<1x128xf32>
    %576 = math.tanh %570 : vector<1x128xf32>
    %577 = vector.extract_strided_slice %575 {offsets = [0, 0], sizes = [1, 32], strides = [1, 1]} : vector<1x128xf32> to vector<1x32xf32>
    %578 = vector.extract_strided_slice %575 {offsets = [0, 32], sizes = [1, 32], strides = [1, 1]} : vector<1x128xf32> to vector<1x32xf32>
    %579 = vector.extract_strided_slice %576 {offsets = [0, 64], sizes = [1, 32], strides = [1, 1]} : vector<1x128xf32> to vector<1x32xf32>
    %580 = vector.extract_strided_slice %575 {offsets = [0, 96], sizes = [1, 32], strides = [1, 1]} : vector<1x128xf32> to vector<1x32xf32>
    %581 = arith.mulf %578, %563 : vector<1x32xf32>
    %582 = arith.mulf %577, %579 : vector<1x32xf32>
    %583 = arith.addf %581, %582 : vector<1x32xf32>
    %584 = math.tanh %583 : vector<1x32xf32>
    %585 = arith.mulf %580, %584 : vector<1x32xf32>
    %c2_191 = arith.constant 2 : index
    %c0_192 = arith.constant 0 : index
    %586 = vector.load %arg13[%c2_191, %c0_192] : memref<4x32xf32, #tpu.memory_space<vmem>>, vector<1x32xf32>
    tpu.vector_store %arg13[%c2_191, %c0_192], %585 {strides = array<i32>} : memref<4x32xf32, #tpu.memory_space<vmem>>, vector<1x32xf32>,
    %587 = vector.extract_strided_slice %524 {offsets = [3, 0], sizes = [1, 128], strides = [1, 1]} : vector<4x128xf32> to vector<1x128xf32>
    %588 = arith.truncf %585 : vector<1x32xf32> to vector<1x32xbf16>
    %cst_193 = arith.constant dense<0.000000e+00> : vector<1x128xf32>
    %589 = tpu.matmul %588, %518, %cst_193 {dimension_numbers = #tpu.dot_dimension_numbers<[1], [0], [0], [1], [0, 0, 1, 1], [], []>} : vector<1x32xbf16>, vector<32x128xbf16>, vector<1x128xf32> -> vector<1x128xf32>
    %590 = arith.addf %587, %589 : vector<1x128xf32>
    %591 = arith.negf %590 : vector<1x128xf32>
    %592 = math.exp %591 : vector<1x128xf32>
    %cst_194 = arith.constant 1.000000e+00 : f32
    %593 = vector.broadcast %cst_194 : f32 to vector<1x128xf32>
    %594 = arith.addf %593, %592 : vector<1x128xf32>
    %595 = arith.divf %593, %594 : vector<1x128xf32>
    %596 = math.tanh %590 : vector<1x128xf32>
    %597 = vector.extract_strided_slice %595 {offsets = [0, 0], sizes = [1, 32], strides = [1, 1]} : vector<1x128xf32> to vector<1x32xf32>
    %598 = vector.extract_strided_slice %595 {offsets = [0, 32], sizes = [1, 32], strides = [1, 1]} : vector<1x128xf32> to vector<1x32xf32>
    %599 = vector.extract_strided_slice %596 {offsets = [0, 64], sizes = [1, 32], strides = [1, 1]} : vector<1x128xf32> to vector<1x32xf32>
    %600 = vector.extract_strided_slice %595 {offsets = [0, 96], sizes = [1, 32], strides = [1, 1]} : vector<1x128xf32> to vector<1x32xf32>
    %601 = arith.mulf %598, %583 : vector<1x32xf32>
    %602 = arith.mulf %597, %599 : vector<1x32xf32>
    %603 = arith.addf %601, %602 : vector<1x32xf32>
    %604 = math.tanh %603 : vector<1x32xf32>
    %605 = arith.mulf %600, %604 : vector<1x32xf32>
    %c3_195 = arith.constant 3 : index
    %c0_196 = arith.constant 0 : index
    %606 = vector.load %arg13[%c3_195, %c0_196] : memref<4x32xf32, #tpu.memory_space<vmem>>, vector<1x32xf32>
    tpu.vector_store %arg13[%c3_195, %c0_196], %605 {strides = array<i32>} : memref<4x32xf32, #tpu.memory_space<vmem>>, vector<1x32xf32>,
    %c0_197 = arith.constant 0 : index
    %c0_198 = arith.constant 0 : index
    %607 = vector.load %arg13[%c0_197, %c0_198] : memref<4x32xf32, #tpu.memory_space<vmem>>, vector<4x32xf32>
    %c2_199 = arith.constant 2 : index
    %c1_200 = arith.constant 1 : index
    %c0_201 = arith.constant 0 : index
    %c0_202 = arith.constant 0 : index
    %608 = vector.load %arg7[%c2_199, %c1_200, %c0_201, %c0_202] : memref<3x2x32x128xbf16, #tpu.memory_space<vmem>>, vector<1x1x32x128xbf16>
    %609 = vector.shape_cast %608 : vector<1x1x32x128xbf16> to vector<32x128xbf16>
    %c2_203 = arith.constant 2 : index
    %c1_204 = arith.constant 1 : index
    %c0_205 = arith.constant 0 : index
    %c0_206 = arith.constant 0 : index
    %610 = vector.load %arg8[%c2_203, %c1_204, %c0_205, %c0_206] : memref<3x2x32x128xbf16, #tpu.memory_space<vmem>>, vector<1x1x32x128xbf16>
    %611 = vector.shape_cast %610 : vector<1x1x32x128xbf16> to vector<32x128xbf16>
    %c2_207 = arith.constant 2 : index
    %c1_208 = arith.constant 1 : index
    %c0_209 = arith.constant 0 : index
    %c0_210 = arith.constant 0 : index
    %612 = vector.load %arg9[%c2_207, %c1_208, %c0_209, %c0_210] : memref<3x2x1x128xf32, #tpu.memory_space<vmem>>, vector<1x1x1x128xf32>
    %613 = vector.shape_cast %612 : vector<1x1x1x128xf32> to vector<1x128xf32>
    %614 = arith.truncf %607 : vector<4x32xf32> to vector<4x32xbf16>
    %cst_211 = arith.constant dense<0.000000e+00> : vector<4x128xf32>
    %615 = tpu.matmul %614, %609, %cst_211 {dimension_numbers = #tpu.dot_dimension_numbers<[1], [0], [0], [1], [0, 0, 1, 1], [], []>} : vector<4x32xbf16>, vector<32x128xbf16>, vector<4x128xf32> -> vector<4x128xf32>
    %616 = vector.broadcast %613 : vector<1x128xf32> to vector<4x128xf32>
    %617 = arith.addf %615, %616 : vector<4x128xf32>
    %618 = vector.extract_strided_slice %501 {offsets = [1, 0], sizes = [1, 32], strides = [1, 1]} : vector<2x32xf32> to vector<1x32xf32>
    %619 = vector.extract_strided_slice %500 {offsets = [1, 0], sizes = [1, 32], strides = [1, 1]} : vector<2x32xf32> to vector<1x32xf32>
    %620 = vector.extract_strided_slice %617 {offsets = [0, 0], sizes = [1, 128], strides = [1, 1]} : vector<4x128xf32> to vector<1x128xf32>
    %621 = arith.truncf %618 : vector<1x32xf32> to vector<1x32xbf16>
    %cst_212 = arith.constant dense<0.000000e+00> : vector<1x128xf32>
    %622 = tpu.matmul %621, %611, %cst_212 {dimension_numbers = #tpu.dot_dimension_numbers<[1], [0], [0], [1], [0, 0, 1, 1], [], []>} : vector<1x32xbf16>, vector<32x128xbf16>, vector<1x128xf32> -> vector<1x128xf32>
    %623 = arith.addf %620, %622 : vector<1x128xf32>
    %624 = arith.negf %623 : vector<1x128xf32>
    %625 = math.exp %624 : vector<1x128xf32>
    %cst_213 = arith.constant 1.000000e+00 : f32
    %626 = vector.broadcast %cst_213 : f32 to vector<1x128xf32>
    %627 = arith.addf %626, %625 : vector<1x128xf32>
    %628 = arith.divf %626, %627 : vector<1x128xf32>
    %629 = math.tanh %623 : vector<1x128xf32>
    %630 = vector.extract_strided_slice %628 {offsets = [0, 0], sizes = [1, 32], strides = [1, 1]} : vector<1x128xf32> to vector<1x32xf32>
    %631 = vector.extract_strided_slice %628 {offsets = [0, 32], sizes = [1, 32], strides = [1, 1]} : vector<1x128xf32> to vector<1x32xf32>
    %632 = vector.extract_strided_slice %629 {offsets = [0, 64], sizes = [1, 32], strides = [1, 1]} : vector<1x128xf32> to vector<1x32xf32>
    %633 = vector.extract_strided_slice %628 {offsets = [0, 96], sizes = [1, 32], strides = [1, 1]} : vector<1x128xf32> to vector<1x32xf32>
    %634 = arith.mulf %631, %619 : vector<1x32xf32>
    %635 = arith.mulf %630, %632 : vector<1x32xf32>
    %636 = arith.addf %634, %635 : vector<1x32xf32>
    %637 = math.tanh %636 : vector<1x32xf32>
    %638 = arith.mulf %633, %637 : vector<1x32xf32>
    %c0_214 = arith.constant 0 : index
    %c0_215 = arith.constant 0 : index
    %639 = vector.load %arg13[%c0_214, %c0_215] : memref<4x32xf32, #tpu.memory_space<vmem>>, vector<1x32xf32>
    tpu.vector_store %arg13[%c0_214, %c0_215], %638 {strides = array<i32>} : memref<4x32xf32, #tpu.memory_space<vmem>>, vector<1x32xf32>,
    %640 = vector.extract_strided_slice %617 {offsets = [1, 0], sizes = [1, 128], strides = [1, 1]} : vector<4x128xf32> to vector<1x128xf32>
    %641 = arith.truncf %638 : vector<1x32xf32> to vector<1x32xbf16>
    %cst_216 = arith.constant dense<0.000000e+00> : vector<1x128xf32>
    %642 = tpu.matmul %641, %611, %cst_216 {dimension_numbers = #tpu.dot_dimension_numbers<[1], [0], [0], [1], [0, 0, 1, 1], [], []>} : vector<1x32xbf16>, vector<32x128xbf16>, vector<1x128xf32> -> vector<1x128xf32>
    %643 = arith.addf %640, %642 : vector<1x128xf32>
    %644 = arith.negf %643 : vector<1x128xf32>
    %645 = math.exp %644 : vector<1x128xf32>
    %cst_217 = arith.constant 1.000000e+00 : f32
    %646 = vector.broadcast %cst_217 : f32 to vector<1x128xf32>
    %647 = arith.addf %646, %645 : vector<1x128xf32>
    %648 = arith.divf %646, %647 : vector<1x128xf32>
    %649 = math.tanh %643 : vector<1x128xf32>
    %650 = vector.extract_strided_slice %648 {offsets = [0, 0], sizes = [1, 32], strides = [1, 1]} : vector<1x128xf32> to vector<1x32xf32>
    %651 = vector.extract_strided_slice %648 {offsets = [0, 32], sizes = [1, 32], strides = [1, 1]} : vector<1x128xf32> to vector<1x32xf32>
    %652 = vector.extract_strided_slice %649 {offsets = [0, 64], sizes = [1, 32], strides = [1, 1]} : vector<1x128xf32> to vector<1x32xf32>
    %653 = vector.extract_strided_slice %648 {offsets = [0, 96], sizes = [1, 32], strides = [1, 1]} : vector<1x128xf32> to vector<1x32xf32>
    %654 = arith.mulf %651, %636 : vector<1x32xf32>
    %655 = arith.mulf %650, %652 : vector<1x32xf32>
    %656 = arith.addf %654, %655 : vector<1x32xf32>
    %657 = math.tanh %656 : vector<1x32xf32>
    %658 = arith.mulf %653, %657 : vector<1x32xf32>
    %c1_218 = arith.constant 1 : index
    %c0_219 = arith.constant 0 : index
    %659 = vector.load %arg13[%c1_218, %c0_219] : memref<4x32xf32, #tpu.memory_space<vmem>>, vector<1x32xf32>
    tpu.vector_store %arg13[%c1_218, %c0_219], %658 {strides = array<i32>} : memref<4x32xf32, #tpu.memory_space<vmem>>, vector<1x32xf32>,
    %660 = vector.extract_strided_slice %617 {offsets = [2, 0], sizes = [1, 128], strides = [1, 1]} : vector<4x128xf32> to vector<1x128xf32>
    %661 = arith.truncf %658 : vector<1x32xf32> to vector<1x32xbf16>
    %cst_220 = arith.constant dense<0.000000e+00> : vector<1x128xf32>
    %662 = tpu.matmul %661, %611, %cst_220 {dimension_numbers = #tpu.dot_dimension_numbers<[1], [0], [0], [1], [0, 0, 1, 1], [], []>} : vector<1x32xbf16>, vector<32x128xbf16>, vector<1x128xf32> -> vector<1x128xf32>
    %663 = arith.addf %660, %662 : vector<1x128xf32>
    %664 = arith.negf %663 : vector<1x128xf32>
    %665 = math.exp %664 : vector<1x128xf32>
    %cst_221 = arith.constant 1.000000e+00 : f32
    %666 = vector.broadcast %cst_221 : f32 to vector<1x128xf32>
    %667 = arith.addf %666, %665 : vector<1x128xf32>
    %668 = arith.divf %666, %667 : vector<1x128xf32>
    %669 = math.tanh %663 : vector<1x128xf32>
    %670 = vector.extract_strided_slice %668 {offsets = [0, 0], sizes = [1, 32], strides = [1, 1]} : vector<1x128xf32> to vector<1x32xf32>
    %671 = vector.extract_strided_slice %668 {offsets = [0, 32], sizes = [1, 32], strides = [1, 1]} : vector<1x128xf32> to vector<1x32xf32>
    %672 = vector.extract_strided_slice %669 {offsets = [0, 64], sizes = [1, 32], strides = [1, 1]} : vector<1x128xf32> to vector<1x32xf32>
    %673 = vector.extract_strided_slice %668 {offsets = [0, 96], sizes = [1, 32], strides = [1, 1]} : vector<1x128xf32> to vector<1x32xf32>
    %674 = arith.mulf %671, %656 : vector<1x32xf32>
    %675 = arith.mulf %670, %672 : vector<1x32xf32>
    %676 = arith.addf %674, %675 : vector<1x32xf32>
    %677 = math.tanh %676 : vector<1x32xf32>
    %678 = arith.mulf %673, %677 : vector<1x32xf32>
    %c2_222 = arith.constant 2 : index
    %c0_223 = arith.constant 0 : index
    %679 = vector.load %arg13[%c2_222, %c0_223] : memref<4x32xf32, #tpu.memory_space<vmem>>, vector<1x32xf32>
    tpu.vector_store %arg13[%c2_222, %c0_223], %678 {strides = array<i32>} : memref<4x32xf32, #tpu.memory_space<vmem>>, vector<1x32xf32>,
    %680 = vector.extract_strided_slice %617 {offsets = [3, 0], sizes = [1, 128], strides = [1, 1]} : vector<4x128xf32> to vector<1x128xf32>
    %681 = arith.truncf %678 : vector<1x32xf32> to vector<1x32xbf16>
    %cst_224 = arith.constant dense<0.000000e+00> : vector<1x128xf32>
    %682 = tpu.matmul %681, %611, %cst_224 {dimension_numbers = #tpu.dot_dimension_numbers<[1], [0], [0], [1], [0, 0, 1, 1], [], []>} : vector<1x32xbf16>, vector<32x128xbf16>, vector<1x128xf32> -> vector<1x128xf32>
    %683 = arith.addf %680, %682 : vector<1x128xf32>
    %684 = arith.negf %683 : vector<1x128xf32>
    %685 = math.exp %684 : vector<1x128xf32>
    %cst_225 = arith.constant 1.000000e+00 : f32
    %686 = vector.broadcast %cst_225 : f32 to vector<1x128xf32>
    %687 = arith.addf %686, %685 : vector<1x128xf32>
    %688 = arith.divf %686, %687 : vector<1x128xf32>
    %689 = math.tanh %683 : vector<1x128xf32>
    %690 = vector.extract_strided_slice %688 {offsets = [0, 0], sizes = [1, 32], strides = [1, 1]} : vector<1x128xf32> to vector<1x32xf32>
    %691 = vector.extract_strided_slice %688 {offsets = [0, 32], sizes = [1, 32], strides = [1, 1]} : vector<1x128xf32> to vector<1x32xf32>
    %692 = vector.extract_strided_slice %689 {offsets = [0, 64], sizes = [1, 32], strides = [1, 1]} : vector<1x128xf32> to vector<1x32xf32>
    %693 = vector.extract_strided_slice %688 {offsets = [0, 96], sizes = [1, 32], strides = [1, 1]} : vector<1x128xf32> to vector<1x32xf32>
    %694 = arith.mulf %691, %676 : vector<1x32xf32>
    %695 = arith.mulf %690, %692 : vector<1x32xf32>
    %696 = arith.addf %694, %695 : vector<1x32xf32>
    %697 = math.tanh %696 : vector<1x32xf32>
    %698 = arith.mulf %693, %697 : vector<1x32xf32>
    %c3_226 = arith.constant 3 : index
    %c0_227 = arith.constant 0 : index
    %699 = vector.load %arg13[%c3_226, %c0_227] : memref<4x32xf32, #tpu.memory_space<vmem>>, vector<1x32xf32>
    tpu.vector_store %arg13[%c3_226, %c0_227], %698 {strides = array<i32>} : memref<4x32xf32, #tpu.memory_space<vmem>>, vector<1x32xf32>,
    %c0_228 = arith.constant 0 : index
    %c0_229 = arith.constant 0 : index
    %700 = vector.load %arg13[%c0_228, %c0_229] : memref<4x32xf32, #tpu.memory_space<vmem>>, vector<4x32xf32>
    %701 = tpu.concatenate %605, %698 in 0 : vector<1x32xf32>, vector<1x32xf32> -> vector<2x32xf32>
    %702 = tpu.concatenate %603, %696 in 0 : vector<1x32xf32>, vector<1x32xf32> -> vector<2x32xf32>
    %cst_230 = arith.constant 0.000000e+00 : f32
    %703 = vector.broadcast %cst_230 : f32 to vector<4x32xf32>
    %704 = arith.maximumf %700, %703 : vector<4x32xf32>
    %705 = arith.addf %504, %704 : vector<4x32xf32>
    %706 = arith.addf %510, %700 : vector<4x32xf32>
    %cst_231 = arith.constant -9.99999996E-12 : f32
    %707 = vector.broadcast %cst_231 : f32 to vector<4x32xf32>
    %708 = arith.cmpf olt, %706, %707 : vector<4x32xf32>
    %cst_232 = arith.constant -1.000000e+10 : f32
    %709 = vector.broadcast %cst_232 : f32 to vector<4x32xf32>
    %710 = arith.mulf %706, %709 : vector<4x32xf32>
    %711 = arith.select %708, %710, %706 : vector<4x32xi1>, vector<4x32xf32>
    %712 = arith.addf %108, %711 : vector<4x32xf32>
    %cst_233 = arith.constant 5.000000e-01 : f32
    %713 = vector.broadcast %cst_233 : f32 to vector<4x32xf32>
    %714 = arith.mulf %712, %713 : vector<4x32xf32>
    %715 = math.tanh %714 : vector<4x32xf32>
    %c0_234 = arith.constant 0 : index
    %c0_235 = arith.constant 0 : index
    %c0_236 = arith.constant 0 : index
    %c0_237 = arith.constant 0 : index
    %716 = vector.load %arg7[%c0_234, %c0_235, %c0_236, %c0_237] : memref<3x2x32x128xbf16, #tpu.memory_space<vmem>>, vector<1x1x32x128xbf16>
    %717 = vector.shape_cast %716 : vector<1x1x32x128xbf16> to vector<32x128xbf16>
    %c0_238 = arith.constant 0 : index
    %c0_239 = arith.constant 0 : index
    %c0_240 = arith.constant 0 : index
    %c0_241 = arith.constant 0 : index
    %718 = vector.load %arg8[%c0_238, %c0_239, %c0_240, %c0_241] : memref<3x2x32x128xbf16, #tpu.memory_space<vmem>>, vector<1x1x32x128xbf16>
    %719 = vector.shape_cast %718 : vector<1x1x32x128xbf16> to vector<32x128xbf16>
    %c0_242 = arith.constant 0 : index
    %c0_243 = arith.constant 0 : index
    %c0_244 = arith.constant 0 : index
    %c0_245 = arith.constant 0 : index
    %720 = vector.load %arg9[%c0_242, %c0_243, %c0_244, %c0_245] : memref<3x2x1x128xf32, #tpu.memory_space<vmem>>, vector<1x1x1x128xf32>
    %721 = vector.shape_cast %720 : vector<1x1x1x128xf32> to vector<1x128xf32>
    %722 = arith.truncf %715 : vector<4x32xf32> to vector<4x32xbf16>
    %cst_246 = arith.constant dense<0.000000e+00> : vector<4x128xf32>
    %723 = tpu.matmul %722, %717, %cst_246 {dimension_numbers = #tpu.dot_dimension_numbers<[1], [0], [0], [1], [0, 0, 1, 1], [], []>} : vector<4x32xbf16>, vector<32x128xbf16>, vector<4x128xf32> -> vector<4x128xf32>
    %724 = vector.broadcast %721 : vector<1x128xf32> to vector<4x128xf32>
    %725 = arith.addf %723, %724 : vector<4x128xf32>
    %726 = vector.extract_strided_slice %702 {offsets = [0, 0], sizes = [1, 32], strides = [1, 1]} : vector<2x32xf32> to vector<1x32xf32>
    %727 = vector.extract_strided_slice %701 {offsets = [0, 0], sizes = [1, 32], strides = [1, 1]} : vector<2x32xf32> to vector<1x32xf32>
    %728 = vector.extract_strided_slice %725 {offsets = [0, 0], sizes = [1, 128], strides = [1, 1]} : vector<4x128xf32> to vector<1x128xf32>
    %729 = arith.truncf %726 : vector<1x32xf32> to vector<1x32xbf16>
    %cst_247 = arith.constant dense<0.000000e+00> : vector<1x128xf32>
    %730 = tpu.matmul %729, %719, %cst_247 {dimension_numbers = #tpu.dot_dimension_numbers<[1], [0], [0], [1], [0, 0, 1, 1], [], []>} : vector<1x32xbf16>, vector<32x128xbf16>, vector<1x128xf32> -> vector<1x128xf32>
    %731 = arith.addf %728, %730 : vector<1x128xf32>
    %732 = arith.negf %731 : vector<1x128xf32>
    %733 = math.exp %732 : vector<1x128xf32>
    %cst_248 = arith.constant 1.000000e+00 : f32
    %734 = vector.broadcast %cst_248 : f32 to vector<1x128xf32>
    %735 = arith.addf %734, %733 : vector<1x128xf32>
    %736 = arith.divf %734, %735 : vector<1x128xf32>
    %737 = math.tanh %731 : vector<1x128xf32>
    %738 = vector.extract_strided_slice %736 {offsets = [0, 0], sizes = [1, 32], strides = [1, 1]} : vector<1x128xf32> to vector<1x32xf32>
    %739 = vector.extract_strided_slice %736 {offsets = [0, 32], sizes = [1, 32], strides = [1, 1]} : vector<1x128xf32> to vector<1x32xf32>
    %740 = vector.extract_strided_slice %737 {offsets = [0, 64], sizes = [1, 32], strides = [1, 1]} : vector<1x128xf32> to vector<1x32xf32>
    %741 = vector.extract_strided_slice %736 {offsets = [0, 96], sizes = [1, 32], strides = [1, 1]} : vector<1x128xf32> to vector<1x32xf32>
    %742 = arith.mulf %739, %727 : vector<1x32xf32>
    %743 = arith.mulf %738, %740 : vector<1x32xf32>
    %744 = arith.addf %742, %743 : vector<1x32xf32>
    %745 = math.tanh %744 : vector<1x32xf32>
    %746 = arith.mulf %741, %745 : vector<1x32xf32>
    %c0_249 = arith.constant 0 : index
    %c0_250 = arith.constant 0 : index
    %747 = vector.load %arg13[%c0_249, %c0_250] : memref<4x32xf32, #tpu.memory_space<vmem>>, vector<1x32xf32>
    tpu.vector_store %arg13[%c0_249, %c0_250], %746 {strides = array<i32>} : memref<4x32xf32, #tpu.memory_space<vmem>>, vector<1x32xf32>,
    %748 = vector.extract_strided_slice %725 {offsets = [1, 0], sizes = [1, 128], strides = [1, 1]} : vector<4x128xf32> to vector<1x128xf32>
    %749 = arith.truncf %746 : vector<1x32xf32> to vector<1x32xbf16>
    %cst_251 = arith.constant dense<0.000000e+00> : vector<1x128xf32>
    %750 = tpu.matmul %749, %719, %cst_251 {dimension_numbers = #tpu.dot_dimension_numbers<[1], [0], [0], [1], [0, 0, 1, 1], [], []>} : vector<1x32xbf16>, vector<32x128xbf16>, vector<1x128xf32> -> vector<1x128xf32>
    %751 = arith.addf %748, %750 : vector<1x128xf32>
    %752 = arith.negf %751 : vector<1x128xf32>
    %753 = math.exp %752 : vector<1x128xf32>
    %cst_252 = arith.constant 1.000000e+00 : f32
    %754 = vector.broadcast %cst_252 : f32 to vector<1x128xf32>
    %755 = arith.addf %754, %753 : vector<1x128xf32>
    %756 = arith.divf %754, %755 : vector<1x128xf32>
    %757 = math.tanh %751 : vector<1x128xf32>
    %758 = vector.extract_strided_slice %756 {offsets = [0, 0], sizes = [1, 32], strides = [1, 1]} : vector<1x128xf32> to vector<1x32xf32>
    %759 = vector.extract_strided_slice %756 {offsets = [0, 32], sizes = [1, 32], strides = [1, 1]} : vector<1x128xf32> to vector<1x32xf32>
    %760 = vector.extract_strided_slice %757 {offsets = [0, 64], sizes = [1, 32], strides = [1, 1]} : vector<1x128xf32> to vector<1x32xf32>
    %761 = vector.extract_strided_slice %756 {offsets = [0, 96], sizes = [1, 32], strides = [1, 1]} : vector<1x128xf32> to vector<1x32xf32>
    %762 = arith.mulf %759, %744 : vector<1x32xf32>
    %763 = arith.mulf %758, %760 : vector<1x32xf32>
    %764 = arith.addf %762, %763 : vector<1x32xf32>
    %765 = math.tanh %764 : vector<1x32xf32>
    %766 = arith.mulf %761, %765 : vector<1x32xf32>
    %c1_253 = arith.constant 1 : index
    %c0_254 = arith.constant 0 : index
    %767 = vector.load %arg13[%c1_253, %c0_254] : memref<4x32xf32, #tpu.memory_space<vmem>>, vector<1x32xf32>
    tpu.vector_store %arg13[%c1_253, %c0_254], %766 {strides = array<i32>} : memref<4x32xf32, #tpu.memory_space<vmem>>, vector<1x32xf32>,
    %768 = vector.extract_strided_slice %725 {offsets = [2, 0], sizes = [1, 128], strides = [1, 1]} : vector<4x128xf32> to vector<1x128xf32>
    %769 = arith.truncf %766 : vector<1x32xf32> to vector<1x32xbf16>
    %cst_255 = arith.constant dense<0.000000e+00> : vector<1x128xf32>
    %770 = tpu.matmul %769, %719, %cst_255 {dimension_numbers = #tpu.dot_dimension_numbers<[1], [0], [0], [1], [0, 0, 1, 1], [], []>} : vector<1x32xbf16>, vector<32x128xbf16>, vector<1x128xf32> -> vector<1x128xf32>
    %771 = arith.addf %768, %770 : vector<1x128xf32>
    %772 = arith.negf %771 : vector<1x128xf32>
    %773 = math.exp %772 : vector<1x128xf32>
    %cst_256 = arith.constant 1.000000e+00 : f32
    %774 = vector.broadcast %cst_256 : f32 to vector<1x128xf32>
    %775 = arith.addf %774, %773 : vector<1x128xf32>
    %776 = arith.divf %774, %775 : vector<1x128xf32>
    %777 = math.tanh %771 : vector<1x128xf32>
    %778 = vector.extract_strided_slice %776 {offsets = [0, 0], sizes = [1, 32], strides = [1, 1]} : vector<1x128xf32> to vector<1x32xf32>
    %779 = vector.extract_strided_slice %776 {offsets = [0, 32], sizes = [1, 32], strides = [1, 1]} : vector<1x128xf32> to vector<1x32xf32>
    %780 = vector.extract_strided_slice %777 {offsets = [0, 64], sizes = [1, 32], strides = [1, 1]} : vector<1x128xf32> to vector<1x32xf32>
    %781 = vector.extract_strided_slice %776 {offsets = [0, 96], sizes = [1, 32], strides = [1, 1]} : vector<1x128xf32> to vector<1x32xf32>
    %782 = arith.mulf %779, %764 : vector<1x32xf32>
    %783 = arith.mulf %778, %780 : vector<1x32xf32>
    %784 = arith.addf %782, %783 : vector<1x32xf32>
    %785 = math.tanh %784 : vector<1x32xf32>
    %786 = arith.mulf %781, %785 : vector<1x32xf32>
    %c2_257 = arith.constant 2 : index
    %c0_258 = arith.constant 0 : index
    %787 = vector.load %arg13[%c2_257, %c0_258] : memref<4x32xf32, #tpu.memory_space<vmem>>, vector<1x32xf32>
    tpu.vector_store %arg13[%c2_257, %c0_258], %786 {strides = array<i32>} : memref<4x32xf32, #tpu.memory_space<vmem>>, vector<1x32xf32>,
    %788 = vector.extract_strided_slice %725 {offsets = [3, 0], sizes = [1, 128], strides = [1, 1]} : vector<4x128xf32> to vector<1x128xf32>
    %789 = arith.truncf %786 : vector<1x32xf32> to vector<1x32xbf16>
    %cst_259 = arith.constant dense<0.000000e+00> : vector<1x128xf32>
    %790 = tpu.matmul %789, %719, %cst_259 {dimension_numbers = #tpu.dot_dimension_numbers<[1], [0], [0], [1], [0, 0, 1, 1], [], []>} : vector<1x32xbf16>, vector<32x128xbf16>, vector<1x128xf32> -> vector<1x128xf32>
    %791 = arith.addf %788, %790 : vector<1x128xf32>
    %792 = arith.negf %791 : vector<1x128xf32>
    %793 = math.exp %792 : vector<1x128xf32>
    %cst_260 = arith.constant 1.000000e+00 : f32
    %794 = vector.broadcast %cst_260 : f32 to vector<1x128xf32>
    %795 = arith.addf %794, %793 : vector<1x128xf32>
    %796 = arith.divf %794, %795 : vector<1x128xf32>
    %797 = math.tanh %791 : vector<1x128xf32>
    %798 = vector.extract_strided_slice %796 {offsets = [0, 0], sizes = [1, 32], strides = [1, 1]} : vector<1x128xf32> to vector<1x32xf32>
    %799 = vector.extract_strided_slice %796 {offsets = [0, 32], sizes = [1, 32], strides = [1, 1]} : vector<1x128xf32> to vector<1x32xf32>
    %800 = vector.extract_strided_slice %797 {offsets = [0, 64], sizes = [1, 32], strides = [1, 1]} : vector<1x128xf32> to vector<1x32xf32>
    %801 = vector.extract_strided_slice %796 {offsets = [0, 96], sizes = [1, 32], strides = [1, 1]} : vector<1x128xf32> to vector<1x32xf32>
    %802 = arith.mulf %799, %784 : vector<1x32xf32>
    %803 = arith.mulf %798, %800 : vector<1x32xf32>
    %804 = arith.addf %802, %803 : vector<1x32xf32>
    %805 = math.tanh %804 : vector<1x32xf32>
    %806 = arith.mulf %801, %805 : vector<1x32xf32>
    %c3_261 = arith.constant 3 : index
    %c0_262 = arith.constant 0 : index
    %807 = vector.load %arg13[%c3_261, %c0_262] : memref<4x32xf32, #tpu.memory_space<vmem>>, vector<1x32xf32>
    tpu.vector_store %arg13[%c3_261, %c0_262], %806 {strides = array<i32>} : memref<4x32xf32, #tpu.memory_space<vmem>>, vector<1x32xf32>,
    %c0_263 = arith.constant 0 : index
    %c0_264 = arith.constant 0 : index
    %808 = vector.load %arg13[%c0_263, %c0_264] : memref<4x32xf32, #tpu.memory_space<vmem>>, vector<4x32xf32>
    %c0_265 = arith.constant 0 : index
    %c1_266 = arith.constant 1 : index
    %c0_267 = arith.constant 0 : index
    %c0_268 = arith.constant 0 : index
    %809 = vector.load %arg7[%c0_265, %c1_266, %c0_267, %c0_268] : memref<3x2x32x128xbf16, #tpu.memory_space<vmem>>, vector<1x1x32x128xbf16>
    %810 = vector.shape_cast %809 : vector<1x1x32x128xbf16> to vector<32x128xbf16>
    %c0_269 = arith.constant 0 : index
    %c1_270 = arith.constant 1 : index
    %c0_271 = arith.constant 0 : index
    %c0_272 = arith.constant 0 : index
    %811 = vector.load %arg8[%c0_269, %c1_270, %c0_271, %c0_272] : memref<3x2x32x128xbf16, #tpu.memory_space<vmem>>, vector<1x1x32x128xbf16>
    %812 = vector.shape_cast %811 : vector<1x1x32x128xbf16> to vector<32x128xbf16>
    %c0_273 = arith.constant 0 : index
    %c1_274 = arith.constant 1 : index
    %c0_275 = arith.constant 0 : index
    %c0_276 = arith.constant 0 : index
    %813 = vector.load %arg9[%c0_273, %c1_274, %c0_275, %c0_276] : memref<3x2x1x128xf32, #tpu.memory_space<vmem>>, vector<1x1x1x128xf32>
    %814 = vector.shape_cast %813 : vector<1x1x1x128xf32> to vector<1x128xf32>
    %815 = arith.truncf %808 : vector<4x32xf32> to vector<4x32xbf16>
    %cst_277 = arith.constant dense<0.000000e+00> : vector<4x128xf32>
    %816 = tpu.matmul %815, %810, %cst_277 {dimension_numbers = #tpu.dot_dimension_numbers<[1], [0], [0], [1], [0, 0, 1, 1], [], []>} : vector<4x32xbf16>, vector<32x128xbf16>, vector<4x128xf32> -> vector<4x128xf32>
    %817 = vector.broadcast %814 : vector<1x128xf32> to vector<4x128xf32>
    %818 = arith.addf %816, %817 : vector<4x128xf32>
    %819 = vector.extract_strided_slice %702 {offsets = [1, 0], sizes = [1, 32], strides = [1, 1]} : vector<2x32xf32> to vector<1x32xf32>
    %820 = vector.extract_strided_slice %701 {offsets = [1, 0], sizes = [1, 32], strides = [1, 1]} : vector<2x32xf32> to vector<1x32xf32>
    %821 = vector.extract_strided_slice %818 {offsets = [0, 0], sizes = [1, 128], strides = [1, 1]} : vector<4x128xf32> to vector<1x128xf32>
    %822 = arith.truncf %819 : vector<1x32xf32> to vector<1x32xbf16>
    %cst_278 = arith.constant dense<0.000000e+00> : vector<1x128xf32>
    %823 = tpu.matmul %822, %812, %cst_278 {dimension_numbers = #tpu.dot_dimension_numbers<[1], [0], [0], [1], [0, 0, 1, 1], [], []>} : vector<1x32xbf16>, vector<32x128xbf16>, vector<1x128xf32> -> vector<1x128xf32>
    %824 = arith.addf %821, %823 : vector<1x128xf32>
    %825 = arith.negf %824 : vector<1x128xf32>
    %826 = math.exp %825 : vector<1x128xf32>
    %cst_279 = arith.constant 1.000000e+00 : f32
    %827 = vector.broadcast %cst_279 : f32 to vector<1x128xf32>
    %828 = arith.addf %827, %826 : vector<1x128xf32>
    %829 = arith.divf %827, %828 : vector<1x128xf32>
    %830 = math.tanh %824 : vector<1x128xf32>
    %831 = vector.extract_strided_slice %829 {offsets = [0, 0], sizes = [1, 32], strides = [1, 1]} : vector<1x128xf32> to vector<1x32xf32>
    %832 = vector.extract_strided_slice %829 {offsets = [0, 32], sizes = [1, 32], strides = [1, 1]} : vector<1x128xf32> to vector<1x32xf32>
    %833 = vector.extract_strided_slice %830 {offsets = [0, 64], sizes = [1, 32], strides = [1, 1]} : vector<1x128xf32> to vector<1x32xf32>
    %834 = vector.extract_strided_slice %829 {offsets = [0, 96], sizes = [1, 32], strides = [1, 1]} : vector<1x128xf32> to vector<1x32xf32>
    %835 = arith.mulf %832, %820 : vector<1x32xf32>
    %836 = arith.mulf %831, %833 : vector<1x32xf32>
    %837 = arith.addf %835, %836 : vector<1x32xf32>
    %838 = math.tanh %837 : vector<1x32xf32>
    %839 = arith.mulf %834, %838 : vector<1x32xf32>
    %c0_280 = arith.constant 0 : index
    %c0_281 = arith.constant 0 : index
    %840 = vector.load %arg13[%c0_280, %c0_281] : memref<4x32xf32, #tpu.memory_space<vmem>>, vector<1x32xf32>
    tpu.vector_store %arg13[%c0_280, %c0_281], %839 {strides = array<i32>} : memref<4x32xf32, #tpu.memory_space<vmem>>, vector<1x32xf32>,
    %841 = vector.extract_strided_slice %818 {offsets = [1, 0], sizes = [1, 128], strides = [1, 1]} : vector<4x128xf32> to vector<1x128xf32>
    %842 = arith.truncf %839 : vector<1x32xf32> to vector<1x32xbf16>
    %cst_282 = arith.constant dense<0.000000e+00> : vector<1x128xf32>
    %843 = tpu.matmul %842, %812, %cst_282 {dimension_numbers = #tpu.dot_dimension_numbers<[1], [0], [0], [1], [0, 0, 1, 1], [], []>} : vector<1x32xbf16>, vector<32x128xbf16>, vector<1x128xf32> -> vector<1x128xf32>
    %844 = arith.addf %841, %843 : vector<1x128xf32>
    %845 = arith.negf %844 : vector<1x128xf32>
    %846 = math.exp %845 : vector<1x128xf32>
    %cst_283 = arith.constant 1.000000e+00 : f32
    %847 = vector.broadcast %cst_283 : f32 to vector<1x128xf32>
    %848 = arith.addf %847, %846 : vector<1x128xf32>
    %849 = arith.divf %847, %848 : vector<1x128xf32>
    %850 = math.tanh %844 : vector<1x128xf32>
    %851 = vector.extract_strided_slice %849 {offsets = [0, 0], sizes = [1, 32], strides = [1, 1]} : vector<1x128xf32> to vector<1x32xf32>
    %852 = vector.extract_strided_slice %849 {offsets = [0, 32], sizes = [1, 32], strides = [1, 1]} : vector<1x128xf32> to vector<1x32xf32>
    %853 = vector.extract_strided_slice %850 {offsets = [0, 64], sizes = [1, 32], strides = [1, 1]} : vector<1x128xf32> to vector<1x32xf32>
    %854 = vector.extract_strided_slice %849 {offsets = [0, 96], sizes = [1, 32], strides = [1, 1]} : vector<1x128xf32> to vector<1x32xf32>
    %855 = arith.mulf %852, %837 : vector<1x32xf32>
    %856 = arith.mulf %851, %853 : vector<1x32xf32>
    %857 = arith.addf %855, %856 : vector<1x32xf32>
    %858 = math.tanh %857 : vector<1x32xf32>
    %859 = arith.mulf %854, %858 : vector<1x32xf32>
    %c1_284 = arith.constant 1 : index
    %c0_285 = arith.constant 0 : index
    %860 = vector.load %arg13[%c1_284, %c0_285] : memref<4x32xf32, #tpu.memory_space<vmem>>, vector<1x32xf32>
    tpu.vector_store %arg13[%c1_284, %c0_285], %859 {strides = array<i32>} : memref<4x32xf32, #tpu.memory_space<vmem>>, vector<1x32xf32>,
    %861 = vector.extract_strided_slice %818 {offsets = [2, 0], sizes = [1, 128], strides = [1, 1]} : vector<4x128xf32> to vector<1x128xf32>
    %862 = arith.truncf %859 : vector<1x32xf32> to vector<1x32xbf16>
    %cst_286 = arith.constant dense<0.000000e+00> : vector<1x128xf32>
    %863 = tpu.matmul %862, %812, %cst_286 {dimension_numbers = #tpu.dot_dimension_numbers<[1], [0], [0], [1], [0, 0, 1, 1], [], []>} : vector<1x32xbf16>, vector<32x128xbf16>, vector<1x128xf32> -> vector<1x128xf32>
    %864 = arith.addf %861, %863 : vector<1x128xf32>
    %865 = arith.negf %864 : vector<1x128xf32>
    %866 = math.exp %865 : vector<1x128xf32>
    %cst_287 = arith.constant 1.000000e+00 : f32
    %867 = vector.broadcast %cst_287 : f32 to vector<1x128xf32>
    %868 = arith.addf %867, %866 : vector<1x128xf32>
    %869 = arith.divf %867, %868 : vector<1x128xf32>
    %870 = math.tanh %864 : vector<1x128xf32>
    %871 = vector.extract_strided_slice %869 {offsets = [0, 0], sizes = [1, 32], strides = [1, 1]} : vector<1x128xf32> to vector<1x32xf32>
    %872 = vector.extract_strided_slice %869 {offsets = [0, 32], sizes = [1, 32], strides = [1, 1]} : vector<1x128xf32> to vector<1x32xf32>
    %873 = vector.extract_strided_slice %870 {offsets = [0, 64], sizes = [1, 32], strides = [1, 1]} : vector<1x128xf32> to vector<1x32xf32>
    %874 = vector.extract_strided_slice %869 {offsets = [0, 96], sizes = [1, 32], strides = [1, 1]} : vector<1x128xf32> to vector<1x32xf32>
    %875 = arith.mulf %872, %857 : vector<1x32xf32>
    %876 = arith.mulf %871, %873 : vector<1x32xf32>
    %877 = arith.addf %875, %876 : vector<1x32xf32>
    %878 = math.tanh %877 : vector<1x32xf32>
    %879 = arith.mulf %874, %878 : vector<1x32xf32>
    %c2_288 = arith.constant 2 : index
    %c0_289 = arith.constant 0 : index
    %880 = vector.load %arg13[%c2_288, %c0_289] : memref<4x32xf32, #tpu.memory_space<vmem>>, vector<1x32xf32>
    tpu.vector_store %arg13[%c2_288, %c0_289], %879 {strides = array<i32>} : memref<4x32xf32, #tpu.memory_space<vmem>>, vector<1x32xf32>,
    %881 = vector.extract_strided_slice %818 {offsets = [3, 0], sizes = [1, 128], strides = [1, 1]} : vector<4x128xf32> to vector<1x128xf32>
    %882 = arith.truncf %879 : vector<1x32xf32> to vector<1x32xbf16>
    %cst_290 = arith.constant dense<0.000000e+00> : vector<1x128xf32>
    %883 = tpu.matmul %882, %812, %cst_290 {dimension_numbers = #tpu.dot_dimension_numbers<[1], [0], [0], [1], [0, 0, 1, 1], [], []>} : vector<1x32xbf16>, vector<32x128xbf16>, vector<1x128xf32> -> vector<1x128xf32>
    %884 = arith.addf %881, %883 : vector<1x128xf32>
    %885 = arith.negf %884 : vector<1x128xf32>
    %886 = math.exp %885 : vector<1x128xf32>
    %cst_291 = arith.constant 1.000000e+00 : f32
    %887 = vector.broadcast %cst_291 : f32 to vector<1x128xf32>
    %888 = arith.addf %887, %886 : vector<1x128xf32>
    %889 = arith.divf %887, %888 : vector<1x128xf32>
    %890 = math.tanh %884 : vector<1x128xf32>
    %891 = vector.extract_strided_slice %889 {offsets = [0, 0], sizes = [1, 32], strides = [1, 1]} : vector<1x128xf32> to vector<1x32xf32>
    %892 = vector.extract_strided_slice %889 {offsets = [0, 32], sizes = [1, 32], strides = [1, 1]} : vector<1x128xf32> to vector<1x32xf32>
    %893 = vector.extract_strided_slice %890 {offsets = [0, 64], sizes = [1, 32], strides = [1, 1]} : vector<1x128xf32> to vector<1x32xf32>
    %894 = vector.extract_strided_slice %889 {offsets = [0, 96], sizes = [1, 32], strides = [1, 1]} : vector<1x128xf32> to vector<1x32xf32>
    %895 = arith.mulf %892, %877 : vector<1x32xf32>
    %896 = arith.mulf %891, %893 : vector<1x32xf32>
    %897 = arith.addf %895, %896 : vector<1x32xf32>
    %898 = math.tanh %897 : vector<1x32xf32>
    %899 = arith.mulf %894, %898 : vector<1x32xf32>
    %c3_292 = arith.constant 3 : index
    %c0_293 = arith.constant 0 : index
    %900 = vector.load %arg13[%c3_292, %c0_293] : memref<4x32xf32, #tpu.memory_space<vmem>>, vector<1x32xf32>
    tpu.vector_store %arg13[%c3_292, %c0_293], %899 {strides = array<i32>} : memref<4x32xf32, #tpu.memory_space<vmem>>, vector<1x32xf32>,
    %c0_294 = arith.constant 0 : index
    %c0_295 = arith.constant 0 : index
    %901 = vector.load %arg13[%c0_294, %c0_295] : memref<4x32xf32, #tpu.memory_space<vmem>>, vector<4x32xf32>
    %902 = tpu.concatenate %806, %899 in 0 : vector<1x32xf32>, vector<1x32xf32> -> vector<2x32xf32>
    %903 = tpu.concatenate %804, %897 in 0 : vector<1x32xf32>, vector<1x32xf32> -> vector<2x32xf32>
    %904 = arith.addf %711, %901 : vector<4x32xf32>
    %cst_296 = arith.constant -9.99999996E-12 : f32
    %905 = vector.broadcast %cst_296 : f32 to vector<4x32xf32>
    %906 = arith.cmpf olt, %904, %905 : vector<4x32xf32>
    %cst_297 = arith.constant -1.000000e+10 : f32
    %907 = vector.broadcast %cst_297 : f32 to vector<4x32xf32>
    %908 = arith.mulf %904, %907 : vector<4x32xf32>
    %909 = arith.select %906, %908, %904 : vector<4x32xi1>, vector<4x32xf32>
    %910 = arith.addf %909, %108 : vector<4x32xf32>
    %cst_298 = arith.constant 5.000000e-01 : f32
    %911 = vector.broadcast %cst_298 : f32 to vector<4x32xf32>
    %912 = arith.mulf %910, %911 : vector<4x32xf32>
    %913 = math.tanh %912 : vector<4x32xf32>
    %c1_299 = arith.constant 1 : index
    %c0_300 = arith.constant 0 : index
    %c0_301 = arith.constant 0 : index
    %c0_302 = arith.constant 0 : index
    %914 = vector.load %arg7[%c1_299, %c0_300, %c0_301, %c0_302] : memref<3x2x32x128xbf16, #tpu.memory_space<vmem>>, vector<1x1x32x128xbf16>
    %915 = vector.shape_cast %914 : vector<1x1x32x128xbf16> to vector<32x128xbf16>
    %c1_303 = arith.constant 1 : index
    %c0_304 = arith.constant 0 : index
    %c0_305 = arith.constant 0 : index
    %c0_306 = arith.constant 0 : index
    %916 = vector.load %arg8[%c1_303, %c0_304, %c0_305, %c0_306] : memref<3x2x32x128xbf16, #tpu.memory_space<vmem>>, vector<1x1x32x128xbf16>
    %917 = vector.shape_cast %916 : vector<1x1x32x128xbf16> to vector<32x128xbf16>
    %c1_307 = arith.constant 1 : index
    %c0_308 = arith.constant 0 : index
    %c0_309 = arith.constant 0 : index
    %c0_310 = arith.constant 0 : index
    %918 = vector.load %arg9[%c1_307, %c0_308, %c0_309, %c0_310] : memref<3x2x1x128xf32, #tpu.memory_space<vmem>>, vector<1x1x1x128xf32>
    %919 = vector.shape_cast %918 : vector<1x1x1x128xf32> to vector<1x128xf32>
    %920 = arith.truncf %913 : vector<4x32xf32> to vector<4x32xbf16>
    %cst_311 = arith.constant dense<0.000000e+00> : vector<4x128xf32>
    %921 = tpu.matmul %920, %915, %cst_311 {dimension_numbers = #tpu.dot_dimension_numbers<[1], [0], [0], [1], [0, 0, 1, 1], [], []>} : vector<4x32xbf16>, vector<32x128xbf16>, vector<4x128xf32> -> vector<4x128xf32>
    %922 = vector.broadcast %919 : vector<1x128xf32> to vector<4x128xf32>
    %923 = arith.addf %921, %922 : vector<4x128xf32>
    %924 = vector.extract_strided_slice %902 {offsets = [0, 0], sizes = [1, 32], strides = [1, 1]} : vector<2x32xf32> to vector<1x32xf32>
    %925 = vector.extract_strided_slice %903 {offsets = [0, 0], sizes = [1, 32], strides = [1, 1]} : vector<2x32xf32> to vector<1x32xf32>
    %926 = vector.extract_strided_slice %923 {offsets = [0, 0], sizes = [1, 128], strides = [1, 1]} : vector<4x128xf32> to vector<1x128xf32>
    %927 = arith.truncf %924 : vector<1x32xf32> to vector<1x32xbf16>
    %cst_312 = arith.constant dense<0.000000e+00> : vector<1x128xf32>
    %928 = tpu.matmul %927, %917, %cst_312 {dimension_numbers = #tpu.dot_dimension_numbers<[1], [0], [0], [1], [0, 0, 1, 1], [], []>} : vector<1x32xbf16>, vector<32x128xbf16>, vector<1x128xf32> -> vector<1x128xf32>
    %929 = arith.addf %926, %928 : vector<1x128xf32>
    %930 = arith.negf %929 : vector<1x128xf32>
    %931 = math.exp %930 : vector<1x128xf32>
    %cst_313 = arith.constant 1.000000e+00 : f32
    %932 = vector.broadcast %cst_313 : f32 to vector<1x128xf32>
    %933 = arith.addf %932, %931 : vector<1x128xf32>
    %934 = arith.divf %932, %933 : vector<1x128xf32>
    %935 = math.tanh %929 : vector<1x128xf32>
    %936 = vector.extract_strided_slice %934 {offsets = [0, 0], sizes = [1, 32], strides = [1, 1]} : vector<1x128xf32> to vector<1x32xf32>
    %937 = vector.extract_strided_slice %934 {offsets = [0, 32], sizes = [1, 32], strides = [1, 1]} : vector<1x128xf32> to vector<1x32xf32>
    %938 = vector.extract_strided_slice %935 {offsets = [0, 64], sizes = [1, 32], strides = [1, 1]} : vector<1x128xf32> to vector<1x32xf32>
    %939 = vector.extract_strided_slice %934 {offsets = [0, 96], sizes = [1, 32], strides = [1, 1]} : vector<1x128xf32> to vector<1x32xf32>
    %940 = arith.mulf %937, %925 : vector<1x32xf32>
    %941 = arith.mulf %936, %938 : vector<1x32xf32>
    %942 = arith.addf %940, %941 : vector<1x32xf32>
    %943 = math.tanh %942 : vector<1x32xf32>
    %944 = arith.mulf %939, %943 : vector<1x32xf32>
    %c0_314 = arith.constant 0 : index
    %c0_315 = arith.constant 0 : index
    %945 = vector.load %arg13[%c0_314, %c0_315] : memref<4x32xf32, #tpu.memory_space<vmem>>, vector<1x32xf32>
    tpu.vector_store %arg13[%c0_314, %c0_315], %944 {strides = array<i32>} : memref<4x32xf32, #tpu.memory_space<vmem>>, vector<1x32xf32>,
    %946 = vector.extract_strided_slice %923 {offsets = [1, 0], sizes = [1, 128], strides = [1, 1]} : vector<4x128xf32> to vector<1x128xf32>
    %947 = arith.truncf %944 : vector<1x32xf32> to vector<1x32xbf16>
    %cst_316 = arith.constant dense<0.000000e+00> : vector<1x128xf32>
    %948 = tpu.matmul %947, %917, %cst_316 {dimension_numbers = #tpu.dot_dimension_numbers<[1], [0], [0], [1], [0, 0, 1, 1], [], []>} : vector<1x32xbf16>, vector<32x128xbf16>, vector<1x128xf32> -> vector<1x128xf32>
    %949 = arith.addf %946, %948 : vector<1x128xf32>
    %950 = arith.negf %949 : vector<1x128xf32>
    %951 = math.exp %950 : vector<1x128xf32>
    %cst_317 = arith.constant 1.000000e+00 : f32
    %952 = vector.broadcast %cst_317 : f32 to vector<1x128xf32>
    %953 = arith.addf %952, %951 : vector<1x128xf32>
    %954 = arith.divf %952, %953 : vector<1x128xf32>
    %955 = math.tanh %949 : vector<1x128xf32>
    %956 = vector.extract_strided_slice %954 {offsets = [0, 0], sizes = [1, 32], strides = [1, 1]} : vector<1x128xf32> to vector<1x32xf32>
    %957 = vector.extract_strided_slice %954 {offsets = [0, 32], sizes = [1, 32], strides = [1, 1]} : vector<1x128xf32> to vector<1x32xf32>
    %958 = vector.extract_strided_slice %955 {offsets = [0, 64], sizes = [1, 32], strides = [1, 1]} : vector<1x128xf32> to vector<1x32xf32>
    %959 = vector.extract_strided_slice %954 {offsets = [0, 96], sizes = [1, 32], strides = [1, 1]} : vector<1x128xf32> to vector<1x32xf32>
    %960 = arith.mulf %957, %942 : vector<1x32xf32>
    %961 = arith.mulf %956, %958 : vector<1x32xf32>
    %962 = arith.addf %960, %961 : vector<1x32xf32>
    %963 = math.tanh %962 : vector<1x32xf32>
    %964 = arith.mulf %959, %963 : vector<1x32xf32>
    %c1_318 = arith.constant 1 : index
    %c0_319 = arith.constant 0 : index
    %965 = vector.load %arg13[%c1_318, %c0_319] : memref<4x32xf32, #tpu.memory_space<vmem>>, vector<1x32xf32>
    tpu.vector_store %arg13[%c1_318, %c0_319], %964 {strides = array<i32>} : memref<4x32xf32, #tpu.memory_space<vmem>>, vector<1x32xf32>,
    %966 = vector.extract_strided_slice %923 {offsets = [2, 0], sizes = [1, 128], strides = [1, 1]} : vector<4x128xf32> to vector<1x128xf32>
    %967 = arith.truncf %964 : vector<1x32xf32> to vector<1x32xbf16>
    %cst_320 = arith.constant dense<0.000000e+00> : vector<1x128xf32>
    %968 = tpu.matmul %967, %917, %cst_320 {dimension_numbers = #tpu.dot_dimension_numbers<[1], [0], [0], [1], [0, 0, 1, 1], [], []>} : vector<1x32xbf16>, vector<32x128xbf16>, vector<1x128xf32> -> vector<1x128xf32>
    %969 = arith.addf %966, %968 : vector<1x128xf32>
    %970 = arith.negf %969 : vector<1x128xf32>
    %971 = math.exp %970 : vector<1x128xf32>
    %cst_321 = arith.constant 1.000000e+00 : f32
    %972 = vector.broadcast %cst_321 : f32 to vector<1x128xf32>
    %973 = arith.addf %972, %971 : vector<1x128xf32>
    %974 = arith.divf %972, %973 : vector<1x128xf32>
    %975 = math.tanh %969 : vector<1x128xf32>
    %976 = vector.extract_strided_slice %974 {offsets = [0, 0], sizes = [1, 32], strides = [1, 1]} : vector<1x128xf32> to vector<1x32xf32>
    %977 = vector.extract_strided_slice %974 {offsets = [0, 32], sizes = [1, 32], strides = [1, 1]} : vector<1x128xf32> to vector<1x32xf32>
    %978 = vector.extract_strided_slice %975 {offsets = [0, 64], sizes = [1, 32], strides = [1, 1]} : vector<1x128xf32> to vector<1x32xf32>
    %979 = vector.extract_strided_slice %974 {offsets = [0, 96], sizes = [1, 32], strides = [1, 1]} : vector<1x128xf32> to vector<1x32xf32>
    %980 = arith.mulf %977, %962 : vector<1x32xf32>
    %981 = arith.mulf %976, %978 : vector<1x32xf32>
    %982 = arith.addf %980, %981 : vector<1x32xf32>
    %983 = math.tanh %982 : vector<1x32xf32>
    %984 = arith.mulf %979, %983 : vector<1x32xf32>
    %c2_322 = arith.constant 2 : index
    %c0_323 = arith.constant 0 : index
    %985 = vector.load %arg13[%c2_322, %c0_323] : memref<4x32xf32, #tpu.memory_space<vmem>>, vector<1x32xf32>
    tpu.vector_store %arg13[%c2_322, %c0_323], %984 {strides = array<i32>} : memref<4x32xf32, #tpu.memory_space<vmem>>, vector<1x32xf32>,
    %986 = vector.extract_strided_slice %923 {offsets = [3, 0], sizes = [1, 128], strides = [1, 1]} : vector<4x128xf32> to vector<1x128xf32>
    %987 = arith.truncf %984 : vector<1x32xf32> to vector<1x32xbf16>
    %cst_324 = arith.constant dense<0.000000e+00> : vector<1x128xf32>
    %988 = tpu.matmul %987, %917, %cst_324 {dimension_numbers = #tpu.dot_dimension_numbers<[1], [0], [0], [1], [0, 0, 1, 1], [], []>} : vector<1x32xbf16>, vector<32x128xbf16>, vector<1x128xf32> -> vector<1x128xf32>
    %989 = arith.addf %986, %988 : vector<1x128xf32>
    %990 = arith.negf %989 : vector<1x128xf32>
    %991 = math.exp %990 : vector<1x128xf32>
    %cst_325 = arith.constant 1.000000e+00 : f32
    %992 = vector.broadcast %cst_325 : f32 to vector<1x128xf32>
    %993 = arith.addf %992, %991 : vector<1x128xf32>
    %994 = arith.divf %992, %993 : vector<1x128xf32>
    %995 = math.tanh %989 : vector<1x128xf32>
    %996 = vector.extract_strided_slice %994 {offsets = [0, 0], sizes = [1, 32], strides = [1, 1]} : vector<1x128xf32> to vector<1x32xf32>
    %997 = vector.extract_strided_slice %994 {offsets = [0, 32], sizes = [1, 32], strides = [1, 1]} : vector<1x128xf32> to vector<1x32xf32>
    %998 = vector.extract_strided_slice %995 {offsets = [0, 64], sizes = [1, 32], strides = [1, 1]} : vector<1x128xf32> to vector<1x32xf32>
    %999 = vector.extract_strided_slice %994 {offsets = [0, 96], sizes = [1, 32], strides = [1, 1]} : vector<1x128xf32> to vector<1x32xf32>
    %1000 = arith.mulf %997, %982 : vector<1x32xf32>
    %1001 = arith.mulf %996, %998 : vector<1x32xf32>
    %1002 = arith.addf %1000, %1001 : vector<1x32xf32>
    %1003 = math.tanh %1002 : vector<1x32xf32>
    %1004 = arith.mulf %999, %1003 : vector<1x32xf32>
    %c3_326 = arith.constant 3 : index
    %c0_327 = arith.constant 0 : index
    %1005 = vector.load %arg13[%c3_326, %c0_327] : memref<4x32xf32, #tpu.memory_space<vmem>>, vector<1x32xf32>
    tpu.vector_store %arg13[%c3_326, %c0_327], %1004 {strides = array<i32>} : memref<4x32xf32, #tpu.memory_space<vmem>>, vector<1x32xf32>,
    %c0_328 = arith.constant 0 : index
    %c0_329 = arith.constant 0 : index
    %1006 = vector.load %arg13[%c0_328, %c0_329] : memref<4x32xf32, #tpu.memory_space<vmem>>, vector<4x32xf32>
    %c1_330 = arith.constant 1 : index
    %c1_331 = arith.constant 1 : index
    %c0_332 = arith.constant 0 : index
    %c0_333 = arith.constant 0 : index
    %1007 = vector.load %arg7[%c1_330, %c1_331, %c0_332, %c0_333] : memref<3x2x32x128xbf16, #tpu.memory_space<vmem>>, vector<1x1x32x128xbf16>
    %1008 = vector.shape_cast %1007 : vector<1x1x32x128xbf16> to vector<32x128xbf16>
    %c1_334 = arith.constant 1 : index
    %c1_335 = arith.constant 1 : index
    %c0_336 = arith.constant 0 : index
    %c0_337 = arith.constant 0 : index
    %1009 = vector.load %arg8[%c1_334, %c1_335, %c0_336, %c0_337] : memref<3x2x32x128xbf16, #tpu.memory_space<vmem>>, vector<1x1x32x128xbf16>
    %1010 = vector.shape_cast %1009 : vector<1x1x32x128xbf16> to vector<32x128xbf16>
    %c1_338 = arith.constant 1 : index
    %c1_339 = arith.constant 1 : index
    %c0_340 = arith.constant 0 : index
    %c0_341 = arith.constant 0 : index
    %1011 = vector.load %arg9[%c1_338, %c1_339, %c0_340, %c0_341] : memref<3x2x1x128xf32, #tpu.memory_space<vmem>>, vector<1x1x1x128xf32>
    %1012 = vector.shape_cast %1011 : vector<1x1x1x128xf32> to vector<1x128xf32>
    %1013 = arith.truncf %1006 : vector<4x32xf32> to vector<4x32xbf16>
    %cst_342 = arith.constant dense<0.000000e+00> : vector<4x128xf32>
    %1014 = tpu.matmul %1013, %1008, %cst_342 {dimension_numbers = #tpu.dot_dimension_numbers<[1], [0], [0], [1], [0, 0, 1, 1], [], []>} : vector<4x32xbf16>, vector<32x128xbf16>, vector<4x128xf32> -> vector<4x128xf32>
    %1015 = vector.broadcast %1012 : vector<1x128xf32> to vector<4x128xf32>
    %1016 = arith.addf %1014, %1015 : vector<4x128xf32>
    %1017 = vector.extract_strided_slice %902 {offsets = [1, 0], sizes = [1, 32], strides = [1, 1]} : vector<2x32xf32> to vector<1x32xf32>
    %1018 = vector.extract_strided_slice %903 {offsets = [1, 0], sizes = [1, 32], strides = [1, 1]} : vector<2x32xf32> to vector<1x32xf32>
    %1019 = vector.extract_strided_slice %1016 {offsets = [0, 0], sizes = [1, 128], strides = [1, 1]} : vector<4x128xf32> to vector<1x128xf32>
    %1020 = arith.truncf %1017 : vector<1x32xf32> to vector<1x32xbf16>
    %cst_343 = arith.constant dense<0.000000e+00> : vector<1x128xf32>
    %1021 = tpu.matmul %1020, %1010, %cst_343 {dimension_numbers = #tpu.dot_dimension_numbers<[1], [0], [0], [1], [0, 0, 1, 1], [], []>} : vector<1x32xbf16>, vector<32x128xbf16>, vector<1x128xf32> -> vector<1x128xf32>
    %1022 = arith.addf %1019, %1021 : vector<1x128xf32>
    %1023 = arith.negf %1022 : vector<1x128xf32>
    %1024 = math.exp %1023 : vector<1x128xf32>
    %cst_344 = arith.constant 1.000000e+00 : f32
    %1025 = vector.broadcast %cst_344 : f32 to vector<1x128xf32>
    %1026 = arith.addf %1025, %1024 : vector<1x128xf32>
    %1027 = arith.divf %1025, %1026 : vector<1x128xf32>
    %1028 = math.tanh %1022 : vector<1x128xf32>
    %1029 = vector.extract_strided_slice %1027 {offsets = [0, 0], sizes = [1, 32], strides = [1, 1]} : vector<1x128xf32> to vector<1x32xf32>
    %1030 = vector.extract_strided_slice %1027 {offsets = [0, 32], sizes = [1, 32], strides = [1, 1]} : vector<1x128xf32> to vector<1x32xf32>
    %1031 = vector.extract_strided_slice %1028 {offsets = [0, 64], sizes = [1, 32], strides = [1, 1]} : vector<1x128xf32> to vector<1x32xf32>
    %1032 = vector.extract_strided_slice %1027 {offsets = [0, 96], sizes = [1, 32], strides = [1, 1]} : vector<1x128xf32> to vector<1x32xf32>
    %1033 = arith.mulf %1030, %1018 : vector<1x32xf32>
    %1034 = arith.mulf %1029, %1031 : vector<1x32xf32>
    %1035 = arith.addf %1033, %1034 : vector<1x32xf32>
    %1036 = math.tanh %1035 : vector<1x32xf32>
    %1037 = arith.mulf %1032, %1036 : vector<1x32xf32>
    %c0_345 = arith.constant 0 : index
    %c0_346 = arith.constant 0 : index
    %1038 = vector.load %arg13[%c0_345, %c0_346] : memref<4x32xf32, #tpu.memory_space<vmem>>, vector<1x32xf32>
    tpu.vector_store %arg13[%c0_345, %c0_346], %1037 {strides = array<i32>} : memref<4x32xf32, #tpu.memory_space<vmem>>, vector<1x32xf32>,
    %1039 = vector.extract_strided_slice %1016 {offsets = [1, 0], sizes = [1, 128], strides = [1, 1]} : vector<4x128xf32> to vector<1x128xf32>
    %1040 = arith.truncf %1037 : vector<1x32xf32> to vector<1x32xbf16>
    %cst_347 = arith.constant dense<0.000000e+00> : vector<1x128xf32>
    %1041 = tpu.matmul %1040, %1010, %cst_347 {dimension_numbers = #tpu.dot_dimension_numbers<[1], [0], [0], [1], [0, 0, 1, 1], [], []>} : vector<1x32xbf16>, vector<32x128xbf16>, vector<1x128xf32> -> vector<1x128xf32>
    %1042 = arith.addf %1039, %1041 : vector<1x128xf32>
    %1043 = arith.negf %1042 : vector<1x128xf32>
    %1044 = math.exp %1043 : vector<1x128xf32>
    %cst_348 = arith.constant 1.000000e+00 : f32
    %1045 = vector.broadcast %cst_348 : f32 to vector<1x128xf32>
    %1046 = arith.addf %1045, %1044 : vector<1x128xf32>
    %1047 = arith.divf %1045, %1046 : vector<1x128xf32>
    %1048 = math.tanh %1042 : vector<1x128xf32>
    %1049 = vector.extract_strided_slice %1047 {offsets = [0, 0], sizes = [1, 32], strides = [1, 1]} : vector<1x128xf32> to vector<1x32xf32>
    %1050 = vector.extract_strided_slice %1047 {offsets = [0, 32], sizes = [1, 32], strides = [1, 1]} : vector<1x128xf32> to vector<1x32xf32>
    %1051 = vector.extract_strided_slice %1048 {offsets = [0, 64], sizes = [1, 32], strides = [1, 1]} : vector<1x128xf32> to vector<1x32xf32>
    %1052 = vector.extract_strided_slice %1047 {offsets = [0, 96], sizes = [1, 32], strides = [1, 1]} : vector<1x128xf32> to vector<1x32xf32>
    %1053 = arith.mulf %1050, %1035 : vector<1x32xf32>
    %1054 = arith.mulf %1049, %1051 : vector<1x32xf32>
    %1055 = arith.addf %1053, %1054 : vector<1x32xf32>
    %1056 = math.tanh %1055 : vector<1x32xf32>
    %1057 = arith.mulf %1052, %1056 : vector<1x32xf32>
    %c1_349 = arith.constant 1 : index
    %c0_350 = arith.constant 0 : index
    %1058 = vector.load %arg13[%c1_349, %c0_350] : memref<4x32xf32, #tpu.memory_space<vmem>>, vector<1x32xf32>
    tpu.vector_store %arg13[%c1_349, %c0_350], %1057 {strides = array<i32>} : memref<4x32xf32, #tpu.memory_space<vmem>>, vector<1x32xf32>,
    %1059 = vector.extract_strided_slice %1016 {offsets = [2, 0], sizes = [1, 128], strides = [1, 1]} : vector<4x128xf32> to vector<1x128xf32>
    %1060 = arith.truncf %1057 : vector<1x32xf32> to vector<1x32xbf16>
    %cst_351 = arith.constant dense<0.000000e+00> : vector<1x128xf32>
    %1061 = tpu.matmul %1060, %1010, %cst_351 {dimension_numbers = #tpu.dot_dimension_numbers<[1], [0], [0], [1], [0, 0, 1, 1], [], []>} : vector<1x32xbf16>, vector<32x128xbf16>, vector<1x128xf32> -> vector<1x128xf32>
    %1062 = arith.addf %1059, %1061 : vector<1x128xf32>
    %1063 = arith.negf %1062 : vector<1x128xf32>
    %1064 = math.exp %1063 : vector<1x128xf32>
    %cst_352 = arith.constant 1.000000e+00 : f32
    %1065 = vector.broadcast %cst_352 : f32 to vector<1x128xf32>
    %1066 = arith.addf %1065, %1064 : vector<1x128xf32>
    %1067 = arith.divf %1065, %1066 : vector<1x128xf32>
    %1068 = math.tanh %1062 : vector<1x128xf32>
    %1069 = vector.extract_strided_slice %1067 {offsets = [0, 0], sizes = [1, 32], strides = [1, 1]} : vector<1x128xf32> to vector<1x32xf32>
    %1070 = vector.extract_strided_slice %1067 {offsets = [0, 32], sizes = [1, 32], strides = [1, 1]} : vector<1x128xf32> to vector<1x32xf32>
    %1071 = vector.extract_strided_slice %1068 {offsets = [0, 64], sizes = [1, 32], strides = [1, 1]} : vector<1x128xf32> to vector<1x32xf32>
    %1072 = vector.extract_strided_slice %1067 {offsets = [0, 96], sizes = [1, 32], strides = [1, 1]} : vector<1x128xf32> to vector<1x32xf32>
    %1073 = arith.mulf %1070, %1055 : vector<1x32xf32>
    %1074 = arith.mulf %1069, %1071 : vector<1x32xf32>
    %1075 = arith.addf %1073, %1074 : vector<1x32xf32>
    %1076 = math.tanh %1075 : vector<1x32xf32>
    %1077 = arith.mulf %1072, %1076 : vector<1x32xf32>
    %c2_353 = arith.constant 2 : index
    %c0_354 = arith.constant 0 : index
    %1078 = vector.load %arg13[%c2_353, %c0_354] : memref<4x32xf32, #tpu.memory_space<vmem>>, vector<1x32xf32>
    tpu.vector_store %arg13[%c2_353, %c0_354], %1077 {strides = array<i32>} : memref<4x32xf32, #tpu.memory_space<vmem>>, vector<1x32xf32>,
    %1079 = vector.extract_strided_slice %1016 {offsets = [3, 0], sizes = [1, 128], strides = [1, 1]} : vector<4x128xf32> to vector<1x128xf32>
    %1080 = arith.truncf %1077 : vector<1x32xf32> to vector<1x32xbf16>
    %cst_355 = arith.constant dense<0.000000e+00> : vector<1x128xf32>
    %1081 = tpu.matmul %1080, %1010, %cst_355 {dimension_numbers = #tpu.dot_dimension_numbers<[1], [0], [0], [1], [0, 0, 1, 1], [], []>} : vector<1x32xbf16>, vector<32x128xbf16>, vector<1x128xf32> -> vector<1x128xf32>
    %1082 = arith.addf %1079, %1081 : vector<1x128xf32>
    %1083 = arith.negf %1082 : vector<1x128xf32>
    %1084 = math.exp %1083 : vector<1x128xf32>
    %cst_356 = arith.constant 1.000000e+00 : f32
    %1085 = vector.broadcast %cst_356 : f32 to vector<1x128xf32>
    %1086 = arith.addf %1085, %1084 : vector<1x128xf32>
    %1087 = arith.divf %1085, %1086 : vector<1x128xf32>
    %1088 = math.tanh %1082 : vector<1x128xf32>
    %1089 = vector.extract_strided_slice %1087 {offsets = [0, 0], sizes = [1, 32], strides = [1, 1]} : vector<1x128xf32> to vector<1x32xf32>
    %1090 = vector.extract_strided_slice %1087 {offsets = [0, 32], sizes = [1, 32], strides = [1, 1]} : vector<1x128xf32> to vector<1x32xf32>
    %1091 = vector.extract_strided_slice %1088 {offsets = [0, 64], sizes = [1, 32], strides = [1, 1]} : vector<1x128xf32> to vector<1x32xf32>
    %1092 = vector.extract_strided_slice %1087 {offsets = [0, 96], sizes = [1, 32], strides = [1, 1]} : vector<1x128xf32> to vector<1x32xf32>
    %1093 = arith.mulf %1090, %1075 : vector<1x32xf32>
    %1094 = arith.mulf %1089, %1091 : vector<1x32xf32>
    %1095 = arith.addf %1093, %1094 : vector<1x32xf32>
    %1096 = math.tanh %1095 : vector<1x32xf32>
    %1097 = arith.mulf %1092, %1096 : vector<1x32xf32>
    %c3_357 = arith.constant 3 : index
    %c0_358 = arith.constant 0 : index
    %1098 = vector.load %arg13[%c3_357, %c0_358] : memref<4x32xf32, #tpu.memory_space<vmem>>, vector<1x32xf32>
    tpu.vector_store %arg13[%c3_357, %c0_358], %1097 {strides = array<i32>} : memref<4x32xf32, #tpu.memory_space<vmem>>, vector<1x32xf32>,
    %c0_359 = arith.constant 0 : index
    %c0_360 = arith.constant 0 : index
    %1099 = vector.load %arg13[%c0_359, %c0_360] : memref<4x32xf32, #tpu.memory_space<vmem>>, vector<4x32xf32>
    %1100 = tpu.concatenate %1004, %1097 in 0 : vector<1x32xf32>, vector<1x32xf32> -> vector<2x32xf32>
    %1101 = tpu.concatenate %1002, %1095 in 0 : vector<1x32xf32>, vector<1x32xf32> -> vector<2x32xf32>
    %cst_361 = arith.constant 0.000000e+00 : f32
    %1102 = vector.broadcast %cst_361 : f32 to vector<4x32xf32>
    %1103 = arith.maximumf %1099, %1102 : vector<4x32xf32>
    %1104 = arith.subf %705, %1103 : vector<4x32xf32>
    %1105 = arith.addf %909, %1099 : vector<4x32xf32>
    %cst_362 = arith.constant -9.99999996E-12 : f32
    %1106 = vector.broadcast %cst_362 : f32 to vector<4x32xf32>
    %1107 = arith.cmpf olt, %1105, %1106 : vector<4x32xf32>
    %cst_363 = arith.constant -1.000000e+10 : f32
    %1108 = vector.broadcast %cst_363 : f32 to vector<4x32xf32>
    %1109 = arith.mulf %1105, %1108 : vector<4x32xf32>
    %1110 = arith.select %1107, %1109, %1105 : vector<4x32xi1>, vector<4x32xf32>
    %1111 = arith.addf %1110, %108 : vector<4x32xf32>
    %cst_364 = arith.constant 5.000000e-01 : f32
    %1112 = vector.broadcast %cst_364 : f32 to vector<4x32xf32>
    %1113 = arith.mulf %1111, %1112 : vector<4x32xf32>
    %1114 = math.tanh %1113 : vector<4x32xf32>
    %c2_365 = arith.constant 2 : index
    %c0_366 = arith.constant 0 : index
    %c0_367 = arith.constant 0 : index
    %c0_368 = arith.constant 0 : index
    %1115 = vector.load %arg7[%c2_365, %c0_366, %c0_367, %c0_368] : memref<3x2x32x128xbf16, #tpu.memory_space<vmem>>, vector<1x1x32x128xbf16>
    %1116 = vector.shape_cast %1115 : vector<1x1x32x128xbf16> to vector<32x128xbf16>
    %c2_369 = arith.constant 2 : index
    %c0_370 = arith.constant 0 : index
    %c0_371 = arith.constant 0 : index
    %c0_372 = arith.constant 0 : index
    %1117 = vector.load %arg8[%c2_369, %c0_370, %c0_371, %c0_372] : memref<3x2x32x128xbf16, #tpu.memory_space<vmem>>, vector<1x1x32x128xbf16>
    %1118 = vector.shape_cast %1117 : vector<1x1x32x128xbf16> to vector<32x128xbf16>
    %c2_373 = arith.constant 2 : index
    %c0_374 = arith.constant 0 : index
    %c0_375 = arith.constant 0 : index
    %c0_376 = arith.constant 0 : index
    %1119 = vector.load %arg9[%c2_373, %c0_374, %c0_375, %c0_376] : memref<3x2x1x128xf32, #tpu.memory_space<vmem>>, vector<1x1x1x128xf32>
    %1120 = vector.shape_cast %1119 : vector<1x1x1x128xf32> to vector<1x128xf32>
    %1121 = arith.truncf %1114 : vector<4x32xf32> to vector<4x32xbf16>
    %cst_377 = arith.constant dense<0.000000e+00> : vector<4x128xf32>
    %1122 = tpu.matmul %1121, %1116, %cst_377 {dimension_numbers = #tpu.dot_dimension_numbers<[1], [0], [0], [1], [0, 0, 1, 1], [], []>} : vector<4x32xbf16>, vector<32x128xbf16>, vector<4x128xf32> -> vector<4x128xf32>
    %1123 = vector.broadcast %1120 : vector<1x128xf32> to vector<4x128xf32>
    %1124 = arith.addf %1122, %1123 : vector<4x128xf32>
    %1125 = vector.extract_strided_slice %1101 {offsets = [0, 0], sizes = [1, 32], strides = [1, 1]} : vector<2x32xf32> to vector<1x32xf32>
    %1126 = vector.extract_strided_slice %1100 {offsets = [0, 0], sizes = [1, 32], strides = [1, 1]} : vector<2x32xf32> to vector<1x32xf32>
    %1127 = vector.extract_strided_slice %1124 {offsets = [0, 0], sizes = [1, 128], strides = [1, 1]} : vector<4x128xf32> to vector<1x128xf32>
    %1128 = arith.truncf %1125 : vector<1x32xf32> to vector<1x32xbf16>
    %cst_378 = arith.constant dense<0.000000e+00> : vector<1x128xf32>
    %1129 = tpu.matmul %1128, %1118, %cst_378 {dimension_numbers = #tpu.dot_dimension_numbers<[1], [0], [0], [1], [0, 0, 1, 1], [], []>} : vector<1x32xbf16>, vector<32x128xbf16>, vector<1x128xf32> -> vector<1x128xf32>
    %1130 = arith.addf %1127, %1129 : vector<1x128xf32>
    %1131 = arith.negf %1130 : vector<1x128xf32>
    %1132 = math.exp %1131 : vector<1x128xf32>
    %cst_379 = arith.constant 1.000000e+00 : f32
    %1133 = vector.broadcast %cst_379 : f32 to vector<1x128xf32>
    %1134 = arith.addf %1133, %1132 : vector<1x128xf32>
    %1135 = arith.divf %1133, %1134 : vector<1x128xf32>
    %1136 = math.tanh %1130 : vector<1x128xf32>
    %1137 = vector.extract_strided_slice %1135 {offsets = [0, 0], sizes = [1, 32], strides = [1, 1]} : vector<1x128xf32> to vector<1x32xf32>
    %1138 = vector.extract_strided_slice %1135 {offsets = [0, 32], sizes = [1, 32], strides = [1, 1]} : vector<1x128xf32> to vector<1x32xf32>
    %1139 = vector.extract_strided_slice %1136 {offsets = [0, 64], sizes = [1, 32], strides = [1, 1]} : vector<1x128xf32> to vector<1x32xf32>
    %1140 = vector.extract_strided_slice %1135 {offsets = [0, 96], sizes = [1, 32], strides = [1, 1]} : vector<1x128xf32> to vector<1x32xf32>
    %1141 = arith.mulf %1138, %1126 : vector<1x32xf32>
    %1142 = arith.mulf %1137, %1139 : vector<1x32xf32>
    %1143 = arith.addf %1141, %1142 : vector<1x32xf32>
    %1144 = math.tanh %1143 : vector<1x32xf32>
    %1145 = arith.mulf %1140, %1144 : vector<1x32xf32>
    %c0_380 = arith.constant 0 : index
    %c0_381 = arith.constant 0 : index
    %1146 = vector.load %arg13[%c0_380, %c0_381] : memref<4x32xf32, #tpu.memory_space<vmem>>, vector<1x32xf32>
    tpu.vector_store %arg13[%c0_380, %c0_381], %1145 {strides = array<i32>} : memref<4x32xf32, #tpu.memory_space<vmem>>, vector<1x32xf32>,
    %1147 = vector.extract_strided_slice %1124 {offsets = [1, 0], sizes = [1, 128], strides = [1, 1]} : vector<4x128xf32> to vector<1x128xf32>
    %1148 = arith.truncf %1145 : vector<1x32xf32> to vector<1x32xbf16>
    %cst_382 = arith.constant dense<0.000000e+00> : vector<1x128xf32>
    %1149 = tpu.matmul %1148, %1118, %cst_382 {dimension_numbers = #tpu.dot_dimension_numbers<[1], [0], [0], [1], [0, 0, 1, 1], [], []>} : vector<1x32xbf16>, vector<32x128xbf16>, vector<1x128xf32> -> vector<1x128xf32>
    %1150 = arith.addf %1147, %1149 : vector<1x128xf32>
    %1151 = arith.negf %1150 : vector<1x128xf32>
    %1152 = math.exp %1151 : vector<1x128xf32>
    %cst_383 = arith.constant 1.000000e+00 : f32
    %1153 = vector.broadcast %cst_383 : f32 to vector<1x128xf32>
    %1154 = arith.addf %1153, %1152 : vector<1x128xf32>
    %1155 = arith.divf %1153, %1154 : vector<1x128xf32>
    %1156 = math.tanh %1150 : vector<1x128xf32>
    %1157 = vector.extract_strided_slice %1155 {offsets = [0, 0], sizes = [1, 32], strides = [1, 1]} : vector<1x128xf32> to vector<1x32xf32>
    %1158 = vector.extract_strided_slice %1155 {offsets = [0, 32], sizes = [1, 32], strides = [1, 1]} : vector<1x128xf32> to vector<1x32xf32>
    %1159 = vector.extract_strided_slice %1156 {offsets = [0, 64], sizes = [1, 32], strides = [1, 1]} : vector<1x128xf32> to vector<1x32xf32>
    %1160 = vector.extract_strided_slice %1155 {offsets = [0, 96], sizes = [1, 32], strides = [1, 1]} : vector<1x128xf32> to vector<1x32xf32>
    %1161 = arith.mulf %1158, %1143 : vector<1x32xf32>
    %1162 = arith.mulf %1157, %1159 : vector<1x32xf32>
    %1163 = arith.addf %1161, %1162 : vector<1x32xf32>
    %1164 = math.tanh %1163 : vector<1x32xf32>
    %1165 = arith.mulf %1160, %1164 : vector<1x32xf32>
    %c1_384 = arith.constant 1 : index
    %c0_385 = arith.constant 0 : index
    %1166 = vector.load %arg13[%c1_384, %c0_385] : memref<4x32xf32, #tpu.memory_space<vmem>>, vector<1x32xf32>
    tpu.vector_store %arg13[%c1_384, %c0_385], %1165 {strides = array<i32>} : memref<4x32xf32, #tpu.memory_space<vmem>>, vector<1x32xf32>,
    %1167 = vector.extract_strided_slice %1124 {offsets = [2, 0], sizes = [1, 128], strides = [1, 1]} : vector<4x128xf32> to vector<1x128xf32>
    %1168 = arith.truncf %1165 : vector<1x32xf32> to vector<1x32xbf16>
    %cst_386 = arith.constant dense<0.000000e+00> : vector<1x128xf32>
    %1169 = tpu.matmul %1168, %1118, %cst_386 {dimension_numbers = #tpu.dot_dimension_numbers<[1], [0], [0], [1], [0, 0, 1, 1], [], []>} : vector<1x32xbf16>, vector<32x128xbf16>, vector<1x128xf32> -> vector<1x128xf32>
    %1170 = arith.addf %1167, %1169 : vector<1x128xf32>
    %1171 = arith.negf %1170 : vector<1x128xf32>
    %1172 = math.exp %1171 : vector<1x128xf32>
    %cst_387 = arith.constant 1.000000e+00 : f32
    %1173 = vector.broadcast %cst_387 : f32 to vector<1x128xf32>
    %1174 = arith.addf %1173, %1172 : vector<1x128xf32>
    %1175 = arith.divf %1173, %1174 : vector<1x128xf32>
    %1176 = math.tanh %1170 : vector<1x128xf32>
    %1177 = vector.extract_strided_slice %1175 {offsets = [0, 0], sizes = [1, 32], strides = [1, 1]} : vector<1x128xf32> to vector<1x32xf32>
    %1178 = vector.extract_strided_slice %1175 {offsets = [0, 32], sizes = [1, 32], strides = [1, 1]} : vector<1x128xf32> to vector<1x32xf32>
    %1179 = vector.extract_strided_slice %1176 {offsets = [0, 64], sizes = [1, 32], strides = [1, 1]} : vector<1x128xf32> to vector<1x32xf32>
    %1180 = vector.extract_strided_slice %1175 {offsets = [0, 96], sizes = [1, 32], strides = [1, 1]} : vector<1x128xf32> to vector<1x32xf32>
    %1181 = arith.mulf %1178, %1163 : vector<1x32xf32>
    %1182 = arith.mulf %1177, %1179 : vector<1x32xf32>
    %1183 = arith.addf %1181, %1182 : vector<1x32xf32>
    %1184 = math.tanh %1183 : vector<1x32xf32>
    %1185 = arith.mulf %1180, %1184 : vector<1x32xf32>
    %c2_388 = arith.constant 2 : index
    %c0_389 = arith.constant 0 : index
    %1186 = vector.load %arg13[%c2_388, %c0_389] : memref<4x32xf32, #tpu.memory_space<vmem>>, vector<1x32xf32>
    tpu.vector_store %arg13[%c2_388, %c0_389], %1185 {strides = array<i32>} : memref<4x32xf32, #tpu.memory_space<vmem>>, vector<1x32xf32>,
    %1187 = vector.extract_strided_slice %1124 {offsets = [3, 0], sizes = [1, 128], strides = [1, 1]} : vector<4x128xf32> to vector<1x128xf32>
    %1188 = arith.truncf %1185 : vector<1x32xf32> to vector<1x32xbf16>
    %cst_390 = arith.constant dense<0.000000e+00> : vector<1x128xf32>
    %1189 = tpu.matmul %1188, %1118, %cst_390 {dimension_numbers = #tpu.dot_dimension_numbers<[1], [0], [0], [1], [0, 0, 1, 1], [], []>} : vector<1x32xbf16>, vector<32x128xbf16>, vector<1x128xf32> -> vector<1x128xf32>
    %1190 = arith.addf %1187, %1189 : vector<1x128xf32>
    %1191 = arith.negf %1190 : vector<1x128xf32>
    %1192 = math.exp %1191 : vector<1x128xf32>
    %cst_391 = arith.constant 1.000000e+00 : f32
    %1193 = vector.broadcast %cst_391 : f32 to vector<1x128xf32>
    %1194 = arith.addf %1193, %1192 : vector<1x128xf32>
    %1195 = arith.divf %1193, %1194 : vector<1x128xf32>
    %1196 = math.tanh %1190 : vector<1x128xf32>
    %1197 = vector.extract_strided_slice %1195 {offsets = [0, 0], sizes = [1, 32], strides = [1, 1]} : vector<1x128xf32> to vector<1x32xf32>
    %1198 = vector.extract_strided_slice %1195 {offsets = [0, 32], sizes = [1, 32], strides = [1, 1]} : vector<1x128xf32> to vector<1x32xf32>
    %1199 = vector.extract_strided_slice %1196 {offsets = [0, 64], sizes = [1, 32], strides = [1, 1]} : vector<1x128xf32> to vector<1x32xf32>
    %1200 = vector.extract_strided_slice %1195 {offsets = [0, 96], sizes = [1, 32], strides = [1, 1]} : vector<1x128xf32> to vector<1x32xf32>
    %1201 = arith.mulf %1198, %1183 : vector<1x32xf32>
    %1202 = arith.mulf %1197, %1199 : vector<1x32xf32>
    %1203 = arith.addf %1201, %1202 : vector<1x32xf32>
    %1204 = math.tanh %1203 : vector<1x32xf32>
    %1205 = arith.mulf %1200, %1204 : vector<1x32xf32>
    %c3_392 = arith.constant 3 : index
    %c0_393 = arith.constant 0 : index
    %1206 = vector.load %arg13[%c3_392, %c0_393] : memref<4x32xf32, #tpu.memory_space<vmem>>, vector<1x32xf32>
    tpu.vector_store %arg13[%c3_392, %c0_393], %1205 {strides = array<i32>} : memref<4x32xf32, #tpu.memory_space<vmem>>, vector<1x32xf32>,
    %c0_394 = arith.constant 0 : index
    %c0_395 = arith.constant 0 : index
    %1207 = vector.load %arg13[%c0_394, %c0_395] : memref<4x32xf32, #tpu.memory_space<vmem>>, vector<4x32xf32>
    %c2_396 = arith.constant 2 : index
    %c1_397 = arith.constant 1 : index
    %c0_398 = arith.constant 0 : index
    %c0_399 = arith.constant 0 : index
    %1208 = vector.load %arg7[%c2_396, %c1_397, %c0_398, %c0_399] : memref<3x2x32x128xbf16, #tpu.memory_space<vmem>>, vector<1x1x32x128xbf16>
    %1209 = vector.shape_cast %1208 : vector<1x1x32x128xbf16> to vector<32x128xbf16>
    %c2_400 = arith.constant 2 : index
    %c1_401 = arith.constant 1 : index
    %c0_402 = arith.constant 0 : index
    %c0_403 = arith.constant 0 : index
    %1210 = vector.load %arg8[%c2_400, %c1_401, %c0_402, %c0_403] : memref<3x2x32x128xbf16, #tpu.memory_space<vmem>>, vector<1x1x32x128xbf16>
    %1211 = vector.shape_cast %1210 : vector<1x1x32x128xbf16> to vector<32x128xbf16>
    %c2_404 = arith.constant 2 : index
    %c1_405 = arith.constant 1 : index
    %c0_406 = arith.constant 0 : index
    %c0_407 = arith.constant 0 : index
    %1212 = vector.load %arg9[%c2_404, %c1_405, %c0_406, %c0_407] : memref<3x2x1x128xf32, #tpu.memory_space<vmem>>, vector<1x1x1x128xf32>
    %1213 = vector.shape_cast %1212 : vector<1x1x1x128xf32> to vector<1x128xf32>
    %1214 = arith.truncf %1207 : vector<4x32xf32> to vector<4x32xbf16>
    %cst_408 = arith.constant dense<0.000000e+00> : vector<4x128xf32>
    %1215 = tpu.matmul %1214, %1209, %cst_408 {dimension_numbers = #tpu.dot_dimension_numbers<[1], [0], [0], [1], [0, 0, 1, 1], [], []>} : vector<4x32xbf16>, vector<32x128xbf16>, vector<4x128xf32> -> vector<4x128xf32>
    %1216 = vector.broadcast %1213 : vector<1x128xf32> to vector<4x128xf32>
    %1217 = arith.addf %1215, %1216 : vector<4x128xf32>
    %1218 = vector.extract_strided_slice %1101 {offsets = [1, 0], sizes = [1, 32], strides = [1, 1]} : vector<2x32xf32> to vector<1x32xf32>
    %1219 = vector.extract_strided_slice %1100 {offsets = [1, 0], sizes = [1, 32], strides = [1, 1]} : vector<2x32xf32> to vector<1x32xf32>
    %1220 = vector.extract_strided_slice %1217 {offsets = [0, 0], sizes = [1, 128], strides = [1, 1]} : vector<4x128xf32> to vector<1x128xf32>
    %1221 = arith.truncf %1218 : vector<1x32xf32> to vector<1x32xbf16>
    %cst_409 = arith.constant dense<0.000000e+00> : vector<1x128xf32>
    %1222 = tpu.matmul %1221, %1211, %cst_409 {dimension_numbers = #tpu.dot_dimension_numbers<[1], [0], [0], [1], [0, 0, 1, 1], [], []>} : vector<1x32xbf16>, vector<32x128xbf16>, vector<1x128xf32> -> vector<1x128xf32>
    %1223 = arith.addf %1220, %1222 : vector<1x128xf32>
    %1224 = arith.negf %1223 : vector<1x128xf32>
    %1225 = math.exp %1224 : vector<1x128xf32>
    %cst_410 = arith.constant 1.000000e+00 : f32
    %1226 = vector.broadcast %cst_410 : f32 to vector<1x128xf32>
    %1227 = arith.addf %1226, %1225 : vector<1x128xf32>
    %1228 = arith.divf %1226, %1227 : vector<1x128xf32>
    %1229 = math.tanh %1223 : vector<1x128xf32>
    %1230 = vector.extract_strided_slice %1228 {offsets = [0, 0], sizes = [1, 32], strides = [1, 1]} : vector<1x128xf32> to vector<1x32xf32>
    %1231 = vector.extract_strided_slice %1228 {offsets = [0, 32], sizes = [1, 32], strides = [1, 1]} : vector<1x128xf32> to vector<1x32xf32>
    %1232 = vector.extract_strided_slice %1229 {offsets = [0, 64], sizes = [1, 32], strides = [1, 1]} : vector<1x128xf32> to vector<1x32xf32>
    %1233 = vector.extract_strided_slice %1228 {offsets = [0, 96], sizes = [1, 32], strides = [1, 1]} : vector<1x128xf32> to vector<1x32xf32>
    %1234 = arith.mulf %1231, %1219 : vector<1x32xf32>
    %1235 = arith.mulf %1230, %1232 : vector<1x32xf32>
    %1236 = arith.addf %1234, %1235 : vector<1x32xf32>
    %1237 = math.tanh %1236 : vector<1x32xf32>
    %1238 = arith.mulf %1233, %1237 : vector<1x32xf32>
    %c0_411 = arith.constant 0 : index
    %c0_412 = arith.constant 0 : index
    %1239 = vector.load %arg13[%c0_411, %c0_412] : memref<4x32xf32, #tpu.memory_space<vmem>>, vector<1x32xf32>
    tpu.vector_store %arg13[%c0_411, %c0_412], %1238 {strides = array<i32>} : memref<4x32xf32, #tpu.memory_space<vmem>>, vector<1x32xf32>,
    %1240 = vector.extract_strided_slice %1217 {offsets = [1, 0], sizes = [1, 128], strides = [1, 1]} : vector<4x128xf32> to vector<1x128xf32>
    %1241 = arith.truncf %1238 : vector<1x32xf32> to vector<1x32xbf16>
    %cst_413 = arith.constant dense<0.000000e+00> : vector<1x128xf32>
    %1242 = tpu.matmul %1241, %1211, %cst_413 {dimension_numbers = #tpu.dot_dimension_numbers<[1], [0], [0], [1], [0, 0, 1, 1], [], []>} : vector<1x32xbf16>, vector<32x128xbf16>, vector<1x128xf32> -> vector<1x128xf32>
    %1243 = arith.addf %1240, %1242 : vector<1x128xf32>
    %1244 = arith.negf %1243 : vector<1x128xf32>
    %1245 = math.exp %1244 : vector<1x128xf32>
    %cst_414 = arith.constant 1.000000e+00 : f32
    %1246 = vector.broadcast %cst_414 : f32 to vector<1x128xf32>
    %1247 = arith.addf %1246, %1245 : vector<1x128xf32>
    %1248 = arith.divf %1246, %1247 : vector<1x128xf32>
    %1249 = math.tanh %1243 : vector<1x128xf32>
    %1250 = vector.extract_strided_slice %1248 {offsets = [0, 0], sizes = [1, 32], strides = [1, 1]} : vector<1x128xf32> to vector<1x32xf32>
    %1251 = vector.extract_strided_slice %1248 {offsets = [0, 32], sizes = [1, 32], strides = [1, 1]} : vector<1x128xf32> to vector<1x32xf32>
    %1252 = vector.extract_strided_slice %1249 {offsets = [0, 64], sizes = [1, 32], strides = [1, 1]} : vector<1x128xf32> to vector<1x32xf32>
    %1253 = vector.extract_strided_slice %1248 {offsets = [0, 96], sizes = [1, 32], strides = [1, 1]} : vector<1x128xf32> to vector<1x32xf32>
    %1254 = arith.mulf %1251, %1236 : vector<1x32xf32>
    %1255 = arith.mulf %1250, %1252 : vector<1x32xf32>
    %1256 = arith.addf %1254, %1255 : vector<1x32xf32>
    %1257 = math.tanh %1256 : vector<1x32xf32>
    %1258 = arith.mulf %1253, %1257 : vector<1x32xf32>
    %c1_415 = arith.constant 1 : index
    %c0_416 = arith.constant 0 : index
    %1259 = vector.load %arg13[%c1_415, %c0_416] : memref<4x32xf32, #tpu.memory_space<vmem>>, vector<1x32xf32>
    tpu.vector_store %arg13[%c1_415, %c0_416], %1258 {strides = array<i32>} : memref<4x32xf32, #tpu.memory_space<vmem>>, vector<1x32xf32>,
    %1260 = vector.extract_strided_slice %1217 {offsets = [2, 0], sizes = [1, 128], strides = [1, 1]} : vector<4x128xf32> to vector<1x128xf32>
    %1261 = arith.truncf %1258 : vector<1x32xf32> to vector<1x32xbf16>
    %cst_417 = arith.constant dense<0.000000e+00> : vector<1x128xf32>
    %1262 = tpu.matmul %1261, %1211, %cst_417 {dimension_numbers = #tpu.dot_dimension_numbers<[1], [0], [0], [1], [0, 0, 1, 1], [], []>} : vector<1x32xbf16>, vector<32x128xbf16>, vector<1x128xf32> -> vector<1x128xf32>
    %1263 = arith.addf %1260, %1262 : vector<1x128xf32>
    %1264 = arith.negf %1263 : vector<1x128xf32>
    %1265 = math.exp %1264 : vector<1x128xf32>
    %cst_418 = arith.constant 1.000000e+00 : f32
    %1266 = vector.broadcast %cst_418 : f32 to vector<1x128xf32>
    %1267 = arith.addf %1266, %1265 : vector<1x128xf32>
    %1268 = arith.divf %1266, %1267 : vector<1x128xf32>
    %1269 = math.tanh %1263 : vector<1x128xf32>
    %1270 = vector.extract_strided_slice %1268 {offsets = [0, 0], sizes = [1, 32], strides = [1, 1]} : vector<1x128xf32> to vector<1x32xf32>
    %1271 = vector.extract_strided_slice %1268 {offsets = [0, 32], sizes = [1, 32], strides = [1, 1]} : vector<1x128xf32> to vector<1x32xf32>
    %1272 = vector.extract_strided_slice %1269 {offsets = [0, 64], sizes = [1, 32], strides = [1, 1]} : vector<1x128xf32> to vector<1x32xf32>
    %1273 = vector.extract_strided_slice %1268 {offsets = [0, 96], sizes = [1, 32], strides = [1, 1]} : vector<1x128xf32> to vector<1x32xf32>
    %1274 = arith.mulf %1271, %1256 : vector<1x32xf32>
    %1275 = arith.mulf %1270, %1272 : vector<1x32xf32>
    %1276 = arith.addf %1274, %1275 : vector<1x32xf32>
    %1277 = math.tanh %1276 : vector<1x32xf32>
    %1278 = arith.mulf %1273, %1277 : vector<1x32xf32>
    %c2_419 = arith.constant 2 : index
    %c0_420 = arith.constant 0 : index
    %1279 = vector.load %arg13[%c2_419, %c0_420] : memref<4x32xf32, #tpu.memory_space<vmem>>, vector<1x32xf32>
    tpu.vector_store %arg13[%c2_419, %c0_420], %1278 {strides = array<i32>} : memref<4x32xf32, #tpu.memory_space<vmem>>, vector<1x32xf32>,
    %1280 = vector.extract_strided_slice %1217 {offsets = [3, 0], sizes = [1, 128], strides = [1, 1]} : vector<4x128xf32> to vector<1x128xf32>
    %1281 = arith.truncf %1278 : vector<1x32xf32> to vector<1x32xbf16>
    %cst_421 = arith.constant dense<0.000000e+00> : vector<1x128xf32>
    %1282 = tpu.matmul %1281, %1211, %cst_421 {dimension_numbers = #tpu.dot_dimension_numbers<[1], [0], [0], [1], [0, 0, 1, 1], [], []>} : vector<1x32xbf16>, vector<32x128xbf16>, vector<1x128xf32> -> vector<1x128xf32>
    %1283 = arith.addf %1280, %1282 : vector<1x128xf32>
    %1284 = arith.negf %1283 : vector<1x128xf32>
    %1285 = math.exp %1284 : vector<1x128xf32>
    %cst_422 = arith.constant 1.000000e+00 : f32
    %1286 = vector.broadcast %cst_422 : f32 to vector<1x128xf32>
    %1287 = arith.addf %1286, %1285 : vector<1x128xf32>
    %1288 = arith.divf %1286, %1287 : vector<1x128xf32>
    %1289 = math.tanh %1283 : vector<1x128xf32>
    %1290 = vector.extract_strided_slice %1288 {offsets = [0, 0], sizes = [1, 32], strides = [1, 1]} : vector<1x128xf32> to vector<1x32xf32>
    %1291 = vector.extract_strided_slice %1288 {offsets = [0, 32], sizes = [1, 32], strides = [1, 1]} : vector<1x128xf32> to vector<1x32xf32>
    %1292 = vector.extract_strided_slice %1289 {offsets = [0, 64], sizes = [1, 32], strides = [1, 1]} : vector<1x128xf32> to vector<1x32xf32>
    %1293 = vector.extract_strided_slice %1288 {offsets = [0, 96], sizes = [1, 32], strides = [1, 1]} : vector<1x128xf32> to vector<1x32xf32>
    %1294 = arith.mulf %1291, %1276 : vector<1x32xf32>
    %1295 = arith.mulf %1290, %1292 : vector<1x32xf32>
    %1296 = arith.addf %1294, %1295 : vector<1x32xf32>
    %1297 = math.tanh %1296 : vector<1x32xf32>
    %1298 = arith.mulf %1293, %1297 : vector<1x32xf32>
    %c3_423 = arith.constant 3 : index
    %c0_424 = arith.constant 0 : index
    %1299 = vector.load %arg13[%c3_423, %c0_424] : memref<4x32xf32, #tpu.memory_space<vmem>>, vector<1x32xf32>
    tpu.vector_store %arg13[%c3_423, %c0_424], %1298 {strides = array<i32>} : memref<4x32xf32, #tpu.memory_space<vmem>>, vector<1x32xf32>,
    %c0_425 = arith.constant 0 : index
    %c0_426 = arith.constant 0 : index
    %1300 = vector.load %arg13[%c0_425, %c0_426] : memref<4x32xf32, #tpu.memory_space<vmem>>, vector<4x32xf32>
    %1301 = tpu.concatenate %1205, %1298 in 0 : vector<1x32xf32>, vector<1x32xf32> -> vector<2x32xf32>
    %1302 = tpu.concatenate %1203, %1296 in 0 : vector<1x32xf32>, vector<1x32xf32> -> vector<2x32xf32>
    %cst_427 = arith.constant 0.000000e+00 : f32
    %1303 = vector.broadcast %cst_427 : f32 to vector<4x32xf32>
    %1304 = arith.maximumf %1300, %1303 : vector<4x32xf32>
    %1305 = arith.addf %1104, %1304 : vector<4x32xf32>
    %c0_428 = arith.constant 0 : index
    %c0_429 = arith.constant 0 : index
    %1306 = vector.load %arg10[%c0_428, %c0_429] : memref<4x32xf32, #tpu.memory_space<vmem>>, vector<4x32xf32>
    tpu.vector_store %arg10[%c0_428, %c0_429], %1305 {strides = array<i32>} : memref<4x32xf32, #tpu.memory_space<vmem>>, vector<4x32xf32>,
    %c0_430 = arith.constant 0 : index
    %c0_431 = arith.constant 0 : index
    %1307 = vector.load %arg11[%c0_430, %c0_431] : memref<2x32xf32, #tpu.memory_space<vmem>>, vector<2x32xf32>
    tpu.vector_store %arg11[%c0_430, %c0_431], %1302 {strides = array<i32>} : memref<2x32xf32, #tpu.memory_space<vmem>>, vector<2x32xf32>,
    %c0_432 = arith.constant 0 : index
    %c0_433 = arith.constant 0 : index
    %1308 = vector.load %arg12[%c0_432, %c0_433] : memref<2x32xf32, #tpu.memory_space<vmem>>, vector<2x32xf32>
    tpu.vector_store %arg12[%c0_432, %c0_433], %1301 {strides = array<i32>} : memref<2x32xf32, #tpu.memory_space<vmem>>, vector<2x32xf32>,
    return
  }
}

</mosaic_0001>

<llo_original>
// kernel: mmm_forward.1
$region0: #{mmm_forward.1}
  #allocation0 [shape = 'u32[]', space=smem, size = 0x4, offset = 0x4, fixed_abs, tag = 'smem constant byte address 0x4 - core index']
  #allocation1 [shape = 'u32[144,128]{1,0:T(1,128)}', space=vmem, size = 0x12000, scoped, tag = 'internal scratch']
  #allocation2 [shape = 'f32[4,32]{1,0:T(4,128)}', space=vmem, size = 0x800, scoped, tag = 'scratch operand']
  %s0 = inlined_call_operand.vmem [shape: f32[4,354], index: 0, kind: input, shape index: {}]
  %s1 = inlined_call_operand.vmem [shape: f32[354,170], index: 1, kind: input, shape index: {}]
  %s2 = inlined_call_operand.vmem [shape: f32[170,78], index: 2, kind: input, shape index: {}]
  %s3 = inlined_call_operand.vmem [shape: f32[78,32], index: 3, kind: input, shape index: {}]
  %s4 = inlined_call_operand.vmem [shape: f32[9], index: 4, kind: input, shape index: {}]
  %s5 = inlined_call_operand.vmem [shape: f32[2,32], index: 5, kind: input, shape index: {}]
  %s6 = inlined_call_operand.vmem [shape: f32[2,32], index: 6, kind: input, shape index: {}]
  %s7 = inlined_call_operand.vmem [shape: bf16[3,2,32,128], index: 7, kind: input, shape index: {}]
  %s8 = inlined_call_operand.vmem [shape: bf16[3,2,32,128], index: 8, kind: input, shape index: {}]
  %s9 = inlined_call_operand.vmem [shape: f32[3,2,1,128], index: 9, kind: input, shape index: {}]
  %s10 = inlined_call_operand.hbm [shape: f32[4,32], index: 10, kind: output, shape index: {0}]
  %s11 = inlined_call_operand.hbm [shape: f32[2,32], index: 11, kind: output, shape index: {1}]
  %s12 = inlined_call_operand.hbm [shape: f32[2,32], index: 12, kind: output, shape index: {2}]
  %13 = xla_tuple %s10, %s11, %s12
  %s14 = sld [smem:[#allocation0]]
  $region70: #{mmm_forward.1} parent=0
    _
  %s16 = ssub.s32 1, %s14
  %s17 = scalar_select 0, %s16, %s14
  $region1: #{mmm_forward.1} parent=0
    #allocation3 [shape = 'u8[512]{0}', space=smem, size = 0x200, scoped, tag = 'input window, operand 4, single buffered']
    #allocation4 [shape = 's32[1]{0}', space=sflag, size = 0x4, scoped, tag = 'scoped memory for mmm_forward.1']
    #allocation5 [shape = 's32[1]{0}', space=sflag, size = 0x4, scoped, tag = 'scoped memory for mmm_forward.1']
    #allocation6 [shape = 'u8[2048]{0}', space=vmem, size = 0x800, scoped, tag = 'output window, operand 0, single buffered']
    #allocation7 [shape = 'u8[1024]{0}', space=vmem, size = 0x400, scoped, tag = 'output window, operand 1, single buffered']
    #allocation8 [shape = 's32[1]{0}', space=sflag, size = 0x4, scoped, tag = 'scoped memory for mmm_forward.1']
    #allocation9 [shape = 'u8[1024]{0}', space=vmem, size = 0x400, scoped, tag = 'output window, operand 2, single buffered']
    %18 = vsyncpa [#allocation5], 0
    %19 = vsyncpa [#allocation4], 0
    %20 = vsyncpa [#allocation8], 0
    // Predicated region
    $region2: #{mmm_forward.1} parent=1 // pred_check
      _
    $region3: #{mmm_forward.1} parent=1 // pred_check_branch
      %22 = sbr.rel (0) target = $region5
    $region4: #{mmm_forward.1} parent=1 // pred_region
      _
    $region5: #{mmm_forward.1} parent=1 // pred_fallthru
      _
    // Predicated region
    $region6: #{mmm_forward.1} parent=1 // pred_check
      _
    $region7: #{mmm_forward.1} parent=1 // pred_check_branch
      %24 = sbr.rel (0) target = $region9
    $region8: #{mmm_forward.1} parent=1 // pred_region
      _
    $region9: #{mmm_forward.1} parent=1 // pred_fallthru
      _
    // Predicated region
    $region10: #{mmm_forward.1} parent=1 // pred_check
      _
    $region11: #{mmm_forward.1} parent=1 // pred_check_branch
      %26 = sbr.rel (0) target = $region13
    $region12: #{mmm_forward.1} parent=1 // pred_region
      _
    $region13: #{mmm_forward.1} parent=1 // pred_fallthru
      _
    // Predicated region
    $region14: #{mmm_forward.1} parent=1 // pred_check
      _
    $region15: #{mmm_forward.1} parent=1 // pred_check_branch
      %28 = sbr.rel (0) target = $region17
    $region16: #{mmm_forward.1} parent=1 // pred_region
      _
    $region17: #{mmm_forward.1} parent=1 // pred_fallthru
      _
    // Predicated region
    $region18: #{mmm_forward.1} parent=1 // pred_check
      _
    $region19: #{mmm_forward.1} parent=1 // pred_check_branch
      %30 = sbr.rel (0) target = $region21
    $region20: #{mmm_forward.1} parent=1 // pred_region
      %s32 = ssub.s32 16, 16
      %33 = vsyncadd [#allocation5], %s32
      %s35 = sshll.u32 %s4, 4
      %s36 = int_to_ptr.vmem [resolvable:$true] %s35
      %38 = dma.vmem_to_smem %s36, 16, [#allocation3], [#allocation5]
    $region21: #{mmm_forward.1} parent=1 // pred_fallthru
      _
    // Predicated region
    $region22: #{mmm_forward.1} parent=1 // pred_check
      _
    $region23: #{mmm_forward.1} parent=1 // pred_check_branch
      %40 = sbr.rel (0) target = $region25
    $region24: #{mmm_forward.1} parent=1 // pred_region
      _
    $region25: #{mmm_forward.1} parent=1 // pred_fallthru
      _
    // Predicated region
    $region26: #{mmm_forward.1} parent=1 // pred_check
      _
    $region27: #{mmm_forward.1} parent=1 // pred_check_branch
      %42 = sbr.rel (0) target = $region29
    $region28: #{mmm_forward.1} parent=1 // pred_region
      _
    $region29: #{mmm_forward.1} parent=1 // pred_fallthru
      _
    // Predicated region
    $region30: #{mmm_forward.1} parent=1 // pred_check
      _
    $region31: #{mmm_forward.1} parent=1 // pred_check_branch
      %44 = sbr.rel (0) target = $region33
    $region32: #{mmm_forward.1} parent=1 // pred_region
      _
    $region33: #{mmm_forward.1} parent=1 // pred_fallthru
      _
    // Predicated region
    $region34: #{mmm_forward.1} parent=1 // pred_check
      _
    $region35: #{mmm_forward.1} parent=1 // pred_check_branch
      %46 = sbr.rel (0) target = $region37
    $region36: #{mmm_forward.1} parent=1 // pred_region
      _
    $region37: #{mmm_forward.1} parent=1 // pred_fallthru
      _
    // Predicated region
    $region38: #{mmm_forward.1} parent=1 // pred_check
      _
    $region39: #{mmm_forward.1} parent=1 // pred_check_branch
      %48 = sbr.rel (0) target = $region41
    $region40: #{mmm_forward.1} parent=1 // pred_region
      _
    $region41: #{mmm_forward.1} parent=1 // pred_fallthru
      _
    // Predicated region
    $region42: #{mmm_forward.1} parent=1 // pred_check
      _
    $region43: #{mmm_forward.1} parent=1 // pred_check_branch
      %50 = sbr.rel (0) target = $region45
    $region44: #{mmm_forward.1} parent=1 // pred_region
      %51 = dma.done [#allocation5], 16
    $region45: #{mmm_forward.1} parent=1 // pred_fallthru
      _
    %52 = sfence
    %v54 = vld [vmem:[%s0] sm:$0xff]
    %v55 = vld [vmem:[%s0 + $0x8] sm:$0xf]
    %v56 = vld [vmem:[%s1] sm:$0xff]
    %v57 = vld [vmem:[%s1 + $0x8] sm:$0xff]
    %v58 = vld [vmem:[%s1 + $0x10] sm:$0xff]
    %v59 = vld [vmem:[%s1 + $0x18] sm:$0xff]
    %v60 = vld [vmem:[%s1 + $0x20] sm:$0xff]
    %v61 = vld [vmem:[%s1 + $0x28] sm:$0xff]
    %v62 = vld [vmem:[%s1 + $0x30] sm:$0xff]
    %v63 = vld [vmem:[%s1 + $0x38] sm:$0xff]
    %v64 = vld [vmem:[%s1 + $0x40] sm:$0xff]
    %v65 = vld [vmem:[%s1 + $0x48] sm:$0xff]
    %v66 = vld [vmem:[%s1 + $0x50] sm:$0xff]
    %v67 = vld [vmem:[%s1 + $0x58] sm:$0xff]
    %v68 = vld [vmem:[%s1 + $0x60] sm:$0xff]
    %v69 = vld [vmem:[%s1 + $0x68] sm:$0xff]
    %v70 = vld [vmem:[%s1 + $0x70] sm:$0xff]
    %v71 = vld [vmem:[%s1 + $0x78] sm:$0xff]
    %v72 = vld [vmem:[%s1 + $0x80] sm:$0xff]
    %v73 = vld [vmem:[%s1 + $0x88] sm:$0xff]
    %v74 = vld [vmem:[%s1 + $0x90] sm:$0xff]
    %v75 = vld [vmem:[%s1 + $0x98] sm:$0xff]
    %v76 = vld [vmem:[%s1 + $0xa0] sm:$0xff]
    %v77 = vld [vmem:[%s1 + $0xa8] sm:$0xff]
    %v78 = vld [vmem:[%s1 + $0xb0] sm:$0xff]
    %v79 = vld [vmem:[%s1 + $0xb8] sm:$0xff]
    %v80 = vld [vmem:[%s1 + $0xc0] sm:$0xff]
    %v81 = vld [vmem:[%s1 + $0xc8] sm:$0xff]
    %v82 = vld [vmem:[%s1 + $0xd0] sm:$0xff]
    %v83 = vld [vmem:[%s1 + $0xd8] sm:$0xff]
    %v84 = vld [vmem:[%s1 + $0xe0] sm:$0xff]
    %v85 = vld [vmem:[%s1 + $0xe8] sm:$0xff]
    %v86 = vld [vmem:[%s1 + $0xf0] sm:$0xff]
    %v87 = vld [vmem:[%s1 + $0xf8] sm:$0xff]
    %v88 = vld [vmem:[%s1 + $0x100] sm:$0xff]
    %v89 = vld [vmem:[%s1 + $0x108] sm:$0xff]
    %v90 = vld [vmem:[%s1 + $0x110] sm:$0xff]
    %v91 = vld [vmem:[%s1 + $0x118] sm:$0xff]
    %v92 = vld [vmem:[%s1 + $0x120] sm:$0xff]
    %v93 = vld [vmem:[%s1 + $0x128] sm:$0xff]
    %v94 = vld [vmem:[%s1 + $0x130] sm:$0xff]
    %v95 = vld [vmem:[%s1 + $0x138] sm:$0xff]
    %v96 = vld [vmem:[%s1 + $0x140] sm:$0xff]
    %v97 = vld [vmem:[%s1 + $0x148] sm:$0xff]
    %v98 = vld [vmem:[%s1 + $0x150] sm:$0xff]
    %v99 = vld [vmem:[%s1 + $0x158] sm:$0xff]
    %v100 = vld [vmem:[%s1 + $0x160] sm:$0xff]
    %v101 = vld [vmem:[%s1 + $0x168] sm:$0xff]
    %v102 = vld [vmem:[%s1 + $0x170] sm:$0xff]
    %v103 = vld [vmem:[%s1 + $0x178] sm:$0xff]
    %v104 = vld [vmem:[%s1 + $0x180] sm:$0xff]
    %v105 = vld [vmem:[%s1 + $0x188] sm:$0xff]
    %v106 = vld [vmem:[%s1 + $0x190] sm:$0xff]
    %v107 = vld [vmem:[%s1 + $0x198] sm:$0xff]
    %v108 = vld [vmem:[%s1 + $0x1a0] sm:$0xff]
    %v109 = vld [vmem:[%s1 + $0x1a8] sm:$0xff]
    %v110 = vld [vmem:[%s1 + $0x1b0] sm:$0xff]
    %v111 = vld [vmem:[%s1 + $0x1b8] sm:$0xff]
    %v112 = vld [vmem:[%s1 + $0x1c0] sm:$0xff]
    %v113 = vld [vmem:[%s1 + $0x1c8] sm:$0xff]
    %v114 = vld [vmem:[%s1 + $0x1d0] sm:$0xff]
    %v115 = vld [vmem:[%s1 + $0x1d8] sm:$0xff]
    %v116 = vld [vmem:[%s1 + $0x1e0] sm:$0xff]
    %v117 = vld [vmem:[%s1 + $0x1e8] sm:$0xff]
    %v118 = vld [vmem:[%s1 + $0x1f0] sm:$0xff]
    %v119 = vld [vmem:[%s1 + $0x1f8] sm:$0xff]
    %v120 = vld [vmem:[%s1 + $0x200] sm:$0xff]
    %v121 = vld [vmem:[%s1 + $0x208] sm:$0xff]
    %v122 = vld [vmem:[%s1 + $0x210] sm:$0xff]
    %v123 = vld [vmem:[%s1 + $0x218] sm:$0xff]
    %v124 = vld [vmem:[%s1 + $0x220] sm:$0xff]
    %v125 = vld [vmem:[%s1 + $0x228] sm:$0xff]
    %v126 = vld [vmem:[%s1 + $0x230] sm:$0xff]
    %v127 = vld [vmem:[%s1 + $0x238] sm:$0xff]
    %v128 = vld [vmem:[%s1 + $0x240] sm:$0xff]
    %v129 = vld [vmem:[%s1 + $0x248] sm:$0xff]
    %v130 = vld [vmem:[%s1 + $0x250] sm:$0xff]
    %v131 = vld [vmem:[%s1 + $0x258] sm:$0xff]
    %v132 = vld [vmem:[%s1 + $0x260] sm:$0xff]
    %v133 = vld [vmem:[%s1 + $0x268] sm:$0xff]
    %v134 = vld [vmem:[%s1 + $0x270] sm:$0xff]
    %v135 = vld [vmem:[%s1 + $0x278] sm:$0xff]
    %v136 = vld [vmem:[%s1 + $0x280] sm:$0xff]
    %v137 = vld [vmem:[%s1 + $0x288] sm:$0xff]
    %v138 = vld [vmem:[%s1 + $0x290] sm:$0xff]
    %v139 = vld [vmem:[%s1 + $0x298] sm:$0xff]
    %v140 = vld [vmem:[%s1 + $0x2a0] sm:$0xff]
    %v141 = vld [vmem:[%s1 + $0x2a8] sm:$0xff]
    %v142 = vld [vmem:[%s1 + $0x2b0] sm:$0xff]
    %v143 = vld [vmem:[%s1 + $0x2b8] sm:$0xff]
    %v144 = vld [vmem:[%s1 + $0x2c0] sm:$0x3]
    %v145 = vld [vmem:[%s1 + $0x2c8] sm:$0x3]
    %s146 = sld [smem:[#allocation3]]
    %v147 = vstv %s146
    %v150 = vcombine.high %v54, %v54
    %vm152 = vcmask 801792
    %v153 = vsel %vm152, %v55, 0
    %vm155 = vcmask 1041408
    %v157 = vsel %vm155, %v144, 0
    %v160 = vsel %vm155, %v145, 0
    %162 = vmatprep.subr.mxu0 %v87
    %163 = vmatpush1.msra.mxu0 %v86
    %164 = vmatprep.subr.mxu0 %v85
    %165 = vmatpush1.msra.mxu0 %v84
    %166 = vmatprep.subr.mxu0 %v83
    %167 = vmatpush1.msra.mxu0 %v82
    %168 = vmatprep.subr.mxu0 %v81
    %169 = vmatpush1.msra.mxu0 %v80
    %170 = vmatprep.subr.mxu0 %v79
    %171 = vmatpush1.msra.mxu0 %v78
    %172 = vmatprep.subr.mxu0 %v77
    %173 = vmatpush1.msra.mxu0 %v76
    %174 = vmatprep.subr.mxu0 %v75
    %175 = vmatpush1.msra.mxu0 %v74
    %176 = vmatprep.subr.mxu0 %v73
    %177 = vmatpush1.msra.mxu0 %v72
    %178 = vmatprep.subr.mxu0 %v71
    %179 = vmatpush1.msra.mxu0 %v70
    %180 = vmatprep.subr.mxu0 %v69
    %181 = vmatpush1.msra.mxu0 %v68
    %182 = vmatprep.subr.mxu0 %v67
    %183 = vmatpush1.msra.mxu0 %v66
    %184 = vmatprep.subr.mxu0 %v65
    %185 = vmatpush1.msra.mxu0 %v64
    %186 = vmatprep.subr.mxu0 %v63
    %187 = vmatpush1.msra.mxu0 %v62
    %188 = vmatprep.subr.mxu0 %v61
    %189 = vmatpush1.msra.mxu0 %v60
    %190 = vmatprep.subr.mxu0 %v59
    %191 = vmatpush1.msra.mxu0 %v58
    %192 = vmatprep.subr.mxu0 %v57
    %193 = vmatpush1.msra.mxu0 %v56
    %194 = vmatprep.subr.mxu0 %v119
    %195 = vmatpush2.msra.mxu0 %v118
    %196 = vmatprep.subr.mxu0 %v117
    %197 = vmatpush2.msra.mxu0 %v116
    %198 = vmatprep.subr.mxu0 %v115
    %199 = vmatpush2.msra.mxu0 %v114
    %200 = vmatprep.subr.mxu0 %v113
    %201 = vmatpush2.msra.mxu0 %v112
    %202 = vmatprep.subr.mxu0 %v111
    %203 = vmatpush2.msra.mxu0 %v110
    %204 = vmatprep.subr.mxu0 %v109
    %205 = vmatpush2.msra.mxu0 %v108
    %206 = vmatprep.subr.mxu0 %v107
    %207 = vmatpush2.msra.mxu0 %v106
    %208 = vmatprep.subr.mxu0 %v105
    %209 = vmatpush2.msra.mxu0 %v104
    %210 = vmatprep.subr.mxu0 %v103
    %211 = vmatpush2.msra.mxu0 %v102
    %212 = vmatprep.subr.mxu0 %v101
    %213 = vmatpush2.msra.mxu0 %v100
    %214 = vmatprep.subr.mxu0 %v99
    %215 = vmatpush2.msra.mxu0 %v98
    %216 = vmatprep.subr.mxu0 %v97
    %217 = vmatpush2.msra.mxu0 %v96
    %218 = vmatprep.subr.mxu0 %v95
    %219 = vmatpush2.msra.mxu0 %v94
    %220 = vmatprep.subr.mxu0 %v93
    %221 = vmatpush2.msra.mxu0 %v92
    %222 = vmatprep.subr.mxu0 %v91
    %223 = vmatpush2.msra.mxu0 %v90
    %224 = vmatprep.subr.mxu0 %v89
    %225 = vmatpush2.msra.mxu0 %v88
    %226 = vmatprep.mubr.f32.mxu0 %v150
    %227 = vmatmul.mubr.f32.gmra.mxu0 %v54
    %v228 = vpop.f32.mrf.mxu0
    %v229 = vadd.f32 %v147, %v228
    %v230 = vpop.f32.mrf.mxu0
    %v231 = vadd.f32 %v147, %v230
    %232 = vdwg.mxu0
    %233 = vmatprep.subr.mxu0 0.0
    %234 = vmatpush1.msra.mxu0 0.0
    %235 = vmatprep.subr.mxu0 0.0
    %236 = vmatpush1.msra.mxu0 0.0
    %237 = vmatprep.subr.mxu0 0.0
    %238 = vmatpush1.msra.mxu0 0.0
    %239 = vmatprep.subr.mxu0 %v160
    %240 = vmatpush1.msra.mxu0 %v157
    %241 = vmatprep.subr.mxu0 %v143
    %242 = vmatpush1.msra.mxu0 %v142
    %243 = vmatprep.subr.mxu0 %v141
    %244 = vmatpush1.msra.mxu0 %v140
    %245 = vmatprep.subr.mxu0 %v139
    %246 = vmatpush1.msra.mxu0 %v138
    %247 = vmatprep.subr.mxu0 %v137
    %248 = vmatpush1.msra.mxu0 %v136
    %249 = vmatprep.subr.mxu0 %v135
    %250 = vmatpush1.msra.mxu0 %v134
    %251 = vmatprep.subr.mxu0 %v133
    %252 = vmatpush1.msra.mxu0 %v132
    %253 = vmatprep.subr.mxu0 %v131
    %254 = vmatpush1.msra.mxu0 %v130
    %255 = vmatprep.subr.mxu0 %v129
    %256 = vmatpush1.msra.mxu0 %v128
    %257 = vmatprep.subr.mxu0 %v127
    %258 = vmatpush1.msra.mxu0 %v126
    %259 = vmatprep.subr.mxu0 %v125
    %260 = vmatpush1.msra.mxu0 %v124
    %261 = vmatprep.subr.mxu0 %v123
    %262 = vmatpush1.msra.mxu0 %v122
    %263 = vmatprep.subr.mxu0 %v121
    %264 = vmatpush1.msra.mxu0 %v120
    %265 = vmatprep.subr.mxu0 0.0
    %266 = vmatpush2.msra.mxu0 0.0
    %267 = vmatprep.subr.mxu0 0.0
    %268 = vmatpush2.msra.mxu0 0.0
    %269 = vmatprep.subr.mxu0 0.0
    %270 = vmatpush2.msra.mxu0 0.0
    %271 = vmatprep.subr.mxu0 0.0
    %272 = vmatpush2.msra.mxu0 0.0
    %273 = vmatprep.subr.mxu0 0.0
    %274 = vmatpush2.msra.mxu0 0.0
    %275 = vmatprep.subr.mxu0 0.0
    %276 = vmatpush2.msra.mxu0 0.0
    %277 = vmatprep.subr.mxu0 0.0
    %278 = vmatpush2.msra.mxu0 0.0
    %279 = vmatprep.subr.mxu0 0.0
    %280 = vmatpush2.msra.mxu0 0.0
    %281 = vmatprep.subr.mxu0 0.0
    %282 = vmatpush2.msra.mxu0 0.0
    %283 = vmatprep.subr.mxu0 0.0
    %284 = vmatpush2.msra.mxu0 0.0
    %285 = vmatprep.subr.mxu0 0.0
    %286 = vmatpush2.msra.mxu0 0.0
    %287 = vmatprep.subr.mxu0 0.0
    %288 = vmatpush2.msra.mxu0 0.0
    %289 = vmatprep.subr.mxu0 0.0
    %290 = vmatpush2.msra.mxu0 0.0
    %291 = vmatprep.subr.mxu0 0.0
    %292 = vmatpush2.msra.mxu0 0.0
    %293 = vmatprep.subr.mxu0 0.0
    %294 = vmatpush2.msra.mxu0 0.0
    %295 = vmatprep.subr.mxu0 0.0
    %296 = vmatpush2.msra.mxu0 0.0
    %297 = vmatprep.mubr.f32.mxu0 0.0
    %298 = vmatmul.mubr.f32.gmra.mxu0 %v153
    %v299 = vpop.f32.mrf.mxu0
    %v300 = vadd.f32 %v229, %v299
    %v301 = vpop.f32.mrf.mxu0
    %v302 = vadd.f32 %v231, %v301
    %303 = vdwg.mxu0
    %vm304 = vcmask 1043456
    %v305 = vsel %vm304, %v300, 0.0
    %vm306 = vcmask 338944
    %v307 = vsel %vm306, %v302, 0.0
    %v308 = vadd.f32 %v305, %v307
    %309 = vadd.xlane.f32.xlu0 %v308
    %v310 = vpop.xlane.xlu0 %309
    %v311 = vrot.slane %v310, 4
    %v312 = vadd.f32 %v310, %v311
    %v313 = vrot.slane %v312, 2
    %v314 = vadd.f32 %v312, %v313
    %v315 = vrot.slane %v314, 1
    %v316 = vadd.f32 %v314, %v315
    %s317 = vtos %v316
    %v318 = vmul.f32 %v300, %v300
    %v319 = vmul.f32 %v302, %v302
    %v320 = vsel %vm304, %v318, 0.0
    %v321 = vsel %vm306, %v319, 0.0
    %v322 = vadd.f32 %v320, %v321
    %323 = vadd.xlane.f32.xlu0 %v322
    %v324 = vpop.xlane.xlu0 %323
    %v325 = vrot.slane %v324, 4
    %v326 = vadd.f32 %v324, %v325
    %v327 = vrot.slane %v326, 2
    %v328 = vadd.f32 %v326, %v327
    %v329 = vrot.slane %v328, 1
    %v330 = vadd.f32 %v328, %v329
    %s331 = vtos %v330
    %v332 = vrcp.pop 680.0
    %s333 = vtos %v332
    %s334 = smul.f32 %s317, %s333
    %v335 = vrcp.pop 680.0
    %s336 = vtos %v335
    %s337 = smul.f32 %s331, %s336
    %s338 = smul.f32 %s334, %s334
    %s339 = ssub.f32 %s337, %s338
    %v340 = vstv %s334
    %v341 = vsub.f32 %v300, %v340
    %v342 = vsub.f32 %v302, %v340
    %s343 = sadd.f32 %s339, 1e-05
    %v344 = vstv %s343
    %v345 = vrsqrt.pop %v344
    %s346 = vtos %v345
    %v347 = vstv %s346
    %v348 = vmul.f32 %v341, %v347
    %v349 = vmul.f32 %v342, %v347
    %s350 = sld [smem:[#allocation3 + $0x1]]
    %v351 = vstv %s350
    %v352 = vmul.f32 %v351, %v348
    %v353 = vmul.f32 %v351, %v349
    %s354 = sld [smem:[#allocation3 + $0x2]]
    %v355 = vstv %s354
    %v356 = vadd.f32 %v352, %v355
    %v357 = vadd.f32 %v353, %v355
    %v358 = vtanh.pop %v356
    %v359 = vtanh.pop %v357
    %vm360 = vcmp.lt.f32.partialorder %v358, -1e-11
    %vm361 = vcmp.lt.f32.partialorder %v359, -1e-11
    %v362 = vmul.f32 %v358, -1e+10
    %v363 = vmul.f32 %v359, -1e+10
    %v364 = vsel %vm360, %v362, %v358
    %v365 = vsel %vm361, %v363, %v359
    %v366 = vld [vmem:[%s2] sm:$0xff]
    %v367 = vld [vmem:[%s2 + $0x8] sm:$0xff]
    %v368 = vld [vmem:[%s2 + $0x10] sm:$0xff]
    %v369 = vld [vmem:[%s2 + $0x18] sm:$0xff]
    %v370 = vld [vmem:[%s2 + $0x20] sm:$0xff]
    %v371 = vld [vmem:[%s2 + $0x28] sm:$0xff]
    %v372 = vld [vmem:[%s2 + $0x30] sm:$0xff]
    %v373 = vld [vmem:[%s2 + $0x38] sm:$0xff]
    %v374 = vld [vmem:[%s2 + $0x40] sm:$0xff]
    %v375 = vld [vmem:[%s2 + $0x48] sm:$0xff]
    %v376 = vld [vmem:[%s2 + $0x50] sm:$0xff]
    %v377 = vld [vmem:[%s2 + $0x58] sm:$0xff]
    %v378 = vld [vmem:[%s2 + $0x60] sm:$0xff]
    %v379 = vld [vmem:[%s2 + $0x68] sm:$0xff]
    %v380 = vld [vmem:[%s2 + $0x70] sm:$0xff]
    %v381 = vld [vmem:[%s2 + $0x78] sm:$0xff]
    %v382 = vld [vmem:[%s2 + $0x80] sm:$0xff]
    %v383 = vld [vmem:[%s2 + $0x88] sm:$0xff]
    %v384 = vld [vmem:[%s2 + $0x90] sm:$0xff]
    %v385 = vld [vmem:[%s2 + $0x98] sm:$0xff]
    %v386 = vld [vmem:[%s2 + $0xa0] sm:$0xff]
    %v387 = vld [vmem:[%s2 + $0xa8] sm:$0x3]
    %s388 = sld [smem:[#allocation3 + $0x3]]
    %v389 = vstv %s388
    %vm390 = vcmask 343040
    %v392 = vsel %vm390, %v365, 0
    %v395 = vsel %vm155, %v387, 0
    %397 = vmatprep.subr.mxu0 0.0
    %398 = vmatpush1.msra.mxu0 %v381
    %399 = vmatprep.subr.mxu0 0.0
    %400 = vmatpush1.msra.mxu0 %v380
    %401 = vmatprep.subr.mxu0 0.0
    %402 = vmatpush1.msra.mxu0 %v379
    %403 = vmatprep.subr.mxu0 0.0
    %404 = vmatpush1.msra.mxu0 %v378
    %405 = vmatprep.subr.mxu0 0.0
    %406 = vmatpush1.msra.mxu0 %v377
    %407 = vmatprep.subr.mxu0 0.0
    %408 = vmatpush1.msra.mxu0 %v376
    %409 = vmatprep.subr.mxu0 0.0
    %410 = vmatpush1.msra.mxu0 %v375
    %411 = vmatprep.subr.mxu0 0.0
    %412 = vmatpush1.msra.mxu0 %v374
    %413 = vmatprep.subr.mxu0 0.0
    %414 = vmatpush1.msra.mxu0 %v373
    %415 = vmatprep.subr.mxu0 0.0
    %416 = vmatpush1.msra.mxu0 %v372
    %417 = vmatprep.subr.mxu0 0.0
    %418 = vmatpush1.msra.mxu0 %v371
    %419 = vmatprep.subr.mxu0 0.0
    %420 = vmatpush1.msra.mxu0 %v370
    %421 = vmatprep.subr.mxu0 0.0
    %422 = vmatpush1.msra.mxu0 %v369
    %423 = vmatprep.subr.mxu0 0.0
    %424 = vmatpush1.msra.mxu0 %v368
    %425 = vmatprep.subr.mxu0 0.0
    %426 = vmatpush1.msra.mxu0 %v367
    %427 = vmatprep.subr.mxu0 0.0
    %428 = vmatpush1.msra.mxu0 %v366
    %429 = vmatprep.subr.mxu0 0.0
    %430 = vmatpush2.msra.mxu0 0.0
    %431 = vmatprep.subr.mxu0 0.0
    %432 = vmatpush2.msra.mxu0 0.0
    %433 = vmatprep.subr.mxu0 0.0
    %434 = vmatpush2.msra.mxu0 0.0
    %435 = vmatprep.subr.mxu0 0.0
    %436 = vmatpush2.msra.mxu0 0.0
    %437 = vmatprep.subr.mxu0 0.0
    %438 = vmatpush2.msra.mxu0 0.0
    %439 = vmatprep.subr.mxu0 0.0
    %440 = vmatpush2.msra.mxu0 0.0
    %441 = vmatprep.subr.mxu0 0.0
    %442 = vmatpush2.msra.mxu0 0.0
    %443 = vmatprep.subr.mxu0 0.0
    %444 = vmatpush2.msra.mxu0 0.0
    %445 = vmatprep.subr.mxu0 0.0
    %446 = vmatpush2.msra.mxu0 0.0
    %447 = vmatprep.subr.mxu0 0.0
    %448 = vmatpush2.msra.mxu0 0.0
    %449 = vmatprep.subr.mxu0 0.0
    %450 = vmatpush2.msra.mxu0 %v395
    %451 = vmatprep.subr.mxu0 0.0
    %452 = vmatpush2.msra.mxu0 %v386
    %453 = vmatprep.subr.mxu0 0.0
    %454 = vmatpush2.msra.mxu0 %v385
    %455 = vmatprep.subr.mxu0 0.0
    %456 = vmatpush2.msra.mxu0 %v384
    %457 = vmatprep.subr.mxu0 0.0
    %458 = vmatpush2.msra.mxu0 %v383
    %459 = vmatprep.subr.mxu0 0.0
    %460 = vmatpush2.msra.mxu0 %v382
    %461 = vmatprep.mubr.f32.mxu0 %v392
    %462 = vmatmul.mubr.f32.gmra.mxu0 %v364
    %v463 = vpop.f32.mrf.mxu0
    %v464 = vadd.f32 %v389, %v463
    %v465 = vpop.f32.mrf.mxu0
    %466 = vdwg.mxu0
    %vm467 = vcmask 633856
    %v468 = vsel %vm467, %v464, 0.0
    %469 = vadd.xlane.f32.xlu0 %v468
    %v470 = vpop.xlane.xlu0 %469
    %v471 = vrot.slane %v470, 4
    %v472 = vadd.f32 %v470, %v471
    %v473 = vrot.slane %v472, 2
    %v474 = vadd.f32 %v472, %v473
    %v475 = vrot.slane %v474, 1
    %v476 = vadd.f32 %v474, %v475
    %s477 = vtos %v476
    %v478 = vmul.f32 %v464, %v464
    %v479 = vsel %vm467, %v478, 0.0
    %480 = vadd.xlane.f32.xlu0 %v479
    %v481 = vpop.xlane.xlu0 %480
    %v482 = vrot.slane %v481, 4
    %v483 = vadd.f32 %v481, %v482
    %v484 = vrot.slane %v483, 2
    %v485 = vadd.f32 %v483, %v484
    %v486 = vrot.slane %v485, 1
    %v487 = vadd.f32 %v485, %v486
    %s488 = vtos %v487
    %v489 = vrcp.pop 312.0
    %s490 = vtos %v489
    %s491 = smul.f32 %s477, %s490
    %v492 = vrcp.pop 312.0
    %s493 = vtos %v492
    %s494 = smul.f32 %s488, %s493
    %s495 = smul.f32 %s491, %s491
    %s496 = ssub.f32 %s494, %s495
    %v497 = vstv %s491
    %v498 = vsub.f32 %v464, %v497
    %s499 = sadd.f32 %s496, 1e-05
    %v500 = vstv %s499
    %v501 = vrsqrt.pop %v500
    %s502 = vtos %v501
    %v503 = vstv %s502
    %v504 = vmul.f32 %v498, %v503
    %s505 = sld [smem:[#allocation3 + $0x4]]
    %v506 = vstv %s505
    %v507 = vmul.f32 %v506, %v504
    %s508 = sld [smem:[#allocation3 + $0x5]]
    %v509 = vstv %s508
    %v510 = vadd.f32 %v507, %v509
    %v511 = vtanh.pop %v510
    %vm512 = vcmp.lt.f32.partialorder %v511, -1e-11
    %v513 = vmul.f32 %v511, -1e+10
    %v514 = vsel %vm512, %v513, %v511
    %v515 = vld [vmem:[%s3] sm:$0xff]
    %v516 = vld [vmem:[%s3 + $0x8] sm:$0xff]
    %v517 = vld [vmem:[%s3 + $0x10] sm:$0xff]
    %v518 = vld [vmem:[%s3 + $0x18] sm:$0xff]
    %v519 = vld [vmem:[%s3 + $0x20] sm:$0xff]
    %v520 = vld [vmem:[%s3 + $0x28] sm:$0xff]
    %v521 = vld [vmem:[%s3 + $0x30] sm:$0xff]
    %v522 = vld [vmem:[%s3 + $0x38] sm:$0xff]
    %v523 = vld [vmem:[%s3 + $0x40] sm:$0xff]
    %v524 = vld [vmem:[%s3 + $0x48] sm:$0x3f]
    %s525 = sld [smem:[#allocation3 + $0x6]]
    %v526 = vstv %s525
    %vm527 = vcmask 637952
    %v529 = vsel %vm527, %v514, 0
    %vm531 = vcmask 1045504
    %v533 = vsel %vm531, %v524, 0
    %535 = vmatprep.subr.mxu0 0.0
    %536 = vmatpush1.msra.mxu0 0.0
    %537 = vmatprep.subr.mxu0 0.0
    %538 = vmatpush1.msra.mxu0 0.0
    %539 = vmatprep.subr.mxu0 0.0
    %540 = vmatpush1.msra.mxu0 0.0
    %541 = vmatprep.subr.mxu0 0.0
    %542 = vmatpush1.msra.mxu0 0.0
    %543 = vmatprep.subr.mxu0 0.0
    %544 = vmatpush1.msra.mxu0 0.0
    %545 = vmatprep.subr.mxu0 0.0
    %546 = vmatpush1.msra.mxu0 0.0
    %547 = vmatprep.subr.mxu0 0.0
    %548 = vmatpush1.msra.mxu0 %v533
    %549 = vmatprep.subr.mxu0 0.0
    %550 = vmatpush1.msra.mxu0 %v523
    %551 = vmatprep.subr.mxu0 0.0
    %552 = vmatpush1.msra.mxu0 %v522
    %553 = vmatprep.subr.mxu0 0.0
    %554 = vmatpush1.msra.mxu0 %v521
    %555 = vmatprep.subr.mxu0 0.0
    %556 = vmatpush1.msra.mxu0 %v520
    %557 = vmatprep.subr.mxu0 0.0
    %558 = vmatpush1.msra.mxu0 %v519
    %559 = vmatprep.subr.mxu0 0.0
    %560 = vmatpush1.msra.mxu0 %v518
    %561 = vmatprep.subr.mxu0 0.0
    %562 = vmatpush1.msra.mxu0 %v517
    %563 = vmatprep.subr.mxu0 0.0
    %564 = vmatpush1.msra.mxu0 %v516
    %565 = vmatprep.subr.mxu0 0.0
    %566 = vmatpush1.msra.mxu0 %v515
    %567 = vmatprep.subr.mxu0 0.0
    %568 = vmatpush2.msra.mxu0 0.0
    %569 = vmatprep.subr.mxu0 0.0
    %570 = vmatpush2.msra.mxu0 0.0
    %571 = vmatprep.subr.mxu0 0.0
    %572 = vmatpush2.msra.mxu0 0.0
    %573 = vmatprep.subr.mxu0 0.0
    %574 = vmatpush2.msra.mxu0 0.0
    %575 = vmatprep.subr.mxu0 0.0
    %576 = vmatpush2.msra.mxu0 0.0
    %577 = vmatprep.subr.mxu0 0.0
    %578 = vmatpush2.msra.mxu0 0.0
    %579 = vmatprep.subr.mxu0 0.0
    %580 = vmatpush2.msra.mxu0 0.0
    %581 = vmatprep.subr.mxu0 0.0
    %582 = vmatpush2.msra.mxu0 0.0
    %583 = vmatprep.subr.mxu0 0.0
    %584 = vmatpush2.msra.mxu0 0.0
    %585 = vmatprep.subr.mxu0 0.0
    %586 = vmatpush2.msra.mxu0 0.0
    %587 = vmatprep.subr.mxu0 0.0
    %588 = vmatpush2.msra.mxu0 0.0
    %589 = vmatprep.subr.mxu0 0.0
    %590 = vmatpush2.msra.mxu0 0.0
    %591 = vmatprep.subr.mxu0 0.0
    %592 = vmatpush2.msra.mxu0 0.0
    %593 = vmatprep.subr.mxu0 0.0
    %594 = vmatpush2.msra.mxu0 0.0
    %595 = vmatprep.subr.mxu0 0.0
    %596 = vmatpush2.msra.mxu0 0.0
    %597 = vmatprep.subr.mxu0 0.0
    %598 = vmatpush2.msra.mxu0 0.0
    %599 = vmatprep.mubr.f32.mxu0 0.0
    %600 = vmatmul.mubr.f32.gmra.mxu0 %v529
    %v601 = vpop.f32.mrf.mxu0
    %v602 = vadd.f32 %v526, %v601
    %v603 = vpop.f32.mrf.mxu0
    %604 = vdwg.mxu0
    %vm605 = vcmask 257024
    %v606 = vsel %vm605, %v602, 0.0
    %607 = vadd.xlane.f32.xlu0 %v606
    %v608 = vpop.xlane.xlu0 %607
    %v609 = vrot.slane %v608, 4
    %v610 = vadd.f32 %v608, %v609
    %v611 = vrot.slane %v610, 2
    %v612 = vadd.f32 %v610, %v611
    %v613 = vrot.slane %v612, 1
    %v614 = vadd.f32 %v612, %v613
    %s615 = vtos %v614
    %v616 = vmul.f32 %v602, %v602
    %v617 = vsel %vm605, %v616, 0.0
    %618 = vadd.xlane.f32.xlu0 %v617
    %v619 = vpop.xlane.xlu0 %618
    %v620 = vrot.slane %v619, 4
    %v621 = vadd.f32 %v619, %v620
    %v622 = vrot.slane %v621, 2
    %v623 = vadd.f32 %v621, %v622
    %v624 = vrot.slane %v623, 1
    %v625 = vadd.f32 %v623, %v624
    %s626 = vtos %v625
    %v627 = vrcp.pop 128.0
    %s628 = vtos %v627
    %s629 = smul.f32 %s615, %s628
    %v630 = vrcp.pop 128.0
    %s631 = vtos %v630
    %s632 = smul.f32 %s626, %s631
    %s633 = smul.f32 %s629, %s629
    %s634 = ssub.f32 %s632, %s633
    %v635 = vstv %s629
    %v636 = vsub.f32 %v602, %v635
    %s637 = sadd.f32 %s634, 1e-05
    %v638 = vstv %s637
    %v639 = vrsqrt.pop %v638
    %s640 = vtos %v639
    %v641 = vstv %s640
    %v642 = vmul.f32 %v636, %v641
    %s643 = sld [smem:[#allocation3 + $0x7]]
    %v644 = vstv %s643
    %v645 = vmul.f32 %v644, %v642
    %s646 = sld [smem:[#allocation3 + $0x8]]
    %v647 = vstv %s646
    %v648 = vadd.f32 %v645, %v647
    %v649 = vtanh.pop %v648
    %vm650 = vcmp.lt.f32.partialorder %v649, -1e-11
    %v651 = vmul.f32 %v649, -1e+10
    %v652 = vsel %vm650, %v651, %v649
    %v653 = vld [vmem:[%s5] sm:$0x3]
    %v654 = vld [vmem:[%s6] sm:$0x3]
    %v655 = vadd.f32 %v652, %v652
    %v656 = vmul.f32 %v655, 0.5
    %v657 = vtanh.pop %v656
    %v658 = vld [vmem:[%s7] sm:$0xf]
    %v659 = vld [vmem:[%s7 + $0x4] sm:$0xf]
    %v660 = vld [vmem:[%s7 + $0x8] sm:$0xf]
    %v661 = vld [vmem:[%s7 + $0xc] sm:$0xf]
    %v662 = vld [vmem:[%s8] sm:$0xf]
    %v663 = vld [vmem:[%s8 + $0x4] sm:$0xf]
    %v664 = vld [vmem:[%s8 + $0x8] sm:$0xf]
    %v665 = vld [vmem:[%s8 + $0xc] sm:$0xf]
    %v666 = vld [vmem:[%s9] sm:$0x1]
    %v667 = vpack.c.bf16 %v657, %v657
    %v669 = vlaneseq
    %v670 = vshrl.u32 %v669, 7
    %v671 = vsub.s32 0, %v670
    %v672 = vrot.slane %v666, %v671
    %v678 = vunpack.c.l.b16 %v658
    %v679 = vunpack.c.l.b16 %v659
    %v680 = vunpack.c.l.b16 %v660
    %v681 = vunpack.c.l.b16 %v661
    %v682 = vpack.c.b16 %v679, %v678
    %v683 = vpack.c.b16 %v681, %v680
    %vm686 = vcmask 261120
    %v688 = vsel %vm686, %v667, 0
    %690 = vmatprep.subr.bf16.mxu0 0
    %691 = vmatpush1.bf16.msra.mxu0 0
    %692 = vmatprep.subr.bf16.mxu0 0
    %693 = vmatpush1.bf16.msra.mxu0 0
    %694 = vmatprep.subr.bf16.mxu0 0
    %695 = vmatpush1.bf16.msra.mxu0 0
    %696 = vmatprep.subr.bf16.mxu0 0
    %697 = vmatpush1.bf16.msra.mxu0 0
    %698 = vmatprep.subr.bf16.mxu0 0
    %699 = vmatpush1.bf16.msra.mxu0 0
    %700 = vmatprep.subr.bf16.mxu0 0
    %701 = vmatpush1.bf16.msra.mxu0 0
    %702 = vmatprep.subr.bf16.mxu0 0
    %703 = vmatpush1.bf16.msra.mxu0 %v683
    %704 = vmatprep.subr.bf16.mxu0 0
    %705 = vmatpush1.bf16.msra.mxu0 %v682
    %706 = vmatprep.subr.bf16.mxu0 0
    %707 = vmatpush2.bf16.msra.mxu0 0
    %708 = vmatprep.subr.bf16.mxu0 0
    %709 = vmatpush2.bf16.msra.mxu0 0
    %710 = vmatprep.subr.bf16.mxu0 0
    %711 = vmatpush2.bf16.msra.mxu0 0
    %712 = vmatprep.subr.bf16.mxu0 0
    %713 = vmatpush2.bf16.msra.mxu0 0
    %714 = vmatprep.subr.bf16.mxu0 0
    %715 = vmatpush2.bf16.msra.mxu0 0
    %716 = vmatprep.subr.bf16.mxu0 0
    %717 = vmatpush2.bf16.msra.mxu0 0
    %718 = vmatprep.subr.bf16.mxu0 0
    %719 = vmatpush2.bf16.msra.mxu0 0
    %720 = vmatprep.subr.bf16.mxu0 0
    %721 = vmatpush2.bf16.msra.mxu0 0
    %722 = vmatprep.mubr.bf16.mxu0 0
    %723 = vmatmul.mubr.bf16.gmra.mxu0 %v688
    %v724 = vpop.f32.mrf.mxu0
    %v725 = vadd.f32 %v672, %v724
    %v726 = vpop.f32.mrf.mxu0
    %v727 = vpop.f32.mrf.mxu0
    %v728 = vpop.f32.mrf.mxu0
    %729 = vdwg.mxu0
    %v730 = vpack.c.bf16 %v653, %v653
    %v735 = vunpack.c.l.b16 %v662
    %v736 = vunpack.c.l.b16 %v663
    %v737 = vunpack.c.l.b16 %v664
    %v738 = vunpack.c.l.b16 %v665
    %v739 = vpack.c.b16 %v736, %v735
    %v740 = vpack.c.b16 %v738, %v737
    %v744 = vsel %vm686, %v730, 0
    %746 = vmatprep.subr.bf16.mxu0 0
    %747 = vmatpush1.bf16.msra.mxu0 0
    %748 = vmatprep.subr.bf16.mxu0 0
    %749 = vmatpush1.bf16.msra.mxu0 0
    %750 = vmatprep.subr.bf16.mxu0 0
    %751 = vmatpush1.bf16.msra.mxu0 0
    %752 = vmatprep.subr.bf16.mxu0 0
    %753 = vmatpush1.bf16.msra.mxu0 0
    %754 = vmatprep.subr.bf16.mxu0 0
    %755 = vmatpush1.bf16.msra.mxu0 0
    %756 = vmatprep.subr.bf16.mxu0 0
    %757 = vmatpush1.bf16.msra.mxu0 0
    %758 = vmatprep.subr.bf16.mxu0 0
    %759 = vmatpush1.bf16.msra.mxu0 %v740
    %760 = vmatprep.subr.bf16.mxu0 0
    %761 = vmatpush1.bf16.msra.mxu0 %v739
    %762 = vmatprep.subr.bf16.mxu0 0
    %763 = vmatpush2.bf16.msra.mxu0 0
    %764 = vmatprep.subr.bf16.mxu0 0
    %765 = vmatpush2.bf16.msra.mxu0 0
    %766 = vmatprep.subr.bf16.mxu0 0
    %767 = vmatpush2.bf16.msra.mxu0 0
    %768 = vmatprep.subr.bf16.mxu0 0
    %769 = vmatpush2.bf16.msra.mxu0 0
    %770 = vmatprep.subr.bf16.mxu0 0
    %771 = vmatpush2.bf16.msra.mxu0 0
    %772 = vmatprep.subr.bf16.mxu0 0
    %773 = vmatpush2.bf16.msra.mxu0 0
    %774 = vmatprep.subr.bf16.mxu0 0
    %775 = vmatpush2.bf16.msra.mxu0 0
    %776 = vmatprep.subr.bf16.mxu0 0
    %777 = vmatpush2.bf16.msra.mxu0 0
    %778 = vmatprep.mubr.bf16.mxu0 0
    %779 = vmatmul.mubr.bf16.gmra.mxu0 %v744
    %v780 = vpop.f32.mrf.mxu0
    %v781 = vadd.f32 0.0, %v780
    %v782 = vpop.f32.mrf.mxu0
    %v783 = vpop.f32.mrf.mxu0
    %v784 = vpop.f32.mrf.mxu0
    %785 = vdwg.mxu0
    %v786 = vadd.f32 %v725, %v781
    %v787 = vxor.u32 %v786, 2147483648
    %v788 = vmul.f32 %v787, 1.442695
    %v789 = vpow.pop %v788
    %v790 = vadd.f32 %v789, 1.0
    %v791 = vrcp.pop %v790
    %v792 = vmul.f32 1.0, %v791
    %v793 = vtanh.pop %v786
    %795 = vrot.lane.b32.xlu0 %v654, 32
    %v796 = vpop.permute.xlu0 %795
    %v798 = vmul.f32 %v792, %v796
    %800 = vrot.lane.b32.xlu0 %v793, 64
    %v801 = vpop.permute.xlu0 %800
    %v803 = vmul.f32 %v792, %v801
    %805 = vrot.lane.b32.xlu0 %v803, 32
    %v806 = vpop.permute.xlu0 %805
    %v808 = vadd.f32 %v798, %v806
    %v809 = vtanh.pop %v808
    %811 = vrot.lane.b32.xlu0 %v809, 64
    %v812 = vpop.permute.xlu0 %811
    %v814 = vmul.f32 %v792, %v812
    %816 = vrot.lane.b32.xlu0 %v814, 32
    %v817 = vpop.permute.xlu0 %816
    %vm819 = vcmask 253952
    %820 = vst.msk [vmem:[#allocation2] sm:$0x1] %vm819, %v817
    %v821 = vpack.c.bf16 %v814, %v814
    %823 = vrot.lane.b32.xlu0 %v821, 32
    %v824 = vpop.permute.xlu0 %823
    %v826 = vsel %vm686, %v824, 0
    %828 = vmatprep.subr.bf16.mxu0 0
    %829 = vmatpush1.bf16.msra.mxu0 0
    %830 = vmatprep.subr.bf16.mxu0 0
    %831 = vmatpush1.bf16.msra.mxu0 0
    %832 = vmatprep.subr.bf16.mxu0 0
    %833 = vmatpush1.bf16.msra.mxu0 0
    %834 = vmatprep.subr.bf16.mxu0 0
    %835 = vmatpush1.bf16.msra.mxu0 0
    %836 = vmatprep.subr.bf16.mxu0 0
    %837 = vmatpush1.bf16.msra.mxu0 0
    %838 = vmatprep.subr.bf16.mxu0 0
    %839 = vmatpush1.bf16.msra.mxu0 0
    %840 = vmatprep.subr.bf16.mxu0 0
    %841 = vmatpush1.bf16.msra.mxu0 %v740
    %842 = vmatprep.subr.bf16.mxu0 0
    %843 = vmatpush1.bf16.msra.mxu0 %v739
    %844 = vmatprep.subr.bf16.mxu0 0
    %845 = vmatpush2.bf16.msra.mxu0 0
    %846 = vmatprep.subr.bf16.mxu0 0
    %847 = vmatpush2.bf16.msra.mxu0 0
    %848 = vmatprep.subr.bf16.mxu0 0
    %849 = vmatpush2.bf16.msra.mxu0 0
    %850 = vmatprep.subr.bf16.mxu0 0
    %851 = vmatpush2.bf16.msra.mxu0 0
    %852 = vmatprep.subr.bf16.mxu0 0
    %853 = vmatpush2.bf16.msra.mxu0 0
    %854 = vmatprep.subr.bf16.mxu0 0
    %855 = vmatpush2.bf16.msra.mxu0 0
    %856 = vmatprep.subr.bf16.mxu0 0
    %857 = vmatpush2.bf16.msra.mxu0 0
    %858 = vmatprep.subr.bf16.mxu0 0
    %859 = vmatpush2.bf16.msra.mxu0 0
    %860 = vmatprep.mubr.bf16.mxu0 0
    %861 = vmatmul.mubr.bf16.gmra.mxu0 %v826
    %v862 = vpop.f32.mrf.mxu0
    %v863 = vadd.f32 0.0, %v862
    %v864 = vpop.f32.mrf.mxu0
    %v865 = vpop.f32.mrf.mxu0
    %v866 = vpop.f32.mrf.mxu0
    %867 = vdwg.mxu0
    %v869 = vrot.slane %v863, 7
    %v871 = vadd.f32 %v725, %v869
    %v872 = vxor.u32 %v871, 2147483648
    %v873 = vmul.f32 %v872, 1.442695
    %v874 = vpow.pop %v873
    %v875 = vadd.f32 %v874, 1.0
    %v876 = vrcp.pop %v875
    %v877 = vmul.f32 1.0, %v876
    %v878 = vtanh.pop %v871
    %v880 = vrot.slane %v808, 7
    %v882 = vmul.f32 %v877, %v880
    %884 = vrot.lane.b32.xlu0 %v878, 64
    %v885 = vpop.permute.xlu0 %884
    %v887 = vmul.f32 %v877, %v885
    %889 = vrot.lane.b32.xlu0 %v887, 32
    %v890 = vpop.permute.xlu0 %889
    %v892 = vadd.f32 %v882, %v890
    %v893 = vtanh.pop %v892
    %895 = vrot.lane.b32.xlu0 %v893, 64
    %v896 = vpop.permute.xlu0 %895
    %v898 = vmul.f32 %v877, %v896
    %900 = vrot.lane.b32.xlu0 %v898, 32
    %v901 = vpop.permute.xlu0 %900
    %vm903 = vcmask 254977
    %904 = vst.msk [vmem:[#allocation2] sm:$0x2] %vm903, %v901
    %v905 = vpack.c.bf16 %v898, %v898
    %v907 = vshrl.u32 %v905, 16
    %909 = vrot.lane.b32.xlu0 %v907, 32
    %v910 = vpop.permute.xlu0 %909
    %v912 = vsel %vm686, %v910, 0
    %914 = vmatprep.subr.bf16.mxu0 0
    %915 = vmatpush1.bf16.msra.mxu0 0
    %916 = vmatprep.subr.bf16.mxu0 0
    %917 = vmatpush1.bf16.msra.mxu0 0
    %918 = vmatprep.subr.bf16.mxu0 0
    %919 = vmatpush1.bf16.msra.mxu0 0
    %920 = vmatprep.subr.bf16.mxu0 0
    %921 = vmatpush1.bf16.msra.mxu0 0
    %922 = vmatprep.subr.bf16.mxu0 0
    %923 = vmatpush1.bf16.msra.mxu0 0
    %924 = vmatprep.subr.bf16.mxu0 0
    %925 = vmatpush1.bf16.msra.mxu0 0
    %926 = vmatprep.subr.bf16.mxu0 0
    %927 = vmatpush1.bf16.msra.mxu0 %v740
    %928 = vmatprep.subr.bf16.mxu0 0
    %929 = vmatpush1.bf16.msra.mxu0 %v739
    %930 = vmatprep.subr.bf16.mxu0 0
    %931 = vmatpush2.bf16.msra.mxu0 0
    %932 = vmatprep.subr.bf16.mxu0 0
    %933 = vmatpush2.bf16.msra.mxu0 0
    %934 = vmatprep.subr.bf16.mxu0 0
    %935 = vmatpush2.bf16.msra.mxu0 0
    %936 = vmatprep.subr.bf16.mxu0 0
    %937 = vmatpush2.bf16.msra.mxu0 0
    %938 = vmatprep.subr.bf16.mxu0 0
    %939 = vmatpush2.bf16.msra.mxu0 0
    %940 = vmatprep.subr.bf16.mxu0 0
    %941 = vmatpush2.bf16.msra.mxu0 0
    %942 = vmatprep.subr.bf16.mxu0 0
    %943 = vmatpush2.bf16.msra.mxu0 0
    %944 = vmatprep.subr.bf16.mxu0 0
    %945 = vmatpush2.bf16.msra.mxu0 0
    %946 = vmatprep.mubr.bf16.mxu0 0
    %947 = vmatmul.mubr.bf16.gmra.mxu0 %v912
    %v948 = vpop.f32.mrf.mxu0
    %v949 = vadd.f32 0.0, %v948
    %v950 = vpop.f32.mrf.mxu0
    %v951 = vpop.f32.mrf.mxu0
    %v952 = vpop.f32.mrf.mxu0
    %953 = vdwg.mxu0
    %v955 = vrot.slane %v949, 6
    %v957 = vadd.f32 %v725, %v955
    %v958 = vxor.u32 %v957, 2147483648
    %v959 = vmul.f32 %v958, 1.442695
    %v960 = vpow.pop %v959
    %v961 = vadd.f32 %v960, 1.0
    %v962 = vrcp.pop %v961
    %v963 = vmul.f32 1.0, %v962
    %v964 = vtanh.pop %v957
    %v966 = vrot.slane %v892, 7
    %v968 = vmul.f32 %v963, %v966
    %970 = vrot.lane.b32.xlu0 %v964, 64
    %v971 = vpop.permute.xlu0 %970
    %v973 = vmul.f32 %v963, %v971
    %975 = vrot.lane.b32.xlu0 %v973, 32
    %v976 = vpop.permute.xlu0 %975
    %v978 = vadd.f32 %v968, %v976
    %v979 = vtanh.pop %v978
    %981 = vrot.lane.b32.xlu0 %v979, 64
    %v982 = vpop.permute.xlu0 %981
    %v984 = vmul.f32 %v963, %v982
    %986 = vrot.lane.b32.xlu0 %v984, 32
    %v987 = vpop.permute.xlu0 %986
    %vm989 = vcmask 256002
    %990 = vst.msk [vmem:[#allocation2] sm:$0x4] %vm989, %v987
    %v991 = vpack.c.bf16 %v984, %v984
    %v993 = vrot.slane %v991, 1
    %994 = vrot.lane.b32.xlu0 %v993, 32
    %v995 = vpop.permute.xlu0 %994
    %v997 = vsel %vm686, %v995, 0
    %999 = vmatprep.subr.bf16.mxu0 0
    %1000 = vmatpush1.bf16.msra.mxu0 0
    %1001 = vmatprep.subr.bf16.mxu0 0
    %1002 = vmatpush1.bf16.msra.mxu0 0
    %1003 = vmatprep.subr.bf16.mxu0 0
    %1004 = vmatpush1.bf16.msra.mxu0 0
    %1005 = vmatprep.subr.bf16.mxu0 0
    %1006 = vmatpush1.bf16.msra.mxu0 0
    %1007 = vmatprep.subr.bf16.mxu0 0
    %1008 = vmatpush1.bf16.msra.mxu0 0
    %1009 = vmatprep.subr.bf16.mxu0 0
    %1010 = vmatpush1.bf16.msra.mxu0 0
    %1011 = vmatprep.subr.bf16.mxu0 0
    %1012 = vmatpush1.bf16.msra.mxu0 %v740
    %1013 = vmatprep.subr.bf16.mxu0 0
    %1014 = vmatpush1.bf16.msra.mxu0 %v739
    %1015 = vmatprep.subr.bf16.mxu0 0
    %1016 = vmatpush2.bf16.msra.mxu0 0
    %1017 = vmatprep.subr.bf16.mxu0 0
    %1018 = vmatpush2.bf16.msra.mxu0 0
    %1019 = vmatprep.subr.bf16.mxu0 0
    %1020 = vmatpush2.bf16.msra.mxu0 0
    %1021 = vmatprep.subr.bf16.mxu0 0
    %1022 = vmatpush2.bf16.msra.mxu0 0
    %1023 = vmatprep.subr.bf16.mxu0 0
    %1024 = vmatpush2.bf16.msra.mxu0 0
    %1025 = vmatprep.subr.bf16.mxu0 0
    %1026 = vmatpush2.bf16.msra.mxu0 0
    %1027 = vmatprep.subr.bf16.mxu0 0
    %1028 = vmatpush2.bf16.msra.mxu0 0
    %1029 = vmatprep.subr.bf16.mxu0 0
    %1030 = vmatpush2.bf16.msra.mxu0 0
    %1031 = vmatprep.mubr.bf16.mxu0 0
    %1032 = vmatmul.mubr.bf16.gmra.mxu0 %v997
    %v1033 = vpop.f32.mrf.mxu0
    %v1034 = vadd.f32 0.0, %v1033
    %v1035 = vpop.f32.mrf.mxu0
    %v1036 = vpop.f32.mrf.mxu0
    %v1037 = vpop.f32.mrf.mxu0
    %1038 = vdwg.mxu0
    %v1040 = vrot.slane %v1034, 5
    %v1042 = vadd.f32 %v725, %v1040
    %v1043 = vxor.u32 %v1042, 2147483648
    %v1044 = vmul.f32 %v1043, 1.442695
    %v1045 = vpow.pop %v1044
    %v1046 = vadd.f32 %v1045, 1.0
    %v1047 = vrcp.pop %v1046
    %v1048 = vmul.f32 1.0, %v1047
    %v1049 = vtanh.pop %v1042
    %v1051 = vrot.slane %v978, 7
    %v1053 = vmul.f32 %v1048, %v1051
    %1055 = vrot.lane.b32.xlu0 %v1049, 64
    %v1056 = vpop.permute.xlu0 %1055
    %v1058 = vmul.f32 %v1048, %v1056
    %1060 = vrot.lane.b32.xlu0 %v1058, 32
    %v1061 = vpop.permute.xlu0 %1060
    %v1063 = vadd.f32 %v1053, %v1061
    %v1064 = vtanh.pop %v1063
    %1066 = vrot.lane.b32.xlu0 %v1064, 64
    %v1067 = vpop.permute.xlu0 %1066
    %v1069 = vmul.f32 %v1048, %v1067
    %1071 = vrot.lane.b32.xlu0 %v1069, 32
    %v1072 = vpop.permute.xlu0 %1071
    %vm1074 = vcmask 257027
    %1075 = vst.msk [vmem:[#allocation2] sm:$0x8] %vm1074, %v1072
    %v1076 = vld [vmem:[#allocation2] sm:$0xf]
    %s1077 = scalar_lea.vmem %s7, 16
    %v1078 = vld [vmem:[%s1077] sm:$0xf]
    %v1079 = vld [vmem:[%s1077 + $0x4] sm:$0xf]
    %v1080 = vld [vmem:[%s1077 + $0x8] sm:$0xf]
    %v1081 = vld [vmem:[%s1077 + $0xc] sm:$0xf]
    %s1082 = scalar_lea.vmem %s8, 16
    %v1083 = vld [vmem:[%s1082] sm:$0xf]
    %v1084 = vld [vmem:[%s1082 + $0x4] sm:$0xf]
    %v1085 = vld [vmem:[%s1082 + $0x8] sm:$0xf]
    %v1086 = vld [vmem:[%s1082 + $0xc] sm:$0xf]
    %s1087 = scalar_lea.vmem %s9, 1
    %v1088 = vld [vmem:[%s1087] sm:$0x1]
    %v1089 = vpack.c.bf16 %v1076, %v1076
    %v1091 = vlaneseq
    %v1092 = vshrl.u32 %v1091, 7
    %v1093 = vsub.s32 0, %v1092
    %v1094 = vrot.slane %v1088, %v1093
    %v1100 = vunpack.c.l.b16 %v1078
    %v1101 = vunpack.c.l.b16 %v1079
    %v1102 = vunpack.c.l.b16 %v1080
    %v1103 = vunpack.c.l.b16 %v1081
    %v1104 = vpack.c.b16 %v1101, %v1100
    %v1105 = vpack.c.b16 %v1103, %v1102
    %v1109 = vsel %vm686, %v1089, 0
    %1111 = vmatprep.subr.bf16.mxu0 0
    %1112 = vmatpush1.bf16.msra.mxu0 0
    %1113 = vmatprep.subr.bf16.mxu0 0
    %1114 = vmatpush1.bf16.msra.mxu0 0
    %1115 = vmatprep.subr.bf16.mxu0 0
    %1116 = vmatpush1.bf16.msra.mxu0 0
    %1117 = vmatprep.subr.bf16.mxu0 0
    %1118 = vmatpush1.bf16.msra.mxu0 0
    %1119 = vmatprep.subr.bf16.mxu0 0
    %1120 = vmatpush1.bf16.msra.mxu0 0
    %1121 = vmatprep.subr.bf16.mxu0 0
    %1122 = vmatpush1.bf16.msra.mxu0 0
    %1123 = vmatprep.subr.bf16.mxu0 0
    %1124 = vmatpush1.bf16.msra.mxu0 %v1105
    %1125 = vmatprep.subr.bf16.mxu0 0
    %1126 = vmatpush1.bf16.msra.mxu0 %v1104
    %1127 = vmatprep.subr.bf16.mxu0 0
    %1128 = vmatpush2.bf16.msra.mxu0 0
    %1129 = vmatprep.subr.bf16.mxu0 0
    %1130 = vmatpush2.bf16.msra.mxu0 0
    %1131 = vmatprep.subr.bf16.mxu0 0
    %1132 = vmatpush2.bf16.msra.mxu0 0
    %1133 = vmatprep.subr.bf16.mxu0 0
    %1134 = vmatpush2.bf16.msra.mxu0 0
    %1135 = vmatprep.subr.bf16.mxu0 0
    %1136 = vmatpush2.bf16.msra.mxu0 0
    %1137 = vmatprep.subr.bf16.mxu0 0
    %1138 = vmatpush2.bf16.msra.mxu0 0
    %1139 = vmatprep.subr.bf16.mxu0 0
    %1140 = vmatpush2.bf16.msra.mxu0 0
    %1141 = vmatprep.subr.bf16.mxu0 0
    %1142 = vmatpush2.bf16.msra.mxu0 0
    %1143 = vmatprep.mubr.bf16.mxu0 0
    %1144 = vmatmul.mubr.bf16.gmra.mxu0 %v1109
    %v1145 = vpop.f32.mrf.mxu0
    %v1146 = vadd.f32 %v1094, %v1145
    %v1147 = vpop.f32.mrf.mxu0
    %v1148 = vpop.f32.mrf.mxu0
    %v1149 = vpop.f32.mrf.mxu0
    %1150 = vdwg.mxu0
    %v1151 = vshrl.u32 %v730, 16
    %v1157 = vunpack.c.l.b16 %v1083
    %v1158 = vunpack.c.l.b16 %v1084
    %v1159 = vunpack.c.l.b16 %v1085
    %v1160 = vunpack.c.l.b16 %v1086
    %v1161 = vpack.c.b16 %v1158, %v1157
    %v1162 = vpack.c.b16 %v1160, %v1159
    %v1166 = vsel %vm686, %v1151, 0
    %1168 = vmatprep.subr.bf16.mxu0 0
    %1169 = vmatpush1.bf16.msra.mxu0 0
    %1170 = vmatprep.subr.bf16.mxu0 0
    %1171 = vmatpush1.bf16.msra.mxu0 0
    %1172 = vmatprep.subr.bf16.mxu0 0
    %1173 = vmatpush1.bf16.msra.mxu0 0
    %1174 = vmatprep.subr.bf16.mxu0 0
    %1175 = vmatpush1.bf16.msra.mxu0 0
    %1176 = vmatprep.subr.bf16.mxu0 0
    %1177 = vmatpush1.bf16.msra.mxu0 0
    %1178 = vmatprep.subr.bf16.mxu0 0
    %1179 = vmatpush1.bf16.msra.mxu0 0
    %1180 = vmatprep.subr.bf16.mxu0 0
    %1181 = vmatpush1.bf16.msra.mxu0 %v1162
    %1182 = vmatprep.subr.bf16.mxu0 0
    %1183 = vmatpush1.bf16.msra.mxu0 %v1161
    %1184 = vmatprep.subr.bf16.mxu0 0
    %1185 = vmatpush2.bf16.msra.mxu0 0
    %1186 = vmatprep.subr.bf16.mxu0 0
    %1187 = vmatpush2.bf16.msra.mxu0 0
    %1188 = vmatprep.subr.bf16.mxu0 0
    %1189 = vmatpush2.bf16.msra.mxu0 0
    %1190 = vmatprep.subr.bf16.mxu0 0
    %1191 = vmatpush2.bf16.msra.mxu0 0
    %1192 = vmatprep.subr.bf16.mxu0 0
    %1193 = vmatpush2.bf16.msra.mxu0 0
    %1194 = vmatprep.subr.bf16.mxu0 0
    %1195 = vmatpush2.bf16.msra.mxu0 0
    %1196 = vmatprep.subr.bf16.mxu0 0
    %1197 = vmatpush2.bf16.msra.mxu0 0
    %1198 = vmatprep.subr.bf16.mxu0 0
    %1199 = vmatpush2.bf16.msra.mxu0 0
    %1200 = vmatprep.mubr.bf16.mxu0 0
    %1201 = vmatmul.mubr.bf16.gmra.mxu0 %v1166
    %v1202 = vpop.f32.mrf.mxu0
    %v1203 = vadd.f32 0.0, %v1202
    %v1204 = vpop.f32.mrf.mxu0
    %v1205 = vpop.f32.mrf.mxu0
    %v1206 = vpop.f32.mrf.mxu0
    %1207 = vdwg.mxu0
    %v1208 = vadd.f32 %v1146, %v1203
    %v1209 = vxor.u32 %v1208, 2147483648
    %v1210 = vmul.f32 %v1209, 1.442695
    %v1211 = vpow.pop %v1210
    %v1212 = vadd.f32 %v1211, 1.0
    %v1213 = vrcp.pop %v1212
    %v1214 = vmul.f32 1.0, %v1213
    %v1215 = vtanh.pop %v1208
    %v1216 = vrot.slane %v654, 1
    %1217 = vrot.lane.b32.xlu0 %v1216, 32
    %v1218 = vpop.permute.xlu0 %1217
    %v1220 = vmul.f32 %v1214, %v1218
    %1222 = vrot.lane.b32.xlu0 %v1215, 64
    %v1223 = vpop.permute.xlu0 %1222
    %v1225 = vmul.f32 %v1214, %v1223
    %1227 = vrot.lane.b32.xlu0 %v1225, 32
    %v1228 = vpop.permute.xlu0 %1227
    %v1230 = vadd.f32 %v1220, %v1228
    %v1231 = vtanh.pop %v1230
    %1233 = vrot.lane.b32.xlu0 %v1231, 64
    %v1234 = vpop.permute.xlu0 %1233
    %v1236 = vmul.f32 %v1214, %v1234
    %1238 = vrot.lane.b32.xlu0 %v1236, 32
    %v1239 = vpop.permute.xlu0 %1238
    %1241 = vst.msk [vmem:[#allocation2] sm:$0x1] %vm819, %v1239
    %v1242 = vpack.c.bf16 %v1236, %v1236
    %1244 = vrot.lane.b32.xlu0 %v1242, 32
    %v1245 = vpop.permute.xlu0 %1244
    %v1247 = vsel %vm686, %v1245, 0
    %1249 = vmatprep.subr.bf16.mxu0 0
    %1250 = vmatpush1.bf16.msra.mxu0 0
    %1251 = vmatprep.subr.bf16.mxu0 0
    %1252 = vmatpush1.bf16.msra.mxu0 0
    %1253 = vmatprep.subr.bf16.mxu0 0
    %1254 = vmatpush1.bf16.msra.mxu0 0
    %1255 = vmatprep.subr.bf16.mxu0 0
    %1256 = vmatpush1.bf16.msra.mxu0 0
    %1257 = vmatprep.subr.bf16.mxu0 0
    %1258 = vmatpush1.bf16.msra.mxu0 0
    %1259 = vmatprep.subr.bf16.mxu0 0
    %1260 = vmatpush1.bf16.msra.mxu0 0
    %1261 = vmatprep.subr.bf16.mxu0 0
    %1262 = vmatpush1.bf16.msra.mxu0 %v1162
    %1263 = vmatprep.subr.bf16.mxu0 0
    %1264 = vmatpush1.bf16.msra.mxu0 %v1161
    %1265 = vmatprep.subr.bf16.mxu0 0
    %1266 = vmatpush2.bf16.msra.mxu0 0
    %1267 = vmatprep.subr.bf16.mxu0 0
    %1268 = vmatpush2.bf16.msra.mxu0 0
    %1269 = vmatprep.subr.bf16.mxu0 0
    %1270 = vmatpush2.bf16.msra.mxu0 0
    %1271 = vmatprep.subr.bf16.mxu0 0
    %1272 = vmatpush2.bf16.msra.mxu0 0
    %1273 = vmatprep.subr.bf16.mxu0 0
    %1274 = vmatpush2.bf16.msra.mxu0 0
    %1275 = vmatprep.subr.bf16.mxu0 0
    %1276 = vmatpush2.bf16.msra.mxu0 0
    %1277 = vmatprep.subr.bf16.mxu0 0
    %1278 = vmatpush2.bf16.msra.mxu0 0
    %1279 = vmatprep.subr.bf16.mxu0 0
    %1280 = vmatpush2.bf16.msra.mxu0 0
    %1281 = vmatprep.mubr.bf16.mxu0 0
    %1282 = vmatmul.mubr.bf16.gmra.mxu0 %v1247
    %v1283 = vpop.f32.mrf.mxu0
    %v1284 = vadd.f32 0.0, %v1283
    %v1285 = vpop.f32.mrf.mxu0
    %v1286 = vpop.f32.mrf.mxu0
    %v1287 = vpop.f32.mrf.mxu0
    %1288 = vdwg.mxu0
    %v1290 = vrot.slane %v1284, 7
    %v1292 = vadd.f32 %v1146, %v1290
    %v1293 = vxor.u32 %v1292, 2147483648
    %v1294 = vmul.f32 %v1293, 1.442695
    %v1295 = vpow.pop %v1294
    %v1296 = vadd.f32 %v1295, 1.0
    %v1297 = vrcp.pop %v1296
    %v1298 = vmul.f32 1.0, %v1297
    %v1299 = vtanh.pop %v1292
    %v1301 = vrot.slane %v1230, 7
    %v1303 = vmul.f32 %v1298, %v1301
    %1305 = vrot.lane.b32.xlu0 %v1299, 64
    %v1306 = vpop.permute.xlu0 %1305
    %v1308 = vmul.f32 %v1298, %v1306
    %1310 = vrot.lane.b32.xlu0 %v1308, 32
    %v1311 = vpop.permute.xlu0 %1310
    %v1313 = vadd.f32 %v1303, %v1311
    %v1314 = vtanh.pop %v1313
    %1316 = vrot.lane.b32.xlu0 %v1314, 64
    %v1317 = vpop.permute.xlu0 %1316
    %v1319 = vmul.f32 %v1298, %v1317
    %1321 = vrot.lane.b32.xlu0 %v1319, 32
    %v1322 = vpop.permute.xlu0 %1321
    %1324 = vst.msk [vmem:[#allocation2] sm:$0x2] %vm903, %v1322
    %v1325 = vpack.c.bf16 %v1319, %v1319
    %v1327 = vshrl.u32 %v1325, 16
    %1329 = vrot.lane.b32.xlu0 %v1327, 32
    %v1330 = vpop.permute.xlu0 %1329
    %v1332 = vsel %vm686, %v1330, 0
    %1334 = vmatprep.subr.bf16.mxu0 0
    %1335 = vmatpush1.bf16.msra.mxu0 0
    %1336 = vmatprep.subr.bf16.mxu0 0
    %1337 = vmatpush1.bf16.msra.mxu0 0
    %1338 = vmatprep.subr.bf16.mxu0 0
    %1339 = vmatpush1.bf16.msra.mxu0 0
    %1340 = vmatprep.subr.bf16.mxu0 0
    %1341 = vmatpush1.bf16.msra.mxu0 0
    %1342 = vmatprep.subr.bf16.mxu0 0
    %1343 = vmatpush1.bf16.msra.mxu0 0
    %1344 = vmatprep.subr.bf16.mxu0 0
    %1345 = vmatpush1.bf16.msra.mxu0 0
    %1346 = vmatprep.subr.bf16.mxu0 0
    %1347 = vmatpush1.bf16.msra.mxu0 %v1162
    %1348 = vmatprep.subr.bf16.mxu0 0
    %1349 = vmatpush1.bf16.msra.mxu0 %v1161
    %1350 = vmatprep.subr.bf16.mxu0 0
    %1351 = vmatpush2.bf16.msra.mxu0 0
    %1352 = vmatprep.subr.bf16.mxu0 0
    %1353 = vmatpush2.bf16.msra.mxu0 0
    %1354 = vmatprep.subr.bf16.mxu0 0
    %1355 = vmatpush2.bf16.msra.mxu0 0
    %1356 = vmatprep.subr.bf16.mxu0 0
    %1357 = vmatpush2.bf16.msra.mxu0 0
    %1358 = vmatprep.subr.bf16.mxu0 0
    %1359 = vmatpush2.bf16.msra.mxu0 0
    %1360 = vmatprep.subr.bf16.mxu0 0
    %1361 = vmatpush2.bf16.msra.mxu0 0
    %1362 = vmatprep.subr.bf16.mxu0 0
    %1363 = vmatpush2.bf16.msra.mxu0 0
    %1364 = vmatprep.subr.bf16.mxu0 0
    %1365 = vmatpush2.bf16.msra.mxu0 0
    %1366 = vmatprep.mubr.bf16.mxu0 0
    %1367 = vmatmul.mubr.bf16.gmra.mxu0 %v1332
    %v1368 = vpop.f32.mrf.mxu0
    %v1369 = vadd.f32 0.0, %v1368
    %v1370 = vpop.f32.mrf.mxu0
    %v1371 = vpop.f32.mrf.mxu0
    %v1372 = vpop.f32.mrf.mxu0
    %1373 = vdwg.mxu0
    %v1375 = vrot.slane %v1369, 6
    %v1377 = vadd.f32 %v1146, %v1375
    %v1378 = vxor.u32 %v1377, 2147483648
    %v1379 = vmul.f32 %v1378, 1.442695
    %v1380 = vpow.pop %v1379
    %v1381 = vadd.f32 %v1380, 1.0
    %v1382 = vrcp.pop %v1381
    %v1383 = vmul.f32 1.0, %v1382
    %v1384 = vtanh.pop %v1377
    %v1386 = vrot.slane %v1313, 7
    %v1388 = vmul.f32 %v1383, %v1386
    %1390 = vrot.lane.b32.xlu0 %v1384, 64
    %v1391 = vpop.permute.xlu0 %1390
    %v1393 = vmul.f32 %v1383, %v1391
    %1395 = vrot.lane.b32.xlu0 %v1393, 32
    %v1396 = vpop.permute.xlu0 %1395
    %v1398 = vadd.f32 %v1388, %v1396
    %v1399 = vtanh.pop %v1398
    %1401 = vrot.lane.b32.xlu0 %v1399, 64
    %v1402 = vpop.permute.xlu0 %1401
    %v1404 = vmul.f32 %v1383, %v1402
    %1406 = vrot.lane.b32.xlu0 %v1404, 32
    %v1407 = vpop.permute.xlu0 %1406
    %1409 = vst.msk [vmem:[#allocation2] sm:$0x4] %vm989, %v1407
    %v1410 = vpack.c.bf16 %v1404, %v1404
    %v1412 = vrot.slane %v1410, 1
    %1413 = vrot.lane.b32.xlu0 %v1412, 32
    %v1414 = vpop.permute.xlu0 %1413
    %v1416 = vsel %vm686, %v1414, 0
    %1418 = vmatprep.subr.bf16.mxu0 0
    %1419 = vmatpush1.bf16.msra.mxu0 0
    %1420 = vmatprep.subr.bf16.mxu0 0
    %1421 = vmatpush1.bf16.msra.mxu0 0
    %1422 = vmatprep.subr.bf16.mxu0 0
    %1423 = vmatpush1.bf16.msra.mxu0 0
    %1424 = vmatprep.subr.bf16.mxu0 0
    %1425 = vmatpush1.bf16.msra.mxu0 0
    %1426 = vmatprep.subr.bf16.mxu0 0
    %1427 = vmatpush1.bf16.msra.mxu0 0
    %1428 = vmatprep.subr.bf16.mxu0 0
    %1429 = vmatpush1.bf16.msra.mxu0 0
    %1430 = vmatprep.subr.bf16.mxu0 0
    %1431 = vmatpush1.bf16.msra.mxu0 %v1162
    %1432 = vmatprep.subr.bf16.mxu0 0
    %1433 = vmatpush1.bf16.msra.mxu0 %v1161
    %1434 = vmatprep.subr.bf16.mxu0 0
    %1435 = vmatpush2.bf16.msra.mxu0 0
    %1436 = vmatprep.subr.bf16.mxu0 0
    %1437 = vmatpush2.bf16.msra.mxu0 0
    %1438 = vmatprep.subr.bf16.mxu0 0
    %1439 = vmatpush2.bf16.msra.mxu0 0
    %1440 = vmatprep.subr.bf16.mxu0 0
    %1441 = vmatpush2.bf16.msra.mxu0 0
    %1442 = vmatprep.subr.bf16.mxu0 0
    %1443 = vmatpush2.bf16.msra.mxu0 0
    %1444 = vmatprep.subr.bf16.mxu0 0
    %1445 = vmatpush2.bf16.msra.mxu0 0
    %1446 = vmatprep.subr.bf16.mxu0 0
    %1447 = vmatpush2.bf16.msra.mxu0 0
    %1448 = vmatprep.subr.bf16.mxu0 0
    %1449 = vmatpush2.bf16.msra.mxu0 0
    %1450 = vmatprep.mubr.bf16.mxu0 0
    %1451 = vmatmul.mubr.bf16.gmra.mxu0 %v1416
    %v1452 = vpop.f32.mrf.mxu0
    %v1453 = vadd.f32 0.0, %v1452
    %v1454 = vpop.f32.mrf.mxu0
    %v1455 = vpop.f32.mrf.mxu0
    %v1456 = vpop.f32.mrf.mxu0
    %1457 = vdwg.mxu0
    %v1459 = vrot.slane %v1453, 5
    %v1461 = vadd.f32 %v1146, %v1459
    %v1462 = vxor.u32 %v1461, 2147483648
    %v1463 = vmul.f32 %v1462, 1.442695
    %v1464 = vpow.pop %v1463
    %v1465 = vadd.f32 %v1464, 1.0
    %v1466 = vrcp.pop %v1465
    %v1467 = vmul.f32 1.0, %v1466
    %v1468 = vtanh.pop %v1461
    %v1470 = vrot.slane %v1398, 7
    %v1472 = vmul.f32 %v1467, %v1470
    %1474 = vrot.lane.b32.xlu0 %v1468, 64
    %v1475 = vpop.permute.xlu0 %1474
    %v1477 = vmul.f32 %v1467, %v1475
    %1479 = vrot.lane.b32.xlu0 %v1477, 32
    %v1480 = vpop.permute.xlu0 %1479
    %v1482 = vadd.f32 %v1472, %v1480
    %v1483 = vtanh.pop %v1482
    %1485 = vrot.lane.b32.xlu0 %v1483, 64
    %v1486 = vpop.permute.xlu0 %1485
    %v1488 = vmul.f32 %v1467, %v1486
    %1490 = vrot.lane.b32.xlu0 %v1488, 32
    %v1491 = vpop.permute.xlu0 %1490
    %1493 = vst.msk [vmem:[#allocation2] sm:$0x8] %vm1074, %v1491
    %v1494 = vld [vmem:[#allocation2] sm:$0xf]
    %v1495 = vrot.slane %v1069, 3
    %v1497 = vrot.slane %v1488, 2
    %vm1499 = vcmask 1040384
    %v1500 = vsel %vm1499, %v1495, %v1497
    %v1502 = vrot.slane %v1063, 3
    %v1505 = vrot.slane %v1482, 2
    %v1507 = vsel %vm1499, %v1502, %v1505
    %v1508 = vadd.f32 %v652, %v1494
    %vm1509 = vcmp.lt.f32.partialorder %v1508, -1e-11
    %v1510 = vmul.f32 %v1508, -1e+10
    %v1511 = vsel %vm1509, %v1510, %v1508
    %v1512 = vadd.f32 %v1511, %v652
    %v1513 = vmul.f32 %v1512, 0.5
    %v1514 = vtanh.pop %v1513
    %s1515 = scalar_lea.vmem %s7, 32
    %v1516 = vld [vmem:[%s1515] sm:$0xf]
    %v1517 = vld [vmem:[%s1515 + $0x4] sm:$0xf]
    %v1518 = vld [vmem:[%s1515 + $0x8] sm:$0xf]
    %v1519 = vld [vmem:[%s1515 + $0xc] sm:$0xf]
    %s1520 = scalar_lea.vmem %s8, 32
    %v1521 = vld [vmem:[%s1520] sm:$0xf]
    %v1522 = vld [vmem:[%s1520 + $0x4] sm:$0xf]
    %v1523 = vld [vmem:[%s1520 + $0x8] sm:$0xf]
    %v1524 = vld [vmem:[%s1520 + $0xc] sm:$0xf]
    %s1525 = scalar_lea.vmem %s9, 2
    %v1526 = vld [vmem:[%s1525] sm:$0x1]
    %v1527 = vpack.c.bf16 %v1514, %v1514
    %v1529 = vlaneseq
    %v1530 = vshrl.u32 %v1529, 7
    %v1531 = vsub.s32 0, %v1530
    %v1532 = vrot.slane %v1526, %v1531
    %v1538 = vunpack.c.l.b16 %v1516
    %v1539 = vunpack.c.l.b16 %v1517
    %v1540 = vunpack.c.l.b16 %v1518
    %v1541 = vunpack.c.l.b16 %v1519
    %v1542 = vpack.c.b16 %v1539, %v1538
    %v1543 = vpack.c.b16 %v1541, %v1540
    %v1547 = vsel %vm686, %v1527, 0
    %1549 = vmatprep.subr.bf16.mxu0 0
    %1550 = vmatpush1.bf16.msra.mxu0 0
    %1551 = vmatprep.subr.bf16.mxu0 0
    %1552 = vmatpush1.bf16.msra.mxu0 0
    %1553 = vmatprep.subr.bf16.mxu0 0
    %1554 = vmatpush1.bf16.msra.mxu0 0
    %1555 = vmatprep.subr.bf16.mxu0 0
    %1556 = vmatpush1.bf16.msra.mxu0 0
    %1557 = vmatprep.subr.bf16.mxu0 0
    %1558 = vmatpush1.bf16.msra.mxu0 0
    %1559 = vmatprep.subr.bf16.mxu0 0
    %1560 = vmatpush1.bf16.msra.mxu0 0
    %1561 = vmatprep.subr.bf16.mxu0 0
    %1562 = vmatpush1.bf16.msra.mxu0 %v1543
    %1563 = vmatprep.subr.bf16.mxu0 0
    %1564 = vmatpush1.bf16.msra.mxu0 %v1542
    %1565 = vmatprep.subr.bf16.mxu0 0
    %1566 = vmatpush2.bf16.msra.mxu0 0
    %1567 = vmatprep.subr.bf16.mxu0 0
    %1568 = vmatpush2.bf16.msra.mxu0 0
    %1569 = vmatprep.subr.bf16.mxu0 0
    %1570 = vmatpush2.bf16.msra.mxu0 0
    %1571 = vmatprep.subr.bf16.mxu0 0
    %1572 = vmatpush2.bf16.msra.mxu0 0
    %1573 = vmatprep.subr.bf16.mxu0 0
    %1574 = vmatpush2.bf16.msra.mxu0 0
    %1575 = vmatprep.subr.bf16.mxu0 0
    %1576 = vmatpush2.bf16.msra.mxu0 0
    %1577 = vmatprep.subr.bf16.mxu0 0
    %1578 = vmatpush2.bf16.msra.mxu0 0
    %1579 = vmatprep.subr.bf16.mxu0 0
    %1580 = vmatpush2.bf16.msra.mxu0 0
    %1581 = vmatprep.mubr.bf16.mxu0 0
    %1582 = vmatmul.mubr.bf16.gmra.mxu0 %v1547
    %v1583 = vpop.f32.mrf.mxu0
    %v1584 = vadd.f32 %v1532, %v1583
    %v1585 = vpop.f32.mrf.mxu0
    %v1586 = vpop.f32.mrf.mxu0
    %v1587 = vpop.f32.mrf.mxu0
    %1588 = vdwg.mxu0
    %v1589 = vpack.c.bf16 %v1500, %v1500
    %1591 = vrot.lane.b32.xlu0 %v1589, 32
    %v1592 = vpop.permute.xlu0 %1591
    %v1597 = vunpack.c.l.b16 %v1521
    %v1598 = vunpack.c.l.b16 %v1522
    %v1599 = vunpack.c.l.b16 %v1523
    %v1600 = vunpack.c.l.b16 %v1524
    %v1601 = vpack.c.b16 %v1598, %v1597
    %v1602 = vpack.c.b16 %v1600, %v1599
    %v1606 = vsel %vm686, %v1592, 0
    %1608 = vmatprep.subr.bf16.mxu0 0
    %1609 = vmatpush1.bf16.msra.mxu0 0
    %1610 = vmatprep.subr.bf16.mxu0 0
    %1611 = vmatpush1.bf16.msra.mxu0 0
    %1612 = vmatprep.subr.bf16.mxu0 0
    %1613 = vmatpush1.bf16.msra.mxu0 0
    %1614 = vmatprep.subr.bf16.mxu0 0
    %1615 = vmatpush1.bf16.msra.mxu0 0
    %1616 = vmatprep.subr.bf16.mxu0 0
    %1617 = vmatpush1.bf16.msra.mxu0 0
    %1618 = vmatprep.subr.bf16.mxu0 0
    %1619 = vmatpush1.bf16.msra.mxu0 0
    %1620 = vmatprep.subr.bf16.mxu0 0
    %1621 = vmatpush1.bf16.msra.mxu0 %v1602
    %1622 = vmatprep.subr.bf16.mxu0 0
    %1623 = vmatpush1.bf16.msra.mxu0 %v1601
    %1624 = vmatprep.subr.bf16.mxu0 0
    %1625 = vmatpush2.bf16.msra.mxu0 0
    %1626 = vmatprep.subr.bf16.mxu0 0
    %1627 = vmatpush2.bf16.msra.mxu0 0
    %1628 = vmatprep.subr.bf16.mxu0 0
    %1629 = vmatpush2.bf16.msra.mxu0 0
    %1630 = vmatprep.subr.bf16.mxu0 0
    %1631 = vmatpush2.bf16.msra.mxu0 0
    %1632 = vmatprep.subr.bf16.mxu0 0
    %1633 = vmatpush2.bf16.msra.mxu0 0
    %1634 = vmatprep.subr.bf16.mxu0 0
    %1635 = vmatpush2.bf16.msra.mxu0 0
    %1636 = vmatprep.subr.bf16.mxu0 0
    %1637 = vmatpush2.bf16.msra.mxu0 0
    %1638 = vmatprep.subr.bf16.mxu0 0
    %1639 = vmatpush2.bf16.msra.mxu0 0
    %1640 = vmatprep.mubr.bf16.mxu0 0
    %1641 = vmatmul.mubr.bf16.gmra.mxu0 %v1606
    %v1642 = vpop.f32.mrf.mxu0
    %v1643 = vadd.f32 0.0, %v1642
    %v1644 = vpop.f32.mrf.mxu0
    %v1645 = vpop.f32.mrf.mxu0
    %v1646 = vpop.f32.mrf.mxu0
    %1647 = vdwg.mxu0
    %v1648 = vadd.f32 %v1584, %v1643
    %v1649 = vxor.u32 %v1648, 2147483648
    %v1650 = vmul.f32 %v1649, 1.442695
    %v1651 = vpow.pop %v1650
    %v1652 = vadd.f32 %v1651, 1.0
    %v1653 = vrcp.pop %v1652
    %v1654 = vmul.f32 1.0, %v1653
    %v1655 = vtanh.pop %v1648
    %v1656 = vmul.f32 %v1654, %v1507
    %1658 = vrot.lane.b32.xlu0 %v1655, 64
    %v1659 = vpop.permute.xlu0 %1658
    %v1661 = vmul.f32 %v1654, %v1659
    %1663 = vrot.lane.b32.xlu0 %v1661, 32
    %v1664 = vpop.permute.xlu0 %1663
    %v1666 = vadd.f32 %v1656, %v1664
    %v1667 = vtanh.pop %v1666
    %1669 = vrot.lane.b32.xlu0 %v1667, 64
    %v1670 = vpop.permute.xlu0 %1669
    %v1672 = vmul.f32 %v1654, %v1670
    %1674 = vrot.lane.b32.xlu0 %v1672, 32
    %v1675 = vpop.permute.xlu0 %1674
    %1677 = vst.msk [vmem:[#allocation2] sm:$0x1] %vm819, %v1675
    %v1678 = vpack.c.bf16 %v1672, %v1672
    %1680 = vrot.lane.b32.xlu0 %v1678, 32
    %v1681 = vpop.permute.xlu0 %1680
    %v1683 = vsel %vm686, %v1681, 0
    %1685 = vmatprep.subr.bf16.mxu0 0
    %1686 = vmatpush1.bf16.msra.mxu0 0
    %1687 = vmatprep.subr.bf16.mxu0 0
    %1688 = vmatpush1.bf16.msra.mxu0 0
    %1689 = vmatprep.subr.bf16.mxu0 0
    %1690 = vmatpush1.bf16.msra.mxu0 0
    %1691 = vmatprep.subr.bf16.mxu0 0
    %1692 = vmatpush1.bf16.msra.mxu0 0
    %1693 = vmatprep.subr.bf16.mxu0 0
    %1694 = vmatpush1.bf16.msra.mxu0 0
    %1695 = vmatprep.subr.bf16.mxu0 0
    %1696 = vmatpush1.bf16.msra.mxu0 0
    %1697 = vmatprep.subr.bf16.mxu0 0
    %1698 = vmatpush1.bf16.msra.mxu0 %v1602
    %1699 = vmatprep.subr.bf16.mxu0 0
    %1700 = vmatpush1.bf16.msra.mxu0 %v1601
    %1701 = vmatprep.subr.bf16.mxu0 0
    %1702 = vmatpush2.bf16.msra.mxu0 0
    %1703 = vmatprep.subr.bf16.mxu0 0
    %1704 = vmatpush2.bf16.msra.mxu0 0
    %1705 = vmatprep.subr.bf16.mxu0 0
    %1706 = vmatpush2.bf16.msra.mxu0 0
    %1707 = vmatprep.subr.bf16.mxu0 0
    %1708 = vmatpush2.bf16.msra.mxu0 0
    %1709 = vmatprep.subr.bf16.mxu0 0
    %1710 = vmatpush2.bf16.msra.mxu0 0
    %1711 = vmatprep.subr.bf16.mxu0 0
    %1712 = vmatpush2.bf16.msra.mxu0 0
    %1713 = vmatprep.subr.bf16.mxu0 0
    %1714 = vmatpush2.bf16.msra.mxu0 0
    %1715 = vmatprep.subr.bf16.mxu0 0
    %1716 = vmatpush2.bf16.msra.mxu0 0
    %1717 = vmatprep.mubr.bf16.mxu0 0
    %1718 = vmatmul.mubr.bf16.gmra.mxu0 %v1683
    %v1719 = vpop.f32.mrf.mxu0
    %v1720 = vadd.f32 0.0, %v1719
    %v1721 = vpop.f32.mrf.mxu0
    %v1722 = vpop.f32.mrf.mxu0
    %v1723 = vpop.f32.mrf.mxu0
    %1724 = vdwg.mxu0
    %v1726 = vrot.slane %v1720, 7
    %v1728 = vadd.f32 %v1584, %v1726
    %v1729 = vxor.u32 %v1728, 2147483648
    %v1730 = vmul.f32 %v1729, 1.442695
    %v1731 = vpow.pop %v1730
    %v1732 = vadd.f32 %v1731, 1.0
    %v1733 = vrcp.pop %v1732
    %v1734 = vmul.f32 1.0, %v1733
    %v1735 = vtanh.pop %v1728
    %v1737 = vrot.slane %v1666, 7
    %v1739 = vmul.f32 %v1734, %v1737
    %1741 = vrot.lane.b32.xlu0 %v1735, 64
    %v1742 = vpop.permute.xlu0 %1741
    %v1744 = vmul.f32 %v1734, %v1742
    %1746 = vrot.lane.b32.xlu0 %v1744, 32
    %v1747 = vpop.permute.xlu0 %1746
    %v1749 = vadd.f32 %v1739, %v1747
    %v1750 = vtanh.pop %v1749
    %1752 = vrot.lane.b32.xlu0 %v1750, 64
    %v1753 = vpop.permute.xlu0 %1752
    %v1755 = vmul.f32 %v1734, %v1753
    %1757 = vrot.lane.b32.xlu0 %v1755, 32
    %v1758 = vpop.permute.xlu0 %1757
    %1760 = vst.msk [vmem:[#allocation2] sm:$0x2] %vm903, %v1758
    %v1761 = vpack.c.bf16 %v1755, %v1755
    %v1763 = vshrl.u32 %v1761, 16
    %1765 = vrot.lane.b32.xlu0 %v1763, 32
    %v1766 = vpop.permute.xlu0 %1765
    %v1768 = vsel %vm686, %v1766, 0
    %1770 = vmatprep.subr.bf16.mxu0 0
    %1771 = vmatpush1.bf16.msra.mxu0 0
    %1772 = vmatprep.subr.bf16.mxu0 0
    %1773 = vmatpush1.bf16.msra.mxu0 0
    %1774 = vmatprep.subr.bf16.mxu0 0
    %1775 = vmatpush1.bf16.msra.mxu0 0
    %1776 = vmatprep.subr.bf16.mxu0 0
    %1777 = vmatpush1.bf16.msra.mxu0 0
    %1778 = vmatprep.subr.bf16.mxu0 0
    %1779 = vmatpush1.bf16.msra.mxu0 0
    %1780 = vmatprep.subr.bf16.mxu0 0
    %1781 = vmatpush1.bf16.msra.mxu0 0
    %1782 = vmatprep.subr.bf16.mxu0 0
    %1783 = vmatpush1.bf16.msra.mxu0 %v1602
    %1784 = vmatprep.subr.bf16.mxu0 0
    %1785 = vmatpush1.bf16.msra.mxu0 %v1601
    %1786 = vmatprep.subr.bf16.mxu0 0
    %1787 = vmatpush2.bf16.msra.mxu0 0
    %1788 = vmatprep.subr.bf16.mxu0 0
    %1789 = vmatpush2.bf16.msra.mxu0 0
    %1790 = vmatprep.subr.bf16.mxu0 0
    %1791 = vmatpush2.bf16.msra.mxu0 0
    %1792 = vmatprep.subr.bf16.mxu0 0
    %1793 = vmatpush2.bf16.msra.mxu0 0
    %1794 = vmatprep.subr.bf16.mxu0 0
    %1795 = vmatpush2.bf16.msra.mxu0 0
    %1796 = vmatprep.subr.bf16.mxu0 0
    %1797 = vmatpush2.bf16.msra.mxu0 0
    %1798 = vmatprep.subr.bf16.mxu0 0
    %1799 = vmatpush2.bf16.msra.mxu0 0
    %1800 = vmatprep.subr.bf16.mxu0 0
    %1801 = vmatpush2.bf16.msra.mxu0 0
    %1802 = vmatprep.mubr.bf16.mxu0 0
    %1803 = vmatmul.mubr.bf16.gmra.mxu0 %v1768
    %v1804 = vpop.f32.mrf.mxu0
    %v1805 = vadd.f32 0.0, %v1804
    %v1806 = vpop.f32.mrf.mxu0
    %v1807 = vpop.f32.mrf.mxu0
    %v1808 = vpop.f32.mrf.mxu0
    %1809 = vdwg.mxu0
    %v1811 = vrot.slane %v1805, 6
    %v1813 = vadd.f32 %v1584, %v1811
    %v1814 = vxor.u32 %v1813, 2147483648
    %v1815 = vmul.f32 %v1814, 1.442695
    %v1816 = vpow.pop %v1815
    %v1817 = vadd.f32 %v1816, 1.0
    %v1818 = vrcp.pop %v1817
    %v1819 = vmul.f32 1.0, %v1818
    %v1820 = vtanh.pop %v1813
    %v1822 = vrot.slane %v1749, 7
    %v1824 = vmul.f32 %v1819, %v1822
    %1826 = vrot.lane.b32.xlu0 %v1820, 64
    %v1827 = vpop.permute.xlu0 %1826
    %v1829 = vmul.f32 %v1819, %v1827
    %1831 = vrot.lane.b32.xlu0 %v1829, 32
    %v1832 = vpop.permute.xlu0 %1831
    %v1834 = vadd.f32 %v1824, %v1832
    %v1835 = vtanh.pop %v1834
    %1837 = vrot.lane.b32.xlu0 %v1835, 64
    %v1838 = vpop.permute.xlu0 %1837
    %v1840 = vmul.f32 %v1819, %v1838
    %1842 = vrot.lane.b32.xlu0 %v1840, 32
    %v1843 = vpop.permute.xlu0 %1842
    %1845 = vst.msk [vmem:[#allocation2] sm:$0x4] %vm989, %v1843
    %v1846 = vpack.c.bf16 %v1840, %v1840
    %v1848 = vrot.slane %v1846, 1
    %1849 = vrot.lane.b32.xlu0 %v1848, 32
    %v1850 = vpop.permute.xlu0 %1849
    %v1852 = vsel %vm686, %v1850, 0
    %1854 = vmatprep.subr.bf16.mxu0 0
    %1855 = vmatpush1.bf16.msra.mxu0 0
    %1856 = vmatprep.subr.bf16.mxu0 0
    %1857 = vmatpush1.bf16.msra.mxu0 0
    %1858 = vmatprep.subr.bf16.mxu0 0
    %1859 = vmatpush1.bf16.msra.mxu0 0
    %1860 = vmatprep.subr.bf16.mxu0 0
    %1861 = vmatpush1.bf16.msra.mxu0 0
    %1862 = vmatprep.subr.bf16.mxu0 0
    %1863 = vmatpush1.bf16.msra.mxu0 0
    %1864 = vmatprep.subr.bf16.mxu0 0
    %1865 = vmatpush1.bf16.msra.mxu0 0
    %1866 = vmatprep.subr.bf16.mxu0 0
    %1867 = vmatpush1.bf16.msra.mxu0 %v1602
    %1868 = vmatprep.subr.bf16.mxu0 0
    %1869 = vmatpush1.bf16.msra.mxu0 %v1601
    %1870 = vmatprep.subr.bf16.mxu0 0
    %1871 = vmatpush2.bf16.msra.mxu0 0
    %1872 = vmatprep.subr.bf16.mxu0 0
    %1873 = vmatpush2.bf16.msra.mxu0 0
    %1874 = vmatprep.subr.bf16.mxu0 0
    %1875 = vmatpush2.bf16.msra.mxu0 0
    %1876 = vmatprep.subr.bf16.mxu0 0
    %1877 = vmatpush2.bf16.msra.mxu0 0
    %1878 = vmatprep.subr.bf16.mxu0 0
    %1879 = vmatpush2.bf16.msra.mxu0 0
    %1880 = vmatprep.subr.bf16.mxu0 0
    %1881 = vmatpush2.bf16.msra.mxu0 0
    %1882 = vmatprep.subr.bf16.mxu0 0
    %1883 = vmatpush2.bf16.msra.mxu0 0
    %1884 = vmatprep.subr.bf16.mxu0 0
    %1885 = vmatpush2.bf16.msra.mxu0 0
    %1886 = vmatprep.mubr.bf16.mxu0 0
    %1887 = vmatmul.mubr.bf16.gmra.mxu0 %v1852
    %v1888 = vpop.f32.mrf.mxu0
    %v1889 = vadd.f32 0.0, %v1888
    %v1890 = vpop.f32.mrf.mxu0
    %v1891 = vpop.f32.mrf.mxu0
    %v1892 = vpop.f32.mrf.mxu0
    %1893 = vdwg.mxu0
    %v1895 = vrot.slane %v1889, 5
    %v1897 = vadd.f32 %v1584, %v1895
    %v1898 = vxor.u32 %v1897, 2147483648
    %v1899 = vmul.f32 %v1898, 1.442695
    %v1900 = vpow.pop %v1899
    %v1901 = vadd.f32 %v1900, 1.0
    %v1902 = vrcp.pop %v1901
    %v1903 = vmul.f32 1.0, %v1902
    %v1904 = vtanh.pop %v1897
    %v1906 = vrot.slane %v1834, 7
    %v1908 = vmul.f32 %v1903, %v1906
    %1910 = vrot.lane.b32.xlu0 %v1904, 64
    %v1911 = vpop.permute.xlu0 %1910
    %v1913 = vmul.f32 %v1903, %v1911
    %1915 = vrot.lane.b32.xlu0 %v1913, 32
    %v1916 = vpop.permute.xlu0 %1915
    %v1918 = vadd.f32 %v1908, %v1916
    %v1919 = vtanh.pop %v1918
    %1921 = vrot.lane.b32.xlu0 %v1919, 64
    %v1922 = vpop.permute.xlu0 %1921
    %v1924 = vmul.f32 %v1903, %v1922
    %1926 = vrot.lane.b32.xlu0 %v1924, 32
    %v1927 = vpop.permute.xlu0 %1926
    %1929 = vst.msk [vmem:[#allocation2] sm:$0x8] %vm1074, %v1927
    %v1930 = vld [vmem:[#allocation2] sm:$0xf]
    %s1931 = scalar_lea.vmem %s7, 48
    %v1932 = vld [vmem:[%s1931] sm:$0xf]
    %v1933 = vld [vmem:[%s1931 + $0x4] sm:$0xf]
    %v1934 = vld [vmem:[%s1931 + $0x8] sm:$0xf]
    %v1935 = vld [vmem:[%s1931 + $0xc] sm:$0xf]
    %s1936 = scalar_lea.vmem %s8, 48
    %v1937 = vld [vmem:[%s1936] sm:$0xf]
    %v1938 = vld [vmem:[%s1936 + $0x4] sm:$0xf]
    %v1939 = vld [vmem:[%s1936 + $0x8] sm:$0xf]
    %v1940 = vld [vmem:[%s1936 + $0xc] sm:$0xf]
    %s1941 = scalar_lea.vmem %s9, 3
    %v1942 = vld [vmem:[%s1941] sm:$0x1]
    %v1943 = vpack.c.bf16 %v1930, %v1930
    %v1945 = vlaneseq
    %v1946 = vshrl.u32 %v1945, 7
    %v1947 = vsub.s32 0, %v1946
    %v1948 = vrot.slane %v1942, %v1947
    %v1954 = vunpack.c.l.b16 %v1932
    %v1955 = vunpack.c.l.b16 %v1933
    %v1956 = vunpack.c.l.b16 %v1934
    %v1957 = vunpack.c.l.b16 %v1935
    %v1958 = vpack.c.b16 %v1955, %v1954
    %v1959 = vpack.c.b16 %v1957, %v1956
    %v1963 = vsel %vm686, %v1943, 0
    %1965 = vmatprep.subr.bf16.mxu0 0
    %1966 = vmatpush1.bf16.msra.mxu0 0
    %1967 = vmatprep.subr.bf16.mxu0 0
    %1968 = vmatpush1.bf16.msra.mxu0 0
    %1969 = vmatprep.subr.bf16.mxu0 0
    %1970 = vmatpush1.bf16.msra.mxu0 0
    %1971 = vmatprep.subr.bf16.mxu0 0
    %1972 = vmatpush1.bf16.msra.mxu0 0
    %1973 = vmatprep.subr.bf16.mxu0 0
    %1974 = vmatpush1.bf16.msra.mxu0 0
    %1975 = vmatprep.subr.bf16.mxu0 0
    %1976 = vmatpush1.bf16.msra.mxu0 0
    %1977 = vmatprep.subr.bf16.mxu0 0
    %1978 = vmatpush1.bf16.msra.mxu0 %v1959
    %1979 = vmatprep.subr.bf16.mxu0 0
    %1980 = vmatpush1.bf16.msra.mxu0 %v1958
    %1981 = vmatprep.subr.bf16.mxu0 0
    %1982 = vmatpush2.bf16.msra.mxu0 0
    %1983 = vmatprep.subr.bf16.mxu0 0
    %1984 = vmatpush2.bf16.msra.mxu0 0
    %1985 = vmatprep.subr.bf16.mxu0 0
    %1986 = vmatpush2.bf16.msra.mxu0 0
    %1987 = vmatprep.subr.bf16.mxu0 0
    %1988 = vmatpush2.bf16.msra.mxu0 0
    %1989 = vmatprep.subr.bf16.mxu0 0
    %1990 = vmatpush2.bf16.msra.mxu0 0
    %1991 = vmatprep.subr.bf16.mxu0 0
    %1992 = vmatpush2.bf16.msra.mxu0 0
    %1993 = vmatprep.subr.bf16.mxu0 0
    %1994 = vmatpush2.bf16.msra.mxu0 0
    %1995 = vmatprep.subr.bf16.mxu0 0
    %1996 = vmatpush2.bf16.msra.mxu0 0
    %1997 = vmatprep.mubr.bf16.mxu0 0
    %1998 = vmatmul.mubr.bf16.gmra.mxu0 %v1963
    %v1999 = vpop.f32.mrf.mxu0
    %v2000 = vadd.f32 %v1948, %v1999
    %v2001 = vpop.f32.mrf.mxu0
    %v2002 = vpop.f32.mrf.mxu0
    %v2003 = vpop.f32.mrf.mxu0
    %2004 = vdwg.mxu0
    %v2006 = vshrl.u32 %v1589, 16
    %2008 = vrot.lane.b32.xlu0 %v2006, 32
    %v2009 = vpop.permute.xlu0 %2008
    %v2014 = vunpack.c.l.b16 %v1937
    %v2015 = vunpack.c.l.b16 %v1938
    %v2016 = vunpack.c.l.b16 %v1939
    %v2017 = vunpack.c.l.b16 %v1940
    %v2018 = vpack.c.b16 %v2015, %v2014
    %v2019 = vpack.c.b16 %v2017, %v2016
    %v2023 = vsel %vm686, %v2009, 0
    %2025 = vmatprep.subr.bf16.mxu0 0
    %2026 = vmatpush1.bf16.msra.mxu0 0
    %2027 = vmatprep.subr.bf16.mxu0 0
    %2028 = vmatpush1.bf16.msra.mxu0 0
    %2029 = vmatprep.subr.bf16.mxu0 0
    %2030 = vmatpush1.bf16.msra.mxu0 0
    %2031 = vmatprep.subr.bf16.mxu0 0
    %2032 = vmatpush1.bf16.msra.mxu0 0
    %2033 = vmatprep.subr.bf16.mxu0 0
    %2034 = vmatpush1.bf16.msra.mxu0 0
    %2035 = vmatprep.subr.bf16.mxu0 0
    %2036 = vmatpush1.bf16.msra.mxu0 0
    %2037 = vmatprep.subr.bf16.mxu0 0
    %2038 = vmatpush1.bf16.msra.mxu0 %v2019
    %2039 = vmatprep.subr.bf16.mxu0 0
    %2040 = vmatpush1.bf16.msra.mxu0 %v2018
    %2041 = vmatprep.subr.bf16.mxu0 0
    %2042 = vmatpush2.bf16.msra.mxu0 0
    %2043 = vmatprep.subr.bf16.mxu0 0
    %2044 = vmatpush2.bf16.msra.mxu0 0
    %2045 = vmatprep.subr.bf16.mxu0 0
    %2046 = vmatpush2.bf16.msra.mxu0 0
    %2047 = vmatprep.subr.bf16.mxu0 0
    %2048 = vmatpush2.bf16.msra.mxu0 0
    %2049 = vmatprep.subr.bf16.mxu0 0
    %2050 = vmatpush2.bf16.msra.mxu0 0
    %2051 = vmatprep.subr.bf16.mxu0 0
    %2052 = vmatpush2.bf16.msra.mxu0 0
    %2053 = vmatprep.subr.bf16.mxu0 0
    %2054 = vmatpush2.bf16.msra.mxu0 0
    %2055 = vmatprep.subr.bf16.mxu0 0
    %2056 = vmatpush2.bf16.msra.mxu0 0
    %2057 = vmatprep.mubr.bf16.mxu0 0
    %2058 = vmatmul.mubr.bf16.gmra.mxu0 %v2023
    %v2059 = vpop.f32.mrf.mxu0
    %v2060 = vadd.f32 0.0, %v2059
    %v2061 = vpop.f32.mrf.mxu0
    %v2062 = vpop.f32.mrf.mxu0
    %v2063 = vpop.f32.mrf.mxu0
    %2064 = vdwg.mxu0
    %v2065 = vadd.f32 %v2000, %v2060
    %v2066 = vxor.u32 %v2065, 2147483648
    %v2067 = vmul.f32 %v2066, 1.442695
    %v2068 = vpow.pop %v2067
    %v2069 = vadd.f32 %v2068, 1.0
    %v2070 = vrcp.pop %v2069
    %v2071 = vmul.f32 1.0, %v2070
    %v2072 = vtanh.pop %v2065
    %v2074 = vrot.slane %v1507, 1
    %v2076 = vmul.f32 %v2071, %v2074
    %2078 = vrot.lane.b32.xlu0 %v2072, 64
    %v2079 = vpop.permute.xlu0 %2078
    %v2081 = vmul.f32 %v2071, %v2079
    %2083 = vrot.lane.b32.xlu0 %v2081, 32
    %v2084 = vpop.permute.xlu0 %2083
    %v2086 = vadd.f32 %v2076, %v2084
    %v2087 = vtanh.pop %v2086
    %2089 = vrot.lane.b32.xlu0 %v2087, 64
    %v2090 = vpop.permute.xlu0 %2089
    %v2092 = vmul.f32 %v2071, %v2090
    %2094 = vrot.lane.b32.xlu0 %v2092, 32
    %v2095 = vpop.permute.xlu0 %2094
    %2097 = vst.msk [vmem:[#allocation2] sm:$0x1] %vm819, %v2095
    %v2098 = vpack.c.bf16 %v2092, %v2092
    %2100 = vrot.lane.b32.xlu0 %v2098, 32
    %v2101 = vpop.permute.xlu0 %2100
    %v2103 = vsel %vm686, %v2101, 0
    %2105 = vmatprep.subr.bf16.mxu0 0
    %2106 = vmatpush1.bf16.msra.mxu0 0
    %2107 = vmatprep.subr.bf16.mxu0 0
    %2108 = vmatpush1.bf16.msra.mxu0 0
    %2109 = vmatprep.subr.bf16.mxu0 0
    %2110 = vmatpush1.bf16.msra.mxu0 0
    %2111 = vmatprep.subr.bf16.mxu0 0
    %2112 = vmatpush1.bf16.msra.mxu0 0
    %2113 = vmatprep.subr.bf16.mxu0 0
    %2114 = vmatpush1.bf16.msra.mxu0 0
    %2115 = vmatprep.subr.bf16.mxu0 0
    %2116 = vmatpush1.bf16.msra.mxu0 0
    %2117 = vmatprep.subr.bf16.mxu0 0
    %2118 = vmatpush1.bf16.msra.mxu0 %v2019
    %2119 = vmatprep.subr.bf16.mxu0 0
    %2120 = vmatpush1.bf16.msra.mxu0 %v2018
    %2121 = vmatprep.subr.bf16.mxu0 0
    %2122 = vmatpush2.bf16.msra.mxu0 0
    %2123 = vmatprep.subr.bf16.mxu0 0
    %2124 = vmatpush2.bf16.msra.mxu0 0
    %2125 = vmatprep.subr.bf16.mxu0 0
    %2126 = vmatpush2.bf16.msra.mxu0 0
    %2127 = vmatprep.subr.bf16.mxu0 0
    %2128 = vmatpush2.bf16.msra.mxu0 0
    %2129 = vmatprep.subr.bf16.mxu0 0
    %2130 = vmatpush2.bf16.msra.mxu0 0
    %2131 = vmatprep.subr.bf16.mxu0 0
    %2132 = vmatpush2.bf16.msra.mxu0 0
    %2133 = vmatprep.subr.bf16.mxu0 0
    %2134 = vmatpush2.bf16.msra.mxu0 0
    %2135 = vmatprep.subr.bf16.mxu0 0
    %2136 = vmatpush2.bf16.msra.mxu0 0
    %2137 = vmatprep.mubr.bf16.mxu0 0
    %2138 = vmatmul.mubr.bf16.gmra.mxu0 %v2103
    %v2139 = vpop.f32.mrf.mxu0
    %v2140 = vadd.f32 0.0, %v2139
    %v2141 = vpop.f32.mrf.mxu0
    %v2142 = vpop.f32.mrf.mxu0
    %v2143 = vpop.f32.mrf.mxu0
    %2144 = vdwg.mxu0
    %v2146 = vrot.slane %v2140, 7
    %v2148 = vadd.f32 %v2000, %v2146
    %v2149 = vxor.u32 %v2148, 2147483648
    %v2150 = vmul.f32 %v2149, 1.442695
    %v2151 = vpow.pop %v2150
    %v2152 = vadd.f32 %v2151, 1.0
    %v2153 = vrcp.pop %v2152
    %v2154 = vmul.f32 1.0, %v2153
    %v2155 = vtanh.pop %v2148
    %v2157 = vrot.slane %v2086, 7
    %v2159 = vmul.f32 %v2154, %v2157
    %2161 = vrot.lane.b32.xlu0 %v2155, 64
    %v2162 = vpop.permute.xlu0 %2161
    %v2164 = vmul.f32 %v2154, %v2162
    %2166 = vrot.lane.b32.xlu0 %v2164, 32
    %v2167 = vpop.permute.xlu0 %2166
    %v2169 = vadd.f32 %v2159, %v2167
    %v2170 = vtanh.pop %v2169
    %2172 = vrot.lane.b32.xlu0 %v2170, 64
    %v2173 = vpop.permute.xlu0 %2172
    %v2175 = vmul.f32 %v2154, %v2173
    %2177 = vrot.lane.b32.xlu0 %v2175, 32
    %v2178 = vpop.permute.xlu0 %2177
    %2180 = vst.msk [vmem:[#allocation2] sm:$0x2] %vm903, %v2178
    %v2181 = vpack.c.bf16 %v2175, %v2175
    %v2183 = vshrl.u32 %v2181, 16
    %2185 = vrot.lane.b32.xlu0 %v2183, 32
    %v2186 = vpop.permute.xlu0 %2185
    %v2188 = vsel %vm686, %v2186, 0
    %2190 = vmatprep.subr.bf16.mxu0 0
    %2191 = vmatpush1.bf16.msra.mxu0 0
    %2192 = vmatprep.subr.bf16.mxu0 0
    %2193 = vmatpush1.bf16.msra.mxu0 0
    %2194 = vmatprep.subr.bf16.mxu0 0
    %2195 = vmatpush1.bf16.msra.mxu0 0
    %2196 = vmatprep.subr.bf16.mxu0 0
    %2197 = vmatpush1.bf16.msra.mxu0 0
    %2198 = vmatprep.subr.bf16.mxu0 0
    %2199 = vmatpush1.bf16.msra.mxu0 0
    %2200 = vmatprep.subr.bf16.mxu0 0
    %2201 = vmatpush1.bf16.msra.mxu0 0
    %2202 = vmatprep.subr.bf16.mxu0 0
    %2203 = vmatpush1.bf16.msra.mxu0 %v2019
    %2204 = vmatprep.subr.bf16.mxu0 0
    %2205 = vmatpush1.bf16.msra.mxu0 %v2018
    %2206 = vmatprep.subr.bf16.mxu0 0
    %2207 = vmatpush2.bf16.msra.mxu0 0
    %2208 = vmatprep.subr.bf16.mxu0 0
    %2209 = vmatpush2.bf16.msra.mxu0 0
    %2210 = vmatprep.subr.bf16.mxu0 0
    %2211 = vmatpush2.bf16.msra.mxu0 0
    %2212 = vmatprep.subr.bf16.mxu0 0
    %2213 = vmatpush2.bf16.msra.mxu0 0
    %2214 = vmatprep.subr.bf16.mxu0 0
    %2215 = vmatpush2.bf16.msra.mxu0 0
    %2216 = vmatprep.subr.bf16.mxu0 0
    %2217 = vmatpush2.bf16.msra.mxu0 0
    %2218 = vmatprep.subr.bf16.mxu0 0
    %2219 = vmatpush2.bf16.msra.mxu0 0
    %2220 = vmatprep.subr.bf16.mxu0 0
    %2221 = vmatpush2.bf16.msra.mxu0 0
    %2222 = vmatprep.mubr.bf16.mxu0 0
    %2223 = vmatmul.mubr.bf16.gmra.mxu0 %v2188
    %v2224 = vpop.f32.mrf.mxu0
    %v2225 = vadd.f32 0.0, %v2224
    %v2226 = vpop.f32.mrf.mxu0
    %v2227 = vpop.f32.mrf.mxu0
    %v2228 = vpop.f32.mrf.mxu0
    %2229 = vdwg.mxu0
    %v2231 = vrot.slane %v2225, 6
    %v2233 = vadd.f32 %v2000, %v2231
    %v2234 = vxor.u32 %v2233, 2147483648
    %v2235 = vmul.f32 %v2234, 1.442695
    %v2236 = vpow.pop %v2235
    %v2237 = vadd.f32 %v2236, 1.0
    %v2238 = vrcp.pop %v2237
    %v2239 = vmul.f32 1.0, %v2238
    %v2240 = vtanh.pop %v2233
    %v2242 = vrot.slane %v2169, 7
    %v2244 = vmul.f32 %v2239, %v2242
    %2246 = vrot.lane.b32.xlu0 %v2240, 64
    %v2247 = vpop.permute.xlu0 %2246
    %v2249 = vmul.f32 %v2239, %v2247
    %2251 = vrot.lane.b32.xlu0 %v2249, 32
    %v2252 = vpop.permute.xlu0 %2251
    %v2254 = vadd.f32 %v2244, %v2252
    %v2255 = vtanh.pop %v2254
    %2257 = vrot.lane.b32.xlu0 %v2255, 64
    %v2258 = vpop.permute.xlu0 %2257
    %v2260 = vmul.f32 %v2239, %v2258
    %2262 = vrot.lane.b32.xlu0 %v2260, 32
    %v2263 = vpop.permute.xlu0 %2262
    %2265 = vst.msk [vmem:[#allocation2] sm:$0x4] %vm989, %v2263
    %v2266 = vpack.c.bf16 %v2260, %v2260
    %v2268 = vrot.slane %v2266, 1
    %2269 = vrot.lane.b32.xlu0 %v2268, 32
    %v2270 = vpop.permute.xlu0 %2269
    %v2272 = vsel %vm686, %v2270, 0
    %2274 = vmatprep.subr.bf16.mxu0 0
    %2275 = vmatpush1.bf16.msra.mxu0 0
    %2276 = vmatprep.subr.bf16.mxu0 0
    %2277 = vmatpush1.bf16.msra.mxu0 0
    %2278 = vmatprep.subr.bf16.mxu0 0
    %2279 = vmatpush1.bf16.msra.mxu0 0
    %2280 = vmatprep.subr.bf16.mxu0 0
    %2281 = vmatpush1.bf16.msra.mxu0 0
    %2282 = vmatprep.subr.bf16.mxu0 0
    %2283 = vmatpush1.bf16.msra.mxu0 0
    %2284 = vmatprep.subr.bf16.mxu0 0
    %2285 = vmatpush1.bf16.msra.mxu0 0
    %2286 = vmatprep.subr.bf16.mxu0 0
    %2287 = vmatpush1.bf16.msra.mxu0 %v2019
    %2288 = vmatprep.subr.bf16.mxu0 0
    %2289 = vmatpush1.bf16.msra.mxu0 %v2018
    %2290 = vmatprep.subr.bf16.mxu0 0
    %2291 = vmatpush2.bf16.msra.mxu0 0
    %2292 = vmatprep.subr.bf16.mxu0 0
    %2293 = vmatpush2.bf16.msra.mxu0 0
    %2294 = vmatprep.subr.bf16.mxu0 0
    %2295 = vmatpush2.bf16.msra.mxu0 0
    %2296 = vmatprep.subr.bf16.mxu0 0
    %2297 = vmatpush2.bf16.msra.mxu0 0
    %2298 = vmatprep.subr.bf16.mxu0 0
    %2299 = vmatpush2.bf16.msra.mxu0 0
    %2300 = vmatprep.subr.bf16.mxu0 0
    %2301 = vmatpush2.bf16.msra.mxu0 0
    %2302 = vmatprep.subr.bf16.mxu0 0
    %2303 = vmatpush2.bf16.msra.mxu0 0
    %2304 = vmatprep.subr.bf16.mxu0 0
    %2305 = vmatpush2.bf16.msra.mxu0 0
    %2306 = vmatprep.mubr.bf16.mxu0 0
    %2307 = vmatmul.mubr.bf16.gmra.mxu0 %v2272
    %v2308 = vpop.f32.mrf.mxu0
    %v2309 = vadd.f32 0.0, %v2308
    %v2310 = vpop.f32.mrf.mxu0
    %v2311 = vpop.f32.mrf.mxu0
    %v2312 = vpop.f32.mrf.mxu0
    %2313 = vdwg.mxu0
    %v2315 = vrot.slane %v2309, 5
    %v2317 = vadd.f32 %v2000, %v2315
    %v2318 = vxor.u32 %v2317, 2147483648
    %v2319 = vmul.f32 %v2318, 1.442695
    %v2320 = vpow.pop %v2319
    %v2321 = vadd.f32 %v2320, 1.0
    %v2322 = vrcp.pop %v2321
    %v2323 = vmul.f32 1.0, %v2322
    %v2324 = vtanh.pop %v2317
    %v2326 = vrot.slane %v2254, 7
    %v2328 = vmul.f32 %v2323, %v2326
    %2330 = vrot.lane.b32.xlu0 %v2324, 64
    %v2331 = vpop.permute.xlu0 %2330
    %v2333 = vmul.f32 %v2323, %v2331
    %2335 = vrot.lane.b32.xlu0 %v2333, 32
    %v2336 = vpop.permute.xlu0 %2335
    %v2338 = vadd.f32 %v2328, %v2336
    %v2339 = vtanh.pop %v2338
    %2341 = vrot.lane.b32.xlu0 %v2339, 64
    %v2342 = vpop.permute.xlu0 %2341
    %v2344 = vmul.f32 %v2323, %v2342
    %2346 = vrot.lane.b32.xlu0 %v2344, 32
    %v2347 = vpop.permute.xlu0 %2346
    %2349 = vst.msk [vmem:[#allocation2] sm:$0x8] %vm1074, %v2347
    %v2350 = vld [vmem:[#allocation2] sm:$0xf]
    %v2351 = vrot.slane %v1924, 3
    %v2353 = vrot.slane %v2344, 2
    %v2355 = vsel %vm1499, %v2351, %v2353
    %v2357 = vrot.slane %v1918, 3
    %v2360 = vrot.slane %v2338, 2
    %v2362 = vsel %vm1499, %v2357, %v2360
    %v2363 = vmax.f32 %v2350, 0.0
    %v2364 = vsub.f32 0.0, %v2363
    %v2365 = vadd.f32 %v1511, %v2350
    %vm2366 = vcmp.lt.f32.partialorder %v2365, -1e-11
    %v2367 = vmul.f32 %v2365, -1e+10
    %v2368 = vsel %vm2366, %v2367, %v2365
    %v2369 = vadd.f32 %v2368, %v652
    %v2370 = vmul.f32 %v2369, 0.5
    %v2371 = vtanh.pop %v2370
    %s2372 = scalar_lea.vmem %s7, 64
    %v2373 = vld [vmem:[%s2372] sm:$0xf]
    %v2374 = vld [vmem:[%s2372 + $0x4] sm:$0xf]
    %v2375 = vld [vmem:[%s2372 + $0x8] sm:$0xf]
    %v2376 = vld [vmem:[%s2372 + $0xc] sm:$0xf]
    %s2377 = scalar_lea.vmem %s8, 64
    %v2378 = vld [vmem:[%s2377] sm:$0xf]
    %v2379 = vld [vmem:[%s2377 + $0x4] sm:$0xf]
    %v2380 = vld [vmem:[%s2377 + $0x8] sm:$0xf]
    %v2381 = vld [vmem:[%s2377 + $0xc] sm:$0xf]
    %s2382 = scalar_lea.vmem %s9, 4
    %v2383 = vld [vmem:[%s2382] sm:$0x1]
    %v2384 = vpack.c.bf16 %v2371, %v2371
    %v2386 = vlaneseq
    %v2387 = vshrl.u32 %v2386, 7
    %v2388 = vsub.s32 0, %v2387
    %v2389 = vrot.slane %v2383, %v2388
    %v2395 = vunpack.c.l.b16 %v2373
    %v2396 = vunpack.c.l.b16 %v2374
    %v2397 = vunpack.c.l.b16 %v2375
    %v2398 = vunpack.c.l.b16 %v2376
    %v2399 = vpack.c.b16 %v2396, %v2395
    %v2400 = vpack.c.b16 %v2398, %v2397
    %v2404 = vsel %vm686, %v2384, 0
    %2406 = vmatprep.subr.bf16.mxu0 0
    %2407 = vmatpush1.bf16.msra.mxu0 0
    %2408 = vmatprep.subr.bf16.mxu0 0
    %2409 = vmatpush1.bf16.msra.mxu0 0
    %2410 = vmatprep.subr.bf16.mxu0 0
    %2411 = vmatpush1.bf16.msra.mxu0 0
    %2412 = vmatprep.subr.bf16.mxu0 0
    %2413 = vmatpush1.bf16.msra.mxu0 0
    %2414 = vmatprep.subr.bf16.mxu0 0
    %2415 = vmatpush1.bf16.msra.mxu0 0
    %2416 = vmatprep.subr.bf16.mxu0 0
    %2417 = vmatpush1.bf16.msra.mxu0 0
    %2418 = vmatprep.subr.bf16.mxu0 0
    %2419 = vmatpush1.bf16.msra.mxu0 %v2400
    %2420 = vmatprep.subr.bf16.mxu0 0
    %2421 = vmatpush1.bf16.msra.mxu0 %v2399
    %2422 = vmatprep.subr.bf16.mxu0 0
    %2423 = vmatpush2.bf16.msra.mxu0 0
    %2424 = vmatprep.subr.bf16.mxu0 0
    %2425 = vmatpush2.bf16.msra.mxu0 0
    %2426 = vmatprep.subr.bf16.mxu0 0
    %2427 = vmatpush2.bf16.msra.mxu0 0
    %2428 = vmatprep.subr.bf16.mxu0 0
    %2429 = vmatpush2.bf16.msra.mxu0 0
    %2430 = vmatprep.subr.bf16.mxu0 0
    %2431 = vmatpush2.bf16.msra.mxu0 0
    %2432 = vmatprep.subr.bf16.mxu0 0
    %2433 = vmatpush2.bf16.msra.mxu0 0
    %2434 = vmatprep.subr.bf16.mxu0 0
    %2435 = vmatpush2.bf16.msra.mxu0 0
    %2436 = vmatprep.subr.bf16.mxu0 0
    %2437 = vmatpush2.bf16.msra.mxu0 0
    %2438 = vmatprep.mubr.bf16.mxu0 0
    %2439 = vmatmul.mubr.bf16.gmra.mxu0 %v2404
    %v2440 = vpop.f32.mrf.mxu0
    %v2441 = vadd.f32 %v2389, %v2440
    %v2442 = vpop.f32.mrf.mxu0
    %v2443 = vpop.f32.mrf.mxu0
    %v2444 = vpop.f32.mrf.mxu0
    %2445 = vdwg.mxu0
    %v2446 = vpack.c.bf16 %v2362, %v2362
    %2448 = vrot.lane.b32.xlu0 %v2446, 96
    %v2449 = vpop.permute.xlu0 %2448
    %v2454 = vunpack.c.l.b16 %v2378
    %v2455 = vunpack.c.l.b16 %v2379
    %v2456 = vunpack.c.l.b16 %v2380
    %v2457 = vunpack.c.l.b16 %v2381
    %v2458 = vpack.c.b16 %v2455, %v2454
    %v2459 = vpack.c.b16 %v2457, %v2456
    %v2463 = vsel %vm686, %v2449, 0
    %2465 = vmatprep.subr.bf16.mxu0 0
    %2466 = vmatpush1.bf16.msra.mxu0 0
    %2467 = vmatprep.subr.bf16.mxu0 0
    %2468 = vmatpush1.bf16.msra.mxu0 0
    %2469 = vmatprep.subr.bf16.mxu0 0
    %2470 = vmatpush1.bf16.msra.mxu0 0
    %2471 = vmatprep.subr.bf16.mxu0 0
    %2472 = vmatpush1.bf16.msra.mxu0 0
    %2473 = vmatprep.subr.bf16.mxu0 0
    %2474 = vmatpush1.bf16.msra.mxu0 0
    %2475 = vmatprep.subr.bf16.mxu0 0
    %2476 = vmatpush1.bf16.msra.mxu0 0
    %2477 = vmatprep.subr.bf16.mxu0 0
    %2478 = vmatpush1.bf16.msra.mxu0 %v2459
    %2479 = vmatprep.subr.bf16.mxu0 0
    %2480 = vmatpush1.bf16.msra.mxu0 %v2458
    %2481 = vmatprep.subr.bf16.mxu0 0
    %2482 = vmatpush2.bf16.msra.mxu0 0
    %2483 = vmatprep.subr.bf16.mxu0 0
    %2484 = vmatpush2.bf16.msra.mxu0 0
    %2485 = vmatprep.subr.bf16.mxu0 0
    %2486 = vmatpush2.bf16.msra.mxu0 0
    %2487 = vmatprep.subr.bf16.mxu0 0
    %2488 = vmatpush2.bf16.msra.mxu0 0
    %2489 = vmatprep.subr.bf16.mxu0 0
    %2490 = vmatpush2.bf16.msra.mxu0 0
    %2491 = vmatprep.subr.bf16.mxu0 0
    %2492 = vmatpush2.bf16.msra.mxu0 0
    %2493 = vmatprep.subr.bf16.mxu0 0
    %2494 = vmatpush2.bf16.msra.mxu0 0
    %2495 = vmatprep.subr.bf16.mxu0 0
    %2496 = vmatpush2.bf16.msra.mxu0 0
    %2497 = vmatprep.mubr.bf16.mxu0 0
    %2498 = vmatmul.mubr.bf16.gmra.mxu0 %v2463
    %v2499 = vpop.f32.mrf.mxu0
    %v2500 = vadd.f32 0.0, %v2499
    %v2501 = vpop.f32.mrf.mxu0
    %v2502 = vpop.f32.mrf.mxu0
    %v2503 = vpop.f32.mrf.mxu0
    %2504 = vdwg.mxu0
    %v2505 = vadd.f32 %v2441, %v2500
    %v2506 = vxor.u32 %v2505, 2147483648
    %v2507 = vmul.f32 %v2506, 1.442695
    %v2508 = vpow.pop %v2507
    %v2509 = vadd.f32 %v2508, 1.0
    %v2510 = vrcp.pop %v2509
    %v2511 = vmul.f32 1.0, %v2510
    %v2512 = vtanh.pop %v2505
    %2514 = vrot.lane.b32.xlu0 %v2355, 64
    %v2515 = vpop.permute.xlu0 %2514
    %v2517 = vmul.f32 %v2511, %v2515
    %2519 = vrot.lane.b32.xlu0 %v2512, 64
    %v2520 = vpop.permute.xlu0 %2519
    %v2522 = vmul.f32 %v2511, %v2520
    %2524 = vrot.lane.b32.xlu0 %v2522, 32
    %v2525 = vpop.permute.xlu0 %2524
    %v2527 = vadd.f32 %v2517, %v2525
    %v2528 = vtanh.pop %v2527
    %2530 = vrot.lane.b32.xlu0 %v2528, 64
    %v2531 = vpop.permute.xlu0 %2530
    %v2533 = vmul.f32 %v2511, %v2531
    %2535 = vrot.lane.b32.xlu0 %v2533, 32
    %v2536 = vpop.permute.xlu0 %2535
    %2538 = vst.msk [vmem:[#allocation2] sm:$0x1] %vm819, %v2536
    %v2539 = vpack.c.bf16 %v2533, %v2533
    %2541 = vrot.lane.b32.xlu0 %v2539, 32
    %v2542 = vpop.permute.xlu0 %2541
    %v2544 = vsel %vm686, %v2542, 0
    %2546 = vmatprep.subr.bf16.mxu0 0
    %2547 = vmatpush1.bf16.msra.mxu0 0
    %2548 = vmatprep.subr.bf16.mxu0 0
    %2549 = vmatpush1.bf16.msra.mxu0 0
    %2550 = vmatprep.subr.bf16.mxu0 0
    %2551 = vmatpush1.bf16.msra.mxu0 0
    %2552 = vmatprep.subr.bf16.mxu0 0
    %2553 = vmatpush1.bf16.msra.mxu0 0
    %2554 = vmatprep.subr.bf16.mxu0 0
    %2555 = vmatpush1.bf16.msra.mxu0 0
    %2556 = vmatprep.subr.bf16.mxu0 0
    %2557 = vmatpush1.bf16.msra.mxu0 0
    %2558 = vmatprep.subr.bf16.mxu0 0
    %2559 = vmatpush1.bf16.msra.mxu0 %v2459
    %2560 = vmatprep.subr.bf16.mxu0 0
    %2561 = vmatpush1.bf16.msra.mxu0 %v2458
    %2562 = vmatprep.subr.bf16.mxu0 0
    %2563 = vmatpush2.bf16.msra.mxu0 0
    %2564 = vmatprep.subr.bf16.mxu0 0
    %2565 = vmatpush2.bf16.msra.mxu0 0
    %2566 = vmatprep.subr.bf16.mxu0 0
    %2567 = vmatpush2.bf16.msra.mxu0 0
    %2568 = vmatprep.subr.bf16.mxu0 0
    %2569 = vmatpush2.bf16.msra.mxu0 0
    %2570 = vmatprep.subr.bf16.mxu0 0
    %2571 = vmatpush2.bf16.msra.mxu0 0
    %2572 = vmatprep.subr.bf16.mxu0 0
    %2573 = vmatpush2.bf16.msra.mxu0 0
    %2574 = vmatprep.subr.bf16.mxu0 0
    %2575 = vmatpush2.bf16.msra.mxu0 0
    %2576 = vmatprep.subr.bf16.mxu0 0
    %2577 = vmatpush2.bf16.msra.mxu0 0
    %2578 = vmatprep.mubr.bf16.mxu0 0
    %2579 = vmatmul.mubr.bf16.gmra.mxu0 %v2544
    %v2580 = vpop.f32.mrf.mxu0
    %v2581 = vadd.f32 0.0, %v2580
    %v2582 = vpop.f32.mrf.mxu0
    %v2583 = vpop.f32.mrf.mxu0
    %v2584 = vpop.f32.mrf.mxu0
    %2585 = vdwg.mxu0
    %v2587 = vrot.slane %v2581, 7
    %v2589 = vadd.f32 %v2441, %v2587
    %v2590 = vxor.u32 %v2589, 2147483648
    %v2591 = vmul.f32 %v2590, 1.442695
    %v2592 = vpow.pop %v2591
    %v2593 = vadd.f32 %v2592, 1.0
    %v2594 = vrcp.pop %v2593
    %v2595 = vmul.f32 1.0, %v2594
    %v2596 = vtanh.pop %v2589
    %v2598 = vrot.slane %v2527, 7
    %v2600 = vmul.f32 %v2595, %v2598
    %2602 = vrot.lane.b32.xlu0 %v2596, 64
    %v2603 = vpop.permute.xlu0 %2602
    %v2605 = vmul.f32 %v2595, %v2603
    %2607 = vrot.lane.b32.xlu0 %v2605, 32
    %v2608 = vpop.permute.xlu0 %2607
    %v2610 = vadd.f32 %v2600, %v2608
    %v2611 = vtanh.pop %v2610
    %2613 = vrot.lane.b32.xlu0 %v2611, 64
    %v2614 = vpop.permute.xlu0 %2613
    %v2616 = vmul.f32 %v2595, %v2614
    %2618 = vrot.lane.b32.xlu0 %v2616, 32
    %v2619 = vpop.permute.xlu0 %2618
    %2621 = vst.msk [vmem:[#allocation2] sm:$0x2] %vm903, %v2619
    %v2622 = vpack.c.bf16 %v2616, %v2616
    %v2624 = vshrl.u32 %v2622, 16
    %2626 = vrot.lane.b32.xlu0 %v2624, 32
    %v2627 = vpop.permute.xlu0 %2626
    %v2629 = vsel %vm686, %v2627, 0
    %2631 = vmatprep.subr.bf16.mxu0 0
    %2632 = vmatpush1.bf16.msra.mxu0 0
    %2633 = vmatprep.subr.bf16.mxu0 0
    %2634 = vmatpush1.bf16.msra.mxu0 0
    %2635 = vmatprep.subr.bf16.mxu0 0
    %2636 = vmatpush1.bf16.msra.mxu0 0
    %2637 = vmatprep.subr.bf16.mxu0 0
    %2638 = vmatpush1.bf16.msra.mxu0 0
    %2639 = vmatprep.subr.bf16.mxu0 0
    %2640 = vmatpush1.bf16.msra.mxu0 0
    %2641 = vmatprep.subr.bf16.mxu0 0
    %2642 = vmatpush1.bf16.msra.mxu0 0
    %2643 = vmatprep.subr.bf16.mxu0 0
    %2644 = vmatpush1.bf16.msra.mxu0 %v2459
    %2645 = vmatprep.subr.bf16.mxu0 0
    %2646 = vmatpush1.bf16.msra.mxu0 %v2458
    %2647 = vmatprep.subr.bf16.mxu0 0
    %2648 = vmatpush2.bf16.msra.mxu0 0
    %2649 = vmatprep.subr.bf16.mxu0 0
    %2650 = vmatpush2.bf16.msra.mxu0 0
    %2651 = vmatprep.subr.bf16.mxu0 0
    %2652 = vmatpush2.bf16.msra.mxu0 0
    %2653 = vmatprep.subr.bf16.mxu0 0
    %2654 = vmatpush2.bf16.msra.mxu0 0
    %2655 = vmatprep.subr.bf16.mxu0 0
    %2656 = vmatpush2.bf16.msra.mxu0 0
    %2657 = vmatprep.subr.bf16.mxu0 0
    %2658 = vmatpush2.bf16.msra.mxu0 0
    %2659 = vmatprep.subr.bf16.mxu0 0
    %2660 = vmatpush2.bf16.msra.mxu0 0
    %2661 = vmatprep.subr.bf16.mxu0 0
    %2662 = vmatpush2.bf16.msra.mxu0 0
    %2663 = vmatprep.mubr.bf16.mxu0 0
    %2664 = vmatmul.mubr.bf16.gmra.mxu0 %v2629
    %v2665 = vpop.f32.mrf.mxu0
    %v2666 = vadd.f32 0.0, %v2665
    %v2667 = vpop.f32.mrf.mxu0
    %v2668 = vpop.f32.mrf.mxu0
    %v2669 = vpop.f32.mrf.mxu0
    %2670 = vdwg.mxu0
    %v2672 = vrot.slane %v2666, 6
    %v2674 = vadd.f32 %v2441, %v2672
    %v2675 = vxor.u32 %v2674, 2147483648
    %v2676 = vmul.f32 %v2675, 1.442695
    %v2677 = vpow.pop %v2676
    %v2678 = vadd.f32 %v2677, 1.0
    %v2679 = vrcp.pop %v2678
    %v2680 = vmul.f32 1.0, %v2679
    %v2681 = vtanh.pop %v2674
    %v2683 = vrot.slane %v2610, 7
    %v2685 = vmul.f32 %v2680, %v2683
    %2687 = vrot.lane.b32.xlu0 %v2681, 64
    %v2688 = vpop.permute.xlu0 %2687
    %v2690 = vmul.f32 %v2680, %v2688
    %2692 = vrot.lane.b32.xlu0 %v2690, 32
    %v2693 = vpop.permute.xlu0 %2692
    %v2695 = vadd.f32 %v2685, %v2693
    %v2696 = vtanh.pop %v2695
    %2698 = vrot.lane.b32.xlu0 %v2696, 64
    %v2699 = vpop.permute.xlu0 %2698
    %v2701 = vmul.f32 %v2680, %v2699
    %2703 = vrot.lane.b32.xlu0 %v2701, 32
    %v2704 = vpop.permute.xlu0 %2703
    %2706 = vst.msk [vmem:[#allocation2] sm:$0x4] %vm989, %v2704
    %v2707 = vpack.c.bf16 %v2701, %v2701
    %v2709 = vrot.slane %v2707, 1
    %2710 = vrot.lane.b32.xlu0 %v2709, 32
    %v2711 = vpop.permute.xlu0 %2710
    %v2713 = vsel %vm686, %v2711, 0
    %2715 = vmatprep.subr.bf16.mxu0 0
    %2716 = vmatpush1.bf16.msra.mxu0 0
    %2717 = vmatprep.subr.bf16.mxu0 0
    %2718 = vmatpush1.bf16.msra.mxu0 0
    %2719 = vmatprep.subr.bf16.mxu0 0
    %2720 = vmatpush1.bf16.msra.mxu0 0
    %2721 = vmatprep.subr.bf16.mxu0 0
    %2722 = vmatpush1.bf16.msra.mxu0 0
    %2723 = vmatprep.subr.bf16.mxu0 0
    %2724 = vmatpush1.bf16.msra.mxu0 0
    %2725 = vmatprep.subr.bf16.mxu0 0
    %2726 = vmatpush1.bf16.msra.mxu0 0
    %2727 = vmatprep.subr.bf16.mxu0 0
    %2728 = vmatpush1.bf16.msra.mxu0 %v2459
    %2729 = vmatprep.subr.bf16.mxu0 0
    %2730 = vmatpush1.bf16.msra.mxu0 %v2458
    %2731 = vmatprep.subr.bf16.mxu0 0
    %2732 = vmatpush2.bf16.msra.mxu0 0
    %2733 = vmatprep.subr.bf16.mxu0 0
    %2734 = vmatpush2.bf16.msra.mxu0 0
    %2735 = vmatprep.subr.bf16.mxu0 0
    %2736 = vmatpush2.bf16.msra.mxu0 0
    %2737 = vmatprep.subr.bf16.mxu0 0
    %2738 = vmatpush2.bf16.msra.mxu0 0
    %2739 = vmatprep.subr.bf16.mxu0 0
    %2740 = vmatpush2.bf16.msra.mxu0 0
    %2741 = vmatprep.subr.bf16.mxu0 0
    %2742 = vmatpush2.bf16.msra.mxu0 0
    %2743 = vmatprep.subr.bf16.mxu0 0
    %2744 = vmatpush2.bf16.msra.mxu0 0
    %2745 = vmatprep.subr.bf16.mxu0 0
    %2746 = vmatpush2.bf16.msra.mxu0 0
    %2747 = vmatprep.mubr.bf16.mxu0 0
    %2748 = vmatmul.mubr.bf16.gmra.mxu0 %v2713
    %v2749 = vpop.f32.mrf.mxu0
    %v2750 = vadd.f32 0.0, %v2749
    %v2751 = vpop.f32.mrf.mxu0
    %v2752 = vpop.f32.mrf.mxu0
    %v2753 = vpop.f32.mrf.mxu0
    %2754 = vdwg.mxu0
    %v2756 = vrot.slane %v2750, 5
    %v2758 = vadd.f32 %v2441, %v2756
    %v2759 = vxor.u32 %v2758, 2147483648
    %v2760 = vmul.f32 %v2759, 1.442695
    %v2761 = vpow.pop %v2760
    %v2762 = vadd.f32 %v2761, 1.0
    %v2763 = vrcp.pop %v2762
    %v2764 = vmul.f32 1.0, %v2763
    %v2765 = vtanh.pop %v2758
    %v2767 = vrot.slane %v2695, 7
    %v2769 = vmul.f32 %v2764, %v2767
    %2771 = vrot.lane.b32.xlu0 %v2765, 64
    %v2772 = vpop.permute.xlu0 %2771
    %v2774 = vmul.f32 %v2764, %v2772
    %2776 = vrot.lane.b32.xlu0 %v2774, 32
    %v2777 = vpop.permute.xlu0 %2776
    %v2779 = vadd.f32 %v2769, %v2777
    %v2780 = vtanh.pop %v2779
    %2782 = vrot.lane.b32.xlu0 %v2780, 64
    %v2783 = vpop.permute.xlu0 %2782
    %v2785 = vmul.f32 %v2764, %v2783
    %2787 = vrot.lane.b32.xlu0 %v2785, 32
    %v2788 = vpop.permute.xlu0 %2787
    %2790 = vst.msk [vmem:[#allocation2] sm:$0x8] %vm1074, %v2788
    %v2791 = vld [vmem:[#allocation2] sm:$0xf]
    %s2792 = scalar_lea.vmem %s7, 80
    %v2793 = vld [vmem:[%s2792] sm:$0xf]
    %v2794 = vld [vmem:[%s2792 + $0x4] sm:$0xf]
    %v2795 = vld [vmem:[%s2792 + $0x8] sm:$0xf]
    %v2796 = vld [vmem:[%s2792 + $0xc] sm:$0xf]
    %s2797 = scalar_lea.vmem %s8, 80
    %v2798 = vld [vmem:[%s2797] sm:$0xf]
    %v2799 = vld [vmem:[%s2797 + $0x4] sm:$0xf]
    %v2800 = vld [vmem:[%s2797 + $0x8] sm:$0xf]
    %v2801 = vld [vmem:[%s2797 + $0xc] sm:$0xf]
    %s2802 = scalar_lea.vmem %s9, 5
    %v2803 = vld [vmem:[%s2802] sm:$0x1]
    %v2804 = vpack.c.bf16 %v2791, %v2791
    %v2806 = vlaneseq
    %v2807 = vshrl.u32 %v2806, 7
    %v2808 = vsub.s32 0, %v2807
    %v2809 = vrot.slane %v2803, %v2808
    %v2815 = vunpack.c.l.b16 %v2793
    %v2816 = vunpack.c.l.b16 %v2794
    %v2817 = vunpack.c.l.b16 %v2795
    %v2818 = vunpack.c.l.b16 %v2796
    %v2819 = vpack.c.b16 %v2816, %v2815
    %v2820 = vpack.c.b16 %v2818, %v2817
    %v2824 = vsel %vm686, %v2804, 0
    %2826 = vmatprep.subr.bf16.mxu0 0
    %2827 = vmatpush1.bf16.msra.mxu0 0
    %2828 = vmatprep.subr.bf16.mxu0 0
    %2829 = vmatpush1.bf16.msra.mxu0 0
    %2830 = vmatprep.subr.bf16.mxu0 0
    %2831 = vmatpush1.bf16.msra.mxu0 0
    %2832 = vmatprep.subr.bf16.mxu0 0
    %2833 = vmatpush1.bf16.msra.mxu0 0
    %2834 = vmatprep.subr.bf16.mxu0 0
    %2835 = vmatpush1.bf16.msra.mxu0 0
    %2836 = vmatprep.subr.bf16.mxu0 0
    %2837 = vmatpush1.bf16.msra.mxu0 0
    %2838 = vmatprep.subr.bf16.mxu0 0
    %2839 = vmatpush1.bf16.msra.mxu0 %v2820
    %2840 = vmatprep.subr.bf16.mxu0 0
    %2841 = vmatpush1.bf16.msra.mxu0 %v2819
    %2842 = vmatprep.subr.bf16.mxu0 0
    %2843 = vmatpush2.bf16.msra.mxu0 0
    %2844 = vmatprep.subr.bf16.mxu0 0
    %2845 = vmatpush2.bf16.msra.mxu0 0
    %2846 = vmatprep.subr.bf16.mxu0 0
    %2847 = vmatpush2.bf16.msra.mxu0 0
    %2848 = vmatprep.subr.bf16.mxu0 0
    %2849 = vmatpush2.bf16.msra.mxu0 0
    %2850 = vmatprep.subr.bf16.mxu0 0
    %2851 = vmatpush2.bf16.msra.mxu0 0
    %2852 = vmatprep.subr.bf16.mxu0 0
    %2853 = vmatpush2.bf16.msra.mxu0 0
    %2854 = vmatprep.subr.bf16.mxu0 0
    %2855 = vmatpush2.bf16.msra.mxu0 0
    %2856 = vmatprep.subr.bf16.mxu0 0
    %2857 = vmatpush2.bf16.msra.mxu0 0
    %2858 = vmatprep.mubr.bf16.mxu0 0
    %2859 = vmatmul.mubr.bf16.gmra.mxu0 %v2824
    %v2860 = vpop.f32.mrf.mxu0
    %v2861 = vadd.f32 %v2809, %v2860
    %v2862 = vpop.f32.mrf.mxu0
    %v2863 = vpop.f32.mrf.mxu0
    %v2864 = vpop.f32.mrf.mxu0
    %2865 = vdwg.mxu0
    %v2867 = vshrl.u32 %v2446, 16
    %2869 = vrot.lane.b32.xlu0 %v2867, 96
    %v2870 = vpop.permute.xlu0 %2869
    %v2875 = vunpack.c.l.b16 %v2798
    %v2876 = vunpack.c.l.b16 %v2799
    %v2877 = vunpack.c.l.b16 %v2800
    %v2878 = vunpack.c.l.b16 %v2801
    %v2879 = vpack.c.b16 %v2876, %v2875
    %v2880 = vpack.c.b16 %v2878, %v2877
    %v2884 = vsel %vm686, %v2870, 0
    %2886 = vmatprep.subr.bf16.mxu0 0
    %2887 = vmatpush1.bf16.msra.mxu0 0
    %2888 = vmatprep.subr.bf16.mxu0 0
    %2889 = vmatpush1.bf16.msra.mxu0 0
    %2890 = vmatprep.subr.bf16.mxu0 0
    %2891 = vmatpush1.bf16.msra.mxu0 0
    %2892 = vmatprep.subr.bf16.mxu0 0
    %2893 = vmatpush1.bf16.msra.mxu0 0
    %2894 = vmatprep.subr.bf16.mxu0 0
    %2895 = vmatpush1.bf16.msra.mxu0 0
    %2896 = vmatprep.subr.bf16.mxu0 0
    %2897 = vmatpush1.bf16.msra.mxu0 0
    %2898 = vmatprep.subr.bf16.mxu0 0
    %2899 = vmatpush1.bf16.msra.mxu0 %v2880
    %2900 = vmatprep.subr.bf16.mxu0 0
    %2901 = vmatpush1.bf16.msra.mxu0 %v2879
    %2902 = vmatprep.subr.bf16.mxu0 0
    %2903 = vmatpush2.bf16.msra.mxu0 0
    %2904 = vmatprep.subr.bf16.mxu0 0
    %2905 = vmatpush2.bf16.msra.mxu0 0
    %2906 = vmatprep.subr.bf16.mxu0 0
    %2907 = vmatpush2.bf16.msra.mxu0 0
    %2908 = vmatprep.subr.bf16.mxu0 0
    %2909 = vmatpush2.bf16.msra.mxu0 0
    %2910 = vmatprep.subr.bf16.mxu0 0
    %2911 = vmatpush2.bf16.msra.mxu0 0
    %2912 = vmatprep.subr.bf16.mxu0 0
    %2913 = vmatpush2.bf16.msra.mxu0 0
    %2914 = vmatprep.subr.bf16.mxu0 0
    %2915 = vmatpush2.bf16.msra.mxu0 0
    %2916 = vmatprep.subr.bf16.mxu0 0
    %2917 = vmatpush2.bf16.msra.mxu0 0
    %2918 = vmatprep.mubr.bf16.mxu0 0
    %2919 = vmatmul.mubr.bf16.gmra.mxu0 %v2884
    %v2920 = vpop.f32.mrf.mxu0
    %v2921 = vadd.f32 0.0, %v2920
    %v2922 = vpop.f32.mrf.mxu0
    %v2923 = vpop.f32.mrf.mxu0
    %v2924 = vpop.f32.mrf.mxu0
    %2925 = vdwg.mxu0
    %v2926 = vadd.f32 %v2861, %v2921
    %v2927 = vxor.u32 %v2926, 2147483648
    %v2928 = vmul.f32 %v2927, 1.442695
    %v2929 = vpow.pop %v2928
    %v2930 = vadd.f32 %v2929, 1.0
    %v2931 = vrcp.pop %v2930
    %v2932 = vmul.f32 1.0, %v2931
    %v2933 = vtanh.pop %v2926
    %v2934 = vrot.slane %v2355, 1
    %2935 = vrot.lane.b32.xlu0 %v2934, 64
    %v2936 = vpop.permute.xlu0 %2935
    %v2938 = vmul.f32 %v2932, %v2936
    %2940 = vrot.lane.b32.xlu0 %v2933, 64
    %v2941 = vpop.permute.xlu0 %2940
    %v2943 = vmul.f32 %v2932, %v2941
    %2945 = vrot.lane.b32.xlu0 %v2943, 32
    %v2946 = vpop.permute.xlu0 %2945
    %v2948 = vadd.f32 %v2938, %v2946
    %v2949 = vtanh.pop %v2948
    %2951 = vrot.lane.b32.xlu0 %v2949, 64
    %v2952 = vpop.permute.xlu0 %2951
    %v2954 = vmul.f32 %v2932, %v2952
    %2956 = vrot.lane.b32.xlu0 %v2954, 32
    %v2957 = vpop.permute.xlu0 %2956
    %2959 = vst.msk [vmem:[#allocation2] sm:$0x1] %vm819, %v2957
    %v2960 = vpack.c.bf16 %v2954, %v2954
    %2962 = vrot.lane.b32.xlu0 %v2960, 32
    %v2963 = vpop.permute.xlu0 %2962
    %v2965 = vsel %vm686, %v2963, 0
    %2967 = vmatprep.subr.bf16.mxu0 0
    %2968 = vmatpush1.bf16.msra.mxu0 0
    %2969 = vmatprep.subr.bf16.mxu0 0
    %2970 = vmatpush1.bf16.msra.mxu0 0
    %2971 = vmatprep.subr.bf16.mxu0 0
    %2972 = vmatpush1.bf16.msra.mxu0 0
    %2973 = vmatprep.subr.bf16.mxu0 0
    %2974 = vmatpush1.bf16.msra.mxu0 0
    %2975 = vmatprep.subr.bf16.mxu0 0
    %2976 = vmatpush1.bf16.msra.mxu0 0
    %2977 = vmatprep.subr.bf16.mxu0 0
    %2978 = vmatpush1.bf16.msra.mxu0 0
    %2979 = vmatprep.subr.bf16.mxu0 0
    %2980 = vmatpush1.bf16.msra.mxu0 %v2880
    %2981 = vmatprep.subr.bf16.mxu0 0
    %2982 = vmatpush1.bf16.msra.mxu0 %v2879
    %2983 = vmatprep.subr.bf16.mxu0 0
    %2984 = vmatpush2.bf16.msra.mxu0 0
    %2985 = vmatprep.subr.bf16.mxu0 0
    %2986 = vmatpush2.bf16.msra.mxu0 0
    %2987 = vmatprep.subr.bf16.mxu0 0
    %2988 = vmatpush2.bf16.msra.mxu0 0
    %2989 = vmatprep.subr.bf16.mxu0 0
    %2990 = vmatpush2.bf16.msra.mxu0 0
    %2991 = vmatprep.subr.bf16.mxu0 0
    %2992 = vmatpush2.bf16.msra.mxu0 0
    %2993 = vmatprep.subr.bf16.mxu0 0
    %2994 = vmatpush2.bf16.msra.mxu0 0
    %2995 = vmatprep.subr.bf16.mxu0 0
    %2996 = vmatpush2.bf16.msra.mxu0 0
    %2997 = vmatprep.subr.bf16.mxu0 0
    %2998 = vmatpush2.bf16.msra.mxu0 0
    %2999 = vmatprep.mubr.bf16.mxu0 0
    %3000 = vmatmul.mubr.bf16.gmra.mxu0 %v2965
    %v3001 = vpop.f32.mrf.mxu0
    %v3002 = vadd.f32 0.0, %v3001
    %v3003 = vpop.f32.mrf.mxu0
    %v3004 = vpop.f32.mrf.mxu0
    %v3005 = vpop.f32.mrf.mxu0
    %3006 = vdwg.mxu0
    %v3008 = vrot.slane %v3002, 7
    %v3010 = vadd.f32 %v2861, %v3008
    %v3011 = vxor.u32 %v3010, 2147483648
    %v3012 = vmul.f32 %v3011, 1.442695
    %v3013 = vpow.pop %v3012
    %v3014 = vadd.f32 %v3013, 1.0
    %v3015 = vrcp.pop %v3014
    %v3016 = vmul.f32 1.0, %v3015
    %v3017 = vtanh.pop %v3010
    %v3019 = vrot.slane %v2948, 7
    %v3021 = vmul.f32 %v3016, %v3019
    %3023 = vrot.lane.b32.xlu0 %v3017, 64
    %v3024 = vpop.permute.xlu0 %3023
    %v3026 = vmul.f32 %v3016, %v3024
    %3028 = vrot.lane.b32.xlu0 %v3026, 32
    %v3029 = vpop.permute.xlu0 %3028
    %v3031 = vadd.f32 %v3021, %v3029
    %v3032 = vtanh.pop %v3031
    %3034 = vrot.lane.b32.xlu0 %v3032, 64
    %v3035 = vpop.permute.xlu0 %3034
    %v3037 = vmul.f32 %v3016, %v3035
    %3039 = vrot.lane.b32.xlu0 %v3037, 32
    %v3040 = vpop.permute.xlu0 %3039
    %3042 = vst.msk [vmem:[#allocation2] sm:$0x2] %vm903, %v3040
    %v3043 = vpack.c.bf16 %v3037, %v3037
    %v3045 = vshrl.u32 %v3043, 16
    %3047 = vrot.lane.b32.xlu0 %v3045, 32
    %v3048 = vpop.permute.xlu0 %3047
    %v3050 = vsel %vm686, %v3048, 0
    %3052 = vmatprep.subr.bf16.mxu0 0
    %3053 = vmatpush1.bf16.msra.mxu0 0
    %3054 = vmatprep.subr.bf16.mxu0 0
    %3055 = vmatpush1.bf16.msra.mxu0 0
    %3056 = vmatprep.subr.bf16.mxu0 0
    %3057 = vmatpush1.bf16.msra.mxu0 0
    %3058 = vmatprep.subr.bf16.mxu0 0
    %3059 = vmatpush1.bf16.msra.mxu0 0
    %3060 = vmatprep.subr.bf16.mxu0 0
    %3061 = vmatpush1.bf16.msra.mxu0 0
    %3062 = vmatprep.subr.bf16.mxu0 0
    %3063 = vmatpush1.bf16.msra.mxu0 0
    %3064 = vmatprep.subr.bf16.mxu0 0
    %3065 = vmatpush1.bf16.msra.mxu0 %v2880
    %3066 = vmatprep.subr.bf16.mxu0 0
    %3067 = vmatpush1.bf16.msra.mxu0 %v2879
    %3068 = vmatprep.subr.bf16.mxu0 0
    %3069 = vmatpush2.bf16.msra.mxu0 0
    %3070 = vmatprep.subr.bf16.mxu0 0
    %3071 = vmatpush2.bf16.msra.mxu0 0
    %3072 = vmatprep.subr.bf16.mxu0 0
    %3073 = vmatpush2.bf16.msra.mxu0 0
    %3074 = vmatprep.subr.bf16.mxu0 0
    %3075 = vmatpush2.bf16.msra.mxu0 0
    %3076 = vmatprep.subr.bf16.mxu0 0
    %3077 = vmatpush2.bf16.msra.mxu0 0
    %3078 = vmatprep.subr.bf16.mxu0 0
    %3079 = vmatpush2.bf16.msra.mxu0 0
    %3080 = vmatprep.subr.bf16.mxu0 0
    %3081 = vmatpush2.bf16.msra.mxu0 0
    %3082 = vmatprep.subr.bf16.mxu0 0
    %3083 = vmatpush2.bf16.msra.mxu0 0
    %3084 = vmatprep.mubr.bf16.mxu0 0
    %3085 = vmatmul.mubr.bf16.gmra.mxu0 %v3050
    %v3086 = vpop.f32.mrf.mxu0
    %v3087 = vadd.f32 0.0, %v3086
    %v3088 = vpop.f32.mrf.mxu0
    %v3089 = vpop.f32.mrf.mxu0
    %v3090 = vpop.f32.mrf.mxu0
    %3091 = vdwg.mxu0
    %v3093 = vrot.slane %v3087, 6
    %v3095 = vadd.f32 %v2861, %v3093
    %v3096 = vxor.u32 %v3095, 2147483648
    %v3097 = vmul.f32 %v3096, 1.442695
    %v3098 = vpow.pop %v3097
    %v3099 = vadd.f32 %v3098, 1.0
    %v3100 = vrcp.pop %v3099
    %v3101 = vmul.f32 1.0, %v3100
    %v3102 = vtanh.pop %v3095
    %v3104 = vrot.slane %v3031, 7
    %v3106 = vmul.f32 %v3101, %v3104
    %3108 = vrot.lane.b32.xlu0 %v3102, 64
    %v3109 = vpop.permute.xlu0 %3108
    %v3111 = vmul.f32 %v3101, %v3109
    %3113 = vrot.lane.b32.xlu0 %v3111, 32
    %v3114 = vpop.permute.xlu0 %3113
    %v3116 = vadd.f32 %v3106, %v3114
    %v3117 = vtanh.pop %v3116
    %3119 = vrot.lane.b32.xlu0 %v3117, 64
    %v3120 = vpop.permute.xlu0 %3119
    %v3122 = vmul.f32 %v3101, %v3120
    %3124 = vrot.lane.b32.xlu0 %v3122, 32
    %v3125 = vpop.permute.xlu0 %3124
    %3127 = vst.msk [vmem:[#allocation2] sm:$0x4] %vm989, %v3125
    %v3128 = vpack.c.bf16 %v3122, %v3122
    %v3130 = vrot.slane %v3128, 1
    %3131 = vrot.lane.b32.xlu0 %v3130, 32
    %v3132 = vpop.permute.xlu0 %3131
    %v3134 = vsel %vm686, %v3132, 0
    %3136 = vmatprep.subr.bf16.mxu0 0
    %3137 = vmatpush1.bf16.msra.mxu0 0
    %3138 = vmatprep.subr.bf16.mxu0 0
    %3139 = vmatpush1.bf16.msra.mxu0 0
    %3140 = vmatprep.subr.bf16.mxu0 0
    %3141 = vmatpush1.bf16.msra.mxu0 0
    %3142 = vmatprep.subr.bf16.mxu0 0
    %3143 = vmatpush1.bf16.msra.mxu0 0
    %3144 = vmatprep.subr.bf16.mxu0 0
    %3145 = vmatpush1.bf16.msra.mxu0 0
    %3146 = vmatprep.subr.bf16.mxu0 0
    %3147 = vmatpush1.bf16.msra.mxu0 0
    %3148 = vmatprep.subr.bf16.mxu0 0
    %3149 = vmatpush1.bf16.msra.mxu0 %v2880
    %3150 = vmatprep.subr.bf16.mxu0 0
    %3151 = vmatpush1.bf16.msra.mxu0 %v2879
    %3152 = vmatprep.subr.bf16.mxu0 0
    %3153 = vmatpush2.bf16.msra.mxu0 0
    %3154 = vmatprep.subr.bf16.mxu0 0
    %3155 = vmatpush2.bf16.msra.mxu0 0
    %3156 = vmatprep.subr.bf16.mxu0 0
    %3157 = vmatpush2.bf16.msra.mxu0 0
    %3158 = vmatprep.subr.bf16.mxu0 0
    %3159 = vmatpush2.bf16.msra.mxu0 0
    %3160 = vmatprep.subr.bf16.mxu0 0
    %3161 = vmatpush2.bf16.msra.mxu0 0
    %3162 = vmatprep.subr.bf16.mxu0 0
    %3163 = vmatpush2.bf16.msra.mxu0 0
    %3164 = vmatprep.subr.bf16.mxu0 0
    %3165 = vmatpush2.bf16.msra.mxu0 0
    %3166 = vmatprep.subr.bf16.mxu0 0
    %3167 = vmatpush2.bf16.msra.mxu0 0
    %3168 = vmatprep.mubr.bf16.mxu0 0
    %3169 = vmatmul.mubr.bf16.gmra.mxu0 %v3134
    %v3170 = vpop.f32.mrf.mxu0
    %v3171 = vadd.f32 0.0, %v3170
    %v3172 = vpop.f32.mrf.mxu0
    %v3173 = vpop.f32.mrf.mxu0
    %v3174 = vpop.f32.mrf.mxu0
    %3175 = vdwg.mxu0
    %v3177 = vrot.slane %v3171, 5
    %v3179 = vadd.f32 %v2861, %v3177
    %v3180 = vxor.u32 %v3179, 2147483648
    %v3181 = vmul.f32 %v3180, 1.442695
    %v3182 = vpow.pop %v3181
    %v3183 = vadd.f32 %v3182, 1.0
    %v3184 = vrcp.pop %v3183
    %v3185 = vmul.f32 1.0, %v3184
    %v3186 = vtanh.pop %v3179
    %v3188 = vrot.slane %v3116, 7
    %v3190 = vmul.f32 %v3185, %v3188
    %3192 = vrot.lane.b32.xlu0 %v3186, 64
    %v3193 = vpop.permute.xlu0 %3192
    %v3195 = vmul.f32 %v3185, %v3193
    %3197 = vrot.lane.b32.xlu0 %v3195, 32
    %v3198 = vpop.permute.xlu0 %3197
    %v3200 = vadd.f32 %v3190, %v3198
    %v3201 = vtanh.pop %v3200
    %3203 = vrot.lane.b32.xlu0 %v3201, 64
    %v3204 = vpop.permute.xlu0 %3203
    %v3206 = vmul.f32 %v3185, %v3204
    %3208 = vrot.lane.b32.xlu0 %v3206, 32
    %v3209 = vpop.permute.xlu0 %3208
    %3211 = vst.msk [vmem:[#allocation2] sm:$0x8] %vm1074, %v3209
    %v3212 = vld [vmem:[#allocation2] sm:$0xf]
    %v3213 = vrot.slane %v2785, 3
    %v3215 = vrot.slane %v3206, 2
    %v3217 = vsel %vm1499, %v3213, %v3215
    %v3219 = vrot.slane %v2779, 3
    %v3222 = vrot.slane %v3200, 2
    %v3224 = vsel %vm1499, %v3219, %v3222
    %v3225 = vmax.f32 %v3212, 0.0
    %v3226 = vadd.f32 %v2364, %v3225
    %v3227 = vadd.f32 %v2368, %v3212
    %vm3228 = vcmp.lt.f32.partialorder %v3227, -1e-11
    %v3229 = vmul.f32 %v3227, -1e+10
    %v3230 = vsel %vm3228, %v3229, %v3227
    %v3231 = vadd.f32 %v652, %v3230
    %v3232 = vmul.f32 %v3231, 0.5
    %v3233 = vtanh.pop %v3232
    %v3234 = vld [vmem:[%s7] sm:$0xf]
    %v3235 = vld [vmem:[%s7 + $0x4] sm:$0xf]
    %v3236 = vld [vmem:[%s7 + $0x8] sm:$0xf]
    %v3237 = vld [vmem:[%s7 + $0xc] sm:$0xf]
    %v3238 = vld [vmem:[%s8] sm:$0xf]
    %v3239 = vld [vmem:[%s8 + $0x4] sm:$0xf]
    %v3240 = vld [vmem:[%s8 + $0x8] sm:$0xf]
    %v3241 = vld [vmem:[%s8 + $0xc] sm:$0xf]
    %v3242 = vld [vmem:[%s9] sm:$0x1]
    %v3243 = vpack.c.bf16 %v3233, %v3233
    %v3245 = vlaneseq
    %v3246 = vshrl.u32 %v3245, 7
    %v3247 = vsub.s32 0, %v3246
    %v3248 = vrot.slane %v3242, %v3247
    %v3254 = vunpack.c.l.b16 %v3234
    %v3255 = vunpack.c.l.b16 %v3235
    %v3256 = vunpack.c.l.b16 %v3236
    %v3257 = vunpack.c.l.b16 %v3237
    %v3258 = vpack.c.b16 %v3255, %v3254
    %v3259 = vpack.c.b16 %v3257, %v3256
    %v3263 = vsel %vm686, %v3243, 0
    %3265 = vmatprep.subr.bf16.mxu0 0
    %3266 = vmatpush1.bf16.msra.mxu0 0
    %3267 = vmatprep.subr.bf16.mxu0 0
    %3268 = vmatpush1.bf16.msra.mxu0 0
    %3269 = vmatprep.subr.bf16.mxu0 0
    %3270 = vmatpush1.bf16.msra.mxu0 0
    %3271 = vmatprep.subr.bf16.mxu0 0
    %3272 = vmatpush1.bf16.msra.mxu0 0
    %3273 = vmatprep.subr.bf16.mxu0 0
    %3274 = vmatpush1.bf16.msra.mxu0 0
    %3275 = vmatprep.subr.bf16.mxu0 0
    %3276 = vmatpush1.bf16.msra.mxu0 0
    %3277 = vmatprep.subr.bf16.mxu0 0
    %3278 = vmatpush1.bf16.msra.mxu0 %v3259
    %3279 = vmatprep.subr.bf16.mxu0 0
    %3280 = vmatpush1.bf16.msra.mxu0 %v3258
    %3281 = vmatprep.subr.bf16.mxu0 0
    %3282 = vmatpush2.bf16.msra.mxu0 0
    %3283 = vmatprep.subr.bf16.mxu0 0
    %3284 = vmatpush2.bf16.msra.mxu0 0
    %3285 = vmatprep.subr.bf16.mxu0 0
    %3286 = vmatpush2.bf16.msra.mxu0 0
    %3287 = vmatprep.subr.bf16.mxu0 0
    %3288 = vmatpush2.bf16.msra.mxu0 0
    %3289 = vmatprep.subr.bf16.mxu0 0
    %3290 = vmatpush2.bf16.msra.mxu0 0
    %3291 = vmatprep.subr.bf16.mxu0 0
    %3292 = vmatpush2.bf16.msra.mxu0 0
    %3293 = vmatprep.subr.bf16.mxu0 0
    %3294 = vmatpush2.bf16.msra.mxu0 0
    %3295 = vmatprep.subr.bf16.mxu0 0
    %3296 = vmatpush2.bf16.msra.mxu0 0
    %3297 = vmatprep.mubr.bf16.mxu0 0
    %3298 = vmatmul.mubr.bf16.gmra.mxu0 %v3263
    %v3299 = vpop.f32.mrf.mxu0
    %v3300 = vadd.f32 %v3248, %v3299
    %v3301 = vpop.f32.mrf.mxu0
    %v3302 = vpop.f32.mrf.mxu0
    %v3303 = vpop.f32.mrf.mxu0
    %3304 = vdwg.mxu0
    %v3305 = vpack.c.bf16 %v3224, %v3224
    %3307 = vrot.lane.b32.xlu0 %v3305, 96
    %v3308 = vpop.permute.xlu0 %3307
    %v3313 = vunpack.c.l.b16 %v3238
    %v3314 = vunpack.c.l.b16 %v3239
    %v3315 = vunpack.c.l.b16 %v3240
    %v3316 = vunpack.c.l.b16 %v3241
    %v3317 = vpack.c.b16 %v3314, %v3313
    %v3318 = vpack.c.b16 %v3316, %v3315
    %v3322 = vsel %vm686, %v3308, 0
    %3324 = vmatprep.subr.bf16.mxu0 0
    %3325 = vmatpush1.bf16.msra.mxu0 0
    %3326 = vmatprep.subr.bf16.mxu0 0
    %3327 = vmatpush1.bf16.msra.mxu0 0
    %3328 = vmatprep.subr.bf16.mxu0 0
    %3329 = vmatpush1.bf16.msra.mxu0 0
    %3330 = vmatprep.subr.bf16.mxu0 0
    %3331 = vmatpush1.bf16.msra.mxu0 0
    %3332 = vmatprep.subr.bf16.mxu0 0
    %3333 = vmatpush1.bf16.msra.mxu0 0
    %3334 = vmatprep.subr.bf16.mxu0 0
    %3335 = vmatpush1.bf16.msra.mxu0 0
    %3336 = vmatprep.subr.bf16.mxu0 0
    %3337 = vmatpush1.bf16.msra.mxu0 %v3318
    %3338 = vmatprep.subr.bf16.mxu0 0
    %3339 = vmatpush1.bf16.msra.mxu0 %v3317
    %3340 = vmatprep.subr.bf16.mxu0 0
    %3341 = vmatpush2.bf16.msra.mxu0 0
    %3342 = vmatprep.subr.bf16.mxu0 0
    %3343 = vmatpush2.bf16.msra.mxu0 0
    %3344 = vmatprep.subr.bf16.mxu0 0
    %3345 = vmatpush2.bf16.msra.mxu0 0
    %3346 = vmatprep.subr.bf16.mxu0 0
    %3347 = vmatpush2.bf16.msra.mxu0 0
    %3348 = vmatprep.subr.bf16.mxu0 0
    %3349 = vmatpush2.bf16.msra.mxu0 0
    %3350 = vmatprep.subr.bf16.mxu0 0
    %3351 = vmatpush2.bf16.msra.mxu0 0
    %3352 = vmatprep.subr.bf16.mxu0 0
    %3353 = vmatpush2.bf16.msra.mxu0 0
    %3354 = vmatprep.subr.bf16.mxu0 0
    %3355 = vmatpush2.bf16.msra.mxu0 0
    %3356 = vmatprep.mubr.bf16.mxu0 0
    %3357 = vmatmul.mubr.bf16.gmra.mxu0 %v3322
    %v3358 = vpop.f32.mrf.mxu0
    %v3359 = vadd.f32 0.0, %v3358
    %v3360 = vpop.f32.mrf.mxu0
    %v3361 = vpop.f32.mrf.mxu0
    %v3362 = vpop.f32.mrf.mxu0
    %3363 = vdwg.mxu0
    %v3364 = vadd.f32 %v3300, %v3359
    %v3365 = vxor.u32 %v3364, 2147483648
    %v3366 = vmul.f32 %v3365, 1.442695
    %v3367 = vpow.pop %v3366
    %v3368 = vadd.f32 %v3367, 1.0
    %v3369 = vrcp.pop %v3368
    %v3370 = vmul.f32 1.0, %v3369
    %v3371 = vtanh.pop %v3364
    %3373 = vrot.lane.b32.xlu0 %v3217, 64
    %v3374 = vpop.permute.xlu0 %3373
    %v3376 = vmul.f32 %v3370, %v3374
    %3378 = vrot.lane.b32.xlu0 %v3371, 64
    %v3379 = vpop.permute.xlu0 %3378
    %v3381 = vmul.f32 %v3370, %v3379
    %3383 = vrot.lane.b32.xlu0 %v3381, 32
    %v3384 = vpop.permute.xlu0 %3383
    %v3386 = vadd.f32 %v3376, %v3384
    %v3387 = vtanh.pop %v3386
    %3389 = vrot.lane.b32.xlu0 %v3387, 64
    %v3390 = vpop.permute.xlu0 %3389
    %v3392 = vmul.f32 %v3370, %v3390
    %3394 = vrot.lane.b32.xlu0 %v3392, 32
    %v3395 = vpop.permute.xlu0 %3394
    %3397 = vst.msk [vmem:[#allocation2] sm:$0x1] %vm819, %v3395
    %v3398 = vpack.c.bf16 %v3392, %v3392
    %3400 = vrot.lane.b32.xlu0 %v3398, 32
    %v3401 = vpop.permute.xlu0 %3400
    %v3403 = vsel %vm686, %v3401, 0
    %3405 = vmatprep.subr.bf16.mxu0 0
    %3406 = vmatpush1.bf16.msra.mxu0 0
    %3407 = vmatprep.subr.bf16.mxu0 0
    %3408 = vmatpush1.bf16.msra.mxu0 0
    %3409 = vmatprep.subr.bf16.mxu0 0
    %3410 = vmatpush1.bf16.msra.mxu0 0
    %3411 = vmatprep.subr.bf16.mxu0 0
    %3412 = vmatpush1.bf16.msra.mxu0 0
    %3413 = vmatprep.subr.bf16.mxu0 0
    %3414 = vmatpush1.bf16.msra.mxu0 0
    %3415 = vmatprep.subr.bf16.mxu0 0
    %3416 = vmatpush1.bf16.msra.mxu0 0
    %3417 = vmatprep.subr.bf16.mxu0 0
    %3418 = vmatpush1.bf16.msra.mxu0 %v3318
    %3419 = vmatprep.subr.bf16.mxu0 0
    %3420 = vmatpush1.bf16.msra.mxu0 %v3317
    %3421 = vmatprep.subr.bf16.mxu0 0
    %3422 = vmatpush2.bf16.msra.mxu0 0
    %3423 = vmatprep.subr.bf16.mxu0 0
    %3424 = vmatpush2.bf16.msra.mxu0 0
    %3425 = vmatprep.subr.bf16.mxu0 0
    %3426 = vmatpush2.bf16.msra.mxu0 0
    %3427 = vmatprep.subr.bf16.mxu0 0
    %3428 = vmatpush2.bf16.msra.mxu0 0
    %3429 = vmatprep.subr.bf16.mxu0 0
    %3430 = vmatpush2.bf16.msra.mxu0 0
    %3431 = vmatprep.subr.bf16.mxu0 0
    %3432 = vmatpush2.bf16.msra.mxu0 0
    %3433 = vmatprep.subr.bf16.mxu0 0
    %3434 = vmatpush2.bf16.msra.mxu0 0
    %3435 = vmatprep.subr.bf16.mxu0 0
    %3436 = vmatpush2.bf16.msra.mxu0 0
    %3437 = vmatprep.mubr.bf16.mxu0 0
    %3438 = vmatmul.mubr.bf16.gmra.mxu0 %v3403
    %v3439 = vpop.f32.mrf.mxu0
    %v3440 = vadd.f32 0.0, %v3439
    %v3441 = vpop.f32.mrf.mxu0
    %v3442 = vpop.f32.mrf.mxu0
    %v3443 = vpop.f32.mrf.mxu0
    %3444 = vdwg.mxu0
    %v3446 = vrot.slane %v3440, 7
    %v3448 = vadd.f32 %v3300, %v3446
    %v3449 = vxor.u32 %v3448, 2147483648
    %v3450 = vmul.f32 %v3449, 1.442695
    %v3451 = vpow.pop %v3450
    %v3452 = vadd.f32 %v3451, 1.0
    %v3453 = vrcp.pop %v3452
    %v3454 = vmul.f32 1.0, %v3453
    %v3455 = vtanh.pop %v3448
    %v3457 = vrot.slane %v3386, 7
    %v3459 = vmul.f32 %v3454, %v3457
    %3461 = vrot.lane.b32.xlu0 %v3455, 64
    %v3462 = vpop.permute.xlu0 %3461
    %v3464 = vmul.f32 %v3454, %v3462
    %3466 = vrot.lane.b32.xlu0 %v3464, 32
    %v3467 = vpop.permute.xlu0 %3466
    %v3469 = vadd.f32 %v3459, %v3467
    %v3470 = vtanh.pop %v3469
    %3472 = vrot.lane.b32.xlu0 %v3470, 64
    %v3473 = vpop.permute.xlu0 %3472
    %v3475 = vmul.f32 %v3454, %v3473
    %3477 = vrot.lane.b32.xlu0 %v3475, 32
    %v3478 = vpop.permute.xlu0 %3477
    %3480 = vst.msk [vmem:[#allocation2] sm:$0x2] %vm903, %v3478
    %v3481 = vpack.c.bf16 %v3475, %v3475
    %v3483 = vshrl.u32 %v3481, 16
    %3485 = vrot.lane.b32.xlu0 %v3483, 32
    %v3486 = vpop.permute.xlu0 %3485
    %v3488 = vsel %vm686, %v3486, 0
    %3490 = vmatprep.subr.bf16.mxu0 0
    %3491 = vmatpush1.bf16.msra.mxu0 0
    %3492 = vmatprep.subr.bf16.mxu0 0
    %3493 = vmatpush1.bf16.msra.mxu0 0
    %3494 = vmatprep.subr.bf16.mxu0 0
    %3495 = vmatpush1.bf16.msra.mxu0 0
    %3496 = vmatprep.subr.bf16.mxu0 0
    %3497 = vmatpush1.bf16.msra.mxu0 0
    %3498 = vmatprep.subr.bf16.mxu0 0
    %3499 = vmatpush1.bf16.msra.mxu0 0
    %3500 = vmatprep.subr.bf16.mxu0 0
    %3501 = vmatpush1.bf16.msra.mxu0 0
    %3502 = vmatprep.subr.bf16.mxu0 0
    %3503 = vmatpush1.bf16.msra.mxu0 %v3318
    %3504 = vmatprep.subr.bf16.mxu0 0
    %3505 = vmatpush1.bf16.msra.mxu0 %v3317
    %3506 = vmatprep.subr.bf16.mxu0 0
    %3507 = vmatpush2.bf16.msra.mxu0 0
    %3508 = vmatprep.subr.bf16.mxu0 0
    %3509 = vmatpush2.bf16.msra.mxu0 0
    %3510 = vmatprep.subr.bf16.mxu0 0
    %3511 = vmatpush2.bf16.msra.mxu0 0
    %3512 = vmatprep.subr.bf16.mxu0 0
    %3513 = vmatpush2.bf16.msra.mxu0 0
    %3514 = vmatprep.subr.bf16.mxu0 0
    %3515 = vmatpush2.bf16.msra.mxu0 0
    %3516 = vmatprep.subr.bf16.mxu0 0
    %3517 = vmatpush2.bf16.msra.mxu0 0
    %3518 = vmatprep.subr.bf16.mxu0 0
    %3519 = vmatpush2.bf16.msra.mxu0 0
    %3520 = vmatprep.subr.bf16.mxu0 0
    %3521 = vmatpush2.bf16.msra.mxu0 0
    %3522 = vmatprep.mubr.bf16.mxu0 0
    %3523 = vmatmul.mubr.bf16.gmra.mxu0 %v3488
    %v3524 = vpop.f32.mrf.mxu0
    %v3525 = vadd.f32 0.0, %v3524
    %v3526 = vpop.f32.mrf.mxu0
    %v3527 = vpop.f32.mrf.mxu0
    %v3528 = vpop.f32.mrf.mxu0
    %3529 = vdwg.mxu0
    %v3531 = vrot.slane %v3525, 6
    %v3533 = vadd.f32 %v3300, %v3531
    %v3534 = vxor.u32 %v3533, 2147483648
    %v3535 = vmul.f32 %v3534, 1.442695
    %v3536 = vpow.pop %v3535
    %v3537 = vadd.f32 %v3536, 1.0
    %v3538 = vrcp.pop %v3537
    %v3539 = vmul.f32 1.0, %v3538
    %v3540 = vtanh.pop %v3533
    %v3542 = vrot.slane %v3469, 7
    %v3544 = vmul.f32 %v3539, %v3542
    %3546 = vrot.lane.b32.xlu0 %v3540, 64
    %v3547 = vpop.permute.xlu0 %3546
    %v3549 = vmul.f32 %v3539, %v3547
    %3551 = vrot.lane.b32.xlu0 %v3549, 32
    %v3552 = vpop.permute.xlu0 %3551
    %v3554 = vadd.f32 %v3544, %v3552
    %v3555 = vtanh.pop %v3554
    %3557 = vrot.lane.b32.xlu0 %v3555, 64
    %v3558 = vpop.permute.xlu0 %3557
    %v3560 = vmul.f32 %v3539, %v3558
    %3562 = vrot.lane.b32.xlu0 %v3560, 32
    %v3563 = vpop.permute.xlu0 %3562
    %3565 = vst.msk [vmem:[#allocation2] sm:$0x4] %vm989, %v3563
    %v3566 = vpack.c.bf16 %v3560, %v3560
    %v3568 = vrot.slane %v3566, 1
    %3569 = vrot.lane.b32.xlu0 %v3568, 32
    %v3570 = vpop.permute.xlu0 %3569
    %v3572 = vsel %vm686, %v3570, 0
    %3574 = vmatprep.subr.bf16.mxu0 0
    %3575 = vmatpush1.bf16.msra.mxu0 0
    %3576 = vmatprep.subr.bf16.mxu0 0
    %3577 = vmatpush1.bf16.msra.mxu0 0
    %3578 = vmatprep.subr.bf16.mxu0 0
    %3579 = vmatpush1.bf16.msra.mxu0 0
    %3580 = vmatprep.subr.bf16.mxu0 0
    %3581 = vmatpush1.bf16.msra.mxu0 0
    %3582 = vmatprep.subr.bf16.mxu0 0
    %3583 = vmatpush1.bf16.msra.mxu0 0
    %3584 = vmatprep.subr.bf16.mxu0 0
    %3585 = vmatpush1.bf16.msra.mxu0 0
    %3586 = vmatprep.subr.bf16.mxu0 0
    %3587 = vmatpush1.bf16.msra.mxu0 %v3318
    %3588 = vmatprep.subr.bf16.mxu0 0
    %3589 = vmatpush1.bf16.msra.mxu0 %v3317
    %3590 = vmatprep.subr.bf16.mxu0 0
    %3591 = vmatpush2.bf16.msra.mxu0 0
    %3592 = vmatprep.subr.bf16.mxu0 0
    %3593 = vmatpush2.bf16.msra.mxu0 0
    %3594 = vmatprep.subr.bf16.mxu0 0
    %3595 = vmatpush2.bf16.msra.mxu0 0
    %3596 = vmatprep.subr.bf16.mxu0 0
    %3597 = vmatpush2.bf16.msra.mxu0 0
    %3598 = vmatprep.subr.bf16.mxu0 0
    %3599 = vmatpush2.bf16.msra.mxu0 0
    %3600 = vmatprep.subr.bf16.mxu0 0
    %3601 = vmatpush2.bf16.msra.mxu0 0
    %3602 = vmatprep.subr.bf16.mxu0 0
    %3603 = vmatpush2.bf16.msra.mxu0 0
    %3604 = vmatprep.subr.bf16.mxu0 0
    %3605 = vmatpush2.bf16.msra.mxu0 0
    %3606 = vmatprep.mubr.bf16.mxu0 0
    %3607 = vmatmul.mubr.bf16.gmra.mxu0 %v3572
    %v3608 = vpop.f32.mrf.mxu0
    %v3609 = vadd.f32 0.0, %v3608
    %v3610 = vpop.f32.mrf.mxu0
    %v3611 = vpop.f32.mrf.mxu0
    %v3612 = vpop.f32.mrf.mxu0
    %3613 = vdwg.mxu0
    %v3615 = vrot.slane %v3609, 5
    %v3617 = vadd.f32 %v3300, %v3615
    %v3618 = vxor.u32 %v3617, 2147483648
    %v3619 = vmul.f32 %v3618, 1.442695
    %v3620 = vpow.pop %v3619
    %v3621 = vadd.f32 %v3620, 1.0
    %v3622 = vrcp.pop %v3621
    %v3623 = vmul.f32 1.0, %v3622
    %v3624 = vtanh.pop %v3617
    %v3626 = vrot.slane %v3554, 7
    %v3628 = vmul.f32 %v3623, %v3626
    %3630 = vrot.lane.b32.xlu0 %v3624, 64
    %v3631 = vpop.permute.xlu0 %3630
    %v3633 = vmul.f32 %v3623, %v3631
    %3635 = vrot.lane.b32.xlu0 %v3633, 32
    %v3636 = vpop.permute.xlu0 %3635
    %v3638 = vadd.f32 %v3628, %v3636
    %v3639 = vtanh.pop %v3638
    %3641 = vrot.lane.b32.xlu0 %v3639, 64
    %v3642 = vpop.permute.xlu0 %3641
    %v3644 = vmul.f32 %v3623, %v3642
    %3646 = vrot.lane.b32.xlu0 %v3644, 32
    %v3647 = vpop.permute.xlu0 %3646
    %3649 = vst.msk [vmem:[#allocation2] sm:$0x8] %vm1074, %v3647
    %v3650 = vld [vmem:[#allocation2] sm:$0xf]
    %v3651 = vld [vmem:[%s1077] sm:$0xf]
    %v3652 = vld [vmem:[%s1077 + $0x4] sm:$0xf]
    %v3653 = vld [vmem:[%s1077 + $0x8] sm:$0xf]
    %v3654 = vld [vmem:[%s1077 + $0xc] sm:$0xf]
    %v3655 = vld [vmem:[%s1082] sm:$0xf]
    %v3656 = vld [vmem:[%s1082 + $0x4] sm:$0xf]
    %v3657 = vld [vmem:[%s1082 + $0x8] sm:$0xf]
    %v3658 = vld [vmem:[%s1082 + $0xc] sm:$0xf]
    %v3659 = vld [vmem:[%s1087] sm:$0x1]
    %v3660 = vpack.c.bf16 %v3650, %v3650
    %v3662 = vlaneseq
    %v3663 = vshrl.u32 %v3662, 7
    %v3664 = vsub.s32 0, %v3663
    %v3665 = vrot.slane %v3659, %v3664
    %v3671 = vunpack.c.l.b16 %v3651
    %v3672 = vunpack.c.l.b16 %v3652
    %v3673 = vunpack.c.l.b16 %v3653
    %v3674 = vunpack.c.l.b16 %v3654
    %v3675 = vpack.c.b16 %v3672, %v3671
    %v3676 = vpack.c.b16 %v3674, %v3673
    %v3680 = vsel %vm686, %v3660, 0
    %3682 = vmatprep.subr.bf16.mxu0 0
    %3683 = vmatpush1.bf16.msra.mxu0 0
    %3684 = vmatprep.subr.bf16.mxu0 0
    %3685 = vmatpush1.bf16.msra.mxu0 0
    %3686 = vmatprep.subr.bf16.mxu0 0
    %3687 = vmatpush1.bf16.msra.mxu0 0
    %3688 = vmatprep.subr.bf16.mxu0 0
    %3689 = vmatpush1.bf16.msra.mxu0 0
    %3690 = vmatprep.subr.bf16.mxu0 0
    %3691 = vmatpush1.bf16.msra.mxu0 0
    %3692 = vmatprep.subr.bf16.mxu0 0
    %3693 = vmatpush1.bf16.msra.mxu0 0
    %3694 = vmatprep.subr.bf16.mxu0 0
    %3695 = vmatpush1.bf16.msra.mxu0 %v3676
    %3696 = vmatprep.subr.bf16.mxu0 0
    %3697 = vmatpush1.bf16.msra.mxu0 %v3675
    %3698 = vmatprep.subr.bf16.mxu0 0
    %3699 = vmatpush2.bf16.msra.mxu0 0
    %3700 = vmatprep.subr.bf16.mxu0 0
    %3701 = vmatpush2.bf16.msra.mxu0 0
    %3702 = vmatprep.subr.bf16.mxu0 0
    %3703 = vmatpush2.bf16.msra.mxu0 0
    %3704 = vmatprep.subr.bf16.mxu0 0
    %3705 = vmatpush2.bf16.msra.mxu0 0
    %3706 = vmatprep.subr.bf16.mxu0 0
    %3707 = vmatpush2.bf16.msra.mxu0 0
    %3708 = vmatprep.subr.bf16.mxu0 0
    %3709 = vmatpush2.bf16.msra.mxu0 0
    %3710 = vmatprep.subr.bf16.mxu0 0
    %3711 = vmatpush2.bf16.msra.mxu0 0
    %3712 = vmatprep.subr.bf16.mxu0 0
    %3713 = vmatpush2.bf16.msra.mxu0 0
    %3714 = vmatprep.mubr.bf16.mxu0 0
    %3715 = vmatmul.mubr.bf16.gmra.mxu0 %v3680
    %v3716 = vpop.f32.mrf.mxu0
    %v3717 = vadd.f32 %v3665, %v3716
    %v3718 = vpop.f32.mrf.mxu0
    %v3719 = vpop.f32.mrf.mxu0
    %v3720 = vpop.f32.mrf.mxu0
    %3721 = vdwg.mxu0
    %v3723 = vshrl.u32 %v3305, 16
    %3725 = vrot.lane.b32.xlu0 %v3723, 96
    %v3726 = vpop.permute.xlu0 %3725
    %v3731 = vunpack.c.l.b16 %v3655
    %v3732 = vunpack.c.l.b16 %v3656
    %v3733 = vunpack.c.l.b16 %v3657
    %v3734 = vunpack.c.l.b16 %v3658
    %v3735 = vpack.c.b16 %v3732, %v3731
    %v3736 = vpack.c.b16 %v3734, %v3733
    %v3740 = vsel %vm686, %v3726, 0
    %3742 = vmatprep.subr.bf16.mxu0 0
    %3743 = vmatpush1.bf16.msra.mxu0 0
    %3744 = vmatprep.subr.bf16.mxu0 0
    %3745 = vmatpush1.bf16.msra.mxu0 0
    %3746 = vmatprep.subr.bf16.mxu0 0
    %3747 = vmatpush1.bf16.msra.mxu0 0
    %3748 = vmatprep.subr.bf16.mxu0 0
    %3749 = vmatpush1.bf16.msra.mxu0 0
    %3750 = vmatprep.subr.bf16.mxu0 0
    %3751 = vmatpush1.bf16.msra.mxu0 0
    %3752 = vmatprep.subr.bf16.mxu0 0
    %3753 = vmatpush1.bf16.msra.mxu0 0
    %3754 = vmatprep.subr.bf16.mxu0 0
    %3755 = vmatpush1.bf16.msra.mxu0 %v3736
    %3756 = vmatprep.subr.bf16.mxu0 0
    %3757 = vmatpush1.bf16.msra.mxu0 %v3735
    %3758 = vmatprep.subr.bf16.mxu0 0
    %3759 = vmatpush2.bf16.msra.mxu0 0
    %3760 = vmatprep.subr.bf16.mxu0 0
    %3761 = vmatpush2.bf16.msra.mxu0 0
    %3762 = vmatprep.subr.bf16.mxu0 0
    %3763 = vmatpush2.bf16.msra.mxu0 0
    %3764 = vmatprep.subr.bf16.mxu0 0
    %3765 = vmatpush2.bf16.msra.mxu0 0
    %3766 = vmatprep.subr.bf16.mxu0 0
    %3767 = vmatpush2.bf16.msra.mxu0 0
    %3768 = vmatprep.subr.bf16.mxu0 0
    %3769 = vmatpush2.bf16.msra.mxu0 0
    %3770 = vmatprep.subr.bf16.mxu0 0
    %3771 = vmatpush2.bf16.msra.mxu0 0
    %3772 = vmatprep.subr.bf16.mxu0 0
    %3773 = vmatpush2.bf16.msra.mxu0 0
    %3774 = vmatprep.mubr.bf16.mxu0 0
    %3775 = vmatmul.mubr.bf16.gmra.mxu0 %v3740
    %v3776 = vpop.f32.mrf.mxu0
    %v3777 = vadd.f32 0.0, %v3776
    %v3778 = vpop.f32.mrf.mxu0
    %v3779 = vpop.f32.mrf.mxu0
    %v3780 = vpop.f32.mrf.mxu0
    %3781 = vdwg.mxu0
    %v3782 = vadd.f32 %v3717, %v3777
    %v3783 = vxor.u32 %v3782, 2147483648
    %v3784 = vmul.f32 %v3783, 1.442695
    %v3785 = vpow.pop %v3784
    %v3786 = vadd.f32 %v3785, 1.0
    %v3787 = vrcp.pop %v3786
    %v3788 = vmul.f32 1.0, %v3787
    %v3789 = vtanh.pop %v3782
    %v3790 = vrot.slane %v3217, 1
    %3791 = vrot.lane.b32.xlu0 %v3790, 64
    %v3792 = vpop.permute.xlu0 %3791
    %v3794 = vmul.f32 %v3788, %v3792
    %3796 = vrot.lane.b32.xlu0 %v3789, 64
    %v3797 = vpop.permute.xlu0 %3796
    %v3799 = vmul.f32 %v3788, %v3797
    %3801 = vrot.lane.b32.xlu0 %v3799, 32
    %v3802 = vpop.permute.xlu0 %3801
    %v3804 = vadd.f32 %v3794, %v3802
    %v3805 = vtanh.pop %v3804
    %3807 = vrot.lane.b32.xlu0 %v3805, 64
    %v3808 = vpop.permute.xlu0 %3807
    %v3810 = vmul.f32 %v3788, %v3808
    %3812 = vrot.lane.b32.xlu0 %v3810, 32
    %v3813 = vpop.permute.xlu0 %3812
    %3815 = vst.msk [vmem:[#allocation2] sm:$0x1] %vm819, %v3813
    %v3816 = vpack.c.bf16 %v3810, %v3810
    %3818 = vrot.lane.b32.xlu0 %v3816, 32
    %v3819 = vpop.permute.xlu0 %3818
    %v3821 = vsel %vm686, %v3819, 0
    %3823 = vmatprep.subr.bf16.mxu0 0
    %3824 = vmatpush1.bf16.msra.mxu0 0
    %3825 = vmatprep.subr.bf16.mxu0 0
    %3826 = vmatpush1.bf16.msra.mxu0 0
    %3827 = vmatprep.subr.bf16.mxu0 0
    %3828 = vmatpush1.bf16.msra.mxu0 0
    %3829 = vmatprep.subr.bf16.mxu0 0
    %3830 = vmatpush1.bf16.msra.mxu0 0
    %3831 = vmatprep.subr.bf16.mxu0 0
    %3832 = vmatpush1.bf16.msra.mxu0 0
    %3833 = vmatprep.subr.bf16.mxu0 0
    %3834 = vmatpush1.bf16.msra.mxu0 0
    %3835 = vmatprep.subr.bf16.mxu0 0
    %3836 = vmatpush1.bf16.msra.mxu0 %v3736
    %3837 = vmatprep.subr.bf16.mxu0 0
    %3838 = vmatpush1.bf16.msra.mxu0 %v3735
    %3839 = vmatprep.subr.bf16.mxu0 0
    %3840 = vmatpush2.bf16.msra.mxu0 0
    %3841 = vmatprep.subr.bf16.mxu0 0
    %3842 = vmatpush2.bf16.msra.mxu0 0
    %3843 = vmatprep.subr.bf16.mxu0 0
    %3844 = vmatpush2.bf16.msra.mxu0 0
    %3845 = vmatprep.subr.bf16.mxu0 0
    %3846 = vmatpush2.bf16.msra.mxu0 0
    %3847 = vmatprep.subr.bf16.mxu0 0
    %3848 = vmatpush2.bf16.msra.mxu0 0
    %3849 = vmatprep.subr.bf16.mxu0 0
    %3850 = vmatpush2.bf16.msra.mxu0 0
    %3851 = vmatprep.subr.bf16.mxu0 0
    %3852 = vmatpush2.bf16.msra.mxu0 0
    %3853 = vmatprep.subr.bf16.mxu0 0
    %3854 = vmatpush2.bf16.msra.mxu0 0
    %3855 = vmatprep.mubr.bf16.mxu0 0
    %3856 = vmatmul.mubr.bf16.gmra.mxu0 %v3821
    %v3857 = vpop.f32.mrf.mxu0
    %v3858 = vadd.f32 0.0, %v3857
    %v3859 = vpop.f32.mrf.mxu0
    %v3860 = vpop.f32.mrf.mxu0
    %v3861 = vpop.f32.mrf.mxu0
    %3862 = vdwg.mxu0
    %v3864 = vrot.slane %v3858, 7
    %v3866 = vadd.f32 %v3717, %v3864
    %v3867 = vxor.u32 %v3866, 2147483648
    %v3868 = vmul.f32 %v3867, 1.442695
    %v3869 = vpow.pop %v3868
    %v3870 = vadd.f32 %v3869, 1.0
    %v3871 = vrcp.pop %v3870
    %v3872 = vmul.f32 1.0, %v3871
    %v3873 = vtanh.pop %v3866
    %v3875 = vrot.slane %v3804, 7
    %v3877 = vmul.f32 %v3872, %v3875
    %3879 = vrot.lane.b32.xlu0 %v3873, 64
    %v3880 = vpop.permute.xlu0 %3879
    %v3882 = vmul.f32 %v3872, %v3880
    %3884 = vrot.lane.b32.xlu0 %v3882, 32
    %v3885 = vpop.permute.xlu0 %3884
    %v3887 = vadd.f32 %v3877, %v3885
    %v3888 = vtanh.pop %v3887
    %3890 = vrot.lane.b32.xlu0 %v3888, 64
    %v3891 = vpop.permute.xlu0 %3890
    %v3893 = vmul.f32 %v3872, %v3891
    %3895 = vrot.lane.b32.xlu0 %v3893, 32
    %v3896 = vpop.permute.xlu0 %3895
    %3898 = vst.msk [vmem:[#allocation2] sm:$0x2] %vm903, %v3896
    %v3899 = vpack.c.bf16 %v3893, %v3893
    %v3901 = vshrl.u32 %v3899, 16
    %3903 = vrot.lane.b32.xlu0 %v3901, 32
    %v3904 = vpop.permute.xlu0 %3903
    %v3906 = vsel %vm686, %v3904, 0
    %3908 = vmatprep.subr.bf16.mxu0 0
    %3909 = vmatpush1.bf16.msra.mxu0 0
    %3910 = vmatprep.subr.bf16.mxu0 0
    %3911 = vmatpush1.bf16.msra.mxu0 0
    %3912 = vmatprep.subr.bf16.mxu0 0
    %3913 = vmatpush1.bf16.msra.mxu0 0
    %3914 = vmatprep.subr.bf16.mxu0 0
    %3915 = vmatpush1.bf16.msra.mxu0 0
    %3916 = vmatprep.subr.bf16.mxu0 0
    %3917 = vmatpush1.bf16.msra.mxu0 0
    %3918 = vmatprep.subr.bf16.mxu0 0
    %3919 = vmatpush1.bf16.msra.mxu0 0
    %3920 = vmatprep.subr.bf16.mxu0 0
    %3921 = vmatpush1.bf16.msra.mxu0 %v3736
    %3922 = vmatprep.subr.bf16.mxu0 0
    %3923 = vmatpush1.bf16.msra.mxu0 %v3735
    %3924 = vmatprep.subr.bf16.mxu0 0
    %3925 = vmatpush2.bf16.msra.mxu0 0
    %3926 = vmatprep.subr.bf16.mxu0 0
    %3927 = vmatpush2.bf16.msra.mxu0 0
    %3928 = vmatprep.subr.bf16.mxu0 0
    %3929 = vmatpush2.bf16.msra.mxu0 0
    %3930 = vmatprep.subr.bf16.mxu0 0
    %3931 = vmatpush2.bf16.msra.mxu0 0
    %3932 = vmatprep.subr.bf16.mxu0 0
    %3933 = vmatpush2.bf16.msra.mxu0 0
    %3934 = vmatprep.subr.bf16.mxu0 0
    %3935 = vmatpush2.bf16.msra.mxu0 0
    %3936 = vmatprep.subr.bf16.mxu0 0
    %3937 = vmatpush2.bf16.msra.mxu0 0
    %3938 = vmatprep.subr.bf16.mxu0 0
    %3939 = vmatpush2.bf16.msra.mxu0 0
    %3940 = vmatprep.mubr.bf16.mxu0 0
    %3941 = vmatmul.mubr.bf16.gmra.mxu0 %v3906
    %v3942 = vpop.f32.mrf.mxu0
    %v3943 = vadd.f32 0.0, %v3942
    %v3944 = vpop.f32.mrf.mxu0
    %v3945 = vpop.f32.mrf.mxu0
    %v3946 = vpop.f32.mrf.mxu0
    %3947 = vdwg.mxu0
    %v3949 = vrot.slane %v3943, 6
    %v3951 = vadd.f32 %v3717, %v3949
    %v3952 = vxor.u32 %v3951, 2147483648
    %v3953 = vmul.f32 %v3952, 1.442695
    %v3954 = vpow.pop %v3953
    %v3955 = vadd.f32 %v3954, 1.0
    %v3956 = vrcp.pop %v3955
    %v3957 = vmul.f32 1.0, %v3956
    %v3958 = vtanh.pop %v3951
    %v3960 = vrot.slane %v3887, 7
    %v3962 = vmul.f32 %v3957, %v3960
    %3964 = vrot.lane.b32.xlu0 %v3958, 64
    %v3965 = vpop.permute.xlu0 %3964
    %v3967 = vmul.f32 %v3957, %v3965
    %3969 = vrot.lane.b32.xlu0 %v3967, 32
    %v3970 = vpop.permute.xlu0 %3969
    %v3972 = vadd.f32 %v3962, %v3970
    %v3973 = vtanh.pop %v3972
    %3975 = vrot.lane.b32.xlu0 %v3973, 64
    %v3976 = vpop.permute.xlu0 %3975
    %v3978 = vmul.f32 %v3957, %v3976
    %3980 = vrot.lane.b32.xlu0 %v3978, 32
    %v3981 = vpop.permute.xlu0 %3980
    %3983 = vst.msk [vmem:[#allocation2] sm:$0x4] %vm989, %v3981
    %v3984 = vpack.c.bf16 %v3978, %v3978
    %v3986 = vrot.slane %v3984, 1
    %3987 = vrot.lane.b32.xlu0 %v3986, 32
    %v3988 = vpop.permute.xlu0 %3987
    %v3990 = vsel %vm686, %v3988, 0
    %3992 = vmatprep.subr.bf16.mxu0 0
    %3993 = vmatpush1.bf16.msra.mxu0 0
    %3994 = vmatprep.subr.bf16.mxu0 0
    %3995 = vmatpush1.bf16.msra.mxu0 0
    %3996 = vmatprep.subr.bf16.mxu0 0
    %3997 = vmatpush1.bf16.msra.mxu0 0
    %3998 = vmatprep.subr.bf16.mxu0 0
    %3999 = vmatpush1.bf16.msra.mxu0 0
    %4000 = vmatprep.subr.bf16.mxu0 0
    %4001 = vmatpush1.bf16.msra.mxu0 0
    %4002 = vmatprep.subr.bf16.mxu0 0
    %4003 = vmatpush1.bf16.msra.mxu0 0
    %4004 = vmatprep.subr.bf16.mxu0 0
    %4005 = vmatpush1.bf16.msra.mxu0 %v3736
    %4006 = vmatprep.subr.bf16.mxu0 0
    %4007 = vmatpush1.bf16.msra.mxu0 %v3735
    %4008 = vmatprep.subr.bf16.mxu0 0
    %4009 = vmatpush2.bf16.msra.mxu0 0
    %4010 = vmatprep.subr.bf16.mxu0 0
    %4011 = vmatpush2.bf16.msra.mxu0 0
    %4012 = vmatprep.subr.bf16.mxu0 0
    %4013 = vmatpush2.bf16.msra.mxu0 0
    %4014 = vmatprep.subr.bf16.mxu0 0
    %4015 = vmatpush2.bf16.msra.mxu0 0
    %4016 = vmatprep.subr.bf16.mxu0 0
    %4017 = vmatpush2.bf16.msra.mxu0 0
    %4018 = vmatprep.subr.bf16.mxu0 0
    %4019 = vmatpush2.bf16.msra.mxu0 0
    %4020 = vmatprep.subr.bf16.mxu0 0
    %4021 = vmatpush2.bf16.msra.mxu0 0
    %4022 = vmatprep.subr.bf16.mxu0 0
    %4023 = vmatpush2.bf16.msra.mxu0 0
    %4024 = vmatprep.mubr.bf16.mxu0 0
    %4025 = vmatmul.mubr.bf16.gmra.mxu0 %v3990
    %v4026 = vpop.f32.mrf.mxu0
    %v4027 = vadd.f32 0.0, %v4026
    %v4028 = vpop.f32.mrf.mxu0
    %v4029 = vpop.f32.mrf.mxu0
    %v4030 = vpop.f32.mrf.mxu0
    %4031 = vdwg.mxu0
    %v4033 = vrot.slane %v4027, 5
    %v4035 = vadd.f32 %v3717, %v4033
    %v4036 = vxor.u32 %v4035, 2147483648
    %v4037 = vmul.f32 %v4036, 1.442695
    %v4038 = vpow.pop %v4037
    %v4039 = vadd.f32 %v4038, 1.0
    %v4040 = vrcp.pop %v4039
    %v4041 = vmul.f32 1.0, %v4040
    %v4042 = vtanh.pop %v4035
    %v4044 = vrot.slane %v3972, 7
    %v4046 = vmul.f32 %v4041, %v4044
    %4048 = vrot.lane.b32.xlu0 %v4042, 64
    %v4049 = vpop.permute.xlu0 %4048
    %v4051 = vmul.f32 %v4041, %v4049
    %4053 = vrot.lane.b32.xlu0 %v4051, 32
    %v4054 = vpop.permute.xlu0 %4053
    %v4056 = vadd.f32 %v4046, %v4054
    %v4057 = vtanh.pop %v4056
    %4059 = vrot.lane.b32.xlu0 %v4057, 64
    %v4060 = vpop.permute.xlu0 %4059
    %v4062 = vmul.f32 %v4041, %v4060
    %4064 = vrot.lane.b32.xlu0 %v4062, 32
    %v4065 = vpop.permute.xlu0 %4064
    %4067 = vst.msk [vmem:[#allocation2] sm:$0x8] %vm1074, %v4065
    %v4068 = vld [vmem:[#allocation2] sm:$0xf]
    %v4069 = vrot.slane %v3644, 3
    %v4071 = vrot.slane %v4062, 2
    %v4073 = vsel %vm1499, %v4069, %v4071
    %v4075 = vrot.slane %v3638, 3
    %v4078 = vrot.slane %v4056, 2
    %v4080 = vsel %vm1499, %v4075, %v4078
    %v4081 = vadd.f32 %v3230, %v4068
    %vm4082 = vcmp.lt.f32.partialorder %v4081, -1e-11
    %v4083 = vmul.f32 %v4081, -1e+10
    %v4084 = vsel %vm4082, %v4083, %v4081
    %v4085 = vadd.f32 %v4084, %v652
    %v4086 = vmul.f32 %v4085, 0.5
    %v4087 = vtanh.pop %v4086
    %v4088 = vld [vmem:[%s1515] sm:$0xf]
    %v4089 = vld [vmem:[%s1515 + $0x4] sm:$0xf]
    %v4090 = vld [vmem:[%s1515 + $0x8] sm:$0xf]
    %v4091 = vld [vmem:[%s1515 + $0xc] sm:$0xf]
    %v4092 = vld [vmem:[%s1520] sm:$0xf]
    %v4093 = vld [vmem:[%s1520 + $0x4] sm:$0xf]
    %v4094 = vld [vmem:[%s1520 + $0x8] sm:$0xf]
    %v4095 = vld [vmem:[%s1520 + $0xc] sm:$0xf]
    %v4096 = vld [vmem:[%s1525] sm:$0x1]
    %v4097 = vpack.c.bf16 %v4087, %v4087
    %v4099 = vlaneseq
    %v4100 = vshrl.u32 %v4099, 7
    %v4101 = vsub.s32 0, %v4100
    %v4102 = vrot.slane %v4096, %v4101
    %v4108 = vunpack.c.l.b16 %v4088
    %v4109 = vunpack.c.l.b16 %v4089
    %v4110 = vunpack.c.l.b16 %v4090
    %v4111 = vunpack.c.l.b16 %v4091
    %v4112 = vpack.c.b16 %v4109, %v4108
    %v4113 = vpack.c.b16 %v4111, %v4110
    %v4117 = vsel %vm686, %v4097, 0
    %4119 = vmatprep.subr.bf16.mxu0 0
    %4120 = vmatpush1.bf16.msra.mxu0 0
    %4121 = vmatprep.subr.bf16.mxu0 0
    %4122 = vmatpush1.bf16.msra.mxu0 0
    %4123 = vmatprep.subr.bf16.mxu0 0
    %4124 = vmatpush1.bf16.msra.mxu0 0
    %4125 = vmatprep.subr.bf16.mxu0 0
    %4126 = vmatpush1.bf16.msra.mxu0 0
    %4127 = vmatprep.subr.bf16.mxu0 0
    %4128 = vmatpush1.bf16.msra.mxu0 0
    %4129 = vmatprep.subr.bf16.mxu0 0
    %4130 = vmatpush1.bf16.msra.mxu0 0
    %4131 = vmatprep.subr.bf16.mxu0 0
    %4132 = vmatpush1.bf16.msra.mxu0 %v4113
    %4133 = vmatprep.subr.bf16.mxu0 0
    %4134 = vmatpush1.bf16.msra.mxu0 %v4112
    %4135 = vmatprep.subr.bf16.mxu0 0
    %4136 = vmatpush2.bf16.msra.mxu0 0
    %4137 = vmatprep.subr.bf16.mxu0 0
    %4138 = vmatpush2.bf16.msra.mxu0 0
    %4139 = vmatprep.subr.bf16.mxu0 0
    %4140 = vmatpush2.bf16.msra.mxu0 0
    %4141 = vmatprep.subr.bf16.mxu0 0
    %4142 = vmatpush2.bf16.msra.mxu0 0
    %4143 = vmatprep.subr.bf16.mxu0 0
    %4144 = vmatpush2.bf16.msra.mxu0 0
    %4145 = vmatprep.subr.bf16.mxu0 0
    %4146 = vmatpush2.bf16.msra.mxu0 0
    %4147 = vmatprep.subr.bf16.mxu0 0
    %4148 = vmatpush2.bf16.msra.mxu0 0
    %4149 = vmatprep.subr.bf16.mxu0 0
    %4150 = vmatpush2.bf16.msra.mxu0 0
    %4151 = vmatprep.mubr.bf16.mxu0 0
    %4152 = vmatmul.mubr.bf16.gmra.mxu0 %v4117
    %v4153 = vpop.f32.mrf.mxu0
    %v4154 = vadd.f32 %v4102, %v4153
    %v4155 = vpop.f32.mrf.mxu0
    %v4156 = vpop.f32.mrf.mxu0
    %v4157 = vpop.f32.mrf.mxu0
    %4158 = vdwg.mxu0
    %v4159 = vpack.c.bf16 %v4073, %v4073
    %4161 = vrot.lane.b32.xlu0 %v4159, 32
    %v4162 = vpop.permute.xlu0 %4161
    %v4167 = vunpack.c.l.b16 %v4092
    %v4168 = vunpack.c.l.b16 %v4093
    %v4169 = vunpack.c.l.b16 %v4094
    %v4170 = vunpack.c.l.b16 %v4095
    %v4171 = vpack.c.b16 %v4168, %v4167
    %v4172 = vpack.c.b16 %v4170, %v4169
    %v4176 = vsel %vm686, %v4162, 0
    %4178 = vmatprep.subr.bf16.mxu0 0
    %4179 = vmatpush1.bf16.msra.mxu0 0
    %4180 = vmatprep.subr.bf16.mxu0 0
    %4181 = vmatpush1.bf16.msra.mxu0 0
    %4182 = vmatprep.subr.bf16.mxu0 0
    %4183 = vmatpush1.bf16.msra.mxu0 0
    %4184 = vmatprep.subr.bf16.mxu0 0
    %4185 = vmatpush1.bf16.msra.mxu0 0
    %4186 = vmatprep.subr.bf16.mxu0 0
    %4187 = vmatpush1.bf16.msra.mxu0 0
    %4188 = vmatprep.subr.bf16.mxu0 0
    %4189 = vmatpush1.bf16.msra.mxu0 0
    %4190 = vmatprep.subr.bf16.mxu0 0
    %4191 = vmatpush1.bf16.msra.mxu0 %v4172
    %4192 = vmatprep.subr.bf16.mxu0 0
    %4193 = vmatpush1.bf16.msra.mxu0 %v4171
    %4194 = vmatprep.subr.bf16.mxu0 0
    %4195 = vmatpush2.bf16.msra.mxu0 0
    %4196 = vmatprep.subr.bf16.mxu0 0
    %4197 = vmatpush2.bf16.msra.mxu0 0
    %4198 = vmatprep.subr.bf16.mxu0 0
    %4199 = vmatpush2.bf16.msra.mxu0 0
    %4200 = vmatprep.subr.bf16.mxu0 0
    %4201 = vmatpush2.bf16.msra.mxu0 0
    %4202 = vmatprep.subr.bf16.mxu0 0
    %4203 = vmatpush2.bf16.msra.mxu0 0
    %4204 = vmatprep.subr.bf16.mxu0 0
    %4205 = vmatpush2.bf16.msra.mxu0 0
    %4206 = vmatprep.subr.bf16.mxu0 0
    %4207 = vmatpush2.bf16.msra.mxu0 0
    %4208 = vmatprep.subr.bf16.mxu0 0
    %4209 = vmatpush2.bf16.msra.mxu0 0
    %4210 = vmatprep.mubr.bf16.mxu0 0
    %4211 = vmatmul.mubr.bf16.gmra.mxu0 %v4176
    %v4212 = vpop.f32.mrf.mxu0
    %v4213 = vadd.f32 0.0, %v4212
    %v4214 = vpop.f32.mrf.mxu0
    %v4215 = vpop.f32.mrf.mxu0
    %v4216 = vpop.f32.mrf.mxu0
    %4217 = vdwg.mxu0
    %v4218 = vadd.f32 %v4154, %v4213
    %v4219 = vxor.u32 %v4218, 2147483648
    %v4220 = vmul.f32 %v4219, 1.442695
    %v4221 = vpow.pop %v4220
    %v4222 = vadd.f32 %v4221, 1.0
    %v4223 = vrcp.pop %v4222
    %v4224 = vmul.f32 1.0, %v4223
    %v4225 = vtanh.pop %v4218
    %v4226 = vmul.f32 %v4224, %v4080
    %4228 = vrot.lane.b32.xlu0 %v4225, 64
    %v4229 = vpop.permute.xlu0 %4228
    %v4231 = vmul.f32 %v4224, %v4229
    %4233 = vrot.lane.b32.xlu0 %v4231, 32
    %v4234 = vpop.permute.xlu0 %4233
    %v4236 = vadd.f32 %v4226, %v4234
    %v4237 = vtanh.pop %v4236
    %4239 = vrot.lane.b32.xlu0 %v4237, 64
    %v4240 = vpop.permute.xlu0 %4239
    %v4242 = vmul.f32 %v4224, %v4240
    %4244 = vrot.lane.b32.xlu0 %v4242, 32
    %v4245 = vpop.permute.xlu0 %4244
    %4247 = vst.msk [vmem:[#allocation2] sm:$0x1] %vm819, %v4245
    %v4248 = vpack.c.bf16 %v4242, %v4242
    %4250 = vrot.lane.b32.xlu0 %v4248, 32
    %v4251 = vpop.permute.xlu0 %4250
    %v4253 = vsel %vm686, %v4251, 0
    %4255 = vmatprep.subr.bf16.mxu0 0
    %4256 = vmatpush1.bf16.msra.mxu0 0
    %4257 = vmatprep.subr.bf16.mxu0 0
    %4258 = vmatpush1.bf16.msra.mxu0 0
    %4259 = vmatprep.subr.bf16.mxu0 0
    %4260 = vmatpush1.bf16.msra.mxu0 0
    %4261 = vmatprep.subr.bf16.mxu0 0
    %4262 = vmatpush1.bf16.msra.mxu0 0
    %4263 = vmatprep.subr.bf16.mxu0 0
    %4264 = vmatpush1.bf16.msra.mxu0 0
    %4265 = vmatprep.subr.bf16.mxu0 0
    %4266 = vmatpush1.bf16.msra.mxu0 0
    %4267 = vmatprep.subr.bf16.mxu0 0
    %4268 = vmatpush1.bf16.msra.mxu0 %v4172
    %4269 = vmatprep.subr.bf16.mxu0 0
    %4270 = vmatpush1.bf16.msra.mxu0 %v4171
    %4271 = vmatprep.subr.bf16.mxu0 0
    %4272 = vmatpush2.bf16.msra.mxu0 0
    %4273 = vmatprep.subr.bf16.mxu0 0
    %4274 = vmatpush2.bf16.msra.mxu0 0
    %4275 = vmatprep.subr.bf16.mxu0 0
    %4276 = vmatpush2.bf16.msra.mxu0 0
    %4277 = vmatprep.subr.bf16.mxu0 0
    %4278 = vmatpush2.bf16.msra.mxu0 0
    %4279 = vmatprep.subr.bf16.mxu0 0
    %4280 = vmatpush2.bf16.msra.mxu0 0
    %4281 = vmatprep.subr.bf16.mxu0 0
    %4282 = vmatpush2.bf16.msra.mxu0 0
    %4283 = vmatprep.subr.bf16.mxu0 0
    %4284 = vmatpush2.bf16.msra.mxu0 0
    %4285 = vmatprep.subr.bf16.mxu0 0
    %4286 = vmatpush2.bf16.msra.mxu0 0
    %4287 = vmatprep.mubr.bf16.mxu0 0
    %4288 = vmatmul.mubr.bf16.gmra.mxu0 %v4253
    %v4289 = vpop.f32.mrf.mxu0
    %v4290 = vadd.f32 0.0, %v4289
    %v4291 = vpop.f32.mrf.mxu0
    %v4292 = vpop.f32.mrf.mxu0
    %v4293 = vpop.f32.mrf.mxu0
    %4294 = vdwg.mxu0
    %v4296 = vrot.slane %v4290, 7
    %v4298 = vadd.f32 %v4154, %v4296
    %v4299 = vxor.u32 %v4298, 2147483648
    %v4300 = vmul.f32 %v4299, 1.442695
    %v4301 = vpow.pop %v4300
    %v4302 = vadd.f32 %v4301, 1.0
    %v4303 = vrcp.pop %v4302
    %v4304 = vmul.f32 1.0, %v4303
    %v4305 = vtanh.pop %v4298
    %v4307 = vrot.slane %v4236, 7
    %v4309 = vmul.f32 %v4304, %v4307
    %4311 = vrot.lane.b32.xlu0 %v4305, 64
    %v4312 = vpop.permute.xlu0 %4311
    %v4314 = vmul.f32 %v4304, %v4312
    %4316 = vrot.lane.b32.xlu0 %v4314, 32
    %v4317 = vpop.permute.xlu0 %4316
    %v4319 = vadd.f32 %v4309, %v4317
    %v4320 = vtanh.pop %v4319
    %4322 = vrot.lane.b32.xlu0 %v4320, 64
    %v4323 = vpop.permute.xlu0 %4322
    %v4325 = vmul.f32 %v4304, %v4323
    %4327 = vrot.lane.b32.xlu0 %v4325, 32
    %v4328 = vpop.permute.xlu0 %4327
    %4330 = vst.msk [vmem:[#allocation2] sm:$0x2] %vm903, %v4328
    %v4331 = vpack.c.bf16 %v4325, %v4325
    %v4333 = vshrl.u32 %v4331, 16
    %4335 = vrot.lane.b32.xlu0 %v4333, 32
    %v4336 = vpop.permute.xlu0 %4335
    %v4338 = vsel %vm686, %v4336, 0
    %4340 = vmatprep.subr.bf16.mxu0 0
    %4341 = vmatpush1.bf16.msra.mxu0 0
    %4342 = vmatprep.subr.bf16.mxu0 0
    %4343 = vmatpush1.bf16.msra.mxu0 0
    %4344 = vmatprep.subr.bf16.mxu0 0
    %4345 = vmatpush1.bf16.msra.mxu0 0
    %4346 = vmatprep.subr.bf16.mxu0 0
    %4347 = vmatpush1.bf16.msra.mxu0 0
    %4348 = vmatprep.subr.bf16.mxu0 0
    %4349 = vmatpush1.bf16.msra.mxu0 0
    %4350 = vmatprep.subr.bf16.mxu0 0
    %4351 = vmatpush1.bf16.msra.mxu0 0
    %4352 = vmatprep.subr.bf16.mxu0 0
    %4353 = vmatpush1.bf16.msra.mxu0 %v4172
    %4354 = vmatprep.subr.bf16.mxu0 0
    %4355 = vmatpush1.bf16.msra.mxu0 %v4171
    %4356 = vmatprep.subr.bf16.mxu0 0
    %4357 = vmatpush2.bf16.msra.mxu0 0
    %4358 = vmatprep.subr.bf16.mxu0 0
    %4359 = vmatpush2.bf16.msra.mxu0 0
    %4360 = vmatprep.subr.bf16.mxu0 0
    %4361 = vmatpush2.bf16.msra.mxu0 0
    %4362 = vmatprep.subr.bf16.mxu0 0
    %4363 = vmatpush2.bf16.msra.mxu0 0
    %4364 = vmatprep.subr.bf16.mxu0 0
    %4365 = vmatpush2.bf16.msra.mxu0 0
    %4366 = vmatprep.subr.bf16.mxu0 0
    %4367 = vmatpush2.bf16.msra.mxu0 0
    %4368 = vmatprep.subr.bf16.mxu0 0
    %4369 = vmatpush2.bf16.msra.mxu0 0
    %4370 = vmatprep.subr.bf16.mxu0 0
    %4371 = vmatpush2.bf16.msra.mxu0 0
    %4372 = vmatprep.mubr.bf16.mxu0 0
    %4373 = vmatmul.mubr.bf16.gmra.mxu0 %v4338
    %v4374 = vpop.f32.mrf.mxu0
    %v4375 = vadd.f32 0.0, %v4374
    %v4376 = vpop.f32.mrf.mxu0
    %v4377 = vpop.f32.mrf.mxu0
    %v4378 = vpop.f32.mrf.mxu0
    %4379 = vdwg.mxu0
    %v4381 = vrot.slane %v4375, 6
    %v4383 = vadd.f32 %v4154, %v4381
    %v4384 = vxor.u32 %v4383, 2147483648
    %v4385 = vmul.f32 %v4384, 1.442695
    %v4386 = vpow.pop %v4385
    %v4387 = vadd.f32 %v4386, 1.0
    %v4388 = vrcp.pop %v4387
    %v4389 = vmul.f32 1.0, %v4388
    %v4390 = vtanh.pop %v4383
    %v4392 = vrot.slane %v4319, 7
    %v4394 = vmul.f32 %v4389, %v4392
    %4396 = vrot.lane.b32.xlu0 %v4390, 64
    %v4397 = vpop.permute.xlu0 %4396
    %v4399 = vmul.f32 %v4389, %v4397
    %4401 = vrot.lane.b32.xlu0 %v4399, 32
    %v4402 = vpop.permute.xlu0 %4401
    %v4404 = vadd.f32 %v4394, %v4402
    %v4405 = vtanh.pop %v4404
    %4407 = vrot.lane.b32.xlu0 %v4405, 64
    %v4408 = vpop.permute.xlu0 %4407
    %v4410 = vmul.f32 %v4389, %v4408
    %4412 = vrot.lane.b32.xlu0 %v4410, 32
    %v4413 = vpop.permute.xlu0 %4412
    %4415 = vst.msk [vmem:[#allocation2] sm:$0x4] %vm989, %v4413
    %v4416 = vpack.c.bf16 %v4410, %v4410
    %v4418 = vrot.slane %v4416, 1
    %4419 = vrot.lane.b32.xlu0 %v4418, 32
    %v4420 = vpop.permute.xlu0 %4419
    %v4422 = vsel %vm686, %v4420, 0
    %4424 = vmatprep.subr.bf16.mxu0 0
    %4425 = vmatpush1.bf16.msra.mxu0 0
    %4426 = vmatprep.subr.bf16.mxu0 0
    %4427 = vmatpush1.bf16.msra.mxu0 0
    %4428 = vmatprep.subr.bf16.mxu0 0
    %4429 = vmatpush1.bf16.msra.mxu0 0
    %4430 = vmatprep.subr.bf16.mxu0 0
    %4431 = vmatpush1.bf16.msra.mxu0 0
    %4432 = vmatprep.subr.bf16.mxu0 0
    %4433 = vmatpush1.bf16.msra.mxu0 0
    %4434 = vmatprep.subr.bf16.mxu0 0
    %4435 = vmatpush1.bf16.msra.mxu0 0
    %4436 = vmatprep.subr.bf16.mxu0 0
    %4437 = vmatpush1.bf16.msra.mxu0 %v4172
    %4438 = vmatprep.subr.bf16.mxu0 0
    %4439 = vmatpush1.bf16.msra.mxu0 %v4171
    %4440 = vmatprep.subr.bf16.mxu0 0
    %4441 = vmatpush2.bf16.msra.mxu0 0
    %4442 = vmatprep.subr.bf16.mxu0 0
    %4443 = vmatpush2.bf16.msra.mxu0 0
    %4444 = vmatprep.subr.bf16.mxu0 0
    %4445 = vmatpush2.bf16.msra.mxu0 0
    %4446 = vmatprep.subr.bf16.mxu0 0
    %4447 = vmatpush2.bf16.msra.mxu0 0
    %4448 = vmatprep.subr.bf16.mxu0 0
    %4449 = vmatpush2.bf16.msra.mxu0 0
    %4450 = vmatprep.subr.bf16.mxu0 0
    %4451 = vmatpush2.bf16.msra.mxu0 0
    %4452 = vmatprep.subr.bf16.mxu0 0
    %4453 = vmatpush2.bf16.msra.mxu0 0
    %4454 = vmatprep.subr.bf16.mxu0 0
    %4455 = vmatpush2.bf16.msra.mxu0 0
    %4456 = vmatprep.mubr.bf16.mxu0 0
    %4457 = vmatmul.mubr.bf16.gmra.mxu0 %v4422
    %v4458 = vpop.f32.mrf.mxu0
    %v4459 = vadd.f32 0.0, %v4458
    %v4460 = vpop.f32.mrf.mxu0
    %v4461 = vpop.f32.mrf.mxu0
    %v4462 = vpop.f32.mrf.mxu0
    %4463 = vdwg.mxu0
    %v4465 = vrot.slane %v4459, 5
    %v4467 = vadd.f32 %v4154, %v4465
    %v4468 = vxor.u32 %v4467, 2147483648
    %v4469 = vmul.f32 %v4468, 1.442695
    %v4470 = vpow.pop %v4469
    %v4471 = vadd.f32 %v4470, 1.0
    %v4472 = vrcp.pop %v4471
    %v4473 = vmul.f32 1.0, %v4472
    %v4474 = vtanh.pop %v4467
    %v4476 = vrot.slane %v4404, 7
    %v4478 = vmul.f32 %v4473, %v4476
    %4480 = vrot.lane.b32.xlu0 %v4474, 64
    %v4481 = vpop.permute.xlu0 %4480
    %v4483 = vmul.f32 %v4473, %v4481
    %4485 = vrot.lane.b32.xlu0 %v4483, 32
    %v4486 = vpop.permute.xlu0 %4485
    %v4488 = vadd.f32 %v4478, %v4486
    %v4489 = vtanh.pop %v4488
    %4491 = vrot.lane.b32.xlu0 %v4489, 64
    %v4492 = vpop.permute.xlu0 %4491
    %v4494 = vmul.f32 %v4473, %v4492
    %4496 = vrot.lane.b32.xlu0 %v4494, 32
    %v4497 = vpop.permute.xlu0 %4496
    %4499 = vst.msk [vmem:[#allocation2] sm:$0x8] %vm1074, %v4497
    %v4500 = vld [vmem:[#allocation2] sm:$0xf]
    %v4501 = vld [vmem:[%s1931] sm:$0xf]
    %v4502 = vld [vmem:[%s1931 + $0x4] sm:$0xf]
    %v4503 = vld [vmem:[%s1931 + $0x8] sm:$0xf]
    %v4504 = vld [vmem:[%s1931 + $0xc] sm:$0xf]
    %v4505 = vld [vmem:[%s1936] sm:$0xf]
    %v4506 = vld [vmem:[%s1936 + $0x4] sm:$0xf]
    %v4507 = vld [vmem:[%s1936 + $0x8] sm:$0xf]
    %v4508 = vld [vmem:[%s1936 + $0xc] sm:$0xf]
    %v4509 = vld [vmem:[%s1941] sm:$0x1]
    %v4510 = vpack.c.bf16 %v4500, %v4500
    %v4512 = vlaneseq
    %v4513 = vshrl.u32 %v4512, 7
    %v4514 = vsub.s32 0, %v4513
    %v4515 = vrot.slane %v4509, %v4514
    %v4521 = vunpack.c.l.b16 %v4501
    %v4522 = vunpack.c.l.b16 %v4502
    %v4523 = vunpack.c.l.b16 %v4503
    %v4524 = vunpack.c.l.b16 %v4504
    %v4525 = vpack.c.b16 %v4522, %v4521
    %v4526 = vpack.c.b16 %v4524, %v4523
    %v4530 = vsel %vm686, %v4510, 0
    %4532 = vmatprep.subr.bf16.mxu0 0
    %4533 = vmatpush1.bf16.msra.mxu0 0
    %4534 = vmatprep.subr.bf16.mxu0 0
    %4535 = vmatpush1.bf16.msra.mxu0 0
    %4536 = vmatprep.subr.bf16.mxu0 0
    %4537 = vmatpush1.bf16.msra.mxu0 0
    %4538 = vmatprep.subr.bf16.mxu0 0
    %4539 = vmatpush1.bf16.msra.mxu0 0
    %4540 = vmatprep.subr.bf16.mxu0 0
    %4541 = vmatpush1.bf16.msra.mxu0 0
    %4542 = vmatprep.subr.bf16.mxu0 0
    %4543 = vmatpush1.bf16.msra.mxu0 0
    %4544 = vmatprep.subr.bf16.mxu0 0
    %4545 = vmatpush1.bf16.msra.mxu0 %v4526
    %4546 = vmatprep.subr.bf16.mxu0 0
    %4547 = vmatpush1.bf16.msra.mxu0 %v4525
    %4548 = vmatprep.subr.bf16.mxu0 0
    %4549 = vmatpush2.bf16.msra.mxu0 0
    %4550 = vmatprep.subr.bf16.mxu0 0
    %4551 = vmatpush2.bf16.msra.mxu0 0
    %4552 = vmatprep.subr.bf16.mxu0 0
    %4553 = vmatpush2.bf16.msra.mxu0 0
    %4554 = vmatprep.subr.bf16.mxu0 0
    %4555 = vmatpush2.bf16.msra.mxu0 0
    %4556 = vmatprep.subr.bf16.mxu0 0
    %4557 = vmatpush2.bf16.msra.mxu0 0
    %4558 = vmatprep.subr.bf16.mxu0 0
    %4559 = vmatpush2.bf16.msra.mxu0 0
    %4560 = vmatprep.subr.bf16.mxu0 0
    %4561 = vmatpush2.bf16.msra.mxu0 0
    %4562 = vmatprep.subr.bf16.mxu0 0
    %4563 = vmatpush2.bf16.msra.mxu0 0
    %4564 = vmatprep.mubr.bf16.mxu0 0
    %4565 = vmatmul.mubr.bf16.gmra.mxu0 %v4530
    %v4566 = vpop.f32.mrf.mxu0
    %v4567 = vadd.f32 %v4515, %v4566
    %v4568 = vpop.f32.mrf.mxu0
    %v4569 = vpop.f32.mrf.mxu0
    %v4570 = vpop.f32.mrf.mxu0
    %4571 = vdwg.mxu0
    %v4573 = vshrl.u32 %v4159, 16
    %4575 = vrot.lane.b32.xlu0 %v4573, 32
    %v4576 = vpop.permute.xlu0 %4575
    %v4581 = vunpack.c.l.b16 %v4505
    %v4582 = vunpack.c.l.b16 %v4506
    %v4583 = vunpack.c.l.b16 %v4507
    %v4584 = vunpack.c.l.b16 %v4508
    %v4585 = vpack.c.b16 %v4582, %v4581
    %v4586 = vpack.c.b16 %v4584, %v4583
    %v4590 = vsel %vm686, %v4576, 0
    %4592 = vmatprep.subr.bf16.mxu0 0
    %4593 = vmatpush1.bf16.msra.mxu0 0
    %4594 = vmatprep.subr.bf16.mxu0 0
    %4595 = vmatpush1.bf16.msra.mxu0 0
    %4596 = vmatprep.subr.bf16.mxu0 0
    %4597 = vmatpush1.bf16.msra.mxu0 0
    %4598 = vmatprep.subr.bf16.mxu0 0
    %4599 = vmatpush1.bf16.msra.mxu0 0
    %4600 = vmatprep.subr.bf16.mxu0 0
    %4601 = vmatpush1.bf16.msra.mxu0 0
    %4602 = vmatprep.subr.bf16.mxu0 0
    %4603 = vmatpush1.bf16.msra.mxu0 0
    %4604 = vmatprep.subr.bf16.mxu0 0
    %4605 = vmatpush1.bf16.msra.mxu0 %v4586
    %4606 = vmatprep.subr.bf16.mxu0 0
    %4607 = vmatpush1.bf16.msra.mxu0 %v4585
    %4608 = vmatprep.subr.bf16.mxu0 0
    %4609 = vmatpush2.bf16.msra.mxu0 0
    %4610 = vmatprep.subr.bf16.mxu0 0
    %4611 = vmatpush2.bf16.msra.mxu0 0
    %4612 = vmatprep.subr.bf16.mxu0 0
    %4613 = vmatpush2.bf16.msra.mxu0 0
    %4614 = vmatprep.subr.bf16.mxu0 0
    %4615 = vmatpush2.bf16.msra.mxu0 0
    %4616 = vmatprep.subr.bf16.mxu0 0
    %4617 = vmatpush2.bf16.msra.mxu0 0
    %4618 = vmatprep.subr.bf16.mxu0 0
    %4619 = vmatpush2.bf16.msra.mxu0 0
    %4620 = vmatprep.subr.bf16.mxu0 0
    %4621 = vmatpush2.bf16.msra.mxu0 0
    %4622 = vmatprep.subr.bf16.mxu0 0
    %4623 = vmatpush2.bf16.msra.mxu0 0
    %4624 = vmatprep.mubr.bf16.mxu0 0
    %4625 = vmatmul.mubr.bf16.gmra.mxu0 %v4590
    %v4626 = vpop.f32.mrf.mxu0
    %v4627 = vadd.f32 0.0, %v4626
    %v4628 = vpop.f32.mrf.mxu0
    %v4629 = vpop.f32.mrf.mxu0
    %v4630 = vpop.f32.mrf.mxu0
    %4631 = vdwg.mxu0
    %v4632 = vadd.f32 %v4567, %v4627
    %v4633 = vxor.u32 %v4632, 2147483648
    %v4634 = vmul.f32 %v4633, 1.442695
    %v4635 = vpow.pop %v4634
    %v4636 = vadd.f32 %v4635, 1.0
    %v4637 = vrcp.pop %v4636
    %v4638 = vmul.f32 1.0, %v4637
    %v4639 = vtanh.pop %v4632
    %v4641 = vrot.slane %v4080, 1
    %v4643 = vmul.f32 %v4638, %v4641
    %4645 = vrot.lane.b32.xlu0 %v4639, 64
    %v4646 = vpop.permute.xlu0 %4645
    %v4648 = vmul.f32 %v4638, %v4646
    %4650 = vrot.lane.b32.xlu0 %v4648, 32
    %v4651 = vpop.permute.xlu0 %4650
    %v4653 = vadd.f32 %v4643, %v4651
    %v4654 = vtanh.pop %v4653
    %4656 = vrot.lane.b32.xlu0 %v4654, 64
    %v4657 = vpop.permute.xlu0 %4656
    %v4659 = vmul.f32 %v4638, %v4657
    %4661 = vrot.lane.b32.xlu0 %v4659, 32
    %v4662 = vpop.permute.xlu0 %4661
    %4664 = vst.msk [vmem:[#allocation2] sm:$0x1] %vm819, %v4662
    %v4665 = vpack.c.bf16 %v4659, %v4659
    %4667 = vrot.lane.b32.xlu0 %v4665, 32
    %v4668 = vpop.permute.xlu0 %4667
    %v4670 = vsel %vm686, %v4668, 0
    %4672 = vmatprep.subr.bf16.mxu0 0
    %4673 = vmatpush1.bf16.msra.mxu0 0
    %4674 = vmatprep.subr.bf16.mxu0 0
    %4675 = vmatpush1.bf16.msra.mxu0 0
    %4676 = vmatprep.subr.bf16.mxu0 0
    %4677 = vmatpush1.bf16.msra.mxu0 0
    %4678 = vmatprep.subr.bf16.mxu0 0
    %4679 = vmatpush1.bf16.msra.mxu0 0
    %4680 = vmatprep.subr.bf16.mxu0 0
    %4681 = vmatpush1.bf16.msra.mxu0 0
    %4682 = vmatprep.subr.bf16.mxu0 0
    %4683 = vmatpush1.bf16.msra.mxu0 0
    %4684 = vmatprep.subr.bf16.mxu0 0
    %4685 = vmatpush1.bf16.msra.mxu0 %v4586
    %4686 = vmatprep.subr.bf16.mxu0 0
    %4687 = vmatpush1.bf16.msra.mxu0 %v4585
    %4688 = vmatprep.subr.bf16.mxu0 0
    %4689 = vmatpush2.bf16.msra.mxu0 0
    %4690 = vmatprep.subr.bf16.mxu0 0
    %4691 = vmatpush2.bf16.msra.mxu0 0
    %4692 = vmatprep.subr.bf16.mxu0 0
    %4693 = vmatpush2.bf16.msra.mxu0 0
    %4694 = vmatprep.subr.bf16.mxu0 0
    %4695 = vmatpush2.bf16.msra.mxu0 0
    %4696 = vmatprep.subr.bf16.mxu0 0
    %4697 = vmatpush2.bf16.msra.mxu0 0
    %4698 = vmatprep.subr.bf16.mxu0 0
    %4699 = vmatpush2.bf16.msra.mxu0 0
    %4700 = vmatprep.subr.bf16.mxu0 0
    %4701 = vmatpush2.bf16.msra.mxu0 0
    %4702 = vmatprep.subr.bf16.mxu0 0
    %4703 = vmatpush2.bf16.msra.mxu0 0
    %4704 = vmatprep.mubr.bf16.mxu0 0
    %4705 = vmatmul.mubr.bf16.gmra.mxu0 %v4670
    %v4706 = vpop.f32.mrf.mxu0
    %v4707 = vadd.f32 0.0, %v4706
    %v4708 = vpop.f32.mrf.mxu0
    %v4709 = vpop.f32.mrf.mxu0
    %v4710 = vpop.f32.mrf.mxu0
    %4711 = vdwg.mxu0
    %v4713 = vrot.slane %v4707, 7
    %v4715 = vadd.f32 %v4567, %v4713
    %v4716 = vxor.u32 %v4715, 2147483648
    %v4717 = vmul.f32 %v4716, 1.442695
    %v4718 = vpow.pop %v4717
    %v4719 = vadd.f32 %v4718, 1.0
    %v4720 = vrcp.pop %v4719
    %v4721 = vmul.f32 1.0, %v4720
    %v4722 = vtanh.pop %v4715
    %v4724 = vrot.slane %v4653, 7
    %v4726 = vmul.f32 %v4721, %v4724
    %4728 = vrot.lane.b32.xlu0 %v4722, 64
    %v4729 = vpop.permute.xlu0 %4728
    %v4731 = vmul.f32 %v4721, %v4729
    %4733 = vrot.lane.b32.xlu0 %v4731, 32
    %v4734 = vpop.permute.xlu0 %4733
    %v4736 = vadd.f32 %v4726, %v4734
    %v4737 = vtanh.pop %v4736
    %4739 = vrot.lane.b32.xlu0 %v4737, 64
    %v4740 = vpop.permute.xlu0 %4739
    %v4742 = vmul.f32 %v4721, %v4740
    %4744 = vrot.lane.b32.xlu0 %v4742, 32
    %v4745 = vpop.permute.xlu0 %4744
    %4747 = vst.msk [vmem:[#allocation2] sm:$0x2] %vm903, %v4745
    %v4748 = vpack.c.bf16 %v4742, %v4742
    %v4750 = vshrl.u32 %v4748, 16
    %4752 = vrot.lane.b32.xlu0 %v4750, 32
    %v4753 = vpop.permute.xlu0 %4752
    %v4755 = vsel %vm686, %v4753, 0
    %4757 = vmatprep.subr.bf16.mxu0 0
    %4758 = vmatpush1.bf16.msra.mxu0 0
    %4759 = vmatprep.subr.bf16.mxu0 0
    %4760 = vmatpush1.bf16.msra.mxu0 0
    %4761 = vmatprep.subr.bf16.mxu0 0
    %4762 = vmatpush1.bf16.msra.mxu0 0
    %4763 = vmatprep.subr.bf16.mxu0 0
    %4764 = vmatpush1.bf16.msra.mxu0 0
    %4765 = vmatprep.subr.bf16.mxu0 0
    %4766 = vmatpush1.bf16.msra.mxu0 0
    %4767 = vmatprep.subr.bf16.mxu0 0
    %4768 = vmatpush1.bf16.msra.mxu0 0
    %4769 = vmatprep.subr.bf16.mxu0 0
    %4770 = vmatpush1.bf16.msra.mxu0 %v4586
    %4771 = vmatprep.subr.bf16.mxu0 0
    %4772 = vmatpush1.bf16.msra.mxu0 %v4585
    %4773 = vmatprep.subr.bf16.mxu0 0
    %4774 = vmatpush2.bf16.msra.mxu0 0
    %4775 = vmatprep.subr.bf16.mxu0 0
    %4776 = vmatpush2.bf16.msra.mxu0 0
    %4777 = vmatprep.subr.bf16.mxu0 0
    %4778 = vmatpush2.bf16.msra.mxu0 0
    %4779 = vmatprep.subr.bf16.mxu0 0
    %4780 = vmatpush2.bf16.msra.mxu0 0
    %4781 = vmatprep.subr.bf16.mxu0 0
    %4782 = vmatpush2.bf16.msra.mxu0 0
    %4783 = vmatprep.subr.bf16.mxu0 0
    %4784 = vmatpush2.bf16.msra.mxu0 0
    %4785 = vmatprep.subr.bf16.mxu0 0
    %4786 = vmatpush2.bf16.msra.mxu0 0
    %4787 = vmatprep.subr.bf16.mxu0 0
    %4788 = vmatpush2.bf16.msra.mxu0 0
    %4789 = vmatprep.mubr.bf16.mxu0 0
    %4790 = vmatmul.mubr.bf16.gmra.mxu0 %v4755
    %v4791 = vpop.f32.mrf.mxu0
    %v4792 = vadd.f32 0.0, %v4791
    %v4793 = vpop.f32.mrf.mxu0
    %v4794 = vpop.f32.mrf.mxu0
    %v4795 = vpop.f32.mrf.mxu0
    %4796 = vdwg.mxu0
    %v4798 = vrot.slane %v4792, 6
    %v4800 = vadd.f32 %v4567, %v4798
    %v4801 = vxor.u32 %v4800, 2147483648
    %v4802 = vmul.f32 %v4801, 1.442695
    %v4803 = vpow.pop %v4802
    %v4804 = vadd.f32 %v4803, 1.0
    %v4805 = vrcp.pop %v4804
    %v4806 = vmul.f32 1.0, %v4805
    %v4807 = vtanh.pop %v4800
    %v4809 = vrot.slane %v4736, 7
    %v4811 = vmul.f32 %v4806, %v4809
    %4813 = vrot.lane.b32.xlu0 %v4807, 64
    %v4814 = vpop.permute.xlu0 %4813
    %v4816 = vmul.f32 %v4806, %v4814
    %4818 = vrot.lane.b32.xlu0 %v4816, 32
    %v4819 = vpop.permute.xlu0 %4818
    %v4821 = vadd.f32 %v4811, %v4819
    %v4822 = vtanh.pop %v4821
    %4824 = vrot.lane.b32.xlu0 %v4822, 64
    %v4825 = vpop.permute.xlu0 %4824
    %v4827 = vmul.f32 %v4806, %v4825
    %4829 = vrot.lane.b32.xlu0 %v4827, 32
    %v4830 = vpop.permute.xlu0 %4829
    %4832 = vst.msk [vmem:[#allocation2] sm:$0x4] %vm989, %v4830
    %v4833 = vpack.c.bf16 %v4827, %v4827
    %v4835 = vrot.slane %v4833, 1
    %4836 = vrot.lane.b32.xlu0 %v4835, 32
    %v4837 = vpop.permute.xlu0 %4836
    %v4839 = vsel %vm686, %v4837, 0
    %4841 = vmatprep.subr.bf16.mxu0 0
    %4842 = vmatpush1.bf16.msra.mxu0 0
    %4843 = vmatprep.subr.bf16.mxu0 0
    %4844 = vmatpush1.bf16.msra.mxu0 0
    %4845 = vmatprep.subr.bf16.mxu0 0
    %4846 = vmatpush1.bf16.msra.mxu0 0
    %4847 = vmatprep.subr.bf16.mxu0 0
    %4848 = vmatpush1.bf16.msra.mxu0 0
    %4849 = vmatprep.subr.bf16.mxu0 0
    %4850 = vmatpush1.bf16.msra.mxu0 0
    %4851 = vmatprep.subr.bf16.mxu0 0
    %4852 = vmatpush1.bf16.msra.mxu0 0
    %4853 = vmatprep.subr.bf16.mxu0 0
    %4854 = vmatpush1.bf16.msra.mxu0 %v4586
    %4855 = vmatprep.subr.bf16.mxu0 0
    %4856 = vmatpush1.bf16.msra.mxu0 %v4585
    %4857 = vmatprep.subr.bf16.mxu0 0
    %4858 = vmatpush2.bf16.msra.mxu0 0
    %4859 = vmatprep.subr.bf16.mxu0 0
    %4860 = vmatpush2.bf16.msra.mxu0 0
    %4861 = vmatprep.subr.bf16.mxu0 0
    %4862 = vmatpush2.bf16.msra.mxu0 0
    %4863 = vmatprep.subr.bf16.mxu0 0
    %4864 = vmatpush2.bf16.msra.mxu0 0
    %4865 = vmatprep.subr.bf16.mxu0 0
    %4866 = vmatpush2.bf16.msra.mxu0 0
    %4867 = vmatprep.subr.bf16.mxu0 0
    %4868 = vmatpush2.bf16.msra.mxu0 0
    %4869 = vmatprep.subr.bf16.mxu0 0
    %4870 = vmatpush2.bf16.msra.mxu0 0
    %4871 = vmatprep.subr.bf16.mxu0 0
    %4872 = vmatpush2.bf16.msra.mxu0 0
    %4873 = vmatprep.mubr.bf16.mxu0 0
    %4874 = vmatmul.mubr.bf16.gmra.mxu0 %v4839
    %v4875 = vpop.f32.mrf.mxu0
    %v4876 = vadd.f32 0.0, %v4875
    %v4877 = vpop.f32.mrf.mxu0
    %v4878 = vpop.f32.mrf.mxu0
    %v4879 = vpop.f32.mrf.mxu0
    %4880 = vdwg.mxu0
    %v4882 = vrot.slane %v4876, 5
    %v4884 = vadd.f32 %v4567, %v4882
    %v4885 = vxor.u32 %v4884, 2147483648
    %v4886 = vmul.f32 %v4885, 1.442695
    %v4887 = vpow.pop %v4886
    %v4888 = vadd.f32 %v4887, 1.0
    %v4889 = vrcp.pop %v4888
    %v4890 = vmul.f32 1.0, %v4889
    %v4891 = vtanh.pop %v4884
    %v4893 = vrot.slane %v4821, 7
    %v4895 = vmul.f32 %v4890, %v4893
    %4897 = vrot.lane.b32.xlu0 %v4891, 64
    %v4898 = vpop.permute.xlu0 %4897
    %v4900 = vmul.f32 %v4890, %v4898
    %4902 = vrot.lane.b32.xlu0 %v4900, 32
    %v4903 = vpop.permute.xlu0 %4902
    %v4905 = vadd.f32 %v4895, %v4903
    %v4906 = vtanh.pop %v4905
    %4908 = vrot.lane.b32.xlu0 %v4906, 64
    %v4909 = vpop.permute.xlu0 %4908
    %v4911 = vmul.f32 %v4890, %v4909
    %4913 = vrot.lane.b32.xlu0 %v4911, 32
    %v4914 = vpop.permute.xlu0 %4913
    %4916 = vst.msk [vmem:[#allocation2] sm:$0x8] %vm1074, %v4914
    %v4917 = vld [vmem:[#allocation2] sm:$0xf]
    %v4918 = vrot.slane %v4494, 3
    %v4920 = vrot.slane %v4911, 2
    %v4922 = vsel %vm1499, %v4918, %v4920
    %v4924 = vrot.slane %v4488, 3
    %v4927 = vrot.slane %v4905, 2
    %v4929 = vsel %vm1499, %v4924, %v4927
    %v4930 = vmax.f32 %v4917, 0.0
    %v4931 = vsub.f32 %v3226, %v4930
    %v4932 = vadd.f32 %v4084, %v4917
    %vm4933 = vcmp.lt.f32.partialorder %v4932, -1e-11
    %v4934 = vmul.f32 %v4932, -1e+10
    %v4935 = vsel %vm4933, %v4934, %v4932
    %v4936 = vadd.f32 %v4935, %v652
    %v4937 = vmul.f32 %v4936, 0.5
    %v4938 = vtanh.pop %v4937
    %v4939 = vld [vmem:[%s2372] sm:$0xf]
    %v4940 = vld [vmem:[%s2372 + $0x4] sm:$0xf]
    %v4941 = vld [vmem:[%s2372 + $0x8] sm:$0xf]
    %v4942 = vld [vmem:[%s2372 + $0xc] sm:$0xf]
    %v4943 = vld [vmem:[%s2377] sm:$0xf]
    %v4944 = vld [vmem:[%s2377 + $0x4] sm:$0xf]
    %v4945 = vld [vmem:[%s2377 + $0x8] sm:$0xf]
    %v4946 = vld [vmem:[%s2377 + $0xc] sm:$0xf]
    %v4947 = vld [vmem:[%s2382] sm:$0x1]
    %v4948 = vpack.c.bf16 %v4938, %v4938
    %v4950 = vlaneseq
    %v4951 = vshrl.u32 %v4950, 7
    %v4952 = vsub.s32 0, %v4951
    %v4953 = vrot.slane %v4947, %v4952
    %v4959 = vunpack.c.l.b16 %v4939
    %v4960 = vunpack.c.l.b16 %v4940
    %v4961 = vunpack.c.l.b16 %v4941
    %v4962 = vunpack.c.l.b16 %v4942
    %v4963 = vpack.c.b16 %v4960, %v4959
    %v4964 = vpack.c.b16 %v4962, %v4961
    %v4968 = vsel %vm686, %v4948, 0
    %4970 = vmatprep.subr.bf16.mxu0 0
    %4971 = vmatpush1.bf16.msra.mxu0 0
    %4972 = vmatprep.subr.bf16.mxu0 0
    %4973 = vmatpush1.bf16.msra.mxu0 0
    %4974 = vmatprep.subr.bf16.mxu0 0
    %4975 = vmatpush1.bf16.msra.mxu0 0
    %4976 = vmatprep.subr.bf16.mxu0 0
    %4977 = vmatpush1.bf16.msra.mxu0 0
    %4978 = vmatprep.subr.bf16.mxu0 0
    %4979 = vmatpush1.bf16.msra.mxu0 0
    %4980 = vmatprep.subr.bf16.mxu0 0
    %4981 = vmatpush1.bf16.msra.mxu0 0
    %4982 = vmatprep.subr.bf16.mxu0 0
    %4983 = vmatpush1.bf16.msra.mxu0 %v4964
    %4984 = vmatprep.subr.bf16.mxu0 0
    %4985 = vmatpush1.bf16.msra.mxu0 %v4963
    %4986 = vmatprep.subr.bf16.mxu0 0
    %4987 = vmatpush2.bf16.msra.mxu0 0
    %4988 = vmatprep.subr.bf16.mxu0 0
    %4989 = vmatpush2.bf16.msra.mxu0 0
    %4990 = vmatprep.subr.bf16.mxu0 0
    %4991 = vmatpush2.bf16.msra.mxu0 0
    %4992 = vmatprep.subr.bf16.mxu0 0
    %4993 = vmatpush2.bf16.msra.mxu0 0
    %4994 = vmatprep.subr.bf16.mxu0 0
    %4995 = vmatpush2.bf16.msra.mxu0 0
    %4996 = vmatprep.subr.bf16.mxu0 0
    %4997 = vmatpush2.bf16.msra.mxu0 0
    %4998 = vmatprep.subr.bf16.mxu0 0
    %4999 = vmatpush2.bf16.msra.mxu0 0
    %5000 = vmatprep.subr.bf16.mxu0 0
    %5001 = vmatpush2.bf16.msra.mxu0 0
    %5002 = vmatprep.mubr.bf16.mxu0 0
    %5003 = vmatmul.mubr.bf16.gmra.mxu0 %v4968
    %v5004 = vpop.f32.mrf.mxu0
    %v5005 = vadd.f32 %v4953, %v5004
    %v5006 = vpop.f32.mrf.mxu0
    %v5007 = vpop.f32.mrf.mxu0
    %v5008 = vpop.f32.mrf.mxu0
    %5009 = vdwg.mxu0
    %v5010 = vpack.c.bf16 %v4929, %v4929
    %5012 = vrot.lane.b32.xlu0 %v5010, 96
    %v5013 = vpop.permute.xlu0 %5012
    %v5018 = vunpack.c.l.b16 %v4943
    %v5019 = vunpack.c.l.b16 %v4944
    %v5020 = vunpack.c.l.b16 %v4945
    %v5021 = vunpack.c.l.b16 %v4946
    %v5022 = vpack.c.b16 %v5019, %v5018
    %v5023 = vpack.c.b16 %v5021, %v5020
    %v5027 = vsel %vm686, %v5013, 0
    %5029 = vmatprep.subr.bf16.mxu0 0
    %5030 = vmatpush1.bf16.msra.mxu0 0
    %5031 = vmatprep.subr.bf16.mxu0 0
    %5032 = vmatpush1.bf16.msra.mxu0 0
    %5033 = vmatprep.subr.bf16.mxu0 0
    %5034 = vmatpush1.bf16.msra.mxu0 0
    %5035 = vmatprep.subr.bf16.mxu0 0
    %5036 = vmatpush1.bf16.msra.mxu0 0
    %5037 = vmatprep.subr.bf16.mxu0 0
    %5038 = vmatpush1.bf16.msra.mxu0 0
    %5039 = vmatprep.subr.bf16.mxu0 0
    %5040 = vmatpush1.bf16.msra.mxu0 0
    %5041 = vmatprep.subr.bf16.mxu0 0
    %5042 = vmatpush1.bf16.msra.mxu0 %v5023
    %5043 = vmatprep.subr.bf16.mxu0 0
    %5044 = vmatpush1.bf16.msra.mxu0 %v5022
    %5045 = vmatprep.subr.bf16.mxu0 0
    %5046 = vmatpush2.bf16.msra.mxu0 0
    %5047 = vmatprep.subr.bf16.mxu0 0
    %5048 = vmatpush2.bf16.msra.mxu0 0
    %5049 = vmatprep.subr.bf16.mxu0 0
    %5050 = vmatpush2.bf16.msra.mxu0 0
    %5051 = vmatprep.subr.bf16.mxu0 0
    %5052 = vmatpush2.bf16.msra.mxu0 0
    %5053 = vmatprep.subr.bf16.mxu0 0
    %5054 = vmatpush2.bf16.msra.mxu0 0
    %5055 = vmatprep.subr.bf16.mxu0 0
    %5056 = vmatpush2.bf16.msra.mxu0 0
    %5057 = vmatprep.subr.bf16.mxu0 0
    %5058 = vmatpush2.bf16.msra.mxu0 0
    %5059 = vmatprep.subr.bf16.mxu0 0
    %5060 = vmatpush2.bf16.msra.mxu0 0
    %5061 = vmatprep.mubr.bf16.mxu0 0
    %5062 = vmatmul.mubr.bf16.gmra.mxu0 %v5027
    %v5063 = vpop.f32.mrf.mxu0
    %v5064 = vadd.f32 0.0, %v5063
    %v5065 = vpop.f32.mrf.mxu0
    %v5066 = vpop.f32.mrf.mxu0
    %v5067 = vpop.f32.mrf.mxu0
    %5068 = vdwg.mxu0
    %v5069 = vadd.f32 %v5005, %v5064
    %v5070 = vxor.u32 %v5069, 2147483648
    %v5071 = vmul.f32 %v5070, 1.442695
    %v5072 = vpow.pop %v5071
    %v5073 = vadd.f32 %v5072, 1.0
    %v5074 = vrcp.pop %v5073
    %v5075 = vmul.f32 1.0, %v5074
    %v5076 = vtanh.pop %v5069
    %5078 = vrot.lane.b32.xlu0 %v4922, 64
    %v5079 = vpop.permute.xlu0 %5078
    %v5081 = vmul.f32 %v5075, %v5079
    %5083 = vrot.lane.b32.xlu0 %v5076, 64
    %v5084 = vpop.permute.xlu0 %5083
    %v5086 = vmul.f32 %v5075, %v5084
    %5088 = vrot.lane.b32.xlu0 %v5086, 32
    %v5089 = vpop.permute.xlu0 %5088
    %v5091 = vadd.f32 %v5081, %v5089
    %v5092 = vtanh.pop %v5091
    %5094 = vrot.lane.b32.xlu0 %v5092, 64
    %v5095 = vpop.permute.xlu0 %5094
    %v5097 = vmul.f32 %v5075, %v5095
    %5099 = vrot.lane.b32.xlu0 %v5097, 32
    %v5100 = vpop.permute.xlu0 %5099
    %5102 = vst.msk [vmem:[#allocation2] sm:$0x1] %vm819, %v5100
    %v5103 = vpack.c.bf16 %v5097, %v5097
    %5105 = vrot.lane.b32.xlu0 %v5103, 32
    %v5106 = vpop.permute.xlu0 %5105
    %v5108 = vsel %vm686, %v5106, 0
    %5110 = vmatprep.subr.bf16.mxu0 0
    %5111 = vmatpush1.bf16.msra.mxu0 0
    %5112 = vmatprep.subr.bf16.mxu0 0
    %5113 = vmatpush1.bf16.msra.mxu0 0
    %5114 = vmatprep.subr.bf16.mxu0 0
    %5115 = vmatpush1.bf16.msra.mxu0 0
    %5116 = vmatprep.subr.bf16.mxu0 0
    %5117 = vmatpush1.bf16.msra.mxu0 0
    %5118 = vmatprep.subr.bf16.mxu0 0
    %5119 = vmatpush1.bf16.msra.mxu0 0
    %5120 = vmatprep.subr.bf16.mxu0 0
    %5121 = vmatpush1.bf16.msra.mxu0 0
    %5122 = vmatprep.subr.bf16.mxu0 0
    %5123 = vmatpush1.bf16.msra.mxu0 %v5023
    %5124 = vmatprep.subr.bf16.mxu0 0
    %5125 = vmatpush1.bf16.msra.mxu0 %v5022
    %5126 = vmatprep.subr.bf16.mxu0 0
    %5127 = vmatpush2.bf16.msra.mxu0 0
    %5128 = vmatprep.subr.bf16.mxu0 0
    %5129 = vmatpush2.bf16.msra.mxu0 0
    %5130 = vmatprep.subr.bf16.mxu0 0
    %5131 = vmatpush2.bf16.msra.mxu0 0
    %5132 = vmatprep.subr.bf16.mxu0 0
    %5133 = vmatpush2.bf16.msra.mxu0 0
    %5134 = vmatprep.subr.bf16.mxu0 0
    %5135 = vmatpush2.bf16.msra.mxu0 0
    %5136 = vmatprep.subr.bf16.mxu0 0
    %5137 = vmatpush2.bf16.msra.mxu0 0
    %5138 = vmatprep.subr.bf16.mxu0 0
    %5139 = vmatpush2.bf16.msra.mxu0 0
    %5140 = vmatprep.subr.bf16.mxu0 0
    %5141 = vmatpush2.bf16.msra.mxu0 0
    %5142 = vmatprep.mubr.bf16.mxu0 0
    %5143 = vmatmul.mubr.bf16.gmra.mxu0 %v5108
    %v5144 = vpop.f32.mrf.mxu0
    %v5145 = vadd.f32 0.0, %v5144
    %v5146 = vpop.f32.mrf.mxu0
    %v5147 = vpop.f32.mrf.mxu0
    %v5148 = vpop.f32.mrf.mxu0
    %5149 = vdwg.mxu0
    %v5151 = vrot.slane %v5145, 7
    %v5153 = vadd.f32 %v5005, %v5151
    %v5154 = vxor.u32 %v5153, 2147483648
    %v5155 = vmul.f32 %v5154, 1.442695
    %v5156 = vpow.pop %v5155
    %v5157 = vadd.f32 %v5156, 1.0
    %v5158 = vrcp.pop %v5157
    %v5159 = vmul.f32 1.0, %v5158
    %v5160 = vtanh.pop %v5153
    %v5162 = vrot.slane %v5091, 7
    %v5164 = vmul.f32 %v5159, %v5162
    %5166 = vrot.lane.b32.xlu0 %v5160, 64
    %v5167 = vpop.permute.xlu0 %5166
    %v5169 = vmul.f32 %v5159, %v5167
    %5171 = vrot.lane.b32.xlu0 %v5169, 32
    %v5172 = vpop.permute.xlu0 %5171
    %v5174 = vadd.f32 %v5164, %v5172
    %v5175 = vtanh.pop %v5174
    %5177 = vrot.lane.b32.xlu0 %v5175, 64
    %v5178 = vpop.permute.xlu0 %5177
    %v5180 = vmul.f32 %v5159, %v5178
    %5182 = vrot.lane.b32.xlu0 %v5180, 32
    %v5183 = vpop.permute.xlu0 %5182
    %5185 = vst.msk [vmem:[#allocation2] sm:$0x2] %vm903, %v5183
    %v5186 = vpack.c.bf16 %v5180, %v5180
    %v5188 = vshrl.u32 %v5186, 16
    %5190 = vrot.lane.b32.xlu0 %v5188, 32
    %v5191 = vpop.permute.xlu0 %5190
    %v5193 = vsel %vm686, %v5191, 0
    %5195 = vmatprep.subr.bf16.mxu0 0
    %5196 = vmatpush1.bf16.msra.mxu0 0
    %5197 = vmatprep.subr.bf16.mxu0 0
    %5198 = vmatpush1.bf16.msra.mxu0 0
    %5199 = vmatprep.subr.bf16.mxu0 0
    %5200 = vmatpush1.bf16.msra.mxu0 0
    %5201 = vmatprep.subr.bf16.mxu0 0
    %5202 = vmatpush1.bf16.msra.mxu0 0
    %5203 = vmatprep.subr.bf16.mxu0 0
    %5204 = vmatpush1.bf16.msra.mxu0 0
    %5205 = vmatprep.subr.bf16.mxu0 0
    %5206 = vmatpush1.bf16.msra.mxu0 0
    %5207 = vmatprep.subr.bf16.mxu0 0
    %5208 = vmatpush1.bf16.msra.mxu0 %v5023
    %5209 = vmatprep.subr.bf16.mxu0 0
    %5210 = vmatpush1.bf16.msra.mxu0 %v5022
    %5211 = vmatprep.subr.bf16.mxu0 0
    %5212 = vmatpush2.bf16.msra.mxu0 0
    %5213 = vmatprep.subr.bf16.mxu0 0
    %5214 = vmatpush2.bf16.msra.mxu0 0
    %5215 = vmatprep.subr.bf16.mxu0 0
    %5216 = vmatpush2.bf16.msra.mxu0 0
    %5217 = vmatprep.subr.bf16.mxu0 0
    %5218 = vmatpush2.bf16.msra.mxu0 0
    %5219 = vmatprep.subr.bf16.mxu0 0
    %5220 = vmatpush2.bf16.msra.mxu0 0
    %5221 = vmatprep.subr.bf16.mxu0 0
    %5222 = vmatpush2.bf16.msra.mxu0 0
    %5223 = vmatprep.subr.bf16.mxu0 0
    %5224 = vmatpush2.bf16.msra.mxu0 0
    %5225 = vmatprep.subr.bf16.mxu0 0
    %5226 = vmatpush2.bf16.msra.mxu0 0
    %5227 = vmatprep.mubr.bf16.mxu0 0
    %5228 = vmatmul.mubr.bf16.gmra.mxu0 %v5193
    %v5229 = vpop.f32.mrf.mxu0
    %v5230 = vadd.f32 0.0, %v5229
    %v5231 = vpop.f32.mrf.mxu0
    %v5232 = vpop.f32.mrf.mxu0
    %v5233 = vpop.f32.mrf.mxu0
    %5234 = vdwg.mxu0
    %v5236 = vrot.slane %v5230, 6
    %v5238 = vadd.f32 %v5005, %v5236
    %v5239 = vxor.u32 %v5238, 2147483648
    %v5240 = vmul.f32 %v5239, 1.442695
    %v5241 = vpow.pop %v5240
    %v5242 = vadd.f32 %v5241, 1.0
    %v5243 = vrcp.pop %v5242
    %v5244 = vmul.f32 1.0, %v5243
    %v5245 = vtanh.pop %v5238
    %v5247 = vrot.slane %v5174, 7
    %v5249 = vmul.f32 %v5244, %v5247
    %5251 = vrot.lane.b32.xlu0 %v5245, 64
    %v5252 = vpop.permute.xlu0 %5251
    %v5254 = vmul.f32 %v5244, %v5252
    %5256 = vrot.lane.b32.xlu0 %v5254, 32
    %v5257 = vpop.permute.xlu0 %5256
    %v5259 = vadd.f32 %v5249, %v5257
    %v5260 = vtanh.pop %v5259
    %5262 = vrot.lane.b32.xlu0 %v5260, 64
    %v5263 = vpop.permute.xlu0 %5262
    %v5265 = vmul.f32 %v5244, %v5263
    %5267 = vrot.lane.b32.xlu0 %v5265, 32
    %v5268 = vpop.permute.xlu0 %5267
    %5270 = vst.msk [vmem:[#allocation2] sm:$0x4] %vm989, %v5268
    %v5271 = vpack.c.bf16 %v5265, %v5265
    %v5273 = vrot.slane %v5271, 1
    %5274 = vrot.lane.b32.xlu0 %v5273, 32
    %v5275 = vpop.permute.xlu0 %5274
    %v5277 = vsel %vm686, %v5275, 0
    %5279 = vmatprep.subr.bf16.mxu0 0
    %5280 = vmatpush1.bf16.msra.mxu0 0
    %5281 = vmatprep.subr.bf16.mxu0 0
    %5282 = vmatpush1.bf16.msra.mxu0 0
    %5283 = vmatprep.subr.bf16.mxu0 0
    %5284 = vmatpush1.bf16.msra.mxu0 0
    %5285 = vmatprep.subr.bf16.mxu0 0
    %5286 = vmatpush1.bf16.msra.mxu0 0
    %5287 = vmatprep.subr.bf16.mxu0 0
    %5288 = vmatpush1.bf16.msra.mxu0 0
    %5289 = vmatprep.subr.bf16.mxu0 0
    %5290 = vmatpush1.bf16.msra.mxu0 0
    %5291 = vmatprep.subr.bf16.mxu0 0
    %5292 = vmatpush1.bf16.msra.mxu0 %v5023
    %5293 = vmatprep.subr.bf16.mxu0 0
    %5294 = vmatpush1.bf16.msra.mxu0 %v5022
    %5295 = vmatprep.subr.bf16.mxu0 0
    %5296 = vmatpush2.bf16.msra.mxu0 0
    %5297 = vmatprep.subr.bf16.mxu0 0
    %5298 = vmatpush2.bf16.msra.mxu0 0
    %5299 = vmatprep.subr.bf16.mxu0 0
    %5300 = vmatpush2.bf16.msra.mxu0 0
    %5301 = vmatprep.subr.bf16.mxu0 0
    %5302 = vmatpush2.bf16.msra.mxu0 0
    %5303 = vmatprep.subr.bf16.mxu0 0
    %5304 = vmatpush2.bf16.msra.mxu0 0
    %5305 = vmatprep.subr.bf16.mxu0 0
    %5306 = vmatpush2.bf16.msra.mxu0 0
    %5307 = vmatprep.subr.bf16.mxu0 0
    %5308 = vmatpush2.bf16.msra.mxu0 0
    %5309 = vmatprep.subr.bf16.mxu0 0
    %5310 = vmatpush2.bf16.msra.mxu0 0
    %5311 = vmatprep.mubr.bf16.mxu0 0
    %5312 = vmatmul.mubr.bf16.gmra.mxu0 %v5277
    %v5313 = vpop.f32.mrf.mxu0
    %v5314 = vadd.f32 0.0, %v5313
    %v5315 = vpop.f32.mrf.mxu0
    %v5316 = vpop.f32.mrf.mxu0
    %v5317 = vpop.f32.mrf.mxu0
    %5318 = vdwg.mxu0
    %v5320 = vrot.slane %v5314, 5
    %v5322 = vadd.f32 %v5005, %v5320
    %v5323 = vxor.u32 %v5322, 2147483648
    %v5324 = vmul.f32 %v5323, 1.442695
    %v5325 = vpow.pop %v5324
    %v5326 = vadd.f32 %v5325, 1.0
    %v5327 = vrcp.pop %v5326
    %v5328 = vmul.f32 1.0, %v5327
    %v5329 = vtanh.pop %v5322
    %v5331 = vrot.slane %v5259, 7
    %v5333 = vmul.f32 %v5328, %v5331
    %5335 = vrot.lane.b32.xlu0 %v5329, 64
    %v5336 = vpop.permute.xlu0 %5335
    %v5338 = vmul.f32 %v5328, %v5336
    %5340 = vrot.lane.b32.xlu0 %v5338, 32
    %v5341 = vpop.permute.xlu0 %5340
    %v5343 = vadd.f32 %v5333, %v5341
    %v5344 = vtanh.pop %v5343
    %5346 = vrot.lane.b32.xlu0 %v5344, 64
    %v5347 = vpop.permute.xlu0 %5346
    %v5349 = vmul.f32 %v5328, %v5347
    %5351 = vrot.lane.b32.xlu0 %v5349, 32
    %v5352 = vpop.permute.xlu0 %5351
    %5354 = vst.msk [vmem:[#allocation2] sm:$0x8] %vm1074, %v5352
    %v5355 = vld [vmem:[#allocation2] sm:$0xf]
    %v5356 = vld [vmem:[%s2792] sm:$0xf]
    %v5357 = vld [vmem:[%s2792 + $0x4] sm:$0xf]
    %v5358 = vld [vmem:[%s2792 + $0x8] sm:$0xf]
    %v5359 = vld [vmem:[%s2792 + $0xc] sm:$0xf]
    %v5360 = vld [vmem:[%s2797] sm:$0xf]
    %v5361 = vld [vmem:[%s2797 + $0x4] sm:$0xf]
    %v5362 = vld [vmem:[%s2797 + $0x8] sm:$0xf]
    %v5363 = vld [vmem:[%s2797 + $0xc] sm:$0xf]
    %v5364 = vld [vmem:[%s2802] sm:$0x1]
    %v5365 = vpack.c.bf16 %v5355, %v5355
    %v5367 = vlaneseq
    %v5368 = vshrl.u32 %v5367, 7
    %v5369 = vsub.s32 0, %v5368
    %v5370 = vrot.slane %v5364, %v5369
    %v5376 = vunpack.c.l.b16 %v5356
    %v5377 = vunpack.c.l.b16 %v5357
    %v5378 = vunpack.c.l.b16 %v5358
    %v5379 = vunpack.c.l.b16 %v5359
    %v5380 = vpack.c.b16 %v5377, %v5376
    %v5381 = vpack.c.b16 %v5379, %v5378
    %v5385 = vsel %vm686, %v5365, 0
    %5387 = vmatprep.subr.bf16.mxu0 0
    %5388 = vmatpush1.bf16.msra.mxu0 0
    %5389 = vmatprep.subr.bf16.mxu0 0
    %5390 = vmatpush1.bf16.msra.mxu0 0
    %5391 = vmatprep.subr.bf16.mxu0 0
    %5392 = vmatpush1.bf16.msra.mxu0 0
    %5393 = vmatprep.subr.bf16.mxu0 0
    %5394 = vmatpush1.bf16.msra.mxu0 0
    %5395 = vmatprep.subr.bf16.mxu0 0
    %5396 = vmatpush1.bf16.msra.mxu0 0
    %5397 = vmatprep.subr.bf16.mxu0 0
    %5398 = vmatpush1.bf16.msra.mxu0 0
    %5399 = vmatprep.subr.bf16.mxu0 0
    %5400 = vmatpush1.bf16.msra.mxu0 %v5381
    %5401 = vmatprep.subr.bf16.mxu0 0
    %5402 = vmatpush1.bf16.msra.mxu0 %v5380
    %5403 = vmatprep.subr.bf16.mxu0 0
    %5404 = vmatpush2.bf16.msra.mxu0 0
    %5405 = vmatprep.subr.bf16.mxu0 0
    %5406 = vmatpush2.bf16.msra.mxu0 0
    %5407 = vmatprep.subr.bf16.mxu0 0
    %5408 = vmatpush2.bf16.msra.mxu0 0
    %5409 = vmatprep.subr.bf16.mxu0 0
    %5410 = vmatpush2.bf16.msra.mxu0 0
    %5411 = vmatprep.subr.bf16.mxu0 0
    %5412 = vmatpush2.bf16.msra.mxu0 0
    %5413 = vmatprep.subr.bf16.mxu0 0
    %5414 = vmatpush2.bf16.msra.mxu0 0
    %5415 = vmatprep.subr.bf16.mxu0 0
    %5416 = vmatpush2.bf16.msra.mxu0 0
    %5417 = vmatprep.subr.bf16.mxu0 0
    %5418 = vmatpush2.bf16.msra.mxu0 0
    %5419 = vmatprep.mubr.bf16.mxu0 0
    %5420 = vmatmul.mubr.bf16.gmra.mxu0 %v5385
    %v5421 = vpop.f32.mrf.mxu0
    %v5422 = vadd.f32 %v5370, %v5421
    %v5423 = vpop.f32.mrf.mxu0
    %v5424 = vpop.f32.mrf.mxu0
    %v5425 = vpop.f32.mrf.mxu0
    %5426 = vdwg.mxu0
    %v5428 = vshrl.u32 %v5010, 16
    %5430 = vrot.lane.b32.xlu0 %v5428, 96
    %v5431 = vpop.permute.xlu0 %5430
    %v5436 = vunpack.c.l.b16 %v5360
    %v5437 = vunpack.c.l.b16 %v5361
    %v5438 = vunpack.c.l.b16 %v5362
    %v5439 = vunpack.c.l.b16 %v5363
    %v5440 = vpack.c.b16 %v5437, %v5436
    %v5441 = vpack.c.b16 %v5439, %v5438
    %v5445 = vsel %vm686, %v5431, 0
    %5447 = vmatprep.subr.bf16.mxu0 0
    %5448 = vmatpush1.bf16.msra.mxu0 0
    %5449 = vmatprep.subr.bf16.mxu0 0
    %5450 = vmatpush1.bf16.msra.mxu0 0
    %5451 = vmatprep.subr.bf16.mxu0 0
    %5452 = vmatpush1.bf16.msra.mxu0 0
    %5453 = vmatprep.subr.bf16.mxu0 0
    %5454 = vmatpush1.bf16.msra.mxu0 0
    %5455 = vmatprep.subr.bf16.mxu0 0
    %5456 = vmatpush1.bf16.msra.mxu0 0
    %5457 = vmatprep.subr.bf16.mxu0 0
    %5458 = vmatpush1.bf16.msra.mxu0 0
    %5459 = vmatprep.subr.bf16.mxu0 0
    %5460 = vmatpush1.bf16.msra.mxu0 %v5441
    %5461 = vmatprep.subr.bf16.mxu0 0
    %5462 = vmatpush1.bf16.msra.mxu0 %v5440
    %5463 = vmatprep.subr.bf16.mxu0 0
    %5464 = vmatpush2.bf16.msra.mxu0 0
    %5465 = vmatprep.subr.bf16.mxu0 0
    %5466 = vmatpush2.bf16.msra.mxu0 0
    %5467 = vmatprep.subr.bf16.mxu0 0
    %5468 = vmatpush2.bf16.msra.mxu0 0
    %5469 = vmatprep.subr.bf16.mxu0 0
    %5470 = vmatpush2.bf16.msra.mxu0 0
    %5471 = vmatprep.subr.bf16.mxu0 0
    %5472 = vmatpush2.bf16.msra.mxu0 0
    %5473 = vmatprep.subr.bf16.mxu0 0
    %5474 = vmatpush2.bf16.msra.mxu0 0
    %5475 = vmatprep.subr.bf16.mxu0 0
    %5476 = vmatpush2.bf16.msra.mxu0 0
    %5477 = vmatprep.subr.bf16.mxu0 0
    %5478 = vmatpush2.bf16.msra.mxu0 0
    %5479 = vmatprep.mubr.bf16.mxu0 0
    %5480 = vmatmul.mubr.bf16.gmra.mxu0 %v5445
    %v5481 = vpop.f32.mrf.mxu0
    %v5482 = vadd.f32 0.0, %v5481
    %v5483 = vpop.f32.mrf.mxu0
    %v5484 = vpop.f32.mrf.mxu0
    %v5485 = vpop.f32.mrf.mxu0
    %5486 = vdwg.mxu0
    %v5487 = vadd.f32 %v5422, %v5482
    %v5488 = vxor.u32 %v5487, 2147483648
    %v5489 = vmul.f32 %v5488, 1.442695
    %v5490 = vpow.pop %v5489
    %v5491 = vadd.f32 %v5490, 1.0
    %v5492 = vrcp.pop %v5491
    %v5493 = vmul.f32 1.0, %v5492
    %v5494 = vtanh.pop %v5487
    %v5495 = vrot.slane %v4922, 1
    %5496 = vrot.lane.b32.xlu0 %v5495, 64
    %v5497 = vpop.permute.xlu0 %5496
    %v5499 = vmul.f32 %v5493, %v5497
    %5501 = vrot.lane.b32.xlu0 %v5494, 64
    %v5502 = vpop.permute.xlu0 %5501
    %v5504 = vmul.f32 %v5493, %v5502
    %5506 = vrot.lane.b32.xlu0 %v5504, 32
    %v5507 = vpop.permute.xlu0 %5506
    %v5509 = vadd.f32 %v5499, %v5507
    %v5510 = vtanh.pop %v5509
    %5512 = vrot.lane.b32.xlu0 %v5510, 64
    %v5513 = vpop.permute.xlu0 %5512
    %v5515 = vmul.f32 %v5493, %v5513
    %5517 = vrot.lane.b32.xlu0 %v5515, 32
    %v5518 = vpop.permute.xlu0 %5517
    %5520 = vst.msk [vmem:[#allocation2] sm:$0x1] %vm819, %v5518
    %v5521 = vpack.c.bf16 %v5515, %v5515
    %5523 = vrot.lane.b32.xlu0 %v5521, 32
    %v5524 = vpop.permute.xlu0 %5523
    %v5526 = vsel %vm686, %v5524, 0
    %5528 = vmatprep.subr.bf16.mxu0 0
    %5529 = vmatpush1.bf16.msra.mxu0 0
    %5530 = vmatprep.subr.bf16.mxu0 0
    %5531 = vmatpush1.bf16.msra.mxu0 0
    %5532 = vmatprep.subr.bf16.mxu0 0
    %5533 = vmatpush1.bf16.msra.mxu0 0
    %5534 = vmatprep.subr.bf16.mxu0 0
    %5535 = vmatpush1.bf16.msra.mxu0 0
    %5536 = vmatprep.subr.bf16.mxu0 0
    %5537 = vmatpush1.bf16.msra.mxu0 0
    %5538 = vmatprep.subr.bf16.mxu0 0
    %5539 = vmatpush1.bf16.msra.mxu0 0
    %5540 = vmatprep.subr.bf16.mxu0 0
    %5541 = vmatpush1.bf16.msra.mxu0 %v5441
    %5542 = vmatprep.subr.bf16.mxu0 0
    %5543 = vmatpush1.bf16.msra.mxu0 %v5440
    %5544 = vmatprep.subr.bf16.mxu0 0
    %5545 = vmatpush2.bf16.msra.mxu0 0
    %5546 = vmatprep.subr.bf16.mxu0 0
    %5547 = vmatpush2.bf16.msra.mxu0 0
    %5548 = vmatprep.subr.bf16.mxu0 0
    %5549 = vmatpush2.bf16.msra.mxu0 0
    %5550 = vmatprep.subr.bf16.mxu0 0
    %5551 = vmatpush2.bf16.msra.mxu0 0
    %5552 = vmatprep.subr.bf16.mxu0 0
    %5553 = vmatpush2.bf16.msra.mxu0 0
    %5554 = vmatprep.subr.bf16.mxu0 0
    %5555 = vmatpush2.bf16.msra.mxu0 0
    %5556 = vmatprep.subr.bf16.mxu0 0
    %5557 = vmatpush2.bf16.msra.mxu0 0
    %5558 = vmatprep.subr.bf16.mxu0 0
    %5559 = vmatpush2.bf16.msra.mxu0 0
    %5560 = vmatprep.mubr.bf16.mxu0 0
    %5561 = vmatmul.mubr.bf16.gmra.mxu0 %v5526
    %v5562 = vpop.f32.mrf.mxu0
    %v5563 = vadd.f32 0.0, %v5562
    %v5564 = vpop.f32.mrf.mxu0
    %v5565 = vpop.f32.mrf.mxu0
    %v5566 = vpop.f32.mrf.mxu0
    %5567 = vdwg.mxu0
    %v5569 = vrot.slane %v5563, 7
    %v5571 = vadd.f32 %v5422, %v5569
    %v5572 = vxor.u32 %v5571, 2147483648
    %v5573 = vmul.f32 %v5572, 1.442695
    %v5574 = vpow.pop %v5573
    %v5575 = vadd.f32 %v5574, 1.0
    %v5576 = vrcp.pop %v5575
    %v5577 = vmul.f32 1.0, %v5576
    %v5578 = vtanh.pop %v5571
    %v5580 = vrot.slane %v5509, 7
    %v5582 = vmul.f32 %v5577, %v5580
    %5584 = vrot.lane.b32.xlu0 %v5578, 64
    %v5585 = vpop.permute.xlu0 %5584
    %v5587 = vmul.f32 %v5577, %v5585
    %5589 = vrot.lane.b32.xlu0 %v5587, 32
    %v5590 = vpop.permute.xlu0 %5589
    %v5592 = vadd.f32 %v5582, %v5590
    %v5593 = vtanh.pop %v5592
    %5595 = vrot.lane.b32.xlu0 %v5593, 64
    %v5596 = vpop.permute.xlu0 %5595
    %v5598 = vmul.f32 %v5577, %v5596
    %5600 = vrot.lane.b32.xlu0 %v5598, 32
    %v5601 = vpop.permute.xlu0 %5600
    %5603 = vst.msk [vmem:[#allocation2] sm:$0x2] %vm903, %v5601
    %v5604 = vpack.c.bf16 %v5598, %v5598
    %v5606 = vshrl.u32 %v5604, 16
    %5608 = vrot.lane.b32.xlu0 %v5606, 32
    %v5609 = vpop.permute.xlu0 %5608
    %v5611 = vsel %vm686, %v5609, 0
    %5613 = vmatprep.subr.bf16.mxu0 0
    %5614 = vmatpush1.bf16.msra.mxu0 0
    %5615 = vmatprep.subr.bf16.mxu0 0
    %5616 = vmatpush1.bf16.msra.mxu0 0
    %5617 = vmatprep.subr.bf16.mxu0 0
    %5618 = vmatpush1.bf16.msra.mxu0 0
    %5619 = vmatprep.subr.bf16.mxu0 0
    %5620 = vmatpush1.bf16.msra.mxu0 0
    %5621 = vmatprep.subr.bf16.mxu0 0
    %5622 = vmatpush1.bf16.msra.mxu0 0
    %5623 = vmatprep.subr.bf16.mxu0 0
    %5624 = vmatpush1.bf16.msra.mxu0 0
    %5625 = vmatprep.subr.bf16.mxu0 0
    %5626 = vmatpush1.bf16.msra.mxu0 %v5441
    %5627 = vmatprep.subr.bf16.mxu0 0
    %5628 = vmatpush1.bf16.msra.mxu0 %v5440
    %5629 = vmatprep.subr.bf16.mxu0 0
    %5630 = vmatpush2.bf16.msra.mxu0 0
    %5631 = vmatprep.subr.bf16.mxu0 0
    %5632 = vmatpush2.bf16.msra.mxu0 0
    %5633 = vmatprep.subr.bf16.mxu0 0
    %5634 = vmatpush2.bf16.msra.mxu0 0
    %5635 = vmatprep.subr.bf16.mxu0 0
    %5636 = vmatpush2.bf16.msra.mxu0 0
    %5637 = vmatprep.subr.bf16.mxu0 0
    %5638 = vmatpush2.bf16.msra.mxu0 0
    %5639 = vmatprep.subr.bf16.mxu0 0
    %5640 = vmatpush2.bf16.msra.mxu0 0
    %5641 = vmatprep.subr.bf16.mxu0 0
    %5642 = vmatpush2.bf16.msra.mxu0 0
    %5643 = vmatprep.subr.bf16.mxu0 0
    %5644 = vmatpush2.bf16.msra.mxu0 0
    %5645 = vmatprep.mubr.bf16.mxu0 0
    %5646 = vmatmul.mubr.bf16.gmra.mxu0 %v5611
    %v5647 = vpop.f32.mrf.mxu0
    %v5648 = vadd.f32 0.0, %v5647
    %v5649 = vpop.f32.mrf.mxu0
    %v5650 = vpop.f32.mrf.mxu0
    %v5651 = vpop.f32.mrf.mxu0
    %5652 = vdwg.mxu0
    %v5654 = vrot.slane %v5648, 6
    %v5656 = vadd.f32 %v5422, %v5654
    %v5657 = vxor.u32 %v5656, 2147483648
    %v5658 = vmul.f32 %v5657, 1.442695
    %v5659 = vpow.pop %v5658
    %v5660 = vadd.f32 %v5659, 1.0
    %v5661 = vrcp.pop %v5660
    %v5662 = vmul.f32 1.0, %v5661
    %v5663 = vtanh.pop %v5656
    %v5665 = vrot.slane %v5592, 7
    %v5667 = vmul.f32 %v5662, %v5665
    %5669 = vrot.lane.b32.xlu0 %v5663, 64
    %v5670 = vpop.permute.xlu0 %5669
    %v5672 = vmul.f32 %v5662, %v5670
    %5674 = vrot.lane.b32.xlu0 %v5672, 32
    %v5675 = vpop.permute.xlu0 %5674
    %v5677 = vadd.f32 %v5667, %v5675
    %v5678 = vtanh.pop %v5677
    %5680 = vrot.lane.b32.xlu0 %v5678, 64
    %v5681 = vpop.permute.xlu0 %5680
    %v5683 = vmul.f32 %v5662, %v5681
    %5685 = vrot.lane.b32.xlu0 %v5683, 32
    %v5686 = vpop.permute.xlu0 %5685
    %5688 = vst.msk [vmem:[#allocation2] sm:$0x4] %vm989, %v5686
    %v5689 = vpack.c.bf16 %v5683, %v5683
    %v5691 = vrot.slane %v5689, 1
    %5692 = vrot.lane.b32.xlu0 %v5691, 32
    %v5693 = vpop.permute.xlu0 %5692
    %v5695 = vsel %vm686, %v5693, 0
    %5697 = vmatprep.subr.bf16.mxu0 0
    %5698 = vmatpush1.bf16.msra.mxu0 0
    %5699 = vmatprep.subr.bf16.mxu0 0
    %5700 = vmatpush1.bf16.msra.mxu0 0
    %5701 = vmatprep.subr.bf16.mxu0 0
    %5702 = vmatpush1.bf16.msra.mxu0 0
    %5703 = vmatprep.subr.bf16.mxu0 0
    %5704 = vmatpush1.bf16.msra.mxu0 0
    %5705 = vmatprep.subr.bf16.mxu0 0
    %5706 = vmatpush1.bf16.msra.mxu0 0
    %5707 = vmatprep.subr.bf16.mxu0 0
    %5708 = vmatpush1.bf16.msra.mxu0 0
    %5709 = vmatprep.subr.bf16.mxu0 0
    %5710 = vmatpush1.bf16.msra.mxu0 %v5441
    %5711 = vmatprep.subr.bf16.mxu0 0
    %5712 = vmatpush1.bf16.msra.mxu0 %v5440
    %5713 = vmatprep.subr.bf16.mxu0 0
    %5714 = vmatpush2.bf16.msra.mxu0 0
    %5715 = vmatprep.subr.bf16.mxu0 0
    %5716 = vmatpush2.bf16.msra.mxu0 0
    %5717 = vmatprep.subr.bf16.mxu0 0
    %5718 = vmatpush2.bf16.msra.mxu0 0
    %5719 = vmatprep.subr.bf16.mxu0 0
    %5720 = vmatpush2.bf16.msra.mxu0 0
    %5721 = vmatprep.subr.bf16.mxu0 0
    %5722 = vmatpush2.bf16.msra.mxu0 0
    %5723 = vmatprep.subr.bf16.mxu0 0
    %5724 = vmatpush2.bf16.msra.mxu0 0
    %5725 = vmatprep.subr.bf16.mxu0 0
    %5726 = vmatpush2.bf16.msra.mxu0 0
    %5727 = vmatprep.subr.bf16.mxu0 0
    %5728 = vmatpush2.bf16.msra.mxu0 0
    %5729 = vmatprep.mubr.bf16.mxu0 0
    %5730 = vmatmul.mubr.bf16.gmra.mxu0 %v5695
    %v5731 = vpop.f32.mrf.mxu0
    %v5732 = vadd.f32 0.0, %v5731
    %v5733 = vpop.f32.mrf.mxu0
    %v5734 = vpop.f32.mrf.mxu0
    %v5735 = vpop.f32.mrf.mxu0
    %5736 = vdwg.mxu0
    %v5738 = vrot.slane %v5732, 5
    %v5740 = vadd.f32 %v5422, %v5738
    %v5741 = vxor.u32 %v5740, 2147483648
    %v5742 = vmul.f32 %v5741, 1.442695
    %v5743 = vpow.pop %v5742
    %v5744 = vadd.f32 %v5743, 1.0
    %v5745 = vrcp.pop %v5744
    %v5746 = vmul.f32 1.0, %v5745
    %v5747 = vtanh.pop %v5740
    %v5749 = vrot.slane %v5677, 7
    %v5751 = vmul.f32 %v5746, %v5749
    %5753 = vrot.lane.b32.xlu0 %v5747, 64
    %v5754 = vpop.permute.xlu0 %5753
    %v5756 = vmul.f32 %v5746, %v5754
    %5758 = vrot.lane.b32.xlu0 %v5756, 32
    %v5759 = vpop.permute.xlu0 %5758
    %v5761 = vadd.f32 %v5751, %v5759
    %v5762 = vtanh.pop %v5761
    %5764 = vrot.lane.b32.xlu0 %v5762, 64
    %v5765 = vpop.permute.xlu0 %5764
    %v5767 = vmul.f32 %v5746, %v5765
    %5769 = vrot.lane.b32.xlu0 %v5767, 32
    %v5770 = vpop.permute.xlu0 %5769
    %5772 = vst.msk [vmem:[#allocation2] sm:$0x8] %vm1074, %v5770
    %v5773 = vld [vmem:[#allocation2] sm:$0xf]
    %v5774 = vrot.slane %v5349, 3
    %v5776 = vrot.slane %v5767, 2
    %v5778 = vsel %vm1499, %v5774, %v5776
    %v5780 = vrot.slane %v5343, 3
    %v5783 = vrot.slane %v5761, 2
    %v5785 = vsel %vm1499, %v5780, %v5783
    %v5786 = vmax.f32 %v5773, 0.0
    %v5787 = vadd.f32 %v4931, %v5786
    %5788 = vst.msk [vmem:[#allocation6] sm:$0xf] %vm605, %v5787
    %5790 = vrot.lane.b32.xlu0 %v5785, 96
    %v5791 = vpop.permute.xlu0 %5790
    %vm5793 = vcmask 254976
    %5794 = vst.msk [vmem:[#allocation7] sm:$0x3] %vm5793, %v5791
    %5796 = vrot.lane.b32.xlu0 %v5778, 32
    %v5797 = vpop.permute.xlu0 %5796
    %5799 = vst.msk [vmem:[#allocation9] sm:$0x3] %vm5793, %v5797
    // Predicated region
    $region46: #{mmm_forward.1} parent=1 // pred_check
      _
    $region47: #{mmm_forward.1} parent=1 // pred_check_branch
      %5801 = sbr.rel (0) target = $region49
    $region48: #{mmm_forward.1} parent=1 // pred_region
      %s5803 = ssub.s32 64, 64
      %5804 = vsyncadd [#allocation4], %s5803
      %s5806 = sshll.u32 [#allocation6], 4
      %s5807 = int_to_ptr.vmem [resolvable:$true] %s5806
      %5809 = dma.vmem_to_hbm [thread:$0]  %s5807, 64, %s10, [#allocation4]
    $region49: #{mmm_forward.1} parent=1 // pred_fallthru
      _
    // Predicated region
    $region50: #{mmm_forward.1} parent=1 // pred_check
      _
    $region51: #{mmm_forward.1} parent=1 // pred_check_branch
      %5811 = sbr.rel (0) target = $region53
    $region52: #{mmm_forward.1} parent=1 // pred_region
      %s5813 = ssub.s32 32, 32
      %5814 = vsyncadd [#allocation8], %s5813
      %s5816 = sshll.u32 [#allocation7], 4
      %s5817 = int_to_ptr.vmem [resolvable:$true] %s5816
      %5819 = dma.vmem_to_hbm [thread:$0]  %s5817, 32, %s11, [#allocation8]
    $region53: #{mmm_forward.1} parent=1 // pred_fallthru
      _
    // Predicated region
    $region54: #{mmm_forward.1} parent=1 // pred_check
      _
    $region55: #{mmm_forward.1} parent=1 // pred_check_branch
      %5821 = sbr.rel (0) target = $region57
    $region56: #{mmm_forward.1} parent=1 // pred_region
      %s5823 = ssub.s32 32, 32
      %5824 = vsyncadd [#allocation8], %s5823
      %s5826 = sshll.u32 [#allocation9], 4
      %s5827 = int_to_ptr.vmem [resolvable:$true] %s5826
      %5829 = dma.vmem_to_hbm [thread:$0]  %s5827, 32, %s12, [#allocation8]
    $region57: #{mmm_forward.1} parent=1 // pred_fallthru
      _
    // Predicated region
    $region58: #{mmm_forward.1} parent=1 // pred_check
      _
    $region59: #{mmm_forward.1} parent=1 // pred_check_branch
      %5831 = sbr.rel (0) target = $region61
    $region60: #{mmm_forward.1} parent=1 // pred_region
      %5832 = dma.done [#allocation4], 64
    $region61: #{mmm_forward.1} parent=1 // pred_fallthru
      _
    // Predicated region
    $region62: #{mmm_forward.1} parent=1 // pred_check
      _
    $region63: #{mmm_forward.1} parent=1 // pred_check_branch
      %5834 = sbr.rel (0) target = $region65
    $region64: #{mmm_forward.1} parent=1 // pred_region
      %5835 = dma.done [#allocation8], 32
    $region65: #{mmm_forward.1} parent=1 // pred_fallthru
      _
    // Predicated region
    $region66: #{mmm_forward.1} parent=1 // pred_check
      _
    $region67: #{mmm_forward.1} parent=1 // pred_check_branch
      %5837 = sbr.rel (0) target = $region69
    $region68: #{mmm_forward.1} parent=1 // pred_region
      %5838 = dma.done [#allocation8], 32
    $region69: #{mmm_forward.1} parent=1 // pred_fallthru
      _
    %5839 = vsyncpa [#allocation4], 1
    %5840 = vsyncpa [#allocation8], 1
    %5841 = vsyncpa [#allocation5], 1

</llo_original>
